<compile_context>
chip_gen: v7x
topology: tpu7x:2x2x1
jax: 0.10.0
libtpu: 0.0.40
codegen_flags: <defaults>
</compile_context>

<pallas_src>
import functools

import numpy as np
import jax
import jax.numpy as jnp
from jax.experimental import pallas as pl
from jax.experimental.pallas import tpu as pltpu

# ----------------------------- configuration -------------------------------
IMAGE_SIZE = 16
PATCH = 4
IN_C = 3
EMBED = 32
DEPTH = 2
HEADS = 4
HEAD_DIM = EMBED // HEADS                 # 8
MLP_RATIO = 4
HIDDEN = EMBED * MLP_RATIO                # 128
NUM_CLASSES = 10
GRID_N = IMAGE_SIZE // PATCH              # 4
N_PATCHES = GRID_N * GRID_N               # 16
N_TOKENS = N_PATCHES + 1                  # 17 (patches + cls)
NT_PAD = 24                               # tokens per image, padded to multiple of 8
CLS_ROW = N_PATCHES                       # cls token lives at row 16 of each slab
PDIM = IN_C * PATCH * PATCH               # 48
EPS = 1e-6                                # LayerNorm eps in the module
LOGIT_LANES = 128                         # lane-dense padded logits width
NEG_INF = -1e30

VECS_PER_BLOCK = 6                        # ln1_w, ln1_b, proj_b, ln2_w, ln2_b, fc2_b
N_VECE = DEPTH * VECS_PER_BLOCK + 2       # + final norm_w, norm_b
N_VECH = DEPTH + 1                        # fc1_b per block + head_b


# ------------------------------ math helpers -------------------------------
def _layernorm(x, w, b):
    mu = jnp.mean(x, axis=-1, keepdims=True)
    xc = x - mu
    var = jnp.mean(xc * xc, axis=-1, keepdims=True)
    return xc * jax.lax.rsqrt(var + EPS) * w + b


def _gelu_exact(x):
    # nn.GELU() default (approximate='none'): 0.5*x*(1+erf(x/sqrt(2))).
    # erf via A&S 7.1.26 (|err| <= 1.5e-7); divide routed to the EUP reciprocal,
    # sign()/symmetry handled with a single select.
    # TODO(synk): replace with jax.lax.erf if/when its Mosaic lowering is guaranteed.
    z = x * 0.7071067811865476
    az = jnp.abs(z)
    t = pl.reciprocal(1.0 + 0.3275911 * az, approx=True)
    poly = ((((1.061405429 * t - 1.453152027) * t + 1.421413741) * t
             - 0.284496736) * t + 0.254829592) * t
    one_minus_erf = poly * jnp.exp(-az * az)            # = 1 - erf(|z|)
    cdf = jnp.where(z >= 0.0, 1.0 - 0.5 * one_minus_erf, 0.5 * one_minus_erf)
    return x * cdf


# ------------------------------- fused kernel ------------------------------
def vit_kernel(patches_ref, mask_ref, patchw_ref, tokadd_ref, wqkv_ref,
               projw_ref, fc1w_ref, fc2w_ref, headw_ref, vece_ref, vech_ref,
               out_ref, *, bc):
    """One batch-chunk of the full ViT forward.  M = bc * NT_PAD token rows."""
    f32 = jnp.float32

    # ---- patch embedding + [patches | cls | pad] token assembly ------------
    # Padded patch rows (incl. the cls slot) are zero, so the matmul leaves them
    # at 0 and tok_add injects (patch_bias + pos) / (cls + pos) into the right rows.
    pe = jnp.dot(patches_ref[...], patchw_ref[...], preferred_element_type=f32)
    x = pe + jnp.concatenate([tokadd_ref[...]] * bc, axis=0)          # (M, E)

    mask = mask_ref[...]                                              # (M, M) additive

    for d in range(DEPTH):                                            # DEPTH=2, unrolled
        vb = d * VECS_PER_BLOCK

        # --- multi-head self-attention (pre-LN), heads unrolled over H=4 ----
        xn = _layernorm(x, vece_ref[vb + 0:vb + 1], vece_ref[vb + 1:vb + 2])
        attn_out = None
        for h in range(HEADS):
            q = jnp.dot(xn, wqkv_ref[3 * d + 0, h], preferred_element_type=f32)  # (M,hd)
            k = jnp.dot(xn, wqkv_ref[3 * d + 1, h], preferred_element_type=f32)
            v = jnp.dot(xn, wqkv_ref[3 * d + 2, h], preferred_element_type=f32)
            # 1/sqrt(hd) is already folded into the q weights at pack time.
            s = jnp.dot(q, k.T, preferred_element_type=f32) + mask               # (M,M)
            s = s - jnp.max(s, axis=-1, keepdims=True)
            p = jnp.exp(s)
            p = p * pl.reciprocal(jnp.sum(p, axis=-1, keepdims=True), approx=True)
            o = jnp.dot(p, v, preferred_element_type=f32)                         # (M,hd)
            c = jnp.dot(o, projw_ref[d, h], preferred_element_type=f32)           # (M,E)
            attn_out = c if attn_out is None else attn_out + c
        x = x + attn_out + vece_ref[vb + 2:vb + 3]                                 # +proj_b

        # --- MLP -------------------------------------------------------------
        xn2 = _layernorm(x, vece_ref[vb + 3:vb + 4], vece_ref[vb + 4:vb + 5])
        h1 = jnp.dot(xn2, fc1w_ref[d], preferred_element_type=f32) + vech_ref[d:d + 1]
        h1 = _gelu_exact(h1)
        h2 = jnp.dot(h1, fc2w_ref[d], preferred_element_type=f32) + vece_ref[vb + 5:vb + 6]
        x = x + h2

    # ---- final LayerNorm on the cls rows + classification head --------------
    cls_tok = x.reshape(bc, NT_PAD, EMBED)[:, CLS_ROW]                 # (bc, E)
    base = DEPTH * VECS_PER_BLOCK
    cls_n = _layernorm(cls_tok, vece_ref[base:base + 1], vece_ref[base + 1:base + 2])
    out_ref[...] = (jnp.dot(cls_n, headw_ref[...], preferred_element_type=f32)
                    + vech_ref[DEPTH:DEPTH + 1])


# --------------------- one-time parameter preprocessing ----------------------
def pack_params(params):
    """Hoisted weight preprocessing (run ONCE at init, not per forward call)."""
    scale = float(HEAD_DIM) ** -0.5
    blocks = params["blocks"]

    # qkv per-head split (head-major columns), qk scale folded into Wq.
    # TODO(synk): when loading real PyTorch weights, qkv_w here is torch_weight.T
    #             (nn.Linear stores (out, in)); same for proj/fc/head weights.
    wqkv = []
    for blk in blocks:
        w = blk["qkv_w"]                              # (E, 3E) = [q | k | v]
        for j, sc in ((0, scale), (1, 1.0), (2, 1.0)):
            wj = w[:, j * EMBED:(j + 1) * EMBED] * sc
            wqkv.append(wj.reshape(EMBED, HEADS, HEAD_DIM).transpose(1, 0, 2))
    wqkv = jnp.stack(wqkv, axis=0)                    # (3*DEPTH, H, E, hd)

    proj_w = jnp.stack([blk["proj_w"].reshape(HEADS, HEAD_DIM, EMBED)
                        for blk in blocks], axis=0)   # (DEPTH, H, hd, E)
    fc1_w = jnp.stack([blk["fc1_w"] for blk in blocks], axis=0)   # (DEPTH, E, HIDDEN)
    fc2_w = jnp.stack([blk["fc2_w"] for blk in blocks], axis=0)   # (DEPTH, HIDDEN, E)

    # All E-wide per-block/final vectors packed into one slab.
    rows_e = []
    for blk in blocks:
        rows_e += [blk["ln1_w"], blk["ln1_b"], blk["proj_b"],
                   blk["ln2_w"], blk["ln2_b"], blk["fc2_b"]]
    rows_e += [params["norm_w"], params["norm_b"]]
    vece = jnp.concatenate([r.reshape(1, EMBED) for r in rows_e], axis=0)  # (14, E)

    # HIDDEN(=128)-wide vectors: fc1 biases + lane-padded head bias.
    head_b = jnp.zeros((1, LOGIT_LANES), jnp.float32)
    head_b = head_b.at[0, :NUM_CLASSES].set(params["head_b"].reshape(-1))
    vech = jnp.concatenate([blk["fc1_b"].reshape(1, HIDDEN) for blk in blocks]
                           + [head_b], axis=0)                              # (3, 128)

    head_w = jnp.zeros((EMBED, LOGIT_LANES), jnp.float32)
    head_w = head_w.at[:, :NUM_CLASSES].set(params["head_w"])

    # Token additive slab: rows 0..15 = patch_bias + pos[1:], row 16 = cls + pos[0].
    pos = params["pos_embed"].reshape(N_TOKENS, EMBED)
    tok_add = jnp.zeros((NT_PAD, EMBED), jnp.float32)
    tok_add = tok_add.at[:N_PATCHES].set(params["patch_b"].reshape(1, EMBED) + pos[1:])
    tok_add = tok_add.at[CLS_ROW].set(params["cls_token"].reshape(EMBED) + pos[0])

    return {"patch_w": params["patch_w"], "tok_add": tok_add, "wqkv": wqkv,
            "proj_w": proj_w, "fc1_w": fc1_w, "fc2_w": fc2_w, "head_w": head_w,
            "vece": vece, "vech": vech}


def _pick_chunk(batch):
    """Images per grid step: prefer 8 (grid>=2 -> splits across v7x's 2 TCs while
    keeping per-chunk M = 192 rows), else the whole batch (block == full array)."""
    for c in (8, 16, 32):
        if batch % c == 0 and batch >= c:
            return c
    return batch


def _block_mask(bc):
    """Additive attention mask: a query may only attend to the N_TOKENS real rows
    of its own image's NT_PAD-row slab (off-block and padded keys get -1e30)."""
    m = np.full((bc * NT_PAD, bc * NT_PAD), NEG_INF, np.float32)
    for b in range(bc):
        r = b * NT_PAD
        m[r:r + NT_PAD, r:r + N_TOKENS] = 0.0
    return m


# ------------------------------ forward wrapper -------------------------------
@jax.jit
def vit_forward(x, packed):
    B = x.shape[0]
    bc = _pick_chunk(B)
    m_chunk = bc * NT_PAD

    # Patch extraction + zero-pad each image to NT_PAD token rows (pure layout;
    # the only per-call XLA work besides the fused kernel and the final slice).
    patches = (x.reshape(B, IN_C, GRID_N, PATCH, GRID_N, PATCH)
                .transpose(0, 2, 4, 1, 3, 5)
                .reshape(B, N_PATCHES, PDIM))
    patches = jnp.pad(patches, ((0, 0), (0, NT_PAD - N_PATCHES), (0, 0)))
    patches = patches.reshape(B * NT_PAD, PDIM)

    mask = jnp.asarray(_block_mask(bc))   # trace-time numpy constant

    logits_pad = pl.pallas_call(
        functools.partial(vit_kernel, bc=bc),
        out_shape=jax.ShapeDtypeStruct((B, LOGIT_LANES), jnp.float32),
        grid=(B // bc,),
        in_specs=[
            pl.BlockSpec((m_chunk, PDIM), lambda i: (i, 0)),               # patches
            pl.BlockSpec((m_chunk, m_chunk), lambda i: (0, 0)),            # attn mask
            pl.BlockSpec((PDIM, EMBED), lambda i: (0, 0)),                 # patch_w
            pl.BlockSpec((NT_PAD, EMBED), lambda i: (0, 0)),               # tok_add
            pl.BlockSpec((3 * DEPTH, HEADS, EMBED, HEAD_DIM),
                         lambda i: (0, 0, 0, 0)),                          # wqkv
            pl.BlockSpec((DEPTH, HEADS, HEAD_DIM, EMBED),
                         lambda i: (0, 0, 0, 0)),                          # proj_w
            pl.BlockSpec((DEPTH, EMBED, HIDDEN), lambda i: (0, 0, 0)),     # fc1_w
            pl.BlockSpec((DEPTH, HIDDEN, EMBED), lambda i: (0, 0, 0)),     # fc2_w
            pl.BlockSpec((EMBED, LOGIT_LANES), lambda i: (0, 0)),          # head_w
            pl.BlockSpec((N_VECE, EMBED), lambda i: (0, 0)),               # E-wide vecs
            pl.BlockSpec((N_VECH, HIDDEN), lambda i: (0, 0)),              # 128-wide vecs
        ],
        out_specs=pl.BlockSpec((bc, LOGIT_LANES), lambda i: (i, 0)),
        compiler_params=pltpu.CompilerParams(
            dimension_semantics=("parallel",)),
    )(patches, mask, packed["patch_w"], packed["tok_add"], packed["wqkv"],
      packed["proj_w"], packed["fc1_w"], packed["fc2_w"], packed["head_w"],
      packed["vece"], packed["vech"])
    return logits_pad[:, :NUM_CLASSES]


# --------------------------- parameter init -----------------------------------
def _trunc_normal(key, shape, std):
    return std * jax.random.truncated_normal(key, -2.0, 2.0, shape, jnp.float32)


def init_params(key):
    keys = iter(jax.random.split(key, 64))
    params = {}

    # PatchEmbed Conv2d: kaiming_normal_(mode='fan_out') -> std = sqrt(2/fan_out).
    # TODO(synk): real PyTorch Conv2d weights must be loaded as
    #             weight.reshape(EMBED, C*P*P).T (matching the (C, P, P) flatten order).
    fan_out = EMBED * PATCH * PATCH
    std_conv = (2.0 / fan_out) ** 0.5
    params["patch_w"] = std_conv * jax.random.normal(
        next(keys), (PDIM, EMBED), jnp.float32)
    params["patch_b"] = jnp.zeros((1, EMBED), jnp.float32)

    params["cls_token"] = _trunc_normal(next(keys), (1, 1, EMBED), 0.02)
    params["pos_embed"] = _trunc_normal(next(keys), (1, N_TOKENS, EMBED), 0.02)

    blocks = []
    for _ in range(DEPTH):
        blk = {
            "ln1_w": jnp.ones((1, EMBED), jnp.float32),
            "ln1_b": jnp.zeros((1, EMBED), jnp.float32),
            "qkv_w": _trunc_normal(next(keys), (EMBED, 3 * EMBED), 0.01),  # qkv_bias=False
            "proj_w": _trunc_normal(next(keys), (EMBED, EMBED), 0.01),
            "proj_b": jnp.zeros((1, EMBED), jnp.float32),
            "ln2_w": jnp.ones((1, EMBED), jnp.float32),
            "ln2_b": jnp.zeros((1, EMBED), jnp.float32),
            "fc1_w": _trunc_normal(next(keys), (EMBED, HIDDEN), 0.01),
            "fc1_b": jnp.zeros((1, HIDDEN), jnp.float32),
            "fc2_w": _trunc_normal(next(keys), (HIDDEN, EMBED), 0.01),
            "fc2_b": jnp.zeros((1, EMBED), jnp.float32),
        }
        blocks.append(blk)
    params["blocks"] = blocks

    params["norm_w"] = jnp.ones((1, EMBED), jnp.float32)
    params["norm_b"] = jnp.zeros((1, EMBED), jnp.float32)
    params["head_w"] = _trunc_normal(next(keys), (EMBED, NUM_CLASSES), 0.01)
    params["head_b"] = jnp.zeros((1, NUM_CLASSES), jnp.float32)
    return params


# --------------------------------- main ----------------------------------------
if __name__ == "__main__":
    root = jax.random.PRNGKey(0)
    k_param, k_x = jax.random.split(root)
    params = init_params(k_param)
    packed = pack_params(params)            # one-time weight preprocessing (hoisted)
    x = jax.random.normal(k_x, (2, IN_C, IMAGE_SIZE, IMAGE_SIZE), jnp.float32)

    logits = vit_forward(x, packed)
    logits = jax.block_until_ready(logits)
    assert logits.shape == (2, NUM_CLASSES) and logits.dtype == jnp.float32
    assert bool(jnp.all(jnp.isfinite(logits)))
    print("KERNEL_OK")
</pallas_src>

<mosaic_0001>
module attributes {stable_mosaic.version = 11 : i64} {
  func.func @vit_kernel(%arg0: i32, %arg1: memref<48x48xf32, #tpu.memory_space<vmem>>, %arg2: memref<48x48xf32, #tpu.memory_space<vmem>>, %arg3: memref<48x32xf32, #tpu.memory_space<vmem>>, %arg4: memref<24x32xf32, #tpu.memory_space<vmem>>, %arg5: memref<6x4x32x8xf32, #tpu.memory_space<vmem>>, %arg6: memref<2x4x8x32xf32, #tpu.memory_space<vmem>>, %arg7: memref<2x32x128xf32, #tpu.memory_space<vmem>>, %arg8: memref<2x128x32xf32, #tpu.memory_space<vmem>>, %arg9: memref<32x128xf32, #tpu.memory_space<vmem>>, %arg10: memref<14x32xf32, #tpu.memory_space<vmem>>, %arg11: memref<3x128xf32, #tpu.memory_space<vmem>>, %arg12: memref<2x128xf32, #tpu.memory_space<vmem>>) attributes {dimension_semantics = [#tpu.dimension_semantics<parallel>], iteration_bounds = array<i64: 1>, scalar_prefetch = 0 : i64, scratch_operands = 0 : i64, tpu.core_type = #tpu.core_type<tc>, window_params = [{transform_indices = @transform_0, window_bounds = array<i64: 48, 48>}, {pipeline_mode = #tpu.pipeline_mode<synchronous>, transform_indices = @transform_1, window_bounds = array<i64: 48, 48>}, {pipeline_mode = #tpu.pipeline_mode<synchronous>, transform_indices = @transform_2, window_bounds = array<i64: 48, 32>}, {pipeline_mode = #tpu.pipeline_mode<synchronous>, transform_indices = @transform_3, window_bounds = array<i64: 24, 32>}, {pipeline_mode = #tpu.pipeline_mode<synchronous>, transform_indices = @transform_4, window_bounds = array<i64: 6, 4, 32, 8>}, {pipeline_mode = #tpu.pipeline_mode<synchronous>, transform_indices = @transform_5, window_bounds = array<i64: 2, 4, 8, 32>}, {pipeline_mode = #tpu.pipeline_mode<synchronous>, transform_indices = @transform_6, window_bounds = array<i64: 2, 32, 128>}, {pipeline_mode = #tpu.pipeline_mode<synchronous>, transform_indices = @transform_7, window_bounds = array<i64: 2, 128, 32>}, {pipeline_mode = #tpu.pipeline_mode<synchronous>, transform_indices = @transform_8, window_bounds = array<i64: 32, 128>}, {pipeline_mode = #tpu.pipeline_mode<synchronous>, transform_indices = @transform_9, window_bounds = array<i64: 14, 32>}, {pipeline_mode = #tpu.pipeline_mode<synchronous>, transform_indices = @transform_10, window_bounds = array<i64: 3, 128>}, {transform_indices = @transform_11, window_bounds = array<i64: 2, 128>}]} {
    %c0 = arith.constant 0 : index
    %c0_0 = arith.constant 0 : index
    %0 = vector.load %arg1[%c0, %c0_0] : memref<48x48xf32, #tpu.memory_space<vmem>>, vector<48x48xf32>
    %c0_1 = arith.constant 0 : index
    %c0_2 = arith.constant 0 : index
    %1 = vector.load %arg3[%c0_1, %c0_2] : memref<48x32xf32, #tpu.memory_space<vmem>>, vector<48x32xf32>
    %cst = arith.constant dense<0.000000e+00> : vector<48x32xf32>
    %2 = tpu.matmul %0, %1, %cst {dimension_numbers = #tpu.dot_dimension_numbers<[1], [0], [0], [1], [0, 0, 1, 1], [], []>} : vector<48x48xf32>, vector<48x32xf32>, vector<48x32xf32> -> vector<48x32xf32>
    %c0_3 = arith.constant 0 : index
    %c0_4 = arith.constant 0 : index
    %3 = vector.load %arg4[%c0_3, %c0_4] : memref<24x32xf32, #tpu.memory_space<vmem>>, vector<24x32xf32>
    %4 = tpu.concatenate %3, %3 in 0 : vector<24x32xf32>, vector<24x32xf32> -> vector<48x32xf32>
    %5 = arith.addf %2, %4 : vector<48x32xf32>
    %c0_5 = arith.constant 0 : index
    %c0_6 = arith.constant 0 : index
    %6 = vector.load %arg2[%c0_5, %c0_6] : memref<48x48xf32, #tpu.memory_space<vmem>>, vector<48x48xf32>
    %c0_7 = arith.constant 0 : index
    %c0_8 = arith.constant 0 : index
    %7 = vector.load %arg10[%c0_7, %c0_8] : memref<14x32xf32, #tpu.memory_space<vmem>>, vector<1x32xf32>
    %c1 = arith.constant 1 : index
    %c0_9 = arith.constant 0 : index
    %8 = vector.load %arg10[%c1, %c0_9] : memref<14x32xf32, #tpu.memory_space<vmem>>, vector<1x32xf32>
    %cst_10 = arith.constant dense<0.000000e+00> : vector<48xf32>
    %9 = vector.multi_reduction <add>, %5, %cst_10 [1] : vector<48x32xf32> to vector<48xf32>
    %10 = vector.shape_cast %9 : vector<48xf32> to vector<48x1xf32>
    %cst_11 = arith.constant 3.200000e+01 : f32
    %11 = vector.broadcast %cst_11 : f32 to vector<48x1xf32>
    %12 = arith.divf %10, %11 : vector<48x1xf32>
    %13 = vector.broadcast %12 : vector<48x1xf32> to vector<48x32xf32>
    %14 = arith.subf %5, %13 : vector<48x32xf32>
    %15 = arith.mulf %14, %14 : vector<48x32xf32>
    %cst_12 = arith.constant dense<0.000000e+00> : vector<48xf32>
    %16 = vector.multi_reduction <add>, %15, %cst_12 [1] : vector<48x32xf32> to vector<48xf32>
    %17 = vector.shape_cast %16 : vector<48xf32> to vector<48x1xf32>
    %cst_13 = arith.constant 3.200000e+01 : f32
    %18 = vector.broadcast %cst_13 : f32 to vector<48x1xf32>
    %19 = arith.divf %17, %18 : vector<48x1xf32>
    %cst_14 = arith.constant 9.99999997E-7 : f32
    %20 = vector.broadcast %cst_14 : f32 to vector<48x1xf32>
    %21 = arith.addf %19, %20 : vector<48x1xf32>
    %22 = math.rsqrt %21 : vector<48x1xf32>
    %23 = vector.broadcast %22 : vector<48x1xf32> to vector<48x32xf32>
    %24 = arith.mulf %14, %23 : vector<48x32xf32>
    %25 = vector.broadcast %7 : vector<1x32xf32> to vector<48x32xf32>
    %26 = arith.mulf %24, %25 : vector<48x32xf32>
    %27 = vector.broadcast %8 : vector<1x32xf32> to vector<48x32xf32>
    %28 = arith.addf %26, %27 : vector<48x32xf32>
    %c0_15 = arith.constant 0 : index
    %c0_16 = arith.constant 0 : index
    %c0_17 = arith.constant 0 : index
    %c0_18 = arith.constant 0 : index
    %29 = vector.load %arg5[%c0_15, %c0_16, %c0_17, %c0_18] : memref<6x4x32x8xf32, #tpu.memory_space<vmem>>, vector<1x1x32x8xf32>
    %30 = vector.shape_cast %29 : vector<1x1x32x8xf32> to vector<32x8xf32>
    %cst_19 = arith.constant dense<0.000000e+00> : vector<48x8xf32>
    %31 = tpu.matmul %28, %30, %cst_19 {dimension_numbers = #tpu.dot_dimension_numbers<[1], [0], [0], [1], [0, 0, 1, 1], [], []>} : vector<48x32xf32>, vector<32x8xf32>, vector<48x8xf32> -> vector<48x8xf32>
    %c1_20 = arith.constant 1 : index
    %c0_21 = arith.constant 0 : index
    %c0_22 = arith.constant 0 : index
    %c0_23 = arith.constant 0 : index
    %32 = vector.load %arg5[%c1_20, %c0_21, %c0_22, %c0_23] : memref<6x4x32x8xf32, #tpu.memory_space<vmem>>, vector<1x1x32x8xf32>
    %33 = vector.shape_cast %32 : vector<1x1x32x8xf32> to vector<32x8xf32>
    %cst_24 = arith.constant dense<0.000000e+00> : vector<48x8xf32>
    %34 = tpu.matmul %28, %33, %cst_24 {dimension_numbers = #tpu.dot_dimension_numbers<[1], [0], [0], [1], [0, 0, 1, 1], [], []>} : vector<48x32xf32>, vector<32x8xf32>, vector<48x8xf32> -> vector<48x8xf32>
    %c2 = arith.constant 2 : index
    %c0_25 = arith.constant 0 : index
    %c0_26 = arith.constant 0 : index
    %c0_27 = arith.constant 0 : index
    %35 = vector.load %arg5[%c2, %c0_25, %c0_26, %c0_27] : memref<6x4x32x8xf32, #tpu.memory_space<vmem>>, vector<1x1x32x8xf32>
    %36 = vector.shape_cast %35 : vector<1x1x32x8xf32> to vector<32x8xf32>
    %cst_28 = arith.constant dense<0.000000e+00> : vector<48x8xf32>
    %37 = tpu.matmul %28, %36, %cst_28 {dimension_numbers = #tpu.dot_dimension_numbers<[1], [0], [0], [1], [0, 0, 1, 1], [], []>} : vector<48x32xf32>, vector<32x8xf32>, vector<48x8xf32> -> vector<48x8xf32>
    %38 = tpu.transpose %34, [1, 0] : vector<48x8xf32> -> vector<8x48xf32>
    %cst_29 = arith.constant dense<0.000000e+00> : vector<48x48xf32>
    %39 = tpu.matmul %31, %38, %cst_29 {dimension_numbers = #tpu.dot_dimension_numbers<[1], [0], [0], [1], [0, 0, 1, 1], [], []>} : vector<48x8xf32>, vector<8x48xf32>, vector<48x48xf32> -> vector<48x48xf32>
    %40 = arith.addf %39, %6 : vector<48x48xf32>
    %cst_30 = arith.constant dense<0xFF800000> : vector<48xf32>
    %41 = vector.multi_reduction <maximumf>, %40, %cst_30 [1] : vector<48x48xf32> to vector<48xf32>
    %42 = vector.shape_cast %41 : vector<48xf32> to vector<48x1xf32>
    %43 = vector.broadcast %42 : vector<48x1xf32> to vector<48x48xf32>
    %44 = arith.subf %40, %43 : vector<48x48xf32>
    %45 = math.exp %44 : vector<48x48xf32>
    %cst_31 = arith.constant dense<0.000000e+00> : vector<48xf32>
    %46 = vector.multi_reduction <add>, %45, %cst_31 [1] : vector<48x48xf32> to vector<48xf32>
    %47 = vector.shape_cast %46 : vector<48xf32> to vector<48x1xf32>
    %48 = tpu.reciprocal %47 {approx = true} : vector<48x1xf32> -> vector<48x1xf32>
    %49 = vector.broadcast %48 : vector<48x1xf32> to vector<48x48xf32>
    %50 = arith.mulf %45, %49 : vector<48x48xf32>
    %cst_32 = arith.constant dense<0.000000e+00> : vector<48x8xf32>
    %51 = tpu.matmul %50, %37, %cst_32 {dimension_numbers = #tpu.dot_dimension_numbers<[1], [0], [0], [1], [0, 0, 1, 1], [], []>} : vector<48x48xf32>, vector<48x8xf32>, vector<48x8xf32> -> vector<48x8xf32>
    %c0_33 = arith.constant 0 : index
    %c0_34 = arith.constant 0 : index
    %c0_35 = arith.constant 0 : index
    %c0_36 = arith.constant 0 : index
    %52 = vector.load %arg6[%c0_33, %c0_34, %c0_35, %c0_36] : memref<2x4x8x32xf32, #tpu.memory_space<vmem>>, vector<1x1x8x32xf32>
    %53 = vector.shape_cast %52 : vector<1x1x8x32xf32> to vector<8x32xf32>
    %cst_37 = arith.constant dense<0.000000e+00> : vector<48x32xf32>
    %54 = tpu.matmul %51, %53, %cst_37 {dimension_numbers = #tpu.dot_dimension_numbers<[1], [0], [0], [1], [0, 0, 1, 1], [], []>} : vector<48x8xf32>, vector<8x32xf32>, vector<48x32xf32> -> vector<48x32xf32>
    %c0_38 = arith.constant 0 : index
    %c1_39 = arith.constant 1 : index
    %c0_40 = arith.constant 0 : index
    %c0_41 = arith.constant 0 : index
    %55 = vector.load %arg5[%c0_38, %c1_39, %c0_40, %c0_41] : memref<6x4x32x8xf32, #tpu.memory_space<vmem>>, vector<1x1x32x8xf32>
    %56 = vector.shape_cast %55 : vector<1x1x32x8xf32> to vector<32x8xf32>
    %cst_42 = arith.constant dense<0.000000e+00> : vector<48x8xf32>
    %57 = tpu.matmul %28, %56, %cst_42 {dimension_numbers = #tpu.dot_dimension_numbers<[1], [0], [0], [1], [0, 0, 1, 1], [], []>} : vector<48x32xf32>, vector<32x8xf32>, vector<48x8xf32> -> vector<48x8xf32>
    %c1_43 = arith.constant 1 : index
    %c1_44 = arith.constant 1 : index
    %c0_45 = arith.constant 0 : index
    %c0_46 = arith.constant 0 : index
    %58 = vector.load %arg5[%c1_43, %c1_44, %c0_45, %c0_46] : memref<6x4x32x8xf32, #tpu.memory_space<vmem>>, vector<1x1x32x8xf32>
    %59 = vector.shape_cast %58 : vector<1x1x32x8xf32> to vector<32x8xf32>
    %cst_47 = arith.constant dense<0.000000e+00> : vector<48x8xf32>
    %60 = tpu.matmul %28, %59, %cst_47 {dimension_numbers = #tpu.dot_dimension_numbers<[1], [0], [0], [1], [0, 0, 1, 1], [], []>} : vector<48x32xf32>, vector<32x8xf32>, vector<48x8xf32> -> vector<48x8xf32>
    %c2_48 = arith.constant 2 : index
    %c1_49 = arith.constant 1 : index
    %c0_50 = arith.constant 0 : index
    %c0_51 = arith.constant 0 : index
    %61 = vector.load %arg5[%c2_48, %c1_49, %c0_50, %c0_51] : memref<6x4x32x8xf32, #tpu.memory_space<vmem>>, vector<1x1x32x8xf32>
    %62 = vector.shape_cast %61 : vector<1x1x32x8xf32> to vector<32x8xf32>
    %cst_52 = arith.constant dense<0.000000e+00> : vector<48x8xf32>
    %63 = tpu.matmul %28, %62, %cst_52 {dimension_numbers = #tpu.dot_dimension_numbers<[1], [0], [0], [1], [0, 0, 1, 1], [], []>} : vector<48x32xf32>, vector<32x8xf32>, vector<48x8xf32> -> vector<48x8xf32>
    %64 = tpu.transpose %60, [1, 0] : vector<48x8xf32> -> vector<8x48xf32>
    %cst_53 = arith.constant dense<0.000000e+00> : vector<48x48xf32>
    %65 = tpu.matmul %57, %64, %cst_53 {dimension_numbers = #tpu.dot_dimension_numbers<[1], [0], [0], [1], [0, 0, 1, 1], [], []>} : vector<48x8xf32>, vector<8x48xf32>, vector<48x48xf32> -> vector<48x48xf32>
    %66 = arith.addf %65, %6 : vector<48x48xf32>
    %cst_54 = arith.constant dense<0xFF800000> : vector<48xf32>
    %67 = vector.multi_reduction <maximumf>, %66, %cst_54 [1] : vector<48x48xf32> to vector<48xf32>
    %68 = vector.shape_cast %67 : vector<48xf32> to vector<48x1xf32>
    %69 = vector.broadcast %68 : vector<48x1xf32> to vector<48x48xf32>
    %70 = arith.subf %66, %69 : vector<48x48xf32>
    %71 = math.exp %70 : vector<48x48xf32>
    %cst_55 = arith.constant dense<0.000000e+00> : vector<48xf32>
    %72 = vector.multi_reduction <add>, %71, %cst_55 [1] : vector<48x48xf32> to vector<48xf32>
    %73 = vector.shape_cast %72 : vector<48xf32> to vector<48x1xf32>
    %74 = tpu.reciprocal %73 {approx = true} : vector<48x1xf32> -> vector<48x1xf32>
    %75 = vector.broadcast %74 : vector<48x1xf32> to vector<48x48xf32>
    %76 = arith.mulf %71, %75 : vector<48x48xf32>
    %cst_56 = arith.constant dense<0.000000e+00> : vector<48x8xf32>
    %77 = tpu.matmul %76, %63, %cst_56 {dimension_numbers = #tpu.dot_dimension_numbers<[1], [0], [0], [1], [0, 0, 1, 1], [], []>} : vector<48x48xf32>, vector<48x8xf32>, vector<48x8xf32> -> vector<48x8xf32>
    %c0_57 = arith.constant 0 : index
    %c1_58 = arith.constant 1 : index
    %c0_59 = arith.constant 0 : index
    %c0_60 = arith.constant 0 : index
    %78 = vector.load %arg6[%c0_57, %c1_58, %c0_59, %c0_60] : memref<2x4x8x32xf32, #tpu.memory_space<vmem>>, vector<1x1x8x32xf32>
    %79 = vector.shape_cast %78 : vector<1x1x8x32xf32> to vector<8x32xf32>
    %cst_61 = arith.constant dense<0.000000e+00> : vector<48x32xf32>
    %80 = tpu.matmul %77, %79, %cst_61 {dimension_numbers = #tpu.dot_dimension_numbers<[1], [0], [0], [1], [0, 0, 1, 1], [], []>} : vector<48x8xf32>, vector<8x32xf32>, vector<48x32xf32> -> vector<48x32xf32>
    %81 = arith.addf %54, %80 : vector<48x32xf32>
    %c0_62 = arith.constant 0 : index
    %c2_63 = arith.constant 2 : index
    %c0_64 = arith.constant 0 : index
    %c0_65 = arith.constant 0 : index
    %82 = vector.load %arg5[%c0_62, %c2_63, %c0_64, %c0_65] : memref<6x4x32x8xf32, #tpu.memory_space<vmem>>, vector<1x1x32x8xf32>
    %83 = vector.shape_cast %82 : vector<1x1x32x8xf32> to vector<32x8xf32>
    %cst_66 = arith.constant dense<0.000000e+00> : vector<48x8xf32>
    %84 = tpu.matmul %28, %83, %cst_66 {dimension_numbers = #tpu.dot_dimension_numbers<[1], [0], [0], [1], [0, 0, 1, 1], [], []>} : vector<48x32xf32>, vector<32x8xf32>, vector<48x8xf32> -> vector<48x8xf32>
    %c1_67 = arith.constant 1 : index
    %c2_68 = arith.constant 2 : index
    %c0_69 = arith.constant 0 : index
    %c0_70 = arith.constant 0 : index
    %85 = vector.load %arg5[%c1_67, %c2_68, %c0_69, %c0_70] : memref<6x4x32x8xf32, #tpu.memory_space<vmem>>, vector<1x1x32x8xf32>
    %86 = vector.shape_cast %85 : vector<1x1x32x8xf32> to vector<32x8xf32>
    %cst_71 = arith.constant dense<0.000000e+00> : vector<48x8xf32>
    %87 = tpu.matmul %28, %86, %cst_71 {dimension_numbers = #tpu.dot_dimension_numbers<[1], [0], [0], [1], [0, 0, 1, 1], [], []>} : vector<48x32xf32>, vector<32x8xf32>, vector<48x8xf32> -> vector<48x8xf32>
    %c2_72 = arith.constant 2 : index
    %c2_73 = arith.constant 2 : index
    %c0_74 = arith.constant 0 : index
    %c0_75 = arith.constant 0 : index
    %88 = vector.load %arg5[%c2_72, %c2_73, %c0_74, %c0_75] : memref<6x4x32x8xf32, #tpu.memory_space<vmem>>, vector<1x1x32x8xf32>
    %89 = vector.shape_cast %88 : vector<1x1x32x8xf32> to vector<32x8xf32>
    %cst_76 = arith.constant dense<0.000000e+00> : vector<48x8xf32>
    %90 = tpu.matmul %28, %89, %cst_76 {dimension_numbers = #tpu.dot_dimension_numbers<[1], [0], [0], [1], [0, 0, 1, 1], [], []>} : vector<48x32xf32>, vector<32x8xf32>, vector<48x8xf32> -> vector<48x8xf32>
    %91 = tpu.transpose %87, [1, 0] : vector<48x8xf32> -> vector<8x48xf32>
    %cst_77 = arith.constant dense<0.000000e+00> : vector<48x48xf32>
    %92 = tpu.matmul %84, %91, %cst_77 {dimension_numbers = #tpu.dot_dimension_numbers<[1], [0], [0], [1], [0, 0, 1, 1], [], []>} : vector<48x8xf32>, vector<8x48xf32>, vector<48x48xf32> -> vector<48x48xf32>
    %93 = arith.addf %92, %6 : vector<48x48xf32>
    %cst_78 = arith.constant dense<0xFF800000> : vector<48xf32>
    %94 = vector.multi_reduction <maximumf>, %93, %cst_78 [1] : vector<48x48xf32> to vector<48xf32>
    %95 = vector.shape_cast %94 : vector<48xf32> to vector<48x1xf32>
    %96 = vector.broadcast %95 : vector<48x1xf32> to vector<48x48xf32>
    %97 = arith.subf %93, %96 : vector<48x48xf32>
    %98 = math.exp %97 : vector<48x48xf32>
    %cst_79 = arith.constant dense<0.000000e+00> : vector<48xf32>
    %99 = vector.multi_reduction <add>, %98, %cst_79 [1] : vector<48x48xf32> to vector<48xf32>
    %100 = vector.shape_cast %99 : vector<48xf32> to vector<48x1xf32>
    %101 = tpu.reciprocal %100 {approx = true} : vector<48x1xf32> -> vector<48x1xf32>
    %102 = vector.broadcast %101 : vector<48x1xf32> to vector<48x48xf32>
    %103 = arith.mulf %98, %102 : vector<48x48xf32>
    %cst_80 = arith.constant dense<0.000000e+00> : vector<48x8xf32>
    %104 = tpu.matmul %103, %90, %cst_80 {dimension_numbers = #tpu.dot_dimension_numbers<[1], [0], [0], [1], [0, 0, 1, 1], [], []>} : vector<48x48xf32>, vector<48x8xf32>, vector<48x8xf32> -> vector<48x8xf32>
    %c0_81 = arith.constant 0 : index
    %c2_82 = arith.constant 2 : index
    %c0_83 = arith.constant 0 : index
    %c0_84 = arith.constant 0 : index
    %105 = vector.load %arg6[%c0_81, %c2_82, %c0_83, %c0_84] : memref<2x4x8x32xf32, #tpu.memory_space<vmem>>, vector<1x1x8x32xf32>
    %106 = vector.shape_cast %105 : vector<1x1x8x32xf32> to vector<8x32xf32>
    %cst_85 = arith.constant dense<0.000000e+00> : vector<48x32xf32>
    %107 = tpu.matmul %104, %106, %cst_85 {dimension_numbers = #tpu.dot_dimension_numbers<[1], [0], [0], [1], [0, 0, 1, 1], [], []>} : vector<48x8xf32>, vector<8x32xf32>, vector<48x32xf32> -> vector<48x32xf32>
    %108 = arith.addf %81, %107 : vector<48x32xf32>
    %c0_86 = arith.constant 0 : index
    %c3 = arith.constant 3 : index
    %c0_87 = arith.constant 0 : index
    %c0_88 = arith.constant 0 : index
    %109 = vector.load %arg5[%c0_86, %c3, %c0_87, %c0_88] : memref<6x4x32x8xf32, #tpu.memory_space<vmem>>, vector<1x1x32x8xf32>
    %110 = vector.shape_cast %109 : vector<1x1x32x8xf32> to vector<32x8xf32>
    %cst_89 = arith.constant dense<0.000000e+00> : vector<48x8xf32>
    %111 = tpu.matmul %28, %110, %cst_89 {dimension_numbers = #tpu.dot_dimension_numbers<[1], [0], [0], [1], [0, 0, 1, 1], [], []>} : vector<48x32xf32>, vector<32x8xf32>, vector<48x8xf32> -> vector<48x8xf32>
    %c1_90 = arith.constant 1 : index
    %c3_91 = arith.constant 3 : index
    %c0_92 = arith.constant 0 : index
    %c0_93 = arith.constant 0 : index
    %112 = vector.load %arg5[%c1_90, %c3_91, %c0_92, %c0_93] : memref<6x4x32x8xf32, #tpu.memory_space<vmem>>, vector<1x1x32x8xf32>
    %113 = vector.shape_cast %112 : vector<1x1x32x8xf32> to vector<32x8xf32>
    %cst_94 = arith.constant dense<0.000000e+00> : vector<48x8xf32>
    %114 = tpu.matmul %28, %113, %cst_94 {dimension_numbers = #tpu.dot_dimension_numbers<[1], [0], [0], [1], [0, 0, 1, 1], [], []>} : vector<48x32xf32>, vector<32x8xf32>, vector<48x8xf32> -> vector<48x8xf32>
    %c2_95 = arith.constant 2 : index
    %c3_96 = arith.constant 3 : index
    %c0_97 = arith.constant 0 : index
    %c0_98 = arith.constant 0 : index
    %115 = vector.load %arg5[%c2_95, %c3_96, %c0_97, %c0_98] : memref<6x4x32x8xf32, #tpu.memory_space<vmem>>, vector<1x1x32x8xf32>
    %116 = vector.shape_cast %115 : vector<1x1x32x8xf32> to vector<32x8xf32>
    %cst_99 = arith.constant dense<0.000000e+00> : vector<48x8xf32>
    %117 = tpu.matmul %28, %116, %cst_99 {dimension_numbers = #tpu.dot_dimension_numbers<[1], [0], [0], [1], [0, 0, 1, 1], [], []>} : vector<48x32xf32>, vector<32x8xf32>, vector<48x8xf32> -> vector<48x8xf32>
    %118 = tpu.transpose %114, [1, 0] : vector<48x8xf32> -> vector<8x48xf32>
    %cst_100 = arith.constant dense<0.000000e+00> : vector<48x48xf32>
    %119 = tpu.matmul %111, %118, %cst_100 {dimension_numbers = #tpu.dot_dimension_numbers<[1], [0], [0], [1], [0, 0, 1, 1], [], []>} : vector<48x8xf32>, vector<8x48xf32>, vector<48x48xf32> -> vector<48x48xf32>
    %120 = arith.addf %119, %6 : vector<48x48xf32>
    %cst_101 = arith.constant dense<0xFF800000> : vector<48xf32>
    %121 = vector.multi_reduction <maximumf>, %120, %cst_101 [1] : vector<48x48xf32> to vector<48xf32>
    %122 = vector.shape_cast %121 : vector<48xf32> to vector<48x1xf32>
    %123 = vector.broadcast %122 : vector<48x1xf32> to vector<48x48xf32>
    %124 = arith.subf %120, %123 : vector<48x48xf32>
    %125 = math.exp %124 : vector<48x48xf32>
    %cst_102 = arith.constant dense<0.000000e+00> : vector<48xf32>
    %126 = vector.multi_reduction <add>, %125, %cst_102 [1] : vector<48x48xf32> to vector<48xf32>
    %127 = vector.shape_cast %126 : vector<48xf32> to vector<48x1xf32>
    %128 = tpu.reciprocal %127 {approx = true} : vector<48x1xf32> -> vector<48x1xf32>
    %129 = vector.broadcast %128 : vector<48x1xf32> to vector<48x48xf32>
    %130 = arith.mulf %125, %129 : vector<48x48xf32>
    %cst_103 = arith.constant dense<0.000000e+00> : vector<48x8xf32>
    %131 = tpu.matmul %130, %117, %cst_103 {dimension_numbers = #tpu.dot_dimension_numbers<[1], [0], [0], [1], [0, 0, 1, 1], [], []>} : vector<48x48xf32>, vector<48x8xf32>, vector<48x8xf32> -> vector<48x8xf32>
    %c0_104 = arith.constant 0 : index
    %c3_105 = arith.constant 3 : index
    %c0_106 = arith.constant 0 : index
    %c0_107 = arith.constant 0 : index
    %132 = vector.load %arg6[%c0_104, %c3_105, %c0_106, %c0_107] : memref<2x4x8x32xf32, #tpu.memory_space<vmem>>, vector<1x1x8x32xf32>
    %133 = vector.shape_cast %132 : vector<1x1x8x32xf32> to vector<8x32xf32>
    %cst_108 = arith.constant dense<0.000000e+00> : vector<48x32xf32>
    %134 = tpu.matmul %131, %133, %cst_108 {dimension_numbers = #tpu.dot_dimension_numbers<[1], [0], [0], [1], [0, 0, 1, 1], [], []>} : vector<48x8xf32>, vector<8x32xf32>, vector<48x32xf32> -> vector<48x32xf32>
    %135 = arith.addf %108, %134 : vector<48x32xf32>
    %136 = arith.addf %5, %135 : vector<48x32xf32>
    %c2_109 = arith.constant 2 : index
    %c0_110 = arith.constant 0 : index
    %137 = vector.load %arg10[%c2_109, %c0_110] : memref<14x32xf32, #tpu.memory_space<vmem>>, vector<1x32xf32>
    %138 = vector.broadcast %137 : vector<1x32xf32> to vector<48x32xf32>
    %139 = arith.addf %136, %138 : vector<48x32xf32>
    %c3_111 = arith.constant 3 : index
    %c0_112 = arith.constant 0 : index
    %140 = vector.load %arg10[%c3_111, %c0_112] : memref<14x32xf32, #tpu.memory_space<vmem>>, vector<1x32xf32>
    %c4 = arith.constant 4 : index
    %c0_113 = arith.constant 0 : index
    %141 = vector.load %arg10[%c4, %c0_113] : memref<14x32xf32, #tpu.memory_space<vmem>>, vector<1x32xf32>
    %cst_114 = arith.constant dense<0.000000e+00> : vector<48xf32>
    %142 = vector.multi_reduction <add>, %139, %cst_114 [1] : vector<48x32xf32> to vector<48xf32>
    %143 = vector.shape_cast %142 : vector<48xf32> to vector<48x1xf32>
    %cst_115 = arith.constant 3.200000e+01 : f32
    %144 = vector.broadcast %cst_115 : f32 to vector<48x1xf32>
    %145 = arith.divf %143, %144 : vector<48x1xf32>
    %146 = vector.broadcast %145 : vector<48x1xf32> to vector<48x32xf32>
    %147 = arith.subf %139, %146 : vector<48x32xf32>
    %148 = arith.mulf %147, %147 : vector<48x32xf32>
    %cst_116 = arith.constant dense<0.000000e+00> : vector<48xf32>
    %149 = vector.multi_reduction <add>, %148, %cst_116 [1] : vector<48x32xf32> to vector<48xf32>
    %150 = vector.shape_cast %149 : vector<48xf32> to vector<48x1xf32>
    %cst_117 = arith.constant 3.200000e+01 : f32
    %151 = vector.broadcast %cst_117 : f32 to vector<48x1xf32>
    %152 = arith.divf %150, %151 : vector<48x1xf32>
    %cst_118 = arith.constant 9.99999997E-7 : f32
    %153 = vector.broadcast %cst_118 : f32 to vector<48x1xf32>
    %154 = arith.addf %152, %153 : vector<48x1xf32>
    %155 = math.rsqrt %154 : vector<48x1xf32>
    %156 = vector.broadcast %155 : vector<48x1xf32> to vector<48x32xf32>
    %157 = arith.mulf %147, %156 : vector<48x32xf32>
    %158 = vector.broadcast %140 : vector<1x32xf32> to vector<48x32xf32>
    %159 = arith.mulf %157, %158 : vector<48x32xf32>
    %160 = vector.broadcast %141 : vector<1x32xf32> to vector<48x32xf32>
    %161 = arith.addf %159, %160 : vector<48x32xf32>
    %c0_119 = arith.constant 0 : index
    %c0_120 = arith.constant 0 : index
    %c0_121 = arith.constant 0 : index
    %162 = vector.load %arg7[%c0_119, %c0_120, %c0_121] : memref<2x32x128xf32, #tpu.memory_space<vmem>>, vector<1x32x128xf32>
    %163 = vector.shape_cast %162 : vector<1x32x128xf32> to vector<32x128xf32>
    %cst_122 = arith.constant dense<0.000000e+00> : vector<48x128xf32>
    %164 = tpu.matmul %161, %163, %cst_122 {dimension_numbers = #tpu.dot_dimension_numbers<[1], [0], [0], [1], [0, 0, 1, 1], [], []>} : vector<48x32xf32>, vector<32x128xf32>, vector<48x128xf32> -> vector<48x128xf32>
    %c0_123 = arith.constant 0 : index
    %c0_124 = arith.constant 0 : index
    %165 = vector.load %arg11[%c0_123, %c0_124] : memref<3x128xf32, #tpu.memory_space<vmem>>, vector<1x128xf32>
    %166 = vector.broadcast %165 : vector<1x128xf32> to vector<48x128xf32>
    %167 = arith.addf %164, %166 : vector<48x128xf32>
    %cst_125 = arith.constant 0.707106769 : f32
    %168 = vector.broadcast %cst_125 : f32 to vector<48x128xf32>
    %169 = arith.mulf %167, %168 : vector<48x128xf32>
    %170 = math.absf %169 : vector<48x128xf32>
    %cst_126 = arith.constant 0.327591091 : f32
    %171 = vector.broadcast %cst_126 : f32 to vector<48x128xf32>
    %172 = arith.mulf %171, %170 : vector<48x128xf32>
    %cst_127 = arith.constant 1.000000e+00 : f32
    %173 = vector.broadcast %cst_127 : f32 to vector<48x128xf32>
    %174 = arith.addf %173, %172 : vector<48x128xf32>
    %175 = tpu.reciprocal %174 {approx = true} : vector<48x128xf32> -> vector<48x128xf32>
    %cst_128 = arith.constant 1.06140542 : f32
    %176 = vector.broadcast %cst_128 : f32 to vector<48x128xf32>
    %177 = arith.mulf %176, %175 : vector<48x128xf32>
    %cst_129 = arith.constant 1.45315206 : f32
    %178 = vector.broadcast %cst_129 : f32 to vector<48x128xf32>
    %179 = arith.subf %177, %178 : vector<48x128xf32>
    %180 = arith.mulf %179, %175 : vector<48x128xf32>
    %cst_130 = arith.constant 1.42141378 : f32
    %181 = vector.broadcast %cst_130 : f32 to vector<48x128xf32>
    %182 = arith.addf %180, %181 : vector<48x128xf32>
    %183 = arith.mulf %182, %175 : vector<48x128xf32>
    %cst_131 = arith.constant 0.284496725 : f32
    %184 = vector.broadcast %cst_131 : f32 to vector<48x128xf32>
    %185 = arith.subf %183, %184 : vector<48x128xf32>
    %186 = arith.mulf %185, %175 : vector<48x128xf32>
    %cst_132 = arith.constant 0.254829586 : f32
    %187 = vector.broadcast %cst_132 : f32 to vector<48x128xf32>
    %188 = arith.addf %186, %187 : vector<48x128xf32>
    %189 = arith.mulf %188, %175 : vector<48x128xf32>
    %cst_133 = arith.constant 0.000000e+00 : f32
    %190 = vector.broadcast %cst_133 : f32 to vector<48x128xf32>
    %191 = arith.subf %190, %170 : vector<48x128xf32>
    %192 = arith.mulf %191, %170 : vector<48x128xf32>
    %193 = math.exp %192 : vector<48x128xf32>
    %194 = arith.mulf %189, %193 : vector<48x128xf32>
    %cst_134 = arith.constant 0.000000e+00 : f32
    %195 = vector.broadcast %cst_134 : f32 to vector<48x128xf32>
    %196 = arith.cmpf oge, %169, %195 : vector<48x128xf32>
    %cst_135 = arith.constant 5.000000e-01 : f32
    %197 = vector.broadcast %cst_135 : f32 to vector<48x128xf32>
    %198 = arith.mulf %197, %194 : vector<48x128xf32>
    %cst_136 = arith.constant 1.000000e+00 : f32
    %199 = vector.broadcast %cst_136 : f32 to vector<48x128xf32>
    %200 = arith.subf %199, %198 : vector<48x128xf32>
    %cst_137 = arith.constant 5.000000e-01 : f32
    %201 = vector.broadcast %cst_137 : f32 to vector<48x128xf32>
    %202 = arith.mulf %201, %194 : vector<48x128xf32>
    %203 = arith.select %196, %200, %202 : vector<48x128xi1>, vector<48x128xf32>
    %204 = arith.mulf %167, %203 : vector<48x128xf32>
    %c0_138 = arith.constant 0 : index
    %c0_139 = arith.constant 0 : index
    %c0_140 = arith.constant 0 : index
    %205 = vector.load %arg8[%c0_138, %c0_139, %c0_140] : memref<2x128x32xf32, #tpu.memory_space<vmem>>, vector<1x128x32xf32>
    %206 = vector.shape_cast %205 : vector<1x128x32xf32> to vector<128x32xf32>
    %cst_141 = arith.constant dense<0.000000e+00> : vector<48x32xf32>
    %207 = tpu.matmul %204, %206, %cst_141 {dimension_numbers = #tpu.dot_dimension_numbers<[1], [0], [0], [1], [0, 0, 1, 1], [], []>} : vector<48x128xf32>, vector<128x32xf32>, vector<48x32xf32> -> vector<48x32xf32>
    %c5 = arith.constant 5 : index
    %c0_142 = arith.constant 0 : index
    %208 = vector.load %arg10[%c5, %c0_142] : memref<14x32xf32, #tpu.memory_space<vmem>>, vector<1x32xf32>
    %209 = vector.broadcast %208 : vector<1x32xf32> to vector<48x32xf32>
    %210 = arith.addf %207, %209 : vector<48x32xf32>
    %211 = arith.addf %139, %210 : vector<48x32xf32>
    %c6 = arith.constant 6 : index
    %c0_143 = arith.constant 0 : index
    %212 = vector.load %arg10[%c6, %c0_143] : memref<14x32xf32, #tpu.memory_space<vmem>>, vector<1x32xf32>
    %c7 = arith.constant 7 : index
    %c0_144 = arith.constant 0 : index
    %213 = vector.load %arg10[%c7, %c0_144] : memref<14x32xf32, #tpu.memory_space<vmem>>, vector<1x32xf32>
    %cst_145 = arith.constant dense<0.000000e+00> : vector<48xf32>
    %214 = vector.multi_reduction <add>, %211, %cst_145 [1] : vector<48x32xf32> to vector<48xf32>
    %215 = vector.shape_cast %214 : vector<48xf32> to vector<48x1xf32>
    %cst_146 = arith.constant 3.200000e+01 : f32
    %216 = vector.broadcast %cst_146 : f32 to vector<48x1xf32>
    %217 = arith.divf %215, %216 : vector<48x1xf32>
    %218 = vector.broadcast %217 : vector<48x1xf32> to vector<48x32xf32>
    %219 = arith.subf %211, %218 : vector<48x32xf32>
    %220 = arith.mulf %219, %219 : vector<48x32xf32>
    %cst_147 = arith.constant dense<0.000000e+00> : vector<48xf32>
    %221 = vector.multi_reduction <add>, %220, %cst_147 [1] : vector<48x32xf32> to vector<48xf32>
    %222 = vector.shape_cast %221 : vector<48xf32> to vector<48x1xf32>
    %cst_148 = arith.constant 3.200000e+01 : f32
    %223 = vector.broadcast %cst_148 : f32 to vector<48x1xf32>
    %224 = arith.divf %222, %223 : vector<48x1xf32>
    %cst_149 = arith.constant 9.99999997E-7 : f32
    %225 = vector.broadcast %cst_149 : f32 to vector<48x1xf32>
    %226 = arith.addf %224, %225 : vector<48x1xf32>
    %227 = math.rsqrt %226 : vector<48x1xf32>
    %228 = vector.broadcast %227 : vector<48x1xf32> to vector<48x32xf32>
    %229 = arith.mulf %219, %228 : vector<48x32xf32>
    %230 = vector.broadcast %212 : vector<1x32xf32> to vector<48x32xf32>
    %231 = arith.mulf %229, %230 : vector<48x32xf32>
    %232 = vector.broadcast %213 : vector<1x32xf32> to vector<48x32xf32>
    %233 = arith.addf %231, %232 : vector<48x32xf32>
    %c3_150 = arith.constant 3 : index
    %c0_151 = arith.constant 0 : index
    %c0_152 = arith.constant 0 : index
    %c0_153 = arith.constant 0 : index
    %234 = vector.load %arg5[%c3_150, %c0_151, %c0_152, %c0_153] : memref<6x4x32x8xf32, #tpu.memory_space<vmem>>, vector<1x1x32x8xf32>
    %235 = vector.shape_cast %234 : vector<1x1x32x8xf32> to vector<32x8xf32>
    %cst_154 = arith.constant dense<0.000000e+00> : vector<48x8xf32>
    %236 = tpu.matmul %233, %235, %cst_154 {dimension_numbers = #tpu.dot_dimension_numbers<[1], [0], [0], [1], [0, 0, 1, 1], [], []>} : vector<48x32xf32>, vector<32x8xf32>, vector<48x8xf32> -> vector<48x8xf32>
    %c4_155 = arith.constant 4 : index
    %c0_156 = arith.constant 0 : index
    %c0_157 = arith.constant 0 : index
    %c0_158 = arith.constant 0 : index
    %237 = vector.load %arg5[%c4_155, %c0_156, %c0_157, %c0_158] : memref<6x4x32x8xf32, #tpu.memory_space<vmem>>, vector<1x1x32x8xf32>
    %238 = vector.shape_cast %237 : vector<1x1x32x8xf32> to vector<32x8xf32>
    %cst_159 = arith.constant dense<0.000000e+00> : vector<48x8xf32>
    %239 = tpu.matmul %233, %238, %cst_159 {dimension_numbers = #tpu.dot_dimension_numbers<[1], [0], [0], [1], [0, 0, 1, 1], [], []>} : vector<48x32xf32>, vector<32x8xf32>, vector<48x8xf32> -> vector<48x8xf32>
    %c5_160 = arith.constant 5 : index
    %c0_161 = arith.constant 0 : index
    %c0_162 = arith.constant 0 : index
    %c0_163 = arith.constant 0 : index
    %240 = vector.load %arg5[%c5_160, %c0_161, %c0_162, %c0_163] : memref<6x4x32x8xf32, #tpu.memory_space<vmem>>, vector<1x1x32x8xf32>
    %241 = vector.shape_cast %240 : vector<1x1x32x8xf32> to vector<32x8xf32>
    %cst_164 = arith.constant dense<0.000000e+00> : vector<48x8xf32>
    %242 = tpu.matmul %233, %241, %cst_164 {dimension_numbers = #tpu.dot_dimension_numbers<[1], [0], [0], [1], [0, 0, 1, 1], [], []>} : vector<48x32xf32>, vector<32x8xf32>, vector<48x8xf32> -> vector<48x8xf32>
    %243 = tpu.transpose %239, [1, 0] : vector<48x8xf32> -> vector<8x48xf32>
    %cst_165 = arith.constant dense<0.000000e+00> : vector<48x48xf32>
    %244 = tpu.matmul %236, %243, %cst_165 {dimension_numbers = #tpu.dot_dimension_numbers<[1], [0], [0], [1], [0, 0, 1, 1], [], []>} : vector<48x8xf32>, vector<8x48xf32>, vector<48x48xf32> -> vector<48x48xf32>
    %245 = arith.addf %244, %6 : vector<48x48xf32>
    %cst_166 = arith.constant dense<0xFF800000> : vector<48xf32>
    %246 = vector.multi_reduction <maximumf>, %245, %cst_166 [1] : vector<48x48xf32> to vector<48xf32>
    %247 = vector.shape_cast %246 : vector<48xf32> to vector<48x1xf32>
    %248 = vector.broadcast %247 : vector<48x1xf32> to vector<48x48xf32>
    %249 = arith.subf %245, %248 : vector<48x48xf32>
    %250 = math.exp %249 : vector<48x48xf32>
    %cst_167 = arith.constant dense<0.000000e+00> : vector<48xf32>
    %251 = vector.multi_reduction <add>, %250, %cst_167 [1] : vector<48x48xf32> to vector<48xf32>
    %252 = vector.shape_cast %251 : vector<48xf32> to vector<48x1xf32>
    %253 = tpu.reciprocal %252 {approx = true} : vector<48x1xf32> -> vector<48x1xf32>
    %254 = vector.broadcast %253 : vector<48x1xf32> to vector<48x48xf32>
    %255 = arith.mulf %250, %254 : vector<48x48xf32>
    %cst_168 = arith.constant dense<0.000000e+00> : vector<48x8xf32>
    %256 = tpu.matmul %255, %242, %cst_168 {dimension_numbers = #tpu.dot_dimension_numbers<[1], [0], [0], [1], [0, 0, 1, 1], [], []>} : vector<48x48xf32>, vector<48x8xf32>, vector<48x8xf32> -> vector<48x8xf32>
    %c1_169 = arith.constant 1 : index
    %c0_170 = arith.constant 0 : index
    %c0_171 = arith.constant 0 : index
    %c0_172 = arith.constant 0 : index
    %257 = vector.load %arg6[%c1_169, %c0_170, %c0_171, %c0_172] : memref<2x4x8x32xf32, #tpu.memory_space<vmem>>, vector<1x1x8x32xf32>
    %258 = vector.shape_cast %257 : vector<1x1x8x32xf32> to vector<8x32xf32>
    %cst_173 = arith.constant dense<0.000000e+00> : vector<48x32xf32>
    %259 = tpu.matmul %256, %258, %cst_173 {dimension_numbers = #tpu.dot_dimension_numbers<[1], [0], [0], [1], [0, 0, 1, 1], [], []>} : vector<48x8xf32>, vector<8x32xf32>, vector<48x32xf32> -> vector<48x32xf32>
    %c3_174 = arith.constant 3 : index
    %c1_175 = arith.constant 1 : index
    %c0_176 = arith.constant 0 : index
    %c0_177 = arith.constant 0 : index
    %260 = vector.load %arg5[%c3_174, %c1_175, %c0_176, %c0_177] : memref<6x4x32x8xf32, #tpu.memory_space<vmem>>, vector<1x1x32x8xf32>
    %261 = vector.shape_cast %260 : vector<1x1x32x8xf32> to vector<32x8xf32>
    %cst_178 = arith.constant dense<0.000000e+00> : vector<48x8xf32>
    %262 = tpu.matmul %233, %261, %cst_178 {dimension_numbers = #tpu.dot_dimension_numbers<[1], [0], [0], [1], [0, 0, 1, 1], [], []>} : vector<48x32xf32>, vector<32x8xf32>, vector<48x8xf32> -> vector<48x8xf32>
    %c4_179 = arith.constant 4 : index
    %c1_180 = arith.constant 1 : index
    %c0_181 = arith.constant 0 : index
    %c0_182 = arith.constant 0 : index
    %263 = vector.load %arg5[%c4_179, %c1_180, %c0_181, %c0_182] : memref<6x4x32x8xf32, #tpu.memory_space<vmem>>, vector<1x1x32x8xf32>
    %264 = vector.shape_cast %263 : vector<1x1x32x8xf32> to vector<32x8xf32>
    %cst_183 = arith.constant dense<0.000000e+00> : vector<48x8xf32>
    %265 = tpu.matmul %233, %264, %cst_183 {dimension_numbers = #tpu.dot_dimension_numbers<[1], [0], [0], [1], [0, 0, 1, 1], [], []>} : vector<48x32xf32>, vector<32x8xf32>, vector<48x8xf32> -> vector<48x8xf32>
    %c5_184 = arith.constant 5 : index
    %c1_185 = arith.constant 1 : index
    %c0_186 = arith.constant 0 : index
    %c0_187 = arith.constant 0 : index
    %266 = vector.load %arg5[%c5_184, %c1_185, %c0_186, %c0_187] : memref<6x4x32x8xf32, #tpu.memory_space<vmem>>, vector<1x1x32x8xf32>
    %267 = vector.shape_cast %266 : vector<1x1x32x8xf32> to vector<32x8xf32>
    %cst_188 = arith.constant dense<0.000000e+00> : vector<48x8xf32>
    %268 = tpu.matmul %233, %267, %cst_188 {dimension_numbers = #tpu.dot_dimension_numbers<[1], [0], [0], [1], [0, 0, 1, 1], [], []>} : vector<48x32xf32>, vector<32x8xf32>, vector<48x8xf32> -> vector<48x8xf32>
    %269 = tpu.transpose %265, [1, 0] : vector<48x8xf32> -> vector<8x48xf32>
    %cst_189 = arith.constant dense<0.000000e+00> : vector<48x48xf32>
    %270 = tpu.matmul %262, %269, %cst_189 {dimension_numbers = #tpu.dot_dimension_numbers<[1], [0], [0], [1], [0, 0, 1, 1], [], []>} : vector<48x8xf32>, vector<8x48xf32>, vector<48x48xf32> -> vector<48x48xf32>
    %271 = arith.addf %270, %6 : vector<48x48xf32>
    %cst_190 = arith.constant dense<0xFF800000> : vector<48xf32>
    %272 = vector.multi_reduction <maximumf>, %271, %cst_190 [1] : vector<48x48xf32> to vector<48xf32>
    %273 = vector.shape_cast %272 : vector<48xf32> to vector<48x1xf32>
    %274 = vector.broadcast %273 : vector<48x1xf32> to vector<48x48xf32>
    %275 = arith.subf %271, %274 : vector<48x48xf32>
    %276 = math.exp %275 : vector<48x48xf32>
    %cst_191 = arith.constant dense<0.000000e+00> : vector<48xf32>
    %277 = vector.multi_reduction <add>, %276, %cst_191 [1] : vector<48x48xf32> to vector<48xf32>
    %278 = vector.shape_cast %277 : vector<48xf32> to vector<48x1xf32>
    %279 = tpu.reciprocal %278 {approx = true} : vector<48x1xf32> -> vector<48x1xf32>
    %280 = vector.broadcast %279 : vector<48x1xf32> to vector<48x48xf32>
    %281 = arith.mulf %276, %280 : vector<48x48xf32>
    %cst_192 = arith.constant dense<0.000000e+00> : vector<48x8xf32>
    %282 = tpu.matmul %281, %268, %cst_192 {dimension_numbers = #tpu.dot_dimension_numbers<[1], [0], [0], [1], [0, 0, 1, 1], [], []>} : vector<48x48xf32>, vector<48x8xf32>, vector<48x8xf32> -> vector<48x8xf32>
    %c1_193 = arith.constant 1 : index
    %c1_194 = arith.constant 1 : index
    %c0_195 = arith.constant 0 : index
    %c0_196 = arith.constant 0 : index
    %283 = vector.load %arg6[%c1_193, %c1_194, %c0_195, %c0_196] : memref<2x4x8x32xf32, #tpu.memory_space<vmem>>, vector<1x1x8x32xf32>
    %284 = vector.shape_cast %283 : vector<1x1x8x32xf32> to vector<8x32xf32>
    %cst_197 = arith.constant dense<0.000000e+00> : vector<48x32xf32>
    %285 = tpu.matmul %282, %284, %cst_197 {dimension_numbers = #tpu.dot_dimension_numbers<[1], [0], [0], [1], [0, 0, 1, 1], [], []>} : vector<48x8xf32>, vector<8x32xf32>, vector<48x32xf32> -> vector<48x32xf32>
    %286 = arith.addf %259, %285 : vector<48x32xf32>
    %c3_198 = arith.constant 3 : index
    %c2_199 = arith.constant 2 : index
    %c0_200 = arith.constant 0 : index
    %c0_201 = arith.constant 0 : index
    %287 = vector.load %arg5[%c3_198, %c2_199, %c0_200, %c0_201] : memref<6x4x32x8xf32, #tpu.memory_space<vmem>>, vector<1x1x32x8xf32>
    %288 = vector.shape_cast %287 : vector<1x1x32x8xf32> to vector<32x8xf32>
    %cst_202 = arith.constant dense<0.000000e+00> : vector<48x8xf32>
    %289 = tpu.matmul %233, %288, %cst_202 {dimension_numbers = #tpu.dot_dimension_numbers<[1], [0], [0], [1], [0, 0, 1, 1], [], []>} : vector<48x32xf32>, vector<32x8xf32>, vector<48x8xf32> -> vector<48x8xf32>
    %c4_203 = arith.constant 4 : index
    %c2_204 = arith.constant 2 : index
    %c0_205 = arith.constant 0 : index
    %c0_206 = arith.constant 0 : index
    %290 = vector.load %arg5[%c4_203, %c2_204, %c0_205, %c0_206] : memref<6x4x32x8xf32, #tpu.memory_space<vmem>>, vector<1x1x32x8xf32>
    %291 = vector.shape_cast %290 : vector<1x1x32x8xf32> to vector<32x8xf32>
    %cst_207 = arith.constant dense<0.000000e+00> : vector<48x8xf32>
    %292 = tpu.matmul %233, %291, %cst_207 {dimension_numbers = #tpu.dot_dimension_numbers<[1], [0], [0], [1], [0, 0, 1, 1], [], []>} : vector<48x32xf32>, vector<32x8xf32>, vector<48x8xf32> -> vector<48x8xf32>
    %c5_208 = arith.constant 5 : index
    %c2_209 = arith.constant 2 : index
    %c0_210 = arith.constant 0 : index
    %c0_211 = arith.constant 0 : index
    %293 = vector.load %arg5[%c5_208, %c2_209, %c0_210, %c0_211] : memref<6x4x32x8xf32, #tpu.memory_space<vmem>>, vector<1x1x32x8xf32>
    %294 = vector.shape_cast %293 : vector<1x1x32x8xf32> to vector<32x8xf32>
    %cst_212 = arith.constant dense<0.000000e+00> : vector<48x8xf32>
    %295 = tpu.matmul %233, %294, %cst_212 {dimension_numbers = #tpu.dot_dimension_numbers<[1], [0], [0], [1], [0, 0, 1, 1], [], []>} : vector<48x32xf32>, vector<32x8xf32>, vector<48x8xf32> -> vector<48x8xf32>
    %296 = tpu.transpose %292, [1, 0] : vector<48x8xf32> -> vector<8x48xf32>
    %cst_213 = arith.constant dense<0.000000e+00> : vector<48x48xf32>
    %297 = tpu.matmul %289, %296, %cst_213 {dimension_numbers = #tpu.dot_dimension_numbers<[1], [0], [0], [1], [0, 0, 1, 1], [], []>} : vector<48x8xf32>, vector<8x48xf32>, vector<48x48xf32> -> vector<48x48xf32>
    %298 = arith.addf %297, %6 : vector<48x48xf32>
    %cst_214 = arith.constant dense<0xFF800000> : vector<48xf32>
    %299 = vector.multi_reduction <maximumf>, %298, %cst_214 [1] : vector<48x48xf32> to vector<48xf32>
    %300 = vector.shape_cast %299 : vector<48xf32> to vector<48x1xf32>
    %301 = vector.broadcast %300 : vector<48x1xf32> to vector<48x48xf32>
    %302 = arith.subf %298, %301 : vector<48x48xf32>
    %303 = math.exp %302 : vector<48x48xf32>
    %cst_215 = arith.constant dense<0.000000e+00> : vector<48xf32>
    %304 = vector.multi_reduction <add>, %303, %cst_215 [1] : vector<48x48xf32> to vector<48xf32>
    %305 = vector.shape_cast %304 : vector<48xf32> to vector<48x1xf32>
    %306 = tpu.reciprocal %305 {approx = true} : vector<48x1xf32> -> vector<48x1xf32>
    %307 = vector.broadcast %306 : vector<48x1xf32> to vector<48x48xf32>
    %308 = arith.mulf %303, %307 : vector<48x48xf32>
    %cst_216 = arith.constant dense<0.000000e+00> : vector<48x8xf32>
    %309 = tpu.matmul %308, %295, %cst_216 {dimension_numbers = #tpu.dot_dimension_numbers<[1], [0], [0], [1], [0, 0, 1, 1], [], []>} : vector<48x48xf32>, vector<48x8xf32>, vector<48x8xf32> -> vector<48x8xf32>
    %c1_217 = arith.constant 1 : index
    %c2_218 = arith.constant 2 : index
    %c0_219 = arith.constant 0 : index
    %c0_220 = arith.constant 0 : index
    %310 = vector.load %arg6[%c1_217, %c2_218, %c0_219, %c0_220] : memref<2x4x8x32xf32, #tpu.memory_space<vmem>>, vector<1x1x8x32xf32>
    %311 = vector.shape_cast %310 : vector<1x1x8x32xf32> to vector<8x32xf32>
    %cst_221 = arith.constant dense<0.000000e+00> : vector<48x32xf32>
    %312 = tpu.matmul %309, %311, %cst_221 {dimension_numbers = #tpu.dot_dimension_numbers<[1], [0], [0], [1], [0, 0, 1, 1], [], []>} : vector<48x8xf32>, vector<8x32xf32>, vector<48x32xf32> -> vector<48x32xf32>
    %313 = arith.addf %286, %312 : vector<48x32xf32>
    %c3_222 = arith.constant 3 : index
    %c3_223 = arith.constant 3 : index
    %c0_224 = arith.constant 0 : index
    %c0_225 = arith.constant 0 : index
    %314 = vector.load %arg5[%c3_222, %c3_223, %c0_224, %c0_225] : memref<6x4x32x8xf32, #tpu.memory_space<vmem>>, vector<1x1x32x8xf32>
    %315 = vector.shape_cast %314 : vector<1x1x32x8xf32> to vector<32x8xf32>
    %cst_226 = arith.constant dense<0.000000e+00> : vector<48x8xf32>
    %316 = tpu.matmul %233, %315, %cst_226 {dimension_numbers = #tpu.dot_dimension_numbers<[1], [0], [0], [1], [0, 0, 1, 1], [], []>} : vector<48x32xf32>, vector<32x8xf32>, vector<48x8xf32> -> vector<48x8xf32>
    %c4_227 = arith.constant 4 : index
    %c3_228 = arith.constant 3 : index
    %c0_229 = arith.constant 0 : index
    %c0_230 = arith.constant 0 : index
    %317 = vector.load %arg5[%c4_227, %c3_228, %c0_229, %c0_230] : memref<6x4x32x8xf32, #tpu.memory_space<vmem>>, vector<1x1x32x8xf32>
    %318 = vector.shape_cast %317 : vector<1x1x32x8xf32> to vector<32x8xf32>
    %cst_231 = arith.constant dense<0.000000e+00> : vector<48x8xf32>
    %319 = tpu.matmul %233, %318, %cst_231 {dimension_numbers = #tpu.dot_dimension_numbers<[1], [0], [0], [1], [0, 0, 1, 1], [], []>} : vector<48x32xf32>, vector<32x8xf32>, vector<48x8xf32> -> vector<48x8xf32>
    %c5_232 = arith.constant 5 : index
    %c3_233 = arith.constant 3 : index
    %c0_234 = arith.constant 0 : index
    %c0_235 = arith.constant 0 : index
    %320 = vector.load %arg5[%c5_232, %c3_233, %c0_234, %c0_235] : memref<6x4x32x8xf32, #tpu.memory_space<vmem>>, vector<1x1x32x8xf32>
    %321 = vector.shape_cast %320 : vector<1x1x32x8xf32> to vector<32x8xf32>
    %cst_236 = arith.constant dense<0.000000e+00> : vector<48x8xf32>
    %322 = tpu.matmul %233, %321, %cst_236 {dimension_numbers = #tpu.dot_dimension_numbers<[1], [0], [0], [1], [0, 0, 1, 1], [], []>} : vector<48x32xf32>, vector<32x8xf32>, vector<48x8xf32> -> vector<48x8xf32>
    %323 = tpu.transpose %319, [1, 0] : vector<48x8xf32> -> vector<8x48xf32>
    %cst_237 = arith.constant dense<0.000000e+00> : vector<48x48xf32>
    %324 = tpu.matmul %316, %323, %cst_237 {dimension_numbers = #tpu.dot_dimension_numbers<[1], [0], [0], [1], [0, 0, 1, 1], [], []>} : vector<48x8xf32>, vector<8x48xf32>, vector<48x48xf32> -> vector<48x48xf32>
    %325 = arith.addf %324, %6 : vector<48x48xf32>
    %cst_238 = arith.constant dense<0xFF800000> : vector<48xf32>
    %326 = vector.multi_reduction <maximumf>, %325, %cst_238 [1] : vector<48x48xf32> to vector<48xf32>
    %327 = vector.shape_cast %326 : vector<48xf32> to vector<48x1xf32>
    %328 = vector.broadcast %327 : vector<48x1xf32> to vector<48x48xf32>
    %329 = arith.subf %325, %328 : vector<48x48xf32>
    %330 = math.exp %329 : vector<48x48xf32>
    %cst_239 = arith.constant dense<0.000000e+00> : vector<48xf32>
    %331 = vector.multi_reduction <add>, %330, %cst_239 [1] : vector<48x48xf32> to vector<48xf32>
    %332 = vector.shape_cast %331 : vector<48xf32> to vector<48x1xf32>
    %333 = tpu.reciprocal %332 {approx = true} : vector<48x1xf32> -> vector<48x1xf32>
    %334 = vector.broadcast %333 : vector<48x1xf32> to vector<48x48xf32>
    %335 = arith.mulf %330, %334 : vector<48x48xf32>
    %cst_240 = arith.constant dense<0.000000e+00> : vector<48x8xf32>
    %336 = tpu.matmul %335, %322, %cst_240 {dimension_numbers = #tpu.dot_dimension_numbers<[1], [0], [0], [1], [0, 0, 1, 1], [], []>} : vector<48x48xf32>, vector<48x8xf32>, vector<48x8xf32> -> vector<48x8xf32>
    %c1_241 = arith.constant 1 : index
    %c3_242 = arith.constant 3 : index
    %c0_243 = arith.constant 0 : index
    %c0_244 = arith.constant 0 : index
    %337 = vector.load %arg6[%c1_241, %c3_242, %c0_243, %c0_244] : memref<2x4x8x32xf32, #tpu.memory_space<vmem>>, vector<1x1x8x32xf32>
    %338 = vector.shape_cast %337 : vector<1x1x8x32xf32> to vector<8x32xf32>
    %cst_245 = arith.constant dense<0.000000e+00> : vector<48x32xf32>
    %339 = tpu.matmul %336, %338, %cst_245 {dimension_numbers = #tpu.dot_dimension_numbers<[1], [0], [0], [1], [0, 0, 1, 1], [], []>} : vector<48x8xf32>, vector<8x32xf32>, vector<48x32xf32> -> vector<48x32xf32>
    %340 = arith.addf %313, %339 : vector<48x32xf32>
    %341 = arith.addf %211, %340 : vector<48x32xf32>
    %c8 = arith.constant 8 : index
    %c0_246 = arith.constant 0 : index
    %342 = vector.load %arg10[%c8, %c0_246] : memref<14x32xf32, #tpu.memory_space<vmem>>, vector<1x32xf32>
    %343 = vector.broadcast %342 : vector<1x32xf32> to vector<48x32xf32>
    %344 = arith.addf %341, %343 : vector<48x32xf32>
    %c9 = arith.constant 9 : index
    %c0_247 = arith.constant 0 : index
    %345 = vector.load %arg10[%c9, %c0_247] : memref<14x32xf32, #tpu.memory_space<vmem>>, vector<1x32xf32>
    %c10 = arith.constant 10 : index
    %c0_248 = arith.constant 0 : index
    %346 = vector.load %arg10[%c10, %c0_248] : memref<14x32xf32, #tpu.memory_space<vmem>>, vector<1x32xf32>
    %cst_249 = arith.constant dense<0.000000e+00> : vector<48xf32>
    %347 = vector.multi_reduction <add>, %344, %cst_249 [1] : vector<48x32xf32> to vector<48xf32>
    %348 = vector.shape_cast %347 : vector<48xf32> to vector<48x1xf32>
    %cst_250 = arith.constant 3.200000e+01 : f32
    %349 = vector.broadcast %cst_250 : f32 to vector<48x1xf32>
    %350 = arith.divf %348, %349 : vector<48x1xf32>
    %351 = vector.broadcast %350 : vector<48x1xf32> to vector<48x32xf32>
    %352 = arith.subf %344, %351 : vector<48x32xf32>
    %353 = arith.mulf %352, %352 : vector<48x32xf32>
    %cst_251 = arith.constant dense<0.000000e+00> : vector<48xf32>
    %354 = vector.multi_reduction <add>, %353, %cst_251 [1] : vector<48x32xf32> to vector<48xf32>
    %355 = vector.shape_cast %354 : vector<48xf32> to vector<48x1xf32>
    %cst_252 = arith.constant 3.200000e+01 : f32
    %356 = vector.broadcast %cst_252 : f32 to vector<48x1xf32>
    %357 = arith.divf %355, %356 : vector<48x1xf32>
    %cst_253 = arith.constant 9.99999997E-7 : f32
    %358 = vector.broadcast %cst_253 : f32 to vector<48x1xf32>
    %359 = arith.addf %357, %358 : vector<48x1xf32>
    %360 = math.rsqrt %359 : vector<48x1xf32>
    %361 = vector.broadcast %360 : vector<48x1xf32> to vector<48x32xf32>
    %362 = arith.mulf %352, %361 : vector<48x32xf32>
    %363 = vector.broadcast %345 : vector<1x32xf32> to vector<48x32xf32>
    %364 = arith.mulf %362, %363 : vector<48x32xf32>
    %365 = vector.broadcast %346 : vector<1x32xf32> to vector<48x32xf32>
    %366 = arith.addf %364, %365 : vector<48x32xf32>
    %c1_254 = arith.constant 1 : index
    %c0_255 = arith.constant 0 : index
    %c0_256 = arith.constant 0 : index
    %367 = vector.load %arg7[%c1_254, %c0_255, %c0_256] : memref<2x32x128xf32, #tpu.memory_space<vmem>>, vector<1x32x128xf32>
    %368 = vector.shape_cast %367 : vector<1x32x128xf32> to vector<32x128xf32>
    %cst_257 = arith.constant dense<0.000000e+00> : vector<48x128xf32>
    %369 = tpu.matmul %366, %368, %cst_257 {dimension_numbers = #tpu.dot_dimension_numbers<[1], [0], [0], [1], [0, 0, 1, 1], [], []>} : vector<48x32xf32>, vector<32x128xf32>, vector<48x128xf32> -> vector<48x128xf32>
    %c1_258 = arith.constant 1 : index
    %c0_259 = arith.constant 0 : index
    %370 = vector.load %arg11[%c1_258, %c0_259] : memref<3x128xf32, #tpu.memory_space<vmem>>, vector<1x128xf32>
    %371 = vector.broadcast %370 : vector<1x128xf32> to vector<48x128xf32>
    %372 = arith.addf %369, %371 : vector<48x128xf32>
    %cst_260 = arith.constant 0.707106769 : f32
    %373 = vector.broadcast %cst_260 : f32 to vector<48x128xf32>
    %374 = arith.mulf %372, %373 : vector<48x128xf32>
    %375 = math.absf %374 : vector<48x128xf32>
    %cst_261 = arith.constant 0.327591091 : f32
    %376 = vector.broadcast %cst_261 : f32 to vector<48x128xf32>
    %377 = arith.mulf %376, %375 : vector<48x128xf32>
    %cst_262 = arith.constant 1.000000e+00 : f32
    %378 = vector.broadcast %cst_262 : f32 to vector<48x128xf32>
    %379 = arith.addf %378, %377 : vector<48x128xf32>
    %380 = tpu.reciprocal %379 {approx = true} : vector<48x128xf32> -> vector<48x128xf32>
    %cst_263 = arith.constant 1.06140542 : f32
    %381 = vector.broadcast %cst_263 : f32 to vector<48x128xf32>
    %382 = arith.mulf %381, %380 : vector<48x128xf32>
    %cst_264 = arith.constant 1.45315206 : f32
    %383 = vector.broadcast %cst_264 : f32 to vector<48x128xf32>
    %384 = arith.subf %382, %383 : vector<48x128xf32>
    %385 = arith.mulf %384, %380 : vector<48x128xf32>
    %cst_265 = arith.constant 1.42141378 : f32
    %386 = vector.broadcast %cst_265 : f32 to vector<48x128xf32>
    %387 = arith.addf %385, %386 : vector<48x128xf32>
    %388 = arith.mulf %387, %380 : vector<48x128xf32>
    %cst_266 = arith.constant 0.284496725 : f32
    %389 = vector.broadcast %cst_266 : f32 to vector<48x128xf32>
    %390 = arith.subf %388, %389 : vector<48x128xf32>
    %391 = arith.mulf %390, %380 : vector<48x128xf32>
    %cst_267 = arith.constant 0.254829586 : f32
    %392 = vector.broadcast %cst_267 : f32 to vector<48x128xf32>
    %393 = arith.addf %391, %392 : vector<48x128xf32>
    %394 = arith.mulf %393, %380 : vector<48x128xf32>
    %cst_268 = arith.constant 0.000000e+00 : f32
    %395 = vector.broadcast %cst_268 : f32 to vector<48x128xf32>
    %396 = arith.subf %395, %375 : vector<48x128xf32>
    %397 = arith.mulf %396, %375 : vector<48x128xf32>
    %398 = math.exp %397 : vector<48x128xf32>
    %399 = arith.mulf %394, %398 : vector<48x128xf32>
    %cst_269 = arith.constant 0.000000e+00 : f32
    %400 = vector.broadcast %cst_269 : f32 to vector<48x128xf32>
    %401 = arith.cmpf oge, %374, %400 : vector<48x128xf32>
    %cst_270 = arith.constant 5.000000e-01 : f32
    %402 = vector.broadcast %cst_270 : f32 to vector<48x128xf32>
    %403 = arith.mulf %402, %399 : vector<48x128xf32>
    %cst_271 = arith.constant 1.000000e+00 : f32
    %404 = vector.broadcast %cst_271 : f32 to vector<48x128xf32>
    %405 = arith.subf %404, %403 : vector<48x128xf32>
    %cst_272 = arith.constant 5.000000e-01 : f32
    %406 = vector.broadcast %cst_272 : f32 to vector<48x128xf32>
    %407 = arith.mulf %406, %399 : vector<48x128xf32>
    %408 = arith.select %401, %405, %407 : vector<48x128xi1>, vector<48x128xf32>
    %409 = arith.mulf %372, %408 : vector<48x128xf32>
    %c1_273 = arith.constant 1 : index
    %c0_274 = arith.constant 0 : index
    %c0_275 = arith.constant 0 : index
    %410 = vector.load %arg8[%c1_273, %c0_274, %c0_275] : memref<2x128x32xf32, #tpu.memory_space<vmem>>, vector<1x128x32xf32>
    %411 = vector.shape_cast %410 : vector<1x128x32xf32> to vector<128x32xf32>
    %cst_276 = arith.constant dense<0.000000e+00> : vector<48x32xf32>
    %412 = tpu.matmul %409, %411, %cst_276 {dimension_numbers = #tpu.dot_dimension_numbers<[1], [0], [0], [1], [0, 0, 1, 1], [], []>} : vector<48x128xf32>, vector<128x32xf32>, vector<48x32xf32> -> vector<48x32xf32>
    %c11 = arith.constant 11 : index
    %c0_277 = arith.constant 0 : index
    %413 = vector.load %arg10[%c11, %c0_277] : memref<14x32xf32, #tpu.memory_space<vmem>>, vector<1x32xf32>
    %414 = vector.broadcast %413 : vector<1x32xf32> to vector<48x32xf32>
    %415 = arith.addf %412, %414 : vector<48x32xf32>
    %416 = arith.addf %344, %415 : vector<48x32xf32>
    %417 = vector.shape_cast %416 : vector<48x32xf32> to vector<2x24x32xf32>
    %418 = vector.extract_strided_slice %417 {offsets = [0, 16, 0], sizes = [2, 1, 32], strides = [1, 1, 1]} : vector<2x24x32xf32> to vector<2x1x32xf32>
    %419 = vector.shape_cast %418 : vector<2x1x32xf32> to vector<2x32xf32>
    %c12 = arith.constant 12 : index
    %c0_278 = arith.constant 0 : index
    %420 = vector.load %arg10[%c12, %c0_278] : memref<14x32xf32, #tpu.memory_space<vmem>>, vector<1x32xf32>
    %c13 = arith.constant 13 : index
    %c0_279 = arith.constant 0 : index
    %421 = vector.load %arg10[%c13, %c0_279] : memref<14x32xf32, #tpu.memory_space<vmem>>, vector<1x32xf32>
    %cst_280 = arith.constant dense<0.000000e+00> : vector<2xf32>
    %422 = vector.multi_reduction <add>, %419, %cst_280 [1] : vector<2x32xf32> to vector<2xf32>
    %423 = vector.shape_cast %422 : vector<2xf32> to vector<2x1xf32>
    %cst_281 = arith.constant 3.200000e+01 : f32
    %424 = vector.broadcast %cst_281 : f32 to vector<2x1xf32>
    %425 = arith.divf %423, %424 : vector<2x1xf32>
    %426 = vector.broadcast %425 : vector<2x1xf32> to vector<2x32xf32>
    %427 = arith.subf %419, %426 : vector<2x32xf32>
    %428 = arith.mulf %427, %427 : vector<2x32xf32>
    %cst_282 = arith.constant dense<0.000000e+00> : vector<2xf32>
    %429 = vector.multi_reduction <add>, %428, %cst_282 [1] : vector<2x32xf32> to vector<2xf32>
    %430 = vector.shape_cast %429 : vector<2xf32> to vector<2x1xf32>
    %cst_283 = arith.constant 3.200000e+01 : f32
    %431 = vector.broadcast %cst_283 : f32 to vector<2x1xf32>
    %432 = arith.divf %430, %431 : vector<2x1xf32>
    %cst_284 = arith.constant 9.99999997E-7 : f32
    %433 = vector.broadcast %cst_284 : f32 to vector<2x1xf32>
    %434 = arith.addf %432, %433 : vector<2x1xf32>
    %435 = math.rsqrt %434 : vector<2x1xf32>
    %436 = vector.broadcast %435 : vector<2x1xf32> to vector<2x32xf32>
    %437 = arith.mulf %427, %436 : vector<2x32xf32>
    %438 = vector.broadcast %420 : vector<1x32xf32> to vector<2x32xf32>
    %439 = arith.mulf %437, %438 : vector<2x32xf32>
    %440 = vector.broadcast %421 : vector<1x32xf32> to vector<2x32xf32>
    %441 = arith.addf %439, %440 : vector<2x32xf32>
    %c0_285 = arith.constant 0 : index
    %c0_286 = arith.constant 0 : index
    %442 = vector.load %arg9[%c0_285, %c0_286] : memref<32x128xf32, #tpu.memory_space<vmem>>, vector<32x128xf32>
    %cst_287 = arith.constant dense<0.000000e+00> : vector<2x128xf32>
    %443 = tpu.matmul %441, %442, %cst_287 {dimension_numbers = #tpu.dot_dimension_numbers<[1], [0], [0], [1], [0, 0, 1, 1], [], []>} : vector<2x32xf32>, vector<32x128xf32>, vector<2x128xf32> -> vector<2x128xf32>
    %c2_288 = arith.constant 2 : index
    %c0_289 = arith.constant 0 : index
    %444 = vector.load %arg11[%c2_288, %c0_289] : memref<3x128xf32, #tpu.memory_space<vmem>>, vector<1x128xf32>
    %445 = vector.broadcast %444 : vector<1x128xf32> to vector<2x128xf32>
    %446 = arith.addf %443, %445 : vector<2x128xf32>
    %c0_290 = arith.constant 0 : index
    %c0_291 = arith.constant 0 : index
    %447 = vector.load %arg12[%c0_290, %c0_291] : memref<2x128xf32, #tpu.memory_space<vmem>>, vector<2x128xf32>
    tpu.vector_store %arg12[%c0_290, %c0_291], %446 {strides = array<i32>} : memref<2x128xf32, #tpu.memory_space<vmem>>, vector<2x128xf32>,
    return
  }
  func.func @transform_0(%arg0: i32) -> (i32, i32) {
    %c0_i32 = arith.constant 0 : i32
    %c0_i32_0 = arith.constant 0 : i32
    return %arg0, %c0_i32 : i32, i32
  }
  func.func @transform_1(%arg0: i32) -> (i32, i32) {
    %c0_i32 = arith.constant 0 : i32
    %c0_i32_0 = arith.constant 0 : i32
    %c0_i32_1 = arith.constant 0 : i32
    return %c0_i32, %c0_i32_0 : i32, i32
  }
  func.func @transform_2(%arg0: i32) -> (i32, i32) {
    %c0_i32 = arith.constant 0 : i32
    %c0_i32_0 = arith.constant 0 : i32
    %c0_i32_1 = arith.constant 0 : i32
    return %c0_i32, %c0_i32_0 : i32, i32
  }
  func.func @transform_3(%arg0: i32) -> (i32, i32) {
    %c0_i32 = arith.constant 0 : i32
    %c0_i32_0 = arith.constant 0 : i32
    %c0_i32_1 = arith.constant 0 : i32
    return %c0_i32, %c0_i32_0 : i32, i32
  }
  func.func @transform_4(%arg0: i32) -> (i32, i32, i32, i32) {
    %c0_i32 = arith.constant 0 : i32
    %c0_i32_0 = arith.constant 0 : i32
    %c0_i32_1 = arith.constant 0 : i32
    %c0_i32_2 = arith.constant 0 : i32
    %c0_i32_3 = arith.constant 0 : i32
    return %c0_i32, %c0_i32_0, %c0_i32_1, %c0_i32_2 : i32, i32, i32, i32
  }
  func.func @transform_5(%arg0: i32) -> (i32, i32, i32, i32) {
    %c0_i32 = arith.constant 0 : i32
    %c0_i32_0 = arith.constant 0 : i32
    %c0_i32_1 = arith.constant 0 : i32
    %c0_i32_2 = arith.constant 0 : i32
    %c0_i32_3 = arith.constant 0 : i32
    return %c0_i32, %c0_i32_0, %c0_i32_1, %c0_i32_2 : i32, i32, i32, i32
  }
  func.func @transform_6(%arg0: i32) -> (i32, i32, i32) {
    %c0_i32 = arith.constant 0 : i32
    %c0_i32_0 = arith.constant 0 : i32
    %c0_i32_1 = arith.constant 0 : i32
    %c0_i32_2 = arith.constant 0 : i32
    return %c0_i32, %c0_i32_0, %c0_i32_1 : i32, i32, i32
  }
  func.func @transform_7(%arg0: i32) -> (i32, i32, i32) {
    %c0_i32 = arith.constant 0 : i32
    %c0_i32_0 = arith.constant 0 : i32
    %c0_i32_1 = arith.constant 0 : i32
    %c0_i32_2 = arith.constant 0 : i32
    return %c0_i32, %c0_i32_0, %c0_i32_1 : i32, i32, i32
  }
  func.func @transform_8(%arg0: i32) -> (i32, i32) {
    %c0_i32 = arith.constant 0 : i32
    %c0_i32_0 = arith.constant 0 : i32
    %c0_i32_1 = arith.constant 0 : i32
    return %c0_i32, %c0_i32_0 : i32, i32
  }
  func.func @transform_9(%arg0: i32) -> (i32, i32) {
    %c0_i32 = arith.constant 0 : i32
    %c0_i32_0 = arith.constant 0 : i32
    %c0_i32_1 = arith.constant 0 : i32
    return %c0_i32, %c0_i32_0 : i32, i32
  }
  func.func @transform_10(%arg0: i32) -> (i32, i32) {
    %c0_i32 = arith.constant 0 : i32
    %c0_i32_0 = arith.constant 0 : i32
    %c0_i32_1 = arith.constant 0 : i32
    return %c0_i32, %c0_i32_0 : i32, i32
  }
  func.func @transform_11(%arg0: i32) -> (i32, i32) {
    %c0_i32 = arith.constant 0 : i32
    %c0_i32_0 = arith.constant 0 : i32
    return %arg0, %c0_i32 : i32, i32
  }
}

</mosaic_0001>

<llo_original>
// kernel: vit_forward.1
$region0: #{vit_forward.1}
  #allocation0 [shape = 'u32[]', space=smem, size = 0x4, offset = 0x4, fixed_abs, tag = 'smem constant byte address 0x4 - core index']
  #allocation1 [shape = 'u32[144,128]{1,0:T(1,128)}', space=vmem, size = 0x12000, scoped, tag = 'internal scratch']
  %s0 = inlined_call_operand.vmem [shape: f32[48,48], index: 0, kind: input, shape index: {}]
  %s1 = inlined_call_operand.vmem [shape: f32[48,48], index: 1, kind: input, shape index: {}]
  %s2 = inlined_call_operand.vmem [shape: f32[48,32], index: 2, kind: input, shape index: {}]
  %s3 = inlined_call_operand.vmem [shape: f32[24,32], index: 3, kind: input, shape index: {}]
  %s4 = inlined_call_operand.vmem [shape: f32[6,4,32,8], index: 4, kind: input, shape index: {}]
  %s5 = inlined_call_operand.vmem [shape: f32[2,4,8,32], index: 5, kind: input, shape index: {}]
  %s6 = inlined_call_operand.vmem [shape: f32[2,32,128], index: 6, kind: input, shape index: {}]
  %s7 = inlined_call_operand.vmem [shape: f32[2,128,32], index: 7, kind: input, shape index: {}]
  %s8 = inlined_call_operand.vmem [shape: f32[32,128], index: 8, kind: input, shape index: {}]
  %s9 = inlined_call_operand.vmem [shape: f32[14,32], index: 9, kind: input, shape index: {}]
  %s10 = inlined_call_operand.vmem [shape: f32[3,128], index: 10, kind: input, shape index: {}]
  %s11 = inlined_call_operand.hbm [shape: f32[2,128], index: 11, kind: output, shape index: {}]
  %s12 = sld [smem:[#allocation0]]
  $region54: #{vit_forward.1} parent=0
    _
  %s14 = ssub.s32 1, %s12
  %s15 = scalar_select 0, %s14, %s12
  $region1: #{vit_forward.1} parent=0
    #allocation2 [shape = 'u8[1024]{0}', space=vmem, size = 0x400, scoped, tag = 'output window, operand 0, single buffered']
    #allocation3 [shape = 's32[1]{0}', space=sflag, size = 0x4, scoped, tag = 'scoped memory for vit_forward.1']
    %16 = vsyncpa [#allocation3], 0
    // Predicated region
    $region2: #{vit_forward.1} parent=1 // pred_check
      _
    $region3: #{vit_forward.1} parent=1 // pred_check_branch
      %18 = sbr.rel (0) target = $region5
    $region4: #{vit_forward.1} parent=1 // pred_region
      _
    $region5: #{vit_forward.1} parent=1 // pred_fallthru
      _
    // Predicated region
    $region6: #{vit_forward.1} parent=1 // pred_check
      _
    $region7: #{vit_forward.1} parent=1 // pred_check_branch
      %20 = sbr.rel (0) target = $region9
    $region8: #{vit_forward.1} parent=1 // pred_region
      _
    $region9: #{vit_forward.1} parent=1 // pred_fallthru
      _
    // Predicated region
    $region10: #{vit_forward.1} parent=1 // pred_check
      _
    $region11: #{vit_forward.1} parent=1 // pred_check_branch
      %22 = sbr.rel (0) target = $region13
    $region12: #{vit_forward.1} parent=1 // pred_region
      _
    $region13: #{vit_forward.1} parent=1 // pred_fallthru
      _
    // Predicated region
    $region14: #{vit_forward.1} parent=1 // pred_check
      _
    $region15: #{vit_forward.1} parent=1 // pred_check_branch
      %24 = sbr.rel (0) target = $region17
    $region16: #{vit_forward.1} parent=1 // pred_region
      _
    $region17: #{vit_forward.1} parent=1 // pred_fallthru
      _
    // Predicated region
    $region18: #{vit_forward.1} parent=1 // pred_check
      _
    $region19: #{vit_forward.1} parent=1 // pred_check_branch
      %26 = sbr.rel (0) target = $region21
    $region20: #{vit_forward.1} parent=1 // pred_region
      _
    $region21: #{vit_forward.1} parent=1 // pred_fallthru
      _
    // Predicated region
    $region22: #{vit_forward.1} parent=1 // pred_check
      _
    $region23: #{vit_forward.1} parent=1 // pred_check_branch
      %28 = sbr.rel (0) target = $region25
    $region24: #{vit_forward.1} parent=1 // pred_region
      _
    $region25: #{vit_forward.1} parent=1 // pred_fallthru
      _
    // Predicated region
    $region26: #{vit_forward.1} parent=1 // pred_check
      _
    $region27: #{vit_forward.1} parent=1 // pred_check_branch
      %30 = sbr.rel (0) target = $region29
    $region28: #{vit_forward.1} parent=1 // pred_region
      _
    $region29: #{vit_forward.1} parent=1 // pred_fallthru
      _
    // Predicated region
    $region30: #{vit_forward.1} parent=1 // pred_check
      _
    $region31: #{vit_forward.1} parent=1 // pred_check_branch
      %32 = sbr.rel (0) target = $region33
    $region32: #{vit_forward.1} parent=1 // pred_region
      _
    $region33: #{vit_forward.1} parent=1 // pred_fallthru
      _
    // Predicated region
    $region34: #{vit_forward.1} parent=1 // pred_check
      _
    $region35: #{vit_forward.1} parent=1 // pred_check_branch
      %34 = sbr.rel (0) target = $region37
    $region36: #{vit_forward.1} parent=1 // pred_region
      _
    $region37: #{vit_forward.1} parent=1 // pred_fallthru
      _
    // Predicated region
    $region38: #{vit_forward.1} parent=1 // pred_check
      _
    $region39: #{vit_forward.1} parent=1 // pred_check_branch
      %36 = sbr.rel (0) target = $region41
    $region40: #{vit_forward.1} parent=1 // pred_region
      _
    $region41: #{vit_forward.1} parent=1 // pred_fallthru
      _
    // Predicated region
    $region42: #{vit_forward.1} parent=1 // pred_check
      _
    $region43: #{vit_forward.1} parent=1 // pred_check_branch
      %38 = sbr.rel (0) target = $region45
    $region44: #{vit_forward.1} parent=1 // pred_region
      _
    $region45: #{vit_forward.1} parent=1 // pred_fallthru
      _
    %v39 = vld [vmem:[%s0] sm:$0xff]
    %v40 = vld [vmem:[%s0 + $0x8] sm:$0xff]
    %v41 = vld [vmem:[%s0 + $0x10] sm:$0xff]
    %v42 = vld [vmem:[%s0 + $0x18] sm:$0xff]
    %v43 = vld [vmem:[%s0 + $0x20] sm:$0xff]
    %v44 = vld [vmem:[%s0 + $0x28] sm:$0xff]
    %v45 = vld [vmem:[%s2] sm:$0xff]
    %v46 = vld [vmem:[%s2 + $0x8] sm:$0xff]
    %v47 = vld [vmem:[%s2 + $0x10] sm:$0xff]
    %v48 = vld [vmem:[%s2 + $0x18] sm:$0xff]
    %v49 = vld [vmem:[%s2 + $0x20] sm:$0xff]
    %v50 = vld [vmem:[%s2 + $0x28] sm:$0xff]
    %v51 = vld [vmem:[%s3] sm:$0xff]
    %v52 = vld [vmem:[%s3 + $0x8] sm:$0xff]
    %v53 = vld [vmem:[%s3 + $0x10] sm:$0xff]
    %vm54 = vcmask 392192
    %v56 = vsel %vm54, %v39, 0
    %v59 = vsel %vm54, %v40, 0
    %v62 = vsel %vm54, %v41, 0
    %v65 = vsel %vm54, %v42, 0
    %v68 = vsel %vm54, %v43, 0
    %v71 = vsel %vm54, %v44, 0
    %73 = vmatprep.subr.mxu0 0.0
    %74 = vmatpush1.msra.mxu0 %v45
    %75 = vmatprep.subr.mxu0 0.0
    %76 = vmatpush1.msra.mxu0 %v46
    %77 = vmatprep.subr.mxu0 0.0
    %78 = vmatpush1.msra.mxu0 %v47
    %79 = vmatprep.subr.mxu0 0.0
    %80 = vmatpush1.msra.mxu0 %v48
    %81 = vmatprep.subr.mxu0 0.0
    %82 = vmatpush1.msra.mxu0 %v49
    %83 = vmatprep.subr.mxu0 0.0
    %84 = vmatpush1.msra.mxu0 %v50
    %85 = vmatprep.subr.mxu0 0.0
    %86 = vmatpush1.msra.mxu0 0.0
    %87 = vmatprep.subr.mxu0 0.0
    %88 = vmatpush1.msra.mxu0 0.0
    %89 = vmatprep.subr.mxu0 0.0
    %90 = vmatpush1.msra.mxu0 0.0
    %91 = vmatprep.subr.mxu0 0.0
    %92 = vmatpush1.msra.mxu0 0.0
    %93 = vmatprep.subr.mxu0 0.0
    %94 = vmatpush1.msra.mxu0 0.0
    %95 = vmatprep.subr.mxu0 0.0
    %96 = vmatpush1.msra.mxu0 0.0
    %97 = vmatprep.subr.mxu0 0.0
    %98 = vmatpush1.msra.mxu0 0.0
    %99 = vmatprep.subr.mxu0 0.0
    %100 = vmatpush1.msra.mxu0 0.0
    %101 = vmatprep.subr.mxu0 0.0
    %102 = vmatpush1.msra.mxu0 0.0
    %103 = vmatprep.subr.mxu0 0.0
    %104 = vmatpush1.msra.mxu0 0.0
    %105 = vmatprep.subr.mxu0 0.0
    %106 = vmatpush1.msra.mxu0 0.0
    %107 = vmatprep.subr.mxu0 0.0
    %108 = vmatpush1.msra.mxu0 0.0
    %109 = vmatprep.subr.mxu0 0.0
    %110 = vmatpush1.msra.mxu0 0.0
    %111 = vmatprep.subr.mxu0 0.0
    %112 = vmatpush1.msra.mxu0 0.0
    %113 = vmatprep.subr.mxu0 0.0
    %114 = vmatpush1.msra.mxu0 0.0
    %115 = vmatprep.subr.mxu0 0.0
    %116 = vmatpush1.msra.mxu0 0.0
    %117 = vmatprep.subr.mxu0 0.0
    %118 = vmatpush1.msra.mxu0 0.0
    %119 = vmatprep.subr.mxu0 0.0
    %120 = vmatpush1.msra.mxu0 0.0
    %121 = vmatprep.subr.mxu0 0.0
    %122 = vmatpush1.msra.mxu0 0.0
    %123 = vmatprep.subr.mxu0 0.0
    %124 = vmatpush1.msra.mxu0 0.0
    %125 = vmatprep.subr.mxu0 0.0
    %126 = vmatpush1.msra.mxu0 0.0
    %127 = vmatprep.subr.mxu0 0.0
    %128 = vmatpush1.msra.mxu0 0.0
    %129 = vmatprep.subr.mxu0 0.0
    %130 = vmatpush1.msra.mxu0 0.0
    %131 = vmatprep.subr.mxu0 0.0
    %132 = vmatpush1.msra.mxu0 0.0
    %133 = vmatprep.subr.mxu0 0.0
    %134 = vmatpush1.msra.mxu0 0.0
    %135 = vmatprep.subr.mxu0 0.0
    %136 = vmatpush1.msra.mxu0 0.0
    %137 = vmatprep.mubr.f32.mxu0 0.0
    %138 = vmatmul.mubr.f32.gmra.mrb[0].mxu0 %v56
    %v139 = vpop.f32.mrb[0].mxu0
    %v140 = vadd.f32 %v51, %v139
    %v141 = vpop.f32.mrb[0].mxu0
    %142 = vmatprep.mubr.f32.mxu0 0.0
    %143 = vmatmul.mubr.f32.gmra.mrb[0].mxu0 %v59
    %v144 = vpop.f32.mrb[0].mxu0
    %v145 = vadd.f32 %v52, %v144
    %v146 = vpop.f32.mrb[0].mxu0
    %147 = vmatprep.mubr.f32.mxu0 0.0
    %148 = vmatmul.mubr.f32.gmra.mrb[0].mxu0 %v62
    %v149 = vpop.f32.mrb[0].mxu0
    %v150 = vadd.f32 %v53, %v149
    %v151 = vpop.f32.mrb[0].mxu0
    %152 = vmatprep.mubr.f32.mxu0 0.0
    %153 = vmatmul.mubr.f32.gmra.mrb[0].mxu0 %v65
    %v154 = vpop.f32.mrb[0].mxu0
    %v155 = vadd.f32 %v51, %v154
    %v156 = vpop.f32.mrb[0].mxu0
    %157 = vmatprep.mubr.f32.mxu0 0.0
    %158 = vmatmul.mubr.f32.gmra.mrb[0].mxu0 %v68
    %v159 = vpop.f32.mrb[0].mxu0
    %v160 = vadd.f32 %v52, %v159
    %v161 = vpop.f32.mrb[0].mxu0
    %162 = vmatprep.mubr.f32.mxu0 0.0
    %163 = vmatmul.mubr.f32.gmra.mrb[0].mxu0 %v71
    %v164 = vpop.f32.mrb[0].mxu0
    %v165 = vadd.f32 %v53, %v164
    %v166 = vpop.f32.mrb[0].mxu0
    %167 = vdwg.mxu0
    %v168 = vld [vmem:[%s1] sm:$0xff]
    %v169 = vld [vmem:[%s1 + $0x8] sm:$0xff]
    %v170 = vld [vmem:[%s1 + $0x10] sm:$0xff]
    %v171 = vld [vmem:[%s1 + $0x18] sm:$0xff]
    %v172 = vld [vmem:[%s1 + $0x20] sm:$0xff]
    %v173 = vld [vmem:[%s1 + $0x28] sm:$0xff]
    %v174 = vld [vmem:[%s9] sm:$0x1]
    %v175 = vld [vmem:[%s9 + $0x1] sm:$0x1]
    %vm176 = vcmask 261120
    %v177 = vsel %vm176, %v140, 0.0
    %178 = vadd.xlane.f32.xlu0 %v177
    %v179 = vpop.xlane.xlu0 %178
    %v180 = vsel %vm176, %v145, 0.0
    %181 = vadd.xlane.f32.xlu0 %v180
    %v182 = vpop.xlane.xlu0 %181
    %v183 = vsel %vm176, %v150, 0.0
    %184 = vadd.xlane.f32.xlu0 %v183
    %v185 = vpop.xlane.xlu0 %184
    %v186 = vsel %vm176, %v155, 0.0
    %187 = vadd.xlane.f32.xlu0 %v186
    %v188 = vpop.xlane.xlu0 %187
    %v189 = vsel %vm176, %v160, 0.0
    %190 = vadd.xlane.f32.xlu0 %v189
    %v191 = vpop.xlane.xlu0 %190
    %v192 = vsel %vm176, %v165, 0.0
    %193 = vadd.xlane.f32.xlu0 %v192
    %v194 = vpop.xlane.xlu0 %193
    %v195 = vrcp.pop 32.0
    %v196 = vmul.f32 %v179, %v195
    %v197 = vmul.f32 %v182, %v195
    %v198 = vmul.f32 %v185, %v195
    %v199 = vmul.f32 %v188, %v195
    %v200 = vmul.f32 %v191, %v195
    %v201 = vmul.f32 %v194, %v195
    %v202 = vsub.f32 %v140, %v196
    %v203 = vsub.f32 %v145, %v197
    %v204 = vsub.f32 %v150, %v198
    %v205 = vsub.f32 %v155, %v199
    %v206 = vsub.f32 %v160, %v200
    %v207 = vsub.f32 %v165, %v201
    %v208 = vmul.f32 %v202, %v202
    %v209 = vmul.f32 %v203, %v203
    %v210 = vmul.f32 %v204, %v204
    %v211 = vmul.f32 %v205, %v205
    %v212 = vmul.f32 %v206, %v206
    %v213 = vmul.f32 %v207, %v207
    %v214 = vsel %vm176, %v208, 0.0
    %215 = vadd.xlane.f32.xlu0 %v214
    %v216 = vpop.xlane.xlu0 %215
    %v217 = vsel %vm176, %v209, 0.0
    %218 = vadd.xlane.f32.xlu0 %v217
    %v219 = vpop.xlane.xlu0 %218
    %v220 = vsel %vm176, %v210, 0.0
    %221 = vadd.xlane.f32.xlu0 %v220
    %v222 = vpop.xlane.xlu0 %221
    %v223 = vsel %vm176, %v211, 0.0
    %224 = vadd.xlane.f32.xlu0 %v223
    %v225 = vpop.xlane.xlu0 %224
    %v226 = vsel %vm176, %v212, 0.0
    %227 = vadd.xlane.f32.xlu0 %v226
    %v228 = vpop.xlane.xlu0 %227
    %v229 = vsel %vm176, %v213, 0.0
    %230 = vadd.xlane.f32.xlu0 %v229
    %v231 = vpop.xlane.xlu0 %230
    %v232 = vmul.f32 %v216, %v195
    %v233 = vmul.f32 %v219, %v195
    %v234 = vmul.f32 %v222, %v195
    %v235 = vmul.f32 %v225, %v195
    %v236 = vmul.f32 %v228, %v195
    %v237 = vmul.f32 %v231, %v195
    %v238 = vadd.f32 %v232, 1e-06
    %v239 = vadd.f32 %v233, 1e-06
    %v240 = vadd.f32 %v234, 1e-06
    %v241 = vadd.f32 %v235, 1e-06
    %v242 = vadd.f32 %v236, 1e-06
    %v243 = vadd.f32 %v237, 1e-06
    %v244 = vrsqrt.pop %v238
    %v245 = vrsqrt.pop %v239
    %v246 = vrsqrt.pop %v240
    %v247 = vrsqrt.pop %v241
    %v248 = vrsqrt.pop %v242
    %v249 = vrsqrt.pop %v243
    %v250 = vmul.f32 %v202, %v244
    %v251 = vmul.f32 %v203, %v245
    %v252 = vmul.f32 %v204, %v246
    %v253 = vmul.f32 %v205, %v247
    %v254 = vmul.f32 %v206, %v248
    %v255 = vmul.f32 %v207, %v249
    %v256 = vlaneseq
    %v257 = vshrl.u32 %v256, 7
    %v258 = vsub.s32 0, %v257
    %v259 = vrot.slane %v174, %v258
    %v260 = vmul.f32 %v250, %v259
    %v261 = vmul.f32 %v251, %v259
    %v262 = vmul.f32 %v252, %v259
    %v263 = vmul.f32 %v253, %v259
    %v264 = vmul.f32 %v254, %v259
    %v265 = vmul.f32 %v255, %v259
    %v266 = vlaneseq
    %v267 = vshrl.u32 %v266, 7
    %v268 = vsub.s32 0, %v267
    %v269 = vrot.slane %v175, %v268
    %v270 = vadd.f32 %v260, %v269
    %v271 = vadd.f32 %v261, %v269
    %v272 = vadd.f32 %v262, %v269
    %v273 = vadd.f32 %v263, %v269
    %v274 = vadd.f32 %v264, %v269
    %v275 = vadd.f32 %v265, %v269
    %v276 = vld [vmem:[%s4] sm:$0xff]
    %v277 = vld [vmem:[%s4 + $0x8] sm:$0xff]
    %v278 = vld [vmem:[%s4 + $0x10] sm:$0xff]
    %v279 = vld [vmem:[%s4 + $0x18] sm:$0xff]
    %v281 = vsel %vm176, %v270, 0
    %v284 = vsel %vm176, %v271, 0
    %v287 = vsel %vm176, %v272, 0
    %v290 = vsel %vm176, %v273, 0
    %v293 = vsel %vm176, %v274, 0
    %v296 = vsel %vm176, %v275, 0
    %298 = vmatprep.subr.mxu0 0.0
    %299 = vmatpush1.msra.mxu0 %v276
    %300 = vmatprep.subr.mxu0 0.0
    %301 = vmatpush1.msra.mxu0 %v277
    %302 = vmatprep.subr.mxu0 0.0
    %303 = vmatpush1.msra.mxu0 %v278
    %304 = vmatprep.subr.mxu0 0.0
    %305 = vmatpush1.msra.mxu0 %v279
    %306 = vmatprep.subr.mxu0 0.0
    %307 = vmatpush1.msra.mxu0 0.0
    %308 = vmatprep.subr.mxu0 0.0
    %309 = vmatpush1.msra.mxu0 0.0
    %310 = vmatprep.subr.mxu0 0.0
    %311 = vmatpush1.msra.mxu0 0.0
    %312 = vmatprep.subr.mxu0 0.0
    %313 = vmatpush1.msra.mxu0 0.0
    %314 = vmatprep.subr.mxu0 0.0
    %315 = vmatpush1.msra.mxu0 0.0
    %316 = vmatprep.subr.mxu0 0.0
    %317 = vmatpush1.msra.mxu0 0.0
    %318 = vmatprep.subr.mxu0 0.0
    %319 = vmatpush1.msra.mxu0 0.0
    %320 = vmatprep.subr.mxu0 0.0
    %321 = vmatpush1.msra.mxu0 0.0
    %322 = vmatprep.subr.mxu0 0.0
    %323 = vmatpush1.msra.mxu0 0.0
    %324 = vmatprep.subr.mxu0 0.0
    %325 = vmatpush1.msra.mxu0 0.0
    %326 = vmatprep.subr.mxu0 0.0
    %327 = vmatpush1.msra.mxu0 0.0
    %328 = vmatprep.subr.mxu0 0.0
    %329 = vmatpush1.msra.mxu0 0.0
    %330 = vmatprep.subr.mxu0 0.0
    %331 = vmatpush1.msra.mxu0 0.0
    %332 = vmatprep.subr.mxu0 0.0
    %333 = vmatpush1.msra.mxu0 0.0
    %334 = vmatprep.subr.mxu0 0.0
    %335 = vmatpush1.msra.mxu0 0.0
    %336 = vmatprep.subr.mxu0 0.0
    %337 = vmatpush1.msra.mxu0 0.0
    %338 = vmatprep.subr.mxu0 0.0
    %339 = vmatpush1.msra.mxu0 0.0
    %340 = vmatprep.subr.mxu0 0.0
    %341 = vmatpush1.msra.mxu0 0.0
    %342 = vmatprep.subr.mxu0 0.0
    %343 = vmatpush1.msra.mxu0 0.0
    %344 = vmatprep.subr.mxu0 0.0
    %345 = vmatpush1.msra.mxu0 0.0
    %346 = vmatprep.subr.mxu0 0.0
    %347 = vmatpush1.msra.mxu0 0.0
    %348 = vmatprep.subr.mxu0 0.0
    %349 = vmatpush1.msra.mxu0 0.0
    %350 = vmatprep.subr.mxu0 0.0
    %351 = vmatpush1.msra.mxu0 0.0
    %352 = vmatprep.subr.mxu0 0.0
    %353 = vmatpush1.msra.mxu0 0.0
    %354 = vmatprep.subr.mxu0 0.0
    %355 = vmatpush1.msra.mxu0 0.0
    %356 = vmatprep.subr.mxu0 0.0
    %357 = vmatpush1.msra.mxu0 0.0
    %358 = vmatprep.subr.mxu0 0.0
    %359 = vmatpush1.msra.mxu0 0.0
    %360 = vmatprep.subr.mxu0 0.0
    %361 = vmatpush1.msra.mxu0 0.0
    %362 = vmatprep.mubr.f32.mxu0 0.0
    %363 = vmatmul.mubr.f32.gmra.mrb[0].mxu0 %v281
    %v364 = vpop.f32.mrb[0].mxu0
    %v365 = vadd.f32 0.0, %v364
    %v366 = vpop.f32.mrb[0].mxu0
    %367 = vmatprep.mubr.f32.mxu0 0.0
    %368 = vmatmul.mubr.f32.gmra.mrb[0].mxu0 %v284
    %v369 = vpop.f32.mrb[0].mxu0
    %v370 = vadd.f32 0.0, %v369
    %v371 = vpop.f32.mrb[0].mxu0
    %372 = vmatprep.mubr.f32.mxu0 0.0
    %373 = vmatmul.mubr.f32.gmra.mrb[0].mxu0 %v287
    %v374 = vpop.f32.mrb[0].mxu0
    %v375 = vadd.f32 0.0, %v374
    %v376 = vpop.f32.mrb[0].mxu0
    %377 = vmatprep.mubr.f32.mxu0 0.0
    %378 = vmatmul.mubr.f32.gmra.mrb[0].mxu0 %v290
    %v379 = vpop.f32.mrb[0].mxu0
    %v380 = vadd.f32 0.0, %v379
    %v381 = vpop.f32.mrb[0].mxu0
    %382 = vmatprep.mubr.f32.mxu0 0.0
    %383 = vmatmul.mubr.f32.gmra.mrb[0].mxu0 %v293
    %v384 = vpop.f32.mrb[0].mxu0
    %v385 = vadd.f32 0.0, %v384
    %v386 = vpop.f32.mrb[0].mxu0
    %387 = vmatprep.mubr.f32.mxu0 0.0
    %388 = vmatmul.mubr.f32.gmra.mrb[0].mxu0 %v296
    %v389 = vpop.f32.mrb[0].mxu0
    %v390 = vadd.f32 0.0, %v389
    %v391 = vpop.f32.mrb[0].mxu0
    %392 = vdwg.mxu0
    %s393 = scalar_lea.vmem %s4, 128
    %v394 = vld [vmem:[%s393] sm:$0xff]
    %v395 = vld [vmem:[%s393 + $0x8] sm:$0xff]
    %v396 = vld [vmem:[%s393 + $0x10] sm:$0xff]
    %v397 = vld [vmem:[%s393 + $0x18] sm:$0xff]
    %398 = vmatprep.subr.mxu0 0.0
    %399 = vmatpush1.msra.mxu0 %v394
    %400 = vmatprep.subr.mxu0 0.0
    %401 = vmatpush1.msra.mxu0 %v395
    %402 = vmatprep.subr.mxu0 0.0
    %403 = vmatpush1.msra.mxu0 %v396
    %404 = vmatprep.subr.mxu0 0.0
    %405 = vmatpush1.msra.mxu0 %v397
    %406 = vmatprep.subr.mxu0 0.0
    %407 = vmatpush1.msra.mxu0 0.0
    %408 = vmatprep.subr.mxu0 0.0
    %409 = vmatpush1.msra.mxu0 0.0
    %410 = vmatprep.subr.mxu0 0.0
    %411 = vmatpush1.msra.mxu0 0.0
    %412 = vmatprep.subr.mxu0 0.0
    %413 = vmatpush1.msra.mxu0 0.0
    %414 = vmatprep.subr.mxu0 0.0
    %415 = vmatpush1.msra.mxu0 0.0
    %416 = vmatprep.subr.mxu0 0.0
    %417 = vmatpush1.msra.mxu0 0.0
    %418 = vmatprep.subr.mxu0 0.0
    %419 = vmatpush1.msra.mxu0 0.0
    %420 = vmatprep.subr.mxu0 0.0
    %421 = vmatpush1.msra.mxu0 0.0
    %422 = vmatprep.subr.mxu0 0.0
    %423 = vmatpush1.msra.mxu0 0.0
    %424 = vmatprep.subr.mxu0 0.0
    %425 = vmatpush1.msra.mxu0 0.0
    %426 = vmatprep.subr.mxu0 0.0
    %427 = vmatpush1.msra.mxu0 0.0
    %428 = vmatprep.subr.mxu0 0.0
    %429 = vmatpush1.msra.mxu0 0.0
    %430 = vmatprep.subr.mxu0 0.0
    %431 = vmatpush1.msra.mxu0 0.0
    %432 = vmatprep.subr.mxu0 0.0
    %433 = vmatpush1.msra.mxu0 0.0
    %434 = vmatprep.subr.mxu0 0.0
    %435 = vmatpush1.msra.mxu0 0.0
    %436 = vmatprep.subr.mxu0 0.0
    %437 = vmatpush1.msra.mxu0 0.0
    %438 = vmatprep.subr.mxu0 0.0
    %439 = vmatpush1.msra.mxu0 0.0
    %440 = vmatprep.subr.mxu0 0.0
    %441 = vmatpush1.msra.mxu0 0.0
    %442 = vmatprep.subr.mxu0 0.0
    %443 = vmatpush1.msra.mxu0 0.0
    %444 = vmatprep.subr.mxu0 0.0
    %445 = vmatpush1.msra.mxu0 0.0
    %446 = vmatprep.subr.mxu0 0.0
    %447 = vmatpush1.msra.mxu0 0.0
    %448 = vmatprep.subr.mxu0 0.0
    %449 = vmatpush1.msra.mxu0 0.0
    %450 = vmatprep.subr.mxu0 0.0
    %451 = vmatpush1.msra.mxu0 0.0
    %452 = vmatprep.subr.mxu0 0.0
    %453 = vmatpush1.msra.mxu0 0.0
    %454 = vmatprep.subr.mxu0 0.0
    %455 = vmatpush1.msra.mxu0 0.0
    %456 = vmatprep.subr.mxu0 0.0
    %457 = vmatpush1.msra.mxu0 0.0
    %458 = vmatprep.subr.mxu0 0.0
    %459 = vmatpush1.msra.mxu0 0.0
    %460 = vmatprep.subr.mxu0 0.0
    %461 = vmatpush1.msra.mxu0 0.0
    %462 = vmatprep.mubr.f32.mxu0 0.0
    %463 = vmatmul.mubr.f32.gmra.mrb[0].mxu0 %v281
    %v464 = vpop.f32.mrb[0].mxu0
    %v465 = vadd.f32 0.0, %v464
    %v466 = vpop.f32.mrb[0].mxu0
    %467 = vmatprep.mubr.f32.mxu0 0.0
    %468 = vmatmul.mubr.f32.gmra.mrb[0].mxu0 %v284
    %v469 = vpop.f32.mrb[0].mxu0
    %v470 = vadd.f32 0.0, %v469
    %v471 = vpop.f32.mrb[0].mxu0
    %472 = vmatprep.mubr.f32.mxu0 0.0
    %473 = vmatmul.mubr.f32.gmra.mrb[0].mxu0 %v287
    %v474 = vpop.f32.mrb[0].mxu0
    %v475 = vadd.f32 0.0, %v474
    %v476 = vpop.f32.mrb[0].mxu0
    %477 = vmatprep.mubr.f32.mxu0 0.0
    %478 = vmatmul.mubr.f32.gmra.mrb[0].mxu0 %v290
    %v479 = vpop.f32.mrb[0].mxu0
    %v480 = vadd.f32 0.0, %v479
    %v481 = vpop.f32.mrb[0].mxu0
    %482 = vmatprep.mubr.f32.mxu0 0.0
    %483 = vmatmul.mubr.f32.gmra.mrb[0].mxu0 %v293
    %v484 = vpop.f32.mrb[0].mxu0
    %v485 = vadd.f32 0.0, %v484
    %v486 = vpop.f32.mrb[0].mxu0
    %487 = vmatprep.mubr.f32.mxu0 0.0
    %488 = vmatmul.mubr.f32.gmra.mrb[0].mxu0 %v296
    %v489 = vpop.f32.mrb[0].mxu0
    %v490 = vadd.f32 0.0, %v489
    %v491 = vpop.f32.mrb[0].mxu0
    %492 = vdwg.mxu0
    %s493 = scalar_lea.vmem %s4, 256
    %v494 = vld [vmem:[%s493] sm:$0xff]
    %v495 = vld [vmem:[%s493 + $0x8] sm:$0xff]
    %v496 = vld [vmem:[%s493 + $0x10] sm:$0xff]
    %v497 = vld [vmem:[%s493 + $0x18] sm:$0xff]
    %498 = vmatprep.subr.mxu0 0.0
    %499 = vmatpush1.msra.mxu0 %v494
    %500 = vmatprep.subr.mxu0 0.0
    %501 = vmatpush1.msra.mxu0 %v495
    %502 = vmatprep.subr.mxu0 0.0
    %503 = vmatpush1.msra.mxu0 %v496
    %504 = vmatprep.subr.mxu0 0.0
    %505 = vmatpush1.msra.mxu0 %v497
    %506 = vmatprep.subr.mxu0 0.0
    %507 = vmatpush1.msra.mxu0 0.0
    %508 = vmatprep.subr.mxu0 0.0
    %509 = vmatpush1.msra.mxu0 0.0
    %510 = vmatprep.subr.mxu0 0.0
    %511 = vmatpush1.msra.mxu0 0.0
    %512 = vmatprep.subr.mxu0 0.0
    %513 = vmatpush1.msra.mxu0 0.0
    %514 = vmatprep.subr.mxu0 0.0
    %515 = vmatpush1.msra.mxu0 0.0
    %516 = vmatprep.subr.mxu0 0.0
    %517 = vmatpush1.msra.mxu0 0.0
    %518 = vmatprep.subr.mxu0 0.0
    %519 = vmatpush1.msra.mxu0 0.0
    %520 = vmatprep.subr.mxu0 0.0
    %521 = vmatpush1.msra.mxu0 0.0
    %522 = vmatprep.subr.mxu0 0.0
    %523 = vmatpush1.msra.mxu0 0.0
    %524 = vmatprep.subr.mxu0 0.0
    %525 = vmatpush1.msra.mxu0 0.0
    %526 = vmatprep.subr.mxu0 0.0
    %527 = vmatpush1.msra.mxu0 0.0
    %528 = vmatprep.subr.mxu0 0.0
    %529 = vmatpush1.msra.mxu0 0.0
    %530 = vmatprep.subr.mxu0 0.0
    %531 = vmatpush1.msra.mxu0 0.0
    %532 = vmatprep.subr.mxu0 0.0
    %533 = vmatpush1.msra.mxu0 0.0
    %534 = vmatprep.subr.mxu0 0.0
    %535 = vmatpush1.msra.mxu0 0.0
    %536 = vmatprep.subr.mxu0 0.0
    %537 = vmatpush1.msra.mxu0 0.0
    %538 = vmatprep.subr.mxu0 0.0
    %539 = vmatpush1.msra.mxu0 0.0
    %540 = vmatprep.subr.mxu0 0.0
    %541 = vmatpush1.msra.mxu0 0.0
    %542 = vmatprep.subr.mxu0 0.0
    %543 = vmatpush1.msra.mxu0 0.0
    %544 = vmatprep.subr.mxu0 0.0
    %545 = vmatpush1.msra.mxu0 0.0
    %546 = vmatprep.subr.mxu0 0.0
    %547 = vmatpush1.msra.mxu0 0.0
    %548 = vmatprep.subr.mxu0 0.0
    %549 = vmatpush1.msra.mxu0 0.0
    %550 = vmatprep.subr.mxu0 0.0
    %551 = vmatpush1.msra.mxu0 0.0
    %552 = vmatprep.subr.mxu0 0.0
    %553 = vmatpush1.msra.mxu0 0.0
    %554 = vmatprep.subr.mxu0 0.0
    %555 = vmatpush1.msra.mxu0 0.0
    %556 = vmatprep.subr.mxu0 0.0
    %557 = vmatpush1.msra.mxu0 0.0
    %558 = vmatprep.subr.mxu0 0.0
    %559 = vmatpush1.msra.mxu0 0.0
    %560 = vmatprep.subr.mxu0 0.0
    %561 = vmatpush1.msra.mxu0 0.0
    %562 = vmatprep.mubr.f32.mxu0 0.0
    %563 = vmatmul.mubr.f32.gmra.mrb[0].mxu0 %v281
    %v564 = vpop.f32.mrb[0].mxu0
    %v565 = vadd.f32 0.0, %v564
    %v566 = vpop.f32.mrb[0].mxu0
    %567 = vmatprep.mubr.f32.mxu0 0.0
    %568 = vmatmul.mubr.f32.gmra.mrb[0].mxu0 %v284
    %v569 = vpop.f32.mrb[0].mxu0
    %v570 = vadd.f32 0.0, %v569
    %v571 = vpop.f32.mrb[0].mxu0
    %572 = vmatprep.mubr.f32.mxu0 0.0
    %573 = vmatmul.mubr.f32.gmra.mrb[0].mxu0 %v287
    %v574 = vpop.f32.mrb[0].mxu0
    %v575 = vadd.f32 0.0, %v574
    %v576 = vpop.f32.mrb[0].mxu0
    %577 = vmatprep.mubr.f32.mxu0 0.0
    %578 = vmatmul.mubr.f32.gmra.mrb[0].mxu0 %v290
    %v579 = vpop.f32.mrb[0].mxu0
    %v580 = vadd.f32 0.0, %v579
    %v581 = vpop.f32.mrb[0].mxu0
    %582 = vmatprep.mubr.f32.mxu0 0.0
    %583 = vmatmul.mubr.f32.gmra.mrb[0].mxu0 %v293
    %v584 = vpop.f32.mrb[0].mxu0
    %v585 = vadd.f32 0.0, %v584
    %v586 = vpop.f32.mrb[0].mxu0
    %587 = vmatprep.mubr.f32.mxu0 0.0
    %588 = vmatmul.mubr.f32.gmra.mrb[0].mxu0 %v296
    %v589 = vpop.f32.mrb[0].mxu0
    %v590 = vadd.f32 0.0, %v589
    %v591 = vpop.f32.mrb[0].mxu0
    %592 = vdwg.mxu0
    %vm593 = vcmask 64512
    %v595 = vsel %vm593, %v365, 0
    %v598 = vsel %vm593, %v370, 0
    %v601 = vsel %vm593, %v375, 0
    %v604 = vsel %vm593, %v380, 0
    %v607 = vsel %vm593, %v385, 0
    %v610 = vsel %vm593, %v390, 0
    %v613 = vsel %vm593, %v465, 0
    %v616 = vsel %vm593, %v470, 0
    %v619 = vsel %vm593, %v475, 0
    %v622 = vsel %vm593, %v480, 0
    %v625 = vsel %vm593, %v485, 0
    %v628 = vsel %vm593, %v490, 0
    %630 = vmatprep.subr.mxu0 0.0
    %631 = vmatpush1.xpose.msra.mxu0 %v613
    %632 = vmatprep.subr.mxu0 0.0
    %633 = vmatpush1.xpose.msra.mxu0 %v616
    %634 = vmatprep.subr.mxu0 0.0
    %635 = vmatpush1.xpose.msra.mxu0 %v619
    %636 = vmatprep.subr.mxu0 0.0
    %637 = vmatpush1.xpose.msra.mxu0 %v622
    %638 = vmatprep.subr.mxu0 0.0
    %639 = vmatpush1.xpose.msra.mxu0 %v625
    %640 = vmatprep.subr.mxu0 0.0
    %641 = vmatpush1.xpose.msra.mxu0 %v628
    %642 = vmatprep.subr.mxu0 0.0
    %643 = vmatpush1.xpose.msra.mxu0 0.0
    %644 = vmatprep.subr.mxu0 0.0
    %645 = vmatpush1.xpose.msra.mxu0 0.0
    %646 = vmatprep.subr.mxu0 0.0
    %647 = vmatpush1.xpose.msra.mxu0 0.0
    %648 = vmatprep.subr.mxu0 0.0
    %649 = vmatpush1.xpose.msra.mxu0 0.0
    %650 = vmatprep.subr.mxu0 0.0
    %651 = vmatpush1.xpose.msra.mxu0 0.0
    %652 = vmatprep.subr.mxu0 0.0
    %653 = vmatpush1.xpose.msra.mxu0 0.0
    %654 = vmatprep.subr.mxu0 0.0
    %655 = vmatpush1.xpose.msra.mxu0 0.0
    %656 = vmatprep.subr.mxu0 0.0
    %657 = vmatpush1.xpose.msra.mxu0 0.0
    %658 = vmatprep.subr.mxu0 0.0
    %659 = vmatpush1.xpose.msra.mxu0 0.0
    %660 = vmatprep.subr.mxu0 0.0
    %661 = vmatpush1.xpose.msra.mxu0 0.0
    %662 = vmatprep.subr.mxu0 0.0
    %663 = vmatpush1.xpose.msra.mxu0 0.0
    %664 = vmatprep.subr.mxu0 0.0
    %665 = vmatpush1.xpose.msra.mxu0 0.0
    %666 = vmatprep.subr.mxu0 0.0
    %667 = vmatpush1.xpose.msra.mxu0 0.0
    %668 = vmatprep.subr.mxu0 0.0
    %669 = vmatpush1.xpose.msra.mxu0 0.0
    %670 = vmatprep.subr.mxu0 0.0
    %671 = vmatpush1.xpose.msra.mxu0 0.0
    %672 = vmatprep.subr.mxu0 0.0
    %673 = vmatpush1.xpose.msra.mxu0 0.0
    %674 = vmatprep.subr.mxu0 0.0
    %675 = vmatpush1.xpose.msra.mxu0 0.0
    %676 = vmatprep.subr.mxu0 0.0
    %677 = vmatpush1.xpose.msra.mxu0 0.0
    %678 = vmatprep.subr.mxu0 0.0
    %679 = vmatpush1.xpose.msra.mxu0 0.0
    %680 = vmatprep.subr.mxu0 0.0
    %681 = vmatpush1.xpose.msra.mxu0 0.0
    %682 = vmatprep.subr.mxu0 0.0
    %683 = vmatpush1.xpose.msra.mxu0 0.0
    %684 = vmatprep.subr.mxu0 0.0
    %685 = vmatpush1.xpose.msra.mxu0 0.0
    %686 = vmatprep.subr.mxu0 0.0
    %687 = vmatpush1.xpose.msra.mxu0 0.0
    %688 = vmatprep.subr.mxu0 0.0
    %689 = vmatpush1.xpose.msra.mxu0 0.0
    %690 = vmatprep.subr.mxu0 0.0
    %691 = vmatpush1.xpose.msra.mxu0 0.0
    %692 = vmatprep.subr.mxu0 0.0
    %693 = vmatpush1.xpose.msra.mxu0 0.0
    %694 = vmatprep.mubr.f32.mxu0 0.0
    %695 = vmatmul.mubr.f32.gmra.mrb[0].mxu0 %v595
    %v696 = vpop.f32.mrb[0].mxu0
    %v697 = vadd.f32 %v168, %v696
    %v698 = vpop.f32.mrb[0].mxu0
    %699 = vmatprep.mubr.f32.mxu0 0.0
    %700 = vmatmul.mubr.f32.gmra.mrb[0].mxu0 %v598
    %v701 = vpop.f32.mrb[0].mxu0
    %v702 = vadd.f32 %v169, %v701
    %v703 = vpop.f32.mrb[0].mxu0
    %704 = vmatprep.mubr.f32.mxu0 0.0
    %705 = vmatmul.mubr.f32.gmra.mrb[0].mxu0 %v601
    %v706 = vpop.f32.mrb[0].mxu0
    %v707 = vadd.f32 %v170, %v706
    %v708 = vpop.f32.mrb[0].mxu0
    %709 = vmatprep.mubr.f32.mxu0 0.0
    %710 = vmatmul.mubr.f32.gmra.mrb[0].mxu0 %v604
    %v711 = vpop.f32.mrb[0].mxu0
    %v712 = vadd.f32 %v171, %v711
    %v713 = vpop.f32.mrb[0].mxu0
    %714 = vmatprep.mubr.f32.mxu0 0.0
    %715 = vmatmul.mubr.f32.gmra.mrb[0].mxu0 %v607
    %v716 = vpop.f32.mrb[0].mxu0
    %v717 = vadd.f32 %v172, %v716
    %v718 = vpop.f32.mrb[0].mxu0
    %719 = vmatprep.mubr.f32.mxu0 0.0
    %720 = vmatmul.mubr.f32.gmra.mrb[0].mxu0 %v610
    %v721 = vpop.f32.mrb[0].mxu0
    %v722 = vadd.f32 %v173, %v721
    %v723 = vpop.f32.mrb[0].mxu0
    %724 = vdwg.mxu0
    %v725 = vsel %vm54, %v697, -inf
    %726 = vmax.xlane.f32.xlu0 %v725
    %v727 = vpop.xlane.xlu0 %726
    %v728 = vsel %vm54, %v702, -inf
    %729 = vmax.xlane.f32.xlu0 %v728
    %v730 = vpop.xlane.xlu0 %729
    %v731 = vsel %vm54, %v707, -inf
    %732 = vmax.xlane.f32.xlu0 %v731
    %v733 = vpop.xlane.xlu0 %732
    %v734 = vsel %vm54, %v712, -inf
    %735 = vmax.xlane.f32.xlu0 %v734
    %v736 = vpop.xlane.xlu0 %735
    %v737 = vsel %vm54, %v717, -inf
    %738 = vmax.xlane.f32.xlu0 %v737
    %v739 = vpop.xlane.xlu0 %738
    %v740 = vsel %vm54, %v722, -inf
    %741 = vmax.xlane.f32.xlu0 %v740
    %v742 = vpop.xlane.xlu0 %741
    %v743 = vsub.f32 %v697, %v727
    %v744 = vsub.f32 %v702, %v730
    %v745 = vsub.f32 %v707, %v733
    %v746 = vsub.f32 %v712, %v736
    %v747 = vsub.f32 %v717, %v739
    %v748 = vsub.f32 %v722, %v742
    %v749 = vmul.f32 %v743, 1.442695
    %v750 = vpow.pop %v749
    %v751 = vmul.f32 %v744, 1.442695
    %v752 = vpow.pop %v751
    %v753 = vmul.f32 %v745, 1.442695
    %v754 = vpow.pop %v753
    %v755 = vmul.f32 %v746, 1.442695
    %v756 = vpow.pop %v755
    %v757 = vmul.f32 %v747, 1.442695
    %v758 = vpow.pop %v757
    %v759 = vmul.f32 %v748, 1.442695
    %v760 = vpow.pop %v759
    %v761 = vsel %vm54, %v750, 0.0
    %762 = vadd.xlane.f32.xlu0 %v761
    %v763 = vpop.xlane.xlu0 %762
    %v764 = vsel %vm54, %v752, 0.0
    %765 = vadd.xlane.f32.xlu0 %v764
    %v766 = vpop.xlane.xlu0 %765
    %v767 = vsel %vm54, %v754, 0.0
    %768 = vadd.xlane.f32.xlu0 %v767
    %v769 = vpop.xlane.xlu0 %768
    %v770 = vsel %vm54, %v756, 0.0
    %771 = vadd.xlane.f32.xlu0 %v770
    %v772 = vpop.xlane.xlu0 %771
    %v773 = vsel %vm54, %v758, 0.0
    %774 = vadd.xlane.f32.xlu0 %v773
    %v775 = vpop.xlane.xlu0 %774
    %v776 = vsel %vm54, %v760, 0.0
    %777 = vadd.xlane.f32.xlu0 %v776
    %v778 = vpop.xlane.xlu0 %777
    %v779 = vrcp.pop %v763
    %v780 = vrcp.pop %v766
    %v781 = vrcp.pop %v769
    %v782 = vrcp.pop %v772
    %v783 = vrcp.pop %v775
    %v784 = vrcp.pop %v778
    %v785 = vmul.f32 %v750, %v779
    %v786 = vmul.f32 %v752, %v780
    %v787 = vmul.f32 %v754, %v781
    %v788 = vmul.f32 %v756, %v782
    %v789 = vmul.f32 %v758, %v783
    %v790 = vmul.f32 %v760, %v784
    %v792 = vsel %vm54, %v785, 0
    %v795 = vsel %vm54, %v786, 0
    %v798 = vsel %vm54, %v787, 0
    %v801 = vsel %vm54, %v788, 0
    %v804 = vsel %vm54, %v789, 0
    %v807 = vsel %vm54, %v790, 0
    %809 = vmatprep.subr.mxu0 0.0
    %810 = vmatpush1.msra.mxu0 %v565
    %811 = vmatprep.subr.mxu0 0.0
    %812 = vmatpush1.msra.mxu0 %v570
    %813 = vmatprep.subr.mxu0 0.0
    %814 = vmatpush1.msra.mxu0 %v575
    %815 = vmatprep.subr.mxu0 0.0
    %816 = vmatpush1.msra.mxu0 %v580
    %817 = vmatprep.subr.mxu0 0.0
    %818 = vmatpush1.msra.mxu0 %v585
    %819 = vmatprep.subr.mxu0 0.0
    %820 = vmatpush1.msra.mxu0 %v590
    %821 = vmatprep.subr.mxu0 0.0
    %822 = vmatpush1.msra.mxu0 0.0
    %823 = vmatprep.subr.mxu0 0.0
    %824 = vmatpush1.msra.mxu0 0.0
    %825 = vmatprep.subr.mxu0 0.0
    %826 = vmatpush1.msra.mxu0 0.0
    %827 = vmatprep.subr.mxu0 0.0
    %828 = vmatpush1.msra.mxu0 0.0
    %829 = vmatprep.subr.mxu0 0.0
    %830 = vmatpush1.msra.mxu0 0.0
    %831 = vmatprep.subr.mxu0 0.0
    %832 = vmatpush1.msra.mxu0 0.0
    %833 = vmatprep.subr.mxu0 0.0
    %834 = vmatpush1.msra.mxu0 0.0
    %835 = vmatprep.subr.mxu0 0.0
    %836 = vmatpush1.msra.mxu0 0.0
    %837 = vmatprep.subr.mxu0 0.0
    %838 = vmatpush1.msra.mxu0 0.0
    %839 = vmatprep.subr.mxu0 0.0
    %840 = vmatpush1.msra.mxu0 0.0
    %841 = vmatprep.subr.mxu0 0.0
    %842 = vmatpush1.msra.mxu0 0.0
    %843 = vmatprep.subr.mxu0 0.0
    %844 = vmatpush1.msra.mxu0 0.0
    %845 = vmatprep.subr.mxu0 0.0
    %846 = vmatpush1.msra.mxu0 0.0
    %847 = vmatprep.subr.mxu0 0.0
    %848 = vmatpush1.msra.mxu0 0.0
    %849 = vmatprep.subr.mxu0 0.0
    %850 = vmatpush1.msra.mxu0 0.0
    %851 = vmatprep.subr.mxu0 0.0
    %852 = vmatpush1.msra.mxu0 0.0
    %853 = vmatprep.subr.mxu0 0.0
    %854 = vmatpush1.msra.mxu0 0.0
    %855 = vmatprep.subr.mxu0 0.0
    %856 = vmatpush1.msra.mxu0 0.0
    %857 = vmatprep.subr.mxu0 0.0
    %858 = vmatpush1.msra.mxu0 0.0
    %859 = vmatprep.subr.mxu0 0.0
    %860 = vmatpush1.msra.mxu0 0.0
    %861 = vmatprep.subr.mxu0 0.0
    %862 = vmatpush1.msra.mxu0 0.0
    %863 = vmatprep.subr.mxu0 0.0
    %864 = vmatpush1.msra.mxu0 0.0
    %865 = vmatprep.subr.mxu0 0.0
    %866 = vmatpush1.msra.mxu0 0.0
    %867 = vmatprep.subr.mxu0 0.0
    %868 = vmatpush1.msra.mxu0 0.0
    %869 = vmatprep.subr.mxu0 0.0
    %870 = vmatpush1.msra.mxu0 0.0
    %871 = vmatprep.subr.mxu0 0.0
    %872 = vmatpush1.msra.mxu0 0.0
    %873 = vmatprep.mubr.f32.mxu0 0.0
    %874 = vmatmul.mubr.f32.gmra.mrb[0].mxu0 %v792
    %v875 = vpop.f32.mrb[0].mxu0
    %v876 = vadd.f32 0.0, %v875
    %v877 = vpop.f32.mrb[0].mxu0
    %878 = vmatprep.mubr.f32.mxu0 0.0
    %879 = vmatmul.mubr.f32.gmra.mrb[0].mxu0 %v795
    %v880 = vpop.f32.mrb[0].mxu0
    %v881 = vadd.f32 0.0, %v880
    %v882 = vpop.f32.mrb[0].mxu0
    %883 = vmatprep.mubr.f32.mxu0 0.0
    %884 = vmatmul.mubr.f32.gmra.mrb[0].mxu0 %v798
    %v885 = vpop.f32.mrb[0].mxu0
    %v886 = vadd.f32 0.0, %v885
    %v887 = vpop.f32.mrb[0].mxu0
    %888 = vmatprep.mubr.f32.mxu0 0.0
    %889 = vmatmul.mubr.f32.gmra.mrb[0].mxu0 %v801
    %v890 = vpop.f32.mrb[0].mxu0
    %v891 = vadd.f32 0.0, %v890
    %v892 = vpop.f32.mrb[0].mxu0
    %893 = vmatprep.mubr.f32.mxu0 0.0
    %894 = vmatmul.mubr.f32.gmra.mrb[0].mxu0 %v804
    %v895 = vpop.f32.mrb[0].mxu0
    %v896 = vadd.f32 0.0, %v895
    %v897 = vpop.f32.mrb[0].mxu0
    %898 = vmatprep.mubr.f32.mxu0 0.0
    %899 = vmatmul.mubr.f32.gmra.mrb[0].mxu0 %v807
    %v900 = vpop.f32.mrb[0].mxu0
    %v901 = vadd.f32 0.0, %v900
    %v902 = vpop.f32.mrb[0].mxu0
    %903 = vdwg.mxu0
    %v904 = vld [vmem:[%s5] sm:$0xff]
    %s905 = scalar_lea.vmem %s4, 32
    %v906 = vld [vmem:[%s905] sm:$0xff]
    %v907 = vld [vmem:[%s905 + $0x8] sm:$0xff]
    %v908 = vld [vmem:[%s905 + $0x10] sm:$0xff]
    %v909 = vld [vmem:[%s905 + $0x18] sm:$0xff]
    %910 = vmatprep.subr.mxu0 0.0
    %911 = vmatpush1.msra.mxu0 %v906
    %912 = vmatprep.subr.mxu0 0.0
    %913 = vmatpush1.msra.mxu0 %v907
    %914 = vmatprep.subr.mxu0 0.0
    %915 = vmatpush1.msra.mxu0 %v908
    %916 = vmatprep.subr.mxu0 0.0
    %917 = vmatpush1.msra.mxu0 %v909
    %918 = vmatprep.subr.mxu0 0.0
    %919 = vmatpush1.msra.mxu0 0.0
    %920 = vmatprep.subr.mxu0 0.0
    %921 = vmatpush1.msra.mxu0 0.0
    %922 = vmatprep.subr.mxu0 0.0
    %923 = vmatpush1.msra.mxu0 0.0
    %924 = vmatprep.subr.mxu0 0.0
    %925 = vmatpush1.msra.mxu0 0.0
    %926 = vmatprep.subr.mxu0 0.0
    %927 = vmatpush1.msra.mxu0 0.0
    %928 = vmatprep.subr.mxu0 0.0
    %929 = vmatpush1.msra.mxu0 0.0
    %930 = vmatprep.subr.mxu0 0.0
    %931 = vmatpush1.msra.mxu0 0.0
    %932 = vmatprep.subr.mxu0 0.0
    %933 = vmatpush1.msra.mxu0 0.0
    %934 = vmatprep.subr.mxu0 0.0
    %935 = vmatpush1.msra.mxu0 0.0
    %936 = vmatprep.subr.mxu0 0.0
    %937 = vmatpush1.msra.mxu0 0.0
    %938 = vmatprep.subr.mxu0 0.0
    %939 = vmatpush1.msra.mxu0 0.0
    %940 = vmatprep.subr.mxu0 0.0
    %941 = vmatpush1.msra.mxu0 0.0
    %942 = vmatprep.subr.mxu0 0.0
    %943 = vmatpush1.msra.mxu0 0.0
    %944 = vmatprep.subr.mxu0 0.0
    %945 = vmatpush1.msra.mxu0 0.0
    %946 = vmatprep.subr.mxu0 0.0
    %947 = vmatpush1.msra.mxu0 0.0
    %948 = vmatprep.subr.mxu0 0.0
    %949 = vmatpush1.msra.mxu0 0.0
    %950 = vmatprep.subr.mxu0 0.0
    %951 = vmatpush1.msra.mxu0 0.0
    %952 = vmatprep.subr.mxu0 0.0
    %953 = vmatpush1.msra.mxu0 0.0
    %954 = vmatprep.subr.mxu0 0.0
    %955 = vmatpush1.msra.mxu0 0.0
    %956 = vmatprep.subr.mxu0 0.0
    %957 = vmatpush1.msra.mxu0 0.0
    %958 = vmatprep.subr.mxu0 0.0
    %959 = vmatpush1.msra.mxu0 0.0
    %960 = vmatprep.subr.mxu0 0.0
    %961 = vmatpush1.msra.mxu0 0.0
    %962 = vmatprep.subr.mxu0 0.0
    %963 = vmatpush1.msra.mxu0 0.0
    %964 = vmatprep.subr.mxu0 0.0
    %965 = vmatpush1.msra.mxu0 0.0
    %966 = vmatprep.subr.mxu0 0.0
    %967 = vmatpush1.msra.mxu0 0.0
    %968 = vmatprep.subr.mxu0 0.0
    %969 = vmatpush1.msra.mxu0 0.0
    %970 = vmatprep.subr.mxu0 0.0
    %971 = vmatpush1.msra.mxu0 0.0
    %972 = vmatprep.subr.mxu0 0.0
    %973 = vmatpush1.msra.mxu0 0.0
    %974 = vmatprep.mubr.f32.mxu0 0.0
    %975 = vmatmul.mubr.f32.gmra.mrb[0].mxu0 %v281
    %v976 = vpop.f32.mrb[0].mxu0
    %v977 = vadd.f32 0.0, %v976
    %v978 = vpop.f32.mrb[0].mxu0
    %979 = vmatprep.mubr.f32.mxu0 0.0
    %980 = vmatmul.mubr.f32.gmra.mrb[0].mxu0 %v284
    %v981 = vpop.f32.mrb[0].mxu0
    %v982 = vadd.f32 0.0, %v981
    %v983 = vpop.f32.mrb[0].mxu0
    %984 = vmatprep.mubr.f32.mxu0 0.0
    %985 = vmatmul.mubr.f32.gmra.mrb[0].mxu0 %v287
    %v986 = vpop.f32.mrb[0].mxu0
    %v987 = vadd.f32 0.0, %v986
    %v988 = vpop.f32.mrb[0].mxu0
    %989 = vmatprep.mubr.f32.mxu0 0.0
    %990 = vmatmul.mubr.f32.gmra.mrb[0].mxu0 %v290
    %v991 = vpop.f32.mrb[0].mxu0
    %v992 = vadd.f32 0.0, %v991
    %v993 = vpop.f32.mrb[0].mxu0
    %994 = vmatprep.mubr.f32.mxu0 0.0
    %995 = vmatmul.mubr.f32.gmra.mrb[0].mxu0 %v293
    %v996 = vpop.f32.mrb[0].mxu0
    %v997 = vadd.f32 0.0, %v996
    %v998 = vpop.f32.mrb[0].mxu0
    %999 = vmatprep.mubr.f32.mxu0 0.0
    %1000 = vmatmul.mubr.f32.gmra.mrb[0].mxu0 %v296
    %v1001 = vpop.f32.mrb[0].mxu0
    %v1002 = vadd.f32 0.0, %v1001
    %v1003 = vpop.f32.mrb[0].mxu0
    %1004 = vdwg.mxu0
    %s1005 = scalar_lea.vmem %s4, 160
    %v1006 = vld [vmem:[%s1005] sm:$0xff]
    %v1007 = vld [vmem:[%s1005 + $0x8] sm:$0xff]
    %v1008 = vld [vmem:[%s1005 + $0x10] sm:$0xff]
    %v1009 = vld [vmem:[%s1005 + $0x18] sm:$0xff]
    %1010 = vmatprep.subr.mxu0 0.0
    %1011 = vmatpush1.msra.mxu0 %v1006
    %1012 = vmatprep.subr.mxu0 0.0
    %1013 = vmatpush1.msra.mxu0 %v1007
    %1014 = vmatprep.subr.mxu0 0.0
    %1015 = vmatpush1.msra.mxu0 %v1008
    %1016 = vmatprep.subr.mxu0 0.0
    %1017 = vmatpush1.msra.mxu0 %v1009
    %1018 = vmatprep.subr.mxu0 0.0
    %1019 = vmatpush1.msra.mxu0 0.0
    %1020 = vmatprep.subr.mxu0 0.0
    %1021 = vmatpush1.msra.mxu0 0.0
    %1022 = vmatprep.subr.mxu0 0.0
    %1023 = vmatpush1.msra.mxu0 0.0
    %1024 = vmatprep.subr.mxu0 0.0
    %1025 = vmatpush1.msra.mxu0 0.0
    %1026 = vmatprep.subr.mxu0 0.0
    %1027 = vmatpush1.msra.mxu0 0.0
    %1028 = vmatprep.subr.mxu0 0.0
    %1029 = vmatpush1.msra.mxu0 0.0
    %1030 = vmatprep.subr.mxu0 0.0
    %1031 = vmatpush1.msra.mxu0 0.0
    %1032 = vmatprep.subr.mxu0 0.0
    %1033 = vmatpush1.msra.mxu0 0.0
    %1034 = vmatprep.subr.mxu0 0.0
    %1035 = vmatpush1.msra.mxu0 0.0
    %1036 = vmatprep.subr.mxu0 0.0
    %1037 = vmatpush1.msra.mxu0 0.0
    %1038 = vmatprep.subr.mxu0 0.0
    %1039 = vmatpush1.msra.mxu0 0.0
    %1040 = vmatprep.subr.mxu0 0.0
    %1041 = vmatpush1.msra.mxu0 0.0
    %1042 = vmatprep.subr.mxu0 0.0
    %1043 = vmatpush1.msra.mxu0 0.0
    %1044 = vmatprep.subr.mxu0 0.0
    %1045 = vmatpush1.msra.mxu0 0.0
    %1046 = vmatprep.subr.mxu0 0.0
    %1047 = vmatpush1.msra.mxu0 0.0
    %1048 = vmatprep.subr.mxu0 0.0
    %1049 = vmatpush1.msra.mxu0 0.0
    %1050 = vmatprep.subr.mxu0 0.0
    %1051 = vmatpush1.msra.mxu0 0.0
    %1052 = vmatprep.subr.mxu0 0.0
    %1053 = vmatpush1.msra.mxu0 0.0
    %1054 = vmatprep.subr.mxu0 0.0
    %1055 = vmatpush1.msra.mxu0 0.0
    %1056 = vmatprep.subr.mxu0 0.0
    %1057 = vmatpush1.msra.mxu0 0.0
    %1058 = vmatprep.subr.mxu0 0.0
    %1059 = vmatpush1.msra.mxu0 0.0
    %1060 = vmatprep.subr.mxu0 0.0
    %1061 = vmatpush1.msra.mxu0 0.0
    %1062 = vmatprep.subr.mxu0 0.0
    %1063 = vmatpush1.msra.mxu0 0.0
    %1064 = vmatprep.subr.mxu0 0.0
    %1065 = vmatpush1.msra.mxu0 0.0
    %1066 = vmatprep.subr.mxu0 0.0
    %1067 = vmatpush1.msra.mxu0 0.0
    %1068 = vmatprep.subr.mxu0 0.0
    %1069 = vmatpush1.msra.mxu0 0.0
    %1070 = vmatprep.subr.mxu0 0.0
    %1071 = vmatpush1.msra.mxu0 0.0
    %1072 = vmatprep.subr.mxu0 0.0
    %1073 = vmatpush1.msra.mxu0 0.0
    %1074 = vmatprep.mubr.f32.mxu0 0.0
    %1075 = vmatmul.mubr.f32.gmra.mrb[0].mxu0 %v281
    %v1076 = vpop.f32.mrb[0].mxu0
    %v1077 = vadd.f32 0.0, %v1076
    %v1078 = vpop.f32.mrb[0].mxu0
    %1079 = vmatprep.mubr.f32.mxu0 0.0
    %1080 = vmatmul.mubr.f32.gmra.mrb[0].mxu0 %v284
    %v1081 = vpop.f32.mrb[0].mxu0
    %v1082 = vadd.f32 0.0, %v1081
    %v1083 = vpop.f32.mrb[0].mxu0
    %1084 = vmatprep.mubr.f32.mxu0 0.0
    %1085 = vmatmul.mubr.f32.gmra.mrb[0].mxu0 %v287
    %v1086 = vpop.f32.mrb[0].mxu0
    %v1087 = vadd.f32 0.0, %v1086
    %v1088 = vpop.f32.mrb[0].mxu0
    %1089 = vmatprep.mubr.f32.mxu0 0.0
    %1090 = vmatmul.mubr.f32.gmra.mrb[0].mxu0 %v290
    %v1091 = vpop.f32.mrb[0].mxu0
    %v1092 = vadd.f32 0.0, %v1091
    %v1093 = vpop.f32.mrb[0].mxu0
    %1094 = vmatprep.mubr.f32.mxu0 0.0
    %1095 = vmatmul.mubr.f32.gmra.mrb[0].mxu0 %v293
    %v1096 = vpop.f32.mrb[0].mxu0
    %v1097 = vadd.f32 0.0, %v1096
    %v1098 = vpop.f32.mrb[0].mxu0
    %1099 = vmatprep.mubr.f32.mxu0 0.0
    %1100 = vmatmul.mubr.f32.gmra.mrb[0].mxu0 %v296
    %v1101 = vpop.f32.mrb[0].mxu0
    %v1102 = vadd.f32 0.0, %v1101
    %v1103 = vpop.f32.mrb[0].mxu0
    %1104 = vdwg.mxu0
    %s1105 = scalar_lea.vmem %s4, 288
    %v1106 = vld [vmem:[%s1105] sm:$0xff]
    %v1107 = vld [vmem:[%s1105 + $0x8] sm:$0xff]
    %v1108 = vld [vmem:[%s1105 + $0x10] sm:$0xff]
    %v1109 = vld [vmem:[%s1105 + $0x18] sm:$0xff]
    %1110 = vmatprep.subr.mxu0 0.0
    %1111 = vmatpush1.msra.mxu0 %v1106
    %1112 = vmatprep.subr.mxu0 0.0
    %1113 = vmatpush1.msra.mxu0 %v1107
    %1114 = vmatprep.subr.mxu0 0.0
    %1115 = vmatpush1.msra.mxu0 %v1108
    %1116 = vmatprep.subr.mxu0 0.0
    %1117 = vmatpush1.msra.mxu0 %v1109
    %1118 = vmatprep.subr.mxu0 0.0
    %1119 = vmatpush1.msra.mxu0 0.0
    %1120 = vmatprep.subr.mxu0 0.0
    %1121 = vmatpush1.msra.mxu0 0.0
    %1122 = vmatprep.subr.mxu0 0.0
    %1123 = vmatpush1.msra.mxu0 0.0
    %1124 = vmatprep.subr.mxu0 0.0
    %1125 = vmatpush1.msra.mxu0 0.0
    %1126 = vmatprep.subr.mxu0 0.0
    %1127 = vmatpush1.msra.mxu0 0.0
    %1128 = vmatprep.subr.mxu0 0.0
    %1129 = vmatpush1.msra.mxu0 0.0
    %1130 = vmatprep.subr.mxu0 0.0
    %1131 = vmatpush1.msra.mxu0 0.0
    %1132 = vmatprep.subr.mxu0 0.0
    %1133 = vmatpush1.msra.mxu0 0.0
    %1134 = vmatprep.subr.mxu0 0.0
    %1135 = vmatpush1.msra.mxu0 0.0
    %1136 = vmatprep.subr.mxu0 0.0
    %1137 = vmatpush1.msra.mxu0 0.0
    %1138 = vmatprep.subr.mxu0 0.0
    %1139 = vmatpush1.msra.mxu0 0.0
    %1140 = vmatprep.subr.mxu0 0.0
    %1141 = vmatpush1.msra.mxu0 0.0
    %1142 = vmatprep.subr.mxu0 0.0
    %1143 = vmatpush1.msra.mxu0 0.0
    %1144 = vmatprep.subr.mxu0 0.0
    %1145 = vmatpush1.msra.mxu0 0.0
    %1146 = vmatprep.subr.mxu0 0.0
    %1147 = vmatpush1.msra.mxu0 0.0
    %1148 = vmatprep.subr.mxu0 0.0
    %1149 = vmatpush1.msra.mxu0 0.0
    %1150 = vmatprep.subr.mxu0 0.0
    %1151 = vmatpush1.msra.mxu0 0.0
    %1152 = vmatprep.subr.mxu0 0.0
    %1153 = vmatpush1.msra.mxu0 0.0
    %1154 = vmatprep.subr.mxu0 0.0
    %1155 = vmatpush1.msra.mxu0 0.0
    %1156 = vmatprep.subr.mxu0 0.0
    %1157 = vmatpush1.msra.mxu0 0.0
    %1158 = vmatprep.subr.mxu0 0.0
    %1159 = vmatpush1.msra.mxu0 0.0
    %1160 = vmatprep.subr.mxu0 0.0
    %1161 = vmatpush1.msra.mxu0 0.0
    %1162 = vmatprep.subr.mxu0 0.0
    %1163 = vmatpush1.msra.mxu0 0.0
    %1164 = vmatprep.subr.mxu0 0.0
    %1165 = vmatpush1.msra.mxu0 0.0
    %1166 = vmatprep.subr.mxu0 0.0
    %1167 = vmatpush1.msra.mxu0 0.0
    %1168 = vmatprep.subr.mxu0 0.0
    %1169 = vmatpush1.msra.mxu0 0.0
    %1170 = vmatprep.subr.mxu0 0.0
    %1171 = vmatpush1.msra.mxu0 0.0
    %1172 = vmatprep.subr.mxu0 0.0
    %1173 = vmatpush1.msra.mxu0 0.0
    %1174 = vmatprep.mubr.f32.mxu0 0.0
    %1175 = vmatmul.mubr.f32.gmra.mrb[0].mxu0 %v281
    %v1176 = vpop.f32.mrb[0].mxu0
    %v1177 = vadd.f32 0.0, %v1176
    %v1178 = vpop.f32.mrb[0].mxu0
    %1179 = vmatprep.mubr.f32.mxu0 0.0
    %1180 = vmatmul.mubr.f32.gmra.mrb[0].mxu0 %v284
    %v1181 = vpop.f32.mrb[0].mxu0
    %v1182 = vadd.f32 0.0, %v1181
    %v1183 = vpop.f32.mrb[0].mxu0
    %1184 = vmatprep.mubr.f32.mxu0 0.0
    %1185 = vmatmul.mubr.f32.gmra.mrb[0].mxu0 %v287
    %v1186 = vpop.f32.mrb[0].mxu0
    %v1187 = vadd.f32 0.0, %v1186
    %v1188 = vpop.f32.mrb[0].mxu0
    %1189 = vmatprep.mubr.f32.mxu0 0.0
    %1190 = vmatmul.mubr.f32.gmra.mrb[0].mxu0 %v290
    %v1191 = vpop.f32.mrb[0].mxu0
    %v1192 = vadd.f32 0.0, %v1191
    %v1193 = vpop.f32.mrb[0].mxu0
    %1194 = vmatprep.mubr.f32.mxu0 0.0
    %1195 = vmatmul.mubr.f32.gmra.mrb[0].mxu0 %v293
    %v1196 = vpop.f32.mrb[0].mxu0
    %v1197 = vadd.f32 0.0, %v1196
    %v1198 = vpop.f32.mrb[0].mxu0
    %1199 = vmatprep.mubr.f32.mxu0 0.0
    %1200 = vmatmul.mubr.f32.gmra.mrb[0].mxu0 %v296
    %v1201 = vpop.f32.mrb[0].mxu0
    %v1202 = vadd.f32 0.0, %v1201
    %v1203 = vpop.f32.mrb[0].mxu0
    %1204 = vdwg.mxu0
    %v1206 = vsel %vm593, %v977, 0
    %v1209 = vsel %vm593, %v982, 0
    %v1212 = vsel %vm593, %v987, 0
    %v1215 = vsel %vm593, %v992, 0
    %v1218 = vsel %vm593, %v997, 0
    %v1221 = vsel %vm593, %v1002, 0
    %v1224 = vsel %vm593, %v1077, 0
    %v1227 = vsel %vm593, %v1082, 0
    %v1230 = vsel %vm593, %v1087, 0
    %v1233 = vsel %vm593, %v1092, 0
    %v1236 = vsel %vm593, %v1097, 0
    %v1239 = vsel %vm593, %v1102, 0
    %1241 = vmatprep.subr.mxu0 0.0
    %1242 = vmatpush1.xpose.msra.mxu0 %v1224
    %1243 = vmatprep.subr.mxu0 0.0
    %1244 = vmatpush1.xpose.msra.mxu0 %v1227
    %1245 = vmatprep.subr.mxu0 0.0
    %1246 = vmatpush1.xpose.msra.mxu0 %v1230
    %1247 = vmatprep.subr.mxu0 0.0
    %1248 = vmatpush1.xpose.msra.mxu0 %v1233
    %1249 = vmatprep.subr.mxu0 0.0
    %1250 = vmatpush1.xpose.msra.mxu0 %v1236
    %1251 = vmatprep.subr.mxu0 0.0
    %1252 = vmatpush1.xpose.msra.mxu0 %v1239
    %1253 = vmatprep.subr.mxu0 0.0
    %1254 = vmatpush1.xpose.msra.mxu0 0.0
    %1255 = vmatprep.subr.mxu0 0.0
    %1256 = vmatpush1.xpose.msra.mxu0 0.0
    %1257 = vmatprep.subr.mxu0 0.0
    %1258 = vmatpush1.xpose.msra.mxu0 0.0
    %1259 = vmatprep.subr.mxu0 0.0
    %1260 = vmatpush1.xpose.msra.mxu0 0.0
    %1261 = vmatprep.subr.mxu0 0.0
    %1262 = vmatpush1.xpose.msra.mxu0 0.0
    %1263 = vmatprep.subr.mxu0 0.0
    %1264 = vmatpush1.xpose.msra.mxu0 0.0
    %1265 = vmatprep.subr.mxu0 0.0
    %1266 = vmatpush1.xpose.msra.mxu0 0.0
    %1267 = vmatprep.subr.mxu0 0.0
    %1268 = vmatpush1.xpose.msra.mxu0 0.0
    %1269 = vmatprep.subr.mxu0 0.0
    %1270 = vmatpush1.xpose.msra.mxu0 0.0
    %1271 = vmatprep.subr.mxu0 0.0
    %1272 = vmatpush1.xpose.msra.mxu0 0.0
    %1273 = vmatprep.subr.mxu0 0.0
    %1274 = vmatpush1.xpose.msra.mxu0 0.0
    %1275 = vmatprep.subr.mxu0 0.0
    %1276 = vmatpush1.xpose.msra.mxu0 0.0
    %1277 = vmatprep.subr.mxu0 0.0
    %1278 = vmatpush1.xpose.msra.mxu0 0.0
    %1279 = vmatprep.subr.mxu0 0.0
    %1280 = vmatpush1.xpose.msra.mxu0 0.0
    %1281 = vmatprep.subr.mxu0 0.0
    %1282 = vmatpush1.xpose.msra.mxu0 0.0
    %1283 = vmatprep.subr.mxu0 0.0
    %1284 = vmatpush1.xpose.msra.mxu0 0.0
    %1285 = vmatprep.subr.mxu0 0.0
    %1286 = vmatpush1.xpose.msra.mxu0 0.0
    %1287 = vmatprep.subr.mxu0 0.0
    %1288 = vmatpush1.xpose.msra.mxu0 0.0
    %1289 = vmatprep.subr.mxu0 0.0
    %1290 = vmatpush1.xpose.msra.mxu0 0.0
    %1291 = vmatprep.subr.mxu0 0.0
    %1292 = vmatpush1.xpose.msra.mxu0 0.0
    %1293 = vmatprep.subr.mxu0 0.0
    %1294 = vmatpush1.xpose.msra.mxu0 0.0
    %1295 = vmatprep.subr.mxu0 0.0
    %1296 = vmatpush1.xpose.msra.mxu0 0.0
    %1297 = vmatprep.subr.mxu0 0.0
    %1298 = vmatpush1.xpose.msra.mxu0 0.0
    %1299 = vmatprep.subr.mxu0 0.0
    %1300 = vmatpush1.xpose.msra.mxu0 0.0
    %1301 = vmatprep.subr.mxu0 0.0
    %1302 = vmatpush1.xpose.msra.mxu0 0.0
    %1303 = vmatprep.subr.mxu0 0.0
    %1304 = vmatpush1.xpose.msra.mxu0 0.0
    %1305 = vmatprep.mubr.f32.mxu0 0.0
    %1306 = vmatmul.mubr.f32.gmra.mrb[0].mxu0 %v1206
    %v1307 = vpop.f32.mrb[0].mxu0
    %v1308 = vadd.f32 %v168, %v1307
    %v1309 = vpop.f32.mrb[0].mxu0
    %1310 = vmatprep.mubr.f32.mxu0 0.0
    %1311 = vmatmul.mubr.f32.gmra.mrb[0].mxu0 %v1209
    %v1312 = vpop.f32.mrb[0].mxu0
    %v1313 = vadd.f32 %v169, %v1312
    %v1314 = vpop.f32.mrb[0].mxu0
    %1315 = vmatprep.mubr.f32.mxu0 0.0
    %1316 = vmatmul.mubr.f32.gmra.mrb[0].mxu0 %v1212
    %v1317 = vpop.f32.mrb[0].mxu0
    %v1318 = vadd.f32 %v170, %v1317
    %v1319 = vpop.f32.mrb[0].mxu0
    %1320 = vmatprep.mubr.f32.mxu0 0.0
    %1321 = vmatmul.mubr.f32.gmra.mrb[0].mxu0 %v1215
    %v1322 = vpop.f32.mrb[0].mxu0
    %v1323 = vadd.f32 %v171, %v1322
    %v1324 = vpop.f32.mrb[0].mxu0
    %1325 = vmatprep.mubr.f32.mxu0 0.0
    %1326 = vmatmul.mubr.f32.gmra.mrb[0].mxu0 %v1218
    %v1327 = vpop.f32.mrb[0].mxu0
    %v1328 = vadd.f32 %v172, %v1327
    %v1329 = vpop.f32.mrb[0].mxu0
    %1330 = vmatprep.mubr.f32.mxu0 0.0
    %1331 = vmatmul.mubr.f32.gmra.mrb[0].mxu0 %v1221
    %v1332 = vpop.f32.mrb[0].mxu0
    %v1333 = vadd.f32 %v173, %v1332
    %v1334 = vpop.f32.mrb[0].mxu0
    %1335 = vdwg.mxu0
    %v1336 = vsel %vm54, %v1308, -inf
    %1337 = vmax.xlane.f32.xlu0 %v1336
    %v1338 = vpop.xlane.xlu0 %1337
    %v1339 = vsel %vm54, %v1313, -inf
    %1340 = vmax.xlane.f32.xlu0 %v1339
    %v1341 = vpop.xlane.xlu0 %1340
    %v1342 = vsel %vm54, %v1318, -inf
    %1343 = vmax.xlane.f32.xlu0 %v1342
    %v1344 = vpop.xlane.xlu0 %1343
    %v1345 = vsel %vm54, %v1323, -inf
    %1346 = vmax.xlane.f32.xlu0 %v1345
    %v1347 = vpop.xlane.xlu0 %1346
    %v1348 = vsel %vm54, %v1328, -inf
    %1349 = vmax.xlane.f32.xlu0 %v1348
    %v1350 = vpop.xlane.xlu0 %1349
    %v1351 = vsel %vm54, %v1333, -inf
    %1352 = vmax.xlane.f32.xlu0 %v1351
    %v1353 = vpop.xlane.xlu0 %1352
    %v1354 = vsub.f32 %v1308, %v1338
    %v1355 = vsub.f32 %v1313, %v1341
    %v1356 = vsub.f32 %v1318, %v1344
    %v1357 = vsub.f32 %v1323, %v1347
    %v1358 = vsub.f32 %v1328, %v1350
    %v1359 = vsub.f32 %v1333, %v1353
    %v1360 = vmul.f32 %v1354, 1.442695
    %v1361 = vpow.pop %v1360
    %v1362 = vmul.f32 %v1355, 1.442695
    %v1363 = vpow.pop %v1362
    %v1364 = vmul.f32 %v1356, 1.442695
    %v1365 = vpow.pop %v1364
    %v1366 = vmul.f32 %v1357, 1.442695
    %v1367 = vpow.pop %v1366
    %v1368 = vmul.f32 %v1358, 1.442695
    %v1369 = vpow.pop %v1368
    %v1370 = vmul.f32 %v1359, 1.442695
    %v1371 = vpow.pop %v1370
    %v1372 = vsel %vm54, %v1361, 0.0
    %1373 = vadd.xlane.f32.xlu0 %v1372
    %v1374 = vpop.xlane.xlu0 %1373
    %v1375 = vsel %vm54, %v1363, 0.0
    %1376 = vadd.xlane.f32.xlu0 %v1375
    %v1377 = vpop.xlane.xlu0 %1376
    %v1378 = vsel %vm54, %v1365, 0.0
    %1379 = vadd.xlane.f32.xlu0 %v1378
    %v1380 = vpop.xlane.xlu0 %1379
    %v1381 = vsel %vm54, %v1367, 0.0
    %1382 = vadd.xlane.f32.xlu0 %v1381
    %v1383 = vpop.xlane.xlu0 %1382
    %v1384 = vsel %vm54, %v1369, 0.0
    %1385 = vadd.xlane.f32.xlu0 %v1384
    %v1386 = vpop.xlane.xlu0 %1385
    %v1387 = vsel %vm54, %v1371, 0.0
    %1388 = vadd.xlane.f32.xlu0 %v1387
    %v1389 = vpop.xlane.xlu0 %1388
    %v1390 = vrcp.pop %v1374
    %v1391 = vrcp.pop %v1377
    %v1392 = vrcp.pop %v1380
    %v1393 = vrcp.pop %v1383
    %v1394 = vrcp.pop %v1386
    %v1395 = vrcp.pop %v1389
    %v1396 = vmul.f32 %v1361, %v1390
    %v1397 = vmul.f32 %v1363, %v1391
    %v1398 = vmul.f32 %v1365, %v1392
    %v1399 = vmul.f32 %v1367, %v1393
    %v1400 = vmul.f32 %v1369, %v1394
    %v1401 = vmul.f32 %v1371, %v1395
    %v1403 = vsel %vm54, %v1396, 0
    %v1406 = vsel %vm54, %v1397, 0
    %v1409 = vsel %vm54, %v1398, 0
    %v1412 = vsel %vm54, %v1399, 0
    %v1415 = vsel %vm54, %v1400, 0
    %v1418 = vsel %vm54, %v1401, 0
    %1420 = vmatprep.subr.mxu0 0.0
    %1421 = vmatpush1.msra.mxu0 %v1177
    %1422 = vmatprep.subr.mxu0 0.0
    %1423 = vmatpush1.msra.mxu0 %v1182
    %1424 = vmatprep.subr.mxu0 0.0
    %1425 = vmatpush1.msra.mxu0 %v1187
    %1426 = vmatprep.subr.mxu0 0.0
    %1427 = vmatpush1.msra.mxu0 %v1192
    %1428 = vmatprep.subr.mxu0 0.0
    %1429 = vmatpush1.msra.mxu0 %v1197
    %1430 = vmatprep.subr.mxu0 0.0
    %1431 = vmatpush1.msra.mxu0 %v1202
    %1432 = vmatprep.subr.mxu0 0.0
    %1433 = vmatpush1.msra.mxu0 0.0
    %1434 = vmatprep.subr.mxu0 0.0
    %1435 = vmatpush1.msra.mxu0 0.0
    %1436 = vmatprep.subr.mxu0 0.0
    %1437 = vmatpush1.msra.mxu0 0.0
    %1438 = vmatprep.subr.mxu0 0.0
    %1439 = vmatpush1.msra.mxu0 0.0
    %1440 = vmatprep.subr.mxu0 0.0
    %1441 = vmatpush1.msra.mxu0 0.0
    %1442 = vmatprep.subr.mxu0 0.0
    %1443 = vmatpush1.msra.mxu0 0.0
    %1444 = vmatprep.subr.mxu0 0.0
    %1445 = vmatpush1.msra.mxu0 0.0
    %1446 = vmatprep.subr.mxu0 0.0
    %1447 = vmatpush1.msra.mxu0 0.0
    %1448 = vmatprep.subr.mxu0 0.0
    %1449 = vmatpush1.msra.mxu0 0.0
    %1450 = vmatprep.subr.mxu0 0.0
    %1451 = vmatpush1.msra.mxu0 0.0
    %1452 = vmatprep.subr.mxu0 0.0
    %1453 = vmatpush1.msra.mxu0 0.0
    %1454 = vmatprep.subr.mxu0 0.0
    %1455 = vmatpush1.msra.mxu0 0.0
    %1456 = vmatprep.subr.mxu0 0.0
    %1457 = vmatpush1.msra.mxu0 0.0
    %1458 = vmatprep.subr.mxu0 0.0
    %1459 = vmatpush1.msra.mxu0 0.0
    %1460 = vmatprep.subr.mxu0 0.0
    %1461 = vmatpush1.msra.mxu0 0.0
    %1462 = vmatprep.subr.mxu0 0.0
    %1463 = vmatpush1.msra.mxu0 0.0
    %1464 = vmatprep.subr.mxu0 0.0
    %1465 = vmatpush1.msra.mxu0 0.0
    %1466 = vmatprep.subr.mxu0 0.0
    %1467 = vmatpush1.msra.mxu0 0.0
    %1468 = vmatprep.subr.mxu0 0.0
    %1469 = vmatpush1.msra.mxu0 0.0
    %1470 = vmatprep.subr.mxu0 0.0
    %1471 = vmatpush1.msra.mxu0 0.0
    %1472 = vmatprep.subr.mxu0 0.0
    %1473 = vmatpush1.msra.mxu0 0.0
    %1474 = vmatprep.subr.mxu0 0.0
    %1475 = vmatpush1.msra.mxu0 0.0
    %1476 = vmatprep.subr.mxu0 0.0
    %1477 = vmatpush1.msra.mxu0 0.0
    %1478 = vmatprep.subr.mxu0 0.0
    %1479 = vmatpush1.msra.mxu0 0.0
    %1480 = vmatprep.subr.mxu0 0.0
    %1481 = vmatpush1.msra.mxu0 0.0
    %1482 = vmatprep.subr.mxu0 0.0
    %1483 = vmatpush1.msra.mxu0 0.0
    %1484 = vmatprep.mubr.f32.mxu0 0.0
    %1485 = vmatmul.mubr.f32.gmra.mrb[0].mxu0 %v1403
    %v1486 = vpop.f32.mrb[0].mxu0
    %v1487 = vadd.f32 0.0, %v1486
    %v1488 = vpop.f32.mrb[0].mxu0
    %1489 = vmatprep.mubr.f32.mxu0 0.0
    %1490 = vmatmul.mubr.f32.gmra.mrb[0].mxu0 %v1406
    %v1491 = vpop.f32.mrb[0].mxu0
    %v1492 = vadd.f32 0.0, %v1491
    %v1493 = vpop.f32.mrb[0].mxu0
    %1494 = vmatprep.mubr.f32.mxu0 0.0
    %1495 = vmatmul.mubr.f32.gmra.mrb[0].mxu0 %v1409
    %v1496 = vpop.f32.mrb[0].mxu0
    %v1497 = vadd.f32 0.0, %v1496
    %v1498 = vpop.f32.mrb[0].mxu0
    %1499 = vmatprep.mubr.f32.mxu0 0.0
    %1500 = vmatmul.mubr.f32.gmra.mrb[0].mxu0 %v1412
    %v1501 = vpop.f32.mrb[0].mxu0
    %v1502 = vadd.f32 0.0, %v1501
    %v1503 = vpop.f32.mrb[0].mxu0
    %1504 = vmatprep.mubr.f32.mxu0 0.0
    %1505 = vmatmul.mubr.f32.gmra.mrb[0].mxu0 %v1415
    %v1506 = vpop.f32.mrb[0].mxu0
    %v1507 = vadd.f32 0.0, %v1506
    %v1508 = vpop.f32.mrb[0].mxu0
    %1509 = vmatprep.mubr.f32.mxu0 0.0
    %1510 = vmatmul.mubr.f32.gmra.mrb[0].mxu0 %v1418
    %v1511 = vpop.f32.mrb[0].mxu0
    %v1512 = vadd.f32 0.0, %v1511
    %v1513 = vpop.f32.mrb[0].mxu0
    %1514 = vdwg.mxu0
    %s1515 = scalar_lea.vmem %s5, 8
    %v1516 = vld [vmem:[%s1515] sm:$0xff]
    %v1518 = vsel %vm593, %v1487, 0
    %v1521 = vsel %vm593, %v1492, 0
    %v1524 = vsel %vm593, %v1497, 0
    %v1527 = vsel %vm593, %v1502, 0
    %v1530 = vsel %vm593, %v1507, 0
    %v1533 = vsel %vm593, %v1512, 0
    %1535 = vmatprep.subr.mxu0 0.0
    %1536 = vmatpush1.msra.mxu0 %v1516
    %1537 = vmatprep.subr.mxu0 0.0
    %1538 = vmatpush1.msra.mxu0 0.0
    %1539 = vmatprep.subr.mxu0 0.0
    %1540 = vmatpush1.msra.mxu0 0.0
    %1541 = vmatprep.subr.mxu0 0.0
    %1542 = vmatpush1.msra.mxu0 0.0
    %1543 = vmatprep.subr.mxu0 0.0
    %1544 = vmatpush1.msra.mxu0 0.0
    %1545 = vmatprep.subr.mxu0 0.0
    %1546 = vmatpush1.msra.mxu0 0.0
    %1547 = vmatprep.subr.mxu0 0.0
    %1548 = vmatpush1.msra.mxu0 0.0
    %1549 = vmatprep.subr.mxu0 0.0
    %1550 = vmatpush1.msra.mxu0 0.0
    %1551 = vmatprep.subr.mxu0 0.0
    %1552 = vmatpush1.msra.mxu0 0.0
    %1553 = vmatprep.subr.mxu0 0.0
    %1554 = vmatpush1.msra.mxu0 0.0
    %1555 = vmatprep.subr.mxu0 0.0
    %1556 = vmatpush1.msra.mxu0 0.0
    %1557 = vmatprep.subr.mxu0 0.0
    %1558 = vmatpush1.msra.mxu0 0.0
    %1559 = vmatprep.subr.mxu0 0.0
    %1560 = vmatpush1.msra.mxu0 0.0
    %1561 = vmatprep.subr.mxu0 0.0
    %1562 = vmatpush1.msra.mxu0 0.0
    %1563 = vmatprep.subr.mxu0 0.0
    %1564 = vmatpush1.msra.mxu0 0.0
    %1565 = vmatprep.subr.mxu0 0.0
    %1566 = vmatpush1.msra.mxu0 0.0
    %1567 = vmatprep.subr.mxu0 0.0
    %1568 = vmatpush1.msra.mxu0 0.0
    %1569 = vmatprep.subr.mxu0 0.0
    %1570 = vmatpush1.msra.mxu0 0.0
    %1571 = vmatprep.subr.mxu0 0.0
    %1572 = vmatpush1.msra.mxu0 0.0
    %1573 = vmatprep.subr.mxu0 0.0
    %1574 = vmatpush1.msra.mxu0 0.0
    %1575 = vmatprep.subr.mxu0 0.0
    %1576 = vmatpush1.msra.mxu0 0.0
    %1577 = vmatprep.subr.mxu0 0.0
    %1578 = vmatpush1.msra.mxu0 0.0
    %1579 = vmatprep.subr.mxu0 0.0
    %1580 = vmatpush1.msra.mxu0 0.0
    %1581 = vmatprep.subr.mxu0 0.0
    %1582 = vmatpush1.msra.mxu0 0.0
    %1583 = vmatprep.subr.mxu0 0.0
    %1584 = vmatpush1.msra.mxu0 0.0
    %1585 = vmatprep.subr.mxu0 0.0
    %1586 = vmatpush1.msra.mxu0 0.0
    %1587 = vmatprep.subr.mxu0 0.0
    %1588 = vmatpush1.msra.mxu0 0.0
    %1589 = vmatprep.subr.mxu0 0.0
    %1590 = vmatpush1.msra.mxu0 0.0
    %1591 = vmatprep.subr.mxu0 0.0
    %1592 = vmatpush1.msra.mxu0 0.0
    %1593 = vmatprep.subr.mxu0 0.0
    %1594 = vmatpush1.msra.mxu0 0.0
    %1595 = vmatprep.subr.mxu0 0.0
    %1596 = vmatpush1.msra.mxu0 0.0
    %1597 = vmatprep.subr.mxu0 0.0
    %1598 = vmatpush1.msra.mxu0 0.0
    %1599 = vmatprep.mubr.f32.mxu0 0.0
    %1600 = vmatmul.mubr.f32.gmra.mrb[0].mxu0 %v1518
    %v1601 = vpop.f32.mrb[0].mxu0
    %v1602 = vadd.f32 0.0, %v1601
    %v1603 = vpop.f32.mrb[0].mxu0
    %1604 = vmatprep.mubr.f32.mxu0 0.0
    %1605 = vmatmul.mubr.f32.gmra.mrb[0].mxu0 %v1521
    %v1606 = vpop.f32.mrb[0].mxu0
    %v1607 = vadd.f32 0.0, %v1606
    %v1608 = vpop.f32.mrb[0].mxu0
    %1609 = vmatprep.mubr.f32.mxu0 0.0
    %1610 = vmatmul.mubr.f32.gmra.mrb[0].mxu0 %v1524
    %v1611 = vpop.f32.mrb[0].mxu0
    %v1612 = vadd.f32 0.0, %v1611
    %v1613 = vpop.f32.mrb[0].mxu0
    %1614 = vmatprep.mubr.f32.mxu0 0.0
    %1615 = vmatmul.mubr.f32.gmra.mrb[0].mxu0 %v1527
    %v1616 = vpop.f32.mrb[0].mxu0
    %v1617 = vadd.f32 0.0, %v1616
    %v1618 = vpop.f32.mrb[0].mxu0
    %1619 = vmatprep.mubr.f32.mxu0 0.0
    %1620 = vmatmul.mubr.f32.gmra.mrb[0].mxu0 %v1530
    %v1621 = vpop.f32.mrb[0].mxu0
    %v1622 = vadd.f32 0.0, %v1621
    %v1623 = vpop.f32.mrb[0].mxu0
    %1624 = vmatprep.mubr.f32.mxu0 0.0
    %1625 = vmatmul.mubr.f32.gmra.mrb[0].mxu0 %v1533
    %v1626 = vpop.f32.mrb[0].mxu0
    %v1627 = vadd.f32 0.0, %v1626
    %v1628 = vpop.f32.mrb[0].mxu0
    %1629 = vdwg.mxu0
    %v1631 = vsel %vm593, %v876, 0
    %v1634 = vsel %vm593, %v881, 0
    %v1637 = vsel %vm593, %v886, 0
    %v1640 = vsel %vm593, %v891, 0
    %v1643 = vsel %vm593, %v896, 0
    %v1646 = vsel %vm593, %v901, 0
    %1648 = vmatprep.subr.mxu0 0.0
    %1649 = vmatpush1.msra.mxu0 %v904
    %1650 = vmatprep.subr.mxu0 0.0
    %1651 = vmatpush1.msra.mxu0 0.0
    %1652 = vmatprep.subr.mxu0 0.0
    %1653 = vmatpush1.msra.mxu0 0.0
    %1654 = vmatprep.subr.mxu0 0.0
    %1655 = vmatpush1.msra.mxu0 0.0
    %1656 = vmatprep.subr.mxu0 0.0
    %1657 = vmatpush1.msra.mxu0 0.0
    %1658 = vmatprep.subr.mxu0 0.0
    %1659 = vmatpush1.msra.mxu0 0.0
    %1660 = vmatprep.subr.mxu0 0.0
    %1661 = vmatpush1.msra.mxu0 0.0
    %1662 = vmatprep.subr.mxu0 0.0
    %1663 = vmatpush1.msra.mxu0 0.0
    %1664 = vmatprep.subr.mxu0 0.0
    %1665 = vmatpush1.msra.mxu0 0.0
    %1666 = vmatprep.subr.mxu0 0.0
    %1667 = vmatpush1.msra.mxu0 0.0
    %1668 = vmatprep.subr.mxu0 0.0
    %1669 = vmatpush1.msra.mxu0 0.0
    %1670 = vmatprep.subr.mxu0 0.0
    %1671 = vmatpush1.msra.mxu0 0.0
    %1672 = vmatprep.subr.mxu0 0.0
    %1673 = vmatpush1.msra.mxu0 0.0
    %1674 = vmatprep.subr.mxu0 0.0
    %1675 = vmatpush1.msra.mxu0 0.0
    %1676 = vmatprep.subr.mxu0 0.0
    %1677 = vmatpush1.msra.mxu0 0.0
    %1678 = vmatprep.subr.mxu0 0.0
    %1679 = vmatpush1.msra.mxu0 0.0
    %1680 = vmatprep.subr.mxu0 0.0
    %1681 = vmatpush1.msra.mxu0 0.0
    %1682 = vmatprep.subr.mxu0 0.0
    %1683 = vmatpush1.msra.mxu0 0.0
    %1684 = vmatprep.subr.mxu0 0.0
    %1685 = vmatpush1.msra.mxu0 0.0
    %1686 = vmatprep.subr.mxu0 0.0
    %1687 = vmatpush1.msra.mxu0 0.0
    %1688 = vmatprep.subr.mxu0 0.0
    %1689 = vmatpush1.msra.mxu0 0.0
    %1690 = vmatprep.subr.mxu0 0.0
    %1691 = vmatpush1.msra.mxu0 0.0
    %1692 = vmatprep.subr.mxu0 0.0
    %1693 = vmatpush1.msra.mxu0 0.0
    %1694 = vmatprep.subr.mxu0 0.0
    %1695 = vmatpush1.msra.mxu0 0.0
    %1696 = vmatprep.subr.mxu0 0.0
    %1697 = vmatpush1.msra.mxu0 0.0
    %1698 = vmatprep.subr.mxu0 0.0
    %1699 = vmatpush1.msra.mxu0 0.0
    %1700 = vmatprep.subr.mxu0 0.0
    %1701 = vmatpush1.msra.mxu0 0.0
    %1702 = vmatprep.subr.mxu0 0.0
    %1703 = vmatpush1.msra.mxu0 0.0
    %1704 = vmatprep.subr.mxu0 0.0
    %1705 = vmatpush1.msra.mxu0 0.0
    %1706 = vmatprep.subr.mxu0 0.0
    %1707 = vmatpush1.msra.mxu0 0.0
    %1708 = vmatprep.subr.mxu0 0.0
    %1709 = vmatpush1.msra.mxu0 0.0
    %1710 = vmatprep.subr.mxu0 0.0
    %1711 = vmatpush1.msra.mxu0 0.0
    %1712 = vmatprep.mubr.f32.mxu0 0.0
    %1713 = vmatmul.mubr.f32.gmra.mrb[0].mxu0 %v1631
    %v1714 = vpop.f32.mrb[0].mxu0
    %v1715 = vadd.f32 %v1602, %v1714
    %v1716 = vpop.f32.mrb[0].mxu0
    %1717 = vmatprep.mubr.f32.mxu0 0.0
    %1718 = vmatmul.mubr.f32.gmra.mrb[0].mxu0 %v1634
    %v1719 = vpop.f32.mrb[0].mxu0
    %v1720 = vadd.f32 %v1607, %v1719
    %v1721 = vpop.f32.mrb[0].mxu0
    %1722 = vmatprep.mubr.f32.mxu0 0.0
    %1723 = vmatmul.mubr.f32.gmra.mrb[0].mxu0 %v1637
    %v1724 = vpop.f32.mrb[0].mxu0
    %v1725 = vadd.f32 %v1612, %v1724
    %v1726 = vpop.f32.mrb[0].mxu0
    %1727 = vmatprep.mubr.f32.mxu0 0.0
    %1728 = vmatmul.mubr.f32.gmra.mrb[0].mxu0 %v1640
    %v1729 = vpop.f32.mrb[0].mxu0
    %v1730 = vadd.f32 %v1617, %v1729
    %v1731 = vpop.f32.mrb[0].mxu0
    %1732 = vmatprep.mubr.f32.mxu0 0.0
    %1733 = vmatmul.mubr.f32.gmra.mrb[0].mxu0 %v1643
    %v1734 = vpop.f32.mrb[0].mxu0
    %v1735 = vadd.f32 %v1622, %v1734
    %v1736 = vpop.f32.mrb[0].mxu0
    %1737 = vmatprep.mubr.f32.mxu0 0.0
    %1738 = vmatmul.mubr.f32.gmra.mrb[0].mxu0 %v1646
    %v1739 = vpop.f32.mrb[0].mxu0
    %v1740 = vadd.f32 %v1627, %v1739
    %v1741 = vpop.f32.mrb[0].mxu0
    %1742 = vdwg.mxu0
    %s1743 = scalar_lea.vmem %s4, 64
    %v1744 = vld [vmem:[%s1743] sm:$0xff]
    %v1745 = vld [vmem:[%s1743 + $0x8] sm:$0xff]
    %v1746 = vld [vmem:[%s1743 + $0x10] sm:$0xff]
    %v1747 = vld [vmem:[%s1743 + $0x18] sm:$0xff]
    %1748 = vmatprep.subr.mxu0 0.0
    %1749 = vmatpush1.msra.mxu0 %v1744
    %1750 = vmatprep.subr.mxu0 0.0
    %1751 = vmatpush1.msra.mxu0 %v1745
    %1752 = vmatprep.subr.mxu0 0.0
    %1753 = vmatpush1.msra.mxu0 %v1746
    %1754 = vmatprep.subr.mxu0 0.0
    %1755 = vmatpush1.msra.mxu0 %v1747
    %1756 = vmatprep.subr.mxu0 0.0
    %1757 = vmatpush1.msra.mxu0 0.0
    %1758 = vmatprep.subr.mxu0 0.0
    %1759 = vmatpush1.msra.mxu0 0.0
    %1760 = vmatprep.subr.mxu0 0.0
    %1761 = vmatpush1.msra.mxu0 0.0
    %1762 = vmatprep.subr.mxu0 0.0
    %1763 = vmatpush1.msra.mxu0 0.0
    %1764 = vmatprep.subr.mxu0 0.0
    %1765 = vmatpush1.msra.mxu0 0.0
    %1766 = vmatprep.subr.mxu0 0.0
    %1767 = vmatpush1.msra.mxu0 0.0
    %1768 = vmatprep.subr.mxu0 0.0
    %1769 = vmatpush1.msra.mxu0 0.0
    %1770 = vmatprep.subr.mxu0 0.0
    %1771 = vmatpush1.msra.mxu0 0.0
    %1772 = vmatprep.subr.mxu0 0.0
    %1773 = vmatpush1.msra.mxu0 0.0
    %1774 = vmatprep.subr.mxu0 0.0
    %1775 = vmatpush1.msra.mxu0 0.0
    %1776 = vmatprep.subr.mxu0 0.0
    %1777 = vmatpush1.msra.mxu0 0.0
    %1778 = vmatprep.subr.mxu0 0.0
    %1779 = vmatpush1.msra.mxu0 0.0
    %1780 = vmatprep.subr.mxu0 0.0
    %1781 = vmatpush1.msra.mxu0 0.0
    %1782 = vmatprep.subr.mxu0 0.0
    %1783 = vmatpush1.msra.mxu0 0.0
    %1784 = vmatprep.subr.mxu0 0.0
    %1785 = vmatpush1.msra.mxu0 0.0
    %1786 = vmatprep.subr.mxu0 0.0
    %1787 = vmatpush1.msra.mxu0 0.0
    %1788 = vmatprep.subr.mxu0 0.0
    %1789 = vmatpush1.msra.mxu0 0.0
    %1790 = vmatprep.subr.mxu0 0.0
    %1791 = vmatpush1.msra.mxu0 0.0
    %1792 = vmatprep.subr.mxu0 0.0
    %1793 = vmatpush1.msra.mxu0 0.0
    %1794 = vmatprep.subr.mxu0 0.0
    %1795 = vmatpush1.msra.mxu0 0.0
    %1796 = vmatprep.subr.mxu0 0.0
    %1797 = vmatpush1.msra.mxu0 0.0
    %1798 = vmatprep.subr.mxu0 0.0
    %1799 = vmatpush1.msra.mxu0 0.0
    %1800 = vmatprep.subr.mxu0 0.0
    %1801 = vmatpush1.msra.mxu0 0.0
    %1802 = vmatprep.subr.mxu0 0.0
    %1803 = vmatpush1.msra.mxu0 0.0
    %1804 = vmatprep.subr.mxu0 0.0
    %1805 = vmatpush1.msra.mxu0 0.0
    %1806 = vmatprep.subr.mxu0 0.0
    %1807 = vmatpush1.msra.mxu0 0.0
    %1808 = vmatprep.subr.mxu0 0.0
    %1809 = vmatpush1.msra.mxu0 0.0
    %1810 = vmatprep.subr.mxu0 0.0
    %1811 = vmatpush1.msra.mxu0 0.0
    %1812 = vmatprep.mubr.f32.mxu0 0.0
    %1813 = vmatmul.mubr.f32.gmra.mrb[0].mxu0 %v281
    %v1814 = vpop.f32.mrb[0].mxu0
    %v1815 = vadd.f32 0.0, %v1814
    %v1816 = vpop.f32.mrb[0].mxu0
    %1817 = vmatprep.mubr.f32.mxu0 0.0
    %1818 = vmatmul.mubr.f32.gmra.mrb[0].mxu0 %v284
    %v1819 = vpop.f32.mrb[0].mxu0
    %v1820 = vadd.f32 0.0, %v1819
    %v1821 = vpop.f32.mrb[0].mxu0
    %1822 = vmatprep.mubr.f32.mxu0 0.0
    %1823 = vmatmul.mubr.f32.gmra.mrb[0].mxu0 %v287
    %v1824 = vpop.f32.mrb[0].mxu0
    %v1825 = vadd.f32 0.0, %v1824
    %v1826 = vpop.f32.mrb[0].mxu0
    %1827 = vmatprep.mubr.f32.mxu0 0.0
    %1828 = vmatmul.mubr.f32.gmra.mrb[0].mxu0 %v290
    %v1829 = vpop.f32.mrb[0].mxu0
    %v1830 = vadd.f32 0.0, %v1829
    %v1831 = vpop.f32.mrb[0].mxu0
    %1832 = vmatprep.mubr.f32.mxu0 0.0
    %1833 = vmatmul.mubr.f32.gmra.mrb[0].mxu0 %v293
    %v1834 = vpop.f32.mrb[0].mxu0
    %v1835 = vadd.f32 0.0, %v1834
    %v1836 = vpop.f32.mrb[0].mxu0
    %1837 = vmatprep.mubr.f32.mxu0 0.0
    %1838 = vmatmul.mubr.f32.gmra.mrb[0].mxu0 %v296
    %v1839 = vpop.f32.mrb[0].mxu0
    %v1840 = vadd.f32 0.0, %v1839
    %v1841 = vpop.f32.mrb[0].mxu0
    %1842 = vdwg.mxu0
    %s1843 = scalar_lea.vmem %s4, 192
    %v1844 = vld [vmem:[%s1843] sm:$0xff]
    %v1845 = vld [vmem:[%s1843 + $0x8] sm:$0xff]
    %v1846 = vld [vmem:[%s1843 + $0x10] sm:$0xff]
    %v1847 = vld [vmem:[%s1843 + $0x18] sm:$0xff]
    %1848 = vmatprep.subr.mxu0 0.0
    %1849 = vmatpush1.msra.mxu0 %v1844
    %1850 = vmatprep.subr.mxu0 0.0
    %1851 = vmatpush1.msra.mxu0 %v1845
    %1852 = vmatprep.subr.mxu0 0.0
    %1853 = vmatpush1.msra.mxu0 %v1846
    %1854 = vmatprep.subr.mxu0 0.0
    %1855 = vmatpush1.msra.mxu0 %v1847
    %1856 = vmatprep.subr.mxu0 0.0
    %1857 = vmatpush1.msra.mxu0 0.0
    %1858 = vmatprep.subr.mxu0 0.0
    %1859 = vmatpush1.msra.mxu0 0.0
    %1860 = vmatprep.subr.mxu0 0.0
    %1861 = vmatpush1.msra.mxu0 0.0
    %1862 = vmatprep.subr.mxu0 0.0
    %1863 = vmatpush1.msra.mxu0 0.0
    %1864 = vmatprep.subr.mxu0 0.0
    %1865 = vmatpush1.msra.mxu0 0.0
    %1866 = vmatprep.subr.mxu0 0.0
    %1867 = vmatpush1.msra.mxu0 0.0
    %1868 = vmatprep.subr.mxu0 0.0
    %1869 = vmatpush1.msra.mxu0 0.0
    %1870 = vmatprep.subr.mxu0 0.0
    %1871 = vmatpush1.msra.mxu0 0.0
    %1872 = vmatprep.subr.mxu0 0.0
    %1873 = vmatpush1.msra.mxu0 0.0
    %1874 = vmatprep.subr.mxu0 0.0
    %1875 = vmatpush1.msra.mxu0 0.0
    %1876 = vmatprep.subr.mxu0 0.0
    %1877 = vmatpush1.msra.mxu0 0.0
    %1878 = vmatprep.subr.mxu0 0.0
    %1879 = vmatpush1.msra.mxu0 0.0
    %1880 = vmatprep.subr.mxu0 0.0
    %1881 = vmatpush1.msra.mxu0 0.0
    %1882 = vmatprep.subr.mxu0 0.0
    %1883 = vmatpush1.msra.mxu0 0.0
    %1884 = vmatprep.subr.mxu0 0.0
    %1885 = vmatpush1.msra.mxu0 0.0
    %1886 = vmatprep.subr.mxu0 0.0
    %1887 = vmatpush1.msra.mxu0 0.0
    %1888 = vmatprep.subr.mxu0 0.0
    %1889 = vmatpush1.msra.mxu0 0.0
    %1890 = vmatprep.subr.mxu0 0.0
    %1891 = vmatpush1.msra.mxu0 0.0
    %1892 = vmatprep.subr.mxu0 0.0
    %1893 = vmatpush1.msra.mxu0 0.0
    %1894 = vmatprep.subr.mxu0 0.0
    %1895 = vmatpush1.msra.mxu0 0.0
    %1896 = vmatprep.subr.mxu0 0.0
    %1897 = vmatpush1.msra.mxu0 0.0
    %1898 = vmatprep.subr.mxu0 0.0
    %1899 = vmatpush1.msra.mxu0 0.0
    %1900 = vmatprep.subr.mxu0 0.0
    %1901 = vmatpush1.msra.mxu0 0.0
    %1902 = vmatprep.subr.mxu0 0.0
    %1903 = vmatpush1.msra.mxu0 0.0
    %1904 = vmatprep.subr.mxu0 0.0
    %1905 = vmatpush1.msra.mxu0 0.0
    %1906 = vmatprep.subr.mxu0 0.0
    %1907 = vmatpush1.msra.mxu0 0.0
    %1908 = vmatprep.subr.mxu0 0.0
    %1909 = vmatpush1.msra.mxu0 0.0
    %1910 = vmatprep.subr.mxu0 0.0
    %1911 = vmatpush1.msra.mxu0 0.0
    %1912 = vmatprep.mubr.f32.mxu0 0.0
    %1913 = vmatmul.mubr.f32.gmra.mrb[0].mxu0 %v281
    %v1914 = vpop.f32.mrb[0].mxu0
    %v1915 = vadd.f32 0.0, %v1914
    %v1916 = vpop.f32.mrb[0].mxu0
    %1917 = vmatprep.mubr.f32.mxu0 0.0
    %1918 = vmatmul.mubr.f32.gmra.mrb[0].mxu0 %v284
    %v1919 = vpop.f32.mrb[0].mxu0
    %v1920 = vadd.f32 0.0, %v1919
    %v1921 = vpop.f32.mrb[0].mxu0
    %1922 = vmatprep.mubr.f32.mxu0 0.0
    %1923 = vmatmul.mubr.f32.gmra.mrb[0].mxu0 %v287
    %v1924 = vpop.f32.mrb[0].mxu0
    %v1925 = vadd.f32 0.0, %v1924
    %v1926 = vpop.f32.mrb[0].mxu0
    %1927 = vmatprep.mubr.f32.mxu0 0.0
    %1928 = vmatmul.mubr.f32.gmra.mrb[0].mxu0 %v290
    %v1929 = vpop.f32.mrb[0].mxu0
    %v1930 = vadd.f32 0.0, %v1929
    %v1931 = vpop.f32.mrb[0].mxu0
    %1932 = vmatprep.mubr.f32.mxu0 0.0
    %1933 = vmatmul.mubr.f32.gmra.mrb[0].mxu0 %v293
    %v1934 = vpop.f32.mrb[0].mxu0
    %v1935 = vadd.f32 0.0, %v1934
    %v1936 = vpop.f32.mrb[0].mxu0
    %1937 = vmatprep.mubr.f32.mxu0 0.0
    %1938 = vmatmul.mubr.f32.gmra.mrb[0].mxu0 %v296
    %v1939 = vpop.f32.mrb[0].mxu0
    %v1940 = vadd.f32 0.0, %v1939
    %v1941 = vpop.f32.mrb[0].mxu0
    %1942 = vdwg.mxu0
    %s1943 = scalar_lea.vmem %s4, 320
    %v1944 = vld [vmem:[%s1943] sm:$0xff]
    %v1945 = vld [vmem:[%s1943 + $0x8] sm:$0xff]
    %v1946 = vld [vmem:[%s1943 + $0x10] sm:$0xff]
    %v1947 = vld [vmem:[%s1943 + $0x18] sm:$0xff]
    %1948 = vmatprep.subr.mxu0 0.0
    %1949 = vmatpush1.msra.mxu0 %v1944
    %1950 = vmatprep.subr.mxu0 0.0
    %1951 = vmatpush1.msra.mxu0 %v1945
    %1952 = vmatprep.subr.mxu0 0.0
    %1953 = vmatpush1.msra.mxu0 %v1946
    %1954 = vmatprep.subr.mxu0 0.0
    %1955 = vmatpush1.msra.mxu0 %v1947
    %1956 = vmatprep.subr.mxu0 0.0
    %1957 = vmatpush1.msra.mxu0 0.0
    %1958 = vmatprep.subr.mxu0 0.0
    %1959 = vmatpush1.msra.mxu0 0.0
    %1960 = vmatprep.subr.mxu0 0.0
    %1961 = vmatpush1.msra.mxu0 0.0
    %1962 = vmatprep.subr.mxu0 0.0
    %1963 = vmatpush1.msra.mxu0 0.0
    %1964 = vmatprep.subr.mxu0 0.0
    %1965 = vmatpush1.msra.mxu0 0.0
    %1966 = vmatprep.subr.mxu0 0.0
    %1967 = vmatpush1.msra.mxu0 0.0
    %1968 = vmatprep.subr.mxu0 0.0
    %1969 = vmatpush1.msra.mxu0 0.0
    %1970 = vmatprep.subr.mxu0 0.0
    %1971 = vmatpush1.msra.mxu0 0.0
    %1972 = vmatprep.subr.mxu0 0.0
    %1973 = vmatpush1.msra.mxu0 0.0
    %1974 = vmatprep.subr.mxu0 0.0
    %1975 = vmatpush1.msra.mxu0 0.0
    %1976 = vmatprep.subr.mxu0 0.0
    %1977 = vmatpush1.msra.mxu0 0.0
    %1978 = vmatprep.subr.mxu0 0.0
    %1979 = vmatpush1.msra.mxu0 0.0
    %1980 = vmatprep.subr.mxu0 0.0
    %1981 = vmatpush1.msra.mxu0 0.0
    %1982 = vmatprep.subr.mxu0 0.0
    %1983 = vmatpush1.msra.mxu0 0.0
    %1984 = vmatprep.subr.mxu0 0.0
    %1985 = vmatpush1.msra.mxu0 0.0
    %1986 = vmatprep.subr.mxu0 0.0
    %1987 = vmatpush1.msra.mxu0 0.0
    %1988 = vmatprep.subr.mxu0 0.0
    %1989 = vmatpush1.msra.mxu0 0.0
    %1990 = vmatprep.subr.mxu0 0.0
    %1991 = vmatpush1.msra.mxu0 0.0
    %1992 = vmatprep.subr.mxu0 0.0
    %1993 = vmatpush1.msra.mxu0 0.0
    %1994 = vmatprep.subr.mxu0 0.0
    %1995 = vmatpush1.msra.mxu0 0.0
    %1996 = vmatprep.subr.mxu0 0.0
    %1997 = vmatpush1.msra.mxu0 0.0
    %1998 = vmatprep.subr.mxu0 0.0
    %1999 = vmatpush1.msra.mxu0 0.0
    %2000 = vmatprep.subr.mxu0 0.0
    %2001 = vmatpush1.msra.mxu0 0.0
    %2002 = vmatprep.subr.mxu0 0.0
    %2003 = vmatpush1.msra.mxu0 0.0
    %2004 = vmatprep.subr.mxu0 0.0
    %2005 = vmatpush1.msra.mxu0 0.0
    %2006 = vmatprep.subr.mxu0 0.0
    %2007 = vmatpush1.msra.mxu0 0.0
    %2008 = vmatprep.subr.mxu0 0.0
    %2009 = vmatpush1.msra.mxu0 0.0
    %2010 = vmatprep.subr.mxu0 0.0
    %2011 = vmatpush1.msra.mxu0 0.0
    %2012 = vmatprep.mubr.f32.mxu0 0.0
    %2013 = vmatmul.mubr.f32.gmra.mrb[0].mxu0 %v281
    %v2014 = vpop.f32.mrb[0].mxu0
    %v2015 = vadd.f32 0.0, %v2014
    %v2016 = vpop.f32.mrb[0].mxu0
    %2017 = vmatprep.mubr.f32.mxu0 0.0
    %2018 = vmatmul.mubr.f32.gmra.mrb[0].mxu0 %v284
    %v2019 = vpop.f32.mrb[0].mxu0
    %v2020 = vadd.f32 0.0, %v2019
    %v2021 = vpop.f32.mrb[0].mxu0
    %2022 = vmatprep.mubr.f32.mxu0 0.0
    %2023 = vmatmul.mubr.f32.gmra.mrb[0].mxu0 %v287
    %v2024 = vpop.f32.mrb[0].mxu0
    %v2025 = vadd.f32 0.0, %v2024
    %v2026 = vpop.f32.mrb[0].mxu0
    %2027 = vmatprep.mubr.f32.mxu0 0.0
    %2028 = vmatmul.mubr.f32.gmra.mrb[0].mxu0 %v290
    %v2029 = vpop.f32.mrb[0].mxu0
    %v2030 = vadd.f32 0.0, %v2029
    %v2031 = vpop.f32.mrb[0].mxu0
    %2032 = vmatprep.mubr.f32.mxu0 0.0
    %2033 = vmatmul.mubr.f32.gmra.mrb[0].mxu0 %v293
    %v2034 = vpop.f32.mrb[0].mxu0
    %v2035 = vadd.f32 0.0, %v2034
    %v2036 = vpop.f32.mrb[0].mxu0
    %2037 = vmatprep.mubr.f32.mxu0 0.0
    %2038 = vmatmul.mubr.f32.gmra.mrb[0].mxu0 %v296
    %v2039 = vpop.f32.mrb[0].mxu0
    %v2040 = vadd.f32 0.0, %v2039
    %v2041 = vpop.f32.mrb[0].mxu0
    %2042 = vdwg.mxu0
    %v2044 = vsel %vm593, %v1815, 0
    %v2047 = vsel %vm593, %v1820, 0
    %v2050 = vsel %vm593, %v1825, 0
    %v2053 = vsel %vm593, %v1830, 0
    %v2056 = vsel %vm593, %v1835, 0
    %v2059 = vsel %vm593, %v1840, 0
    %v2062 = vsel %vm593, %v1915, 0
    %v2065 = vsel %vm593, %v1920, 0
    %v2068 = vsel %vm593, %v1925, 0
    %v2071 = vsel %vm593, %v1930, 0
    %v2074 = vsel %vm593, %v1935, 0
    %v2077 = vsel %vm593, %v1940, 0
    %2079 = vmatprep.subr.mxu0 0.0
    %2080 = vmatpush1.xpose.msra.mxu0 %v2062
    %2081 = vmatprep.subr.mxu0 0.0
    %2082 = vmatpush1.xpose.msra.mxu0 %v2065
    %2083 = vmatprep.subr.mxu0 0.0
    %2084 = vmatpush1.xpose.msra.mxu0 %v2068
    %2085 = vmatprep.subr.mxu0 0.0
    %2086 = vmatpush1.xpose.msra.mxu0 %v2071
    %2087 = vmatprep.subr.mxu0 0.0
    %2088 = vmatpush1.xpose.msra.mxu0 %v2074
    %2089 = vmatprep.subr.mxu0 0.0
    %2090 = vmatpush1.xpose.msra.mxu0 %v2077
    %2091 = vmatprep.subr.mxu0 0.0
    %2092 = vmatpush1.xpose.msra.mxu0 0.0
    %2093 = vmatprep.subr.mxu0 0.0
    %2094 = vmatpush1.xpose.msra.mxu0 0.0
    %2095 = vmatprep.subr.mxu0 0.0
    %2096 = vmatpush1.xpose.msra.mxu0 0.0
    %2097 = vmatprep.subr.mxu0 0.0
    %2098 = vmatpush1.xpose.msra.mxu0 0.0
    %2099 = vmatprep.subr.mxu0 0.0
    %2100 = vmatpush1.xpose.msra.mxu0 0.0
    %2101 = vmatprep.subr.mxu0 0.0
    %2102 = vmatpush1.xpose.msra.mxu0 0.0
    %2103 = vmatprep.subr.mxu0 0.0
    %2104 = vmatpush1.xpose.msra.mxu0 0.0
    %2105 = vmatprep.subr.mxu0 0.0
    %2106 = vmatpush1.xpose.msra.mxu0 0.0
    %2107 = vmatprep.subr.mxu0 0.0
    %2108 = vmatpush1.xpose.msra.mxu0 0.0
    %2109 = vmatprep.subr.mxu0 0.0
    %2110 = vmatpush1.xpose.msra.mxu0 0.0
    %2111 = vmatprep.subr.mxu0 0.0
    %2112 = vmatpush1.xpose.msra.mxu0 0.0
    %2113 = vmatprep.subr.mxu0 0.0
    %2114 = vmatpush1.xpose.msra.mxu0 0.0
    %2115 = vmatprep.subr.mxu0 0.0
    %2116 = vmatpush1.xpose.msra.mxu0 0.0
    %2117 = vmatprep.subr.mxu0 0.0
    %2118 = vmatpush1.xpose.msra.mxu0 0.0
    %2119 = vmatprep.subr.mxu0 0.0
    %2120 = vmatpush1.xpose.msra.mxu0 0.0
    %2121 = vmatprep.subr.mxu0 0.0
    %2122 = vmatpush1.xpose.msra.mxu0 0.0
    %2123 = vmatprep.subr.mxu0 0.0
    %2124 = vmatpush1.xpose.msra.mxu0 0.0
    %2125 = vmatprep.subr.mxu0 0.0
    %2126 = vmatpush1.xpose.msra.mxu0 0.0
    %2127 = vmatprep.subr.mxu0 0.0
    %2128 = vmatpush1.xpose.msra.mxu0 0.0
    %2129 = vmatprep.subr.mxu0 0.0
    %2130 = vmatpush1.xpose.msra.mxu0 0.0
    %2131 = vmatprep.subr.mxu0 0.0
    %2132 = vmatpush1.xpose.msra.mxu0 0.0
    %2133 = vmatprep.subr.mxu0 0.0
    %2134 = vmatpush1.xpose.msra.mxu0 0.0
    %2135 = vmatprep.subr.mxu0 0.0
    %2136 = vmatpush1.xpose.msra.mxu0 0.0
    %2137 = vmatprep.subr.mxu0 0.0
    %2138 = vmatpush1.xpose.msra.mxu0 0.0
    %2139 = vmatprep.subr.mxu0 0.0
    %2140 = vmatpush1.xpose.msra.mxu0 0.0
    %2141 = vmatprep.subr.mxu0 0.0
    %2142 = vmatpush1.xpose.msra.mxu0 0.0
    %2143 = vmatprep.mubr.f32.mxu0 0.0
    %2144 = vmatmul.mubr.f32.gmra.mrb[0].mxu0 %v2044
    %v2145 = vpop.f32.mrb[0].mxu0
    %v2146 = vadd.f32 %v168, %v2145
    %v2147 = vpop.f32.mrb[0].mxu0
    %2148 = vmatprep.mubr.f32.mxu0 0.0
    %2149 = vmatmul.mubr.f32.gmra.mrb[0].mxu0 %v2047
    %v2150 = vpop.f32.mrb[0].mxu0
    %v2151 = vadd.f32 %v169, %v2150
    %v2152 = vpop.f32.mrb[0].mxu0
    %2153 = vmatprep.mubr.f32.mxu0 0.0
    %2154 = vmatmul.mubr.f32.gmra.mrb[0].mxu0 %v2050
    %v2155 = vpop.f32.mrb[0].mxu0
    %v2156 = vadd.f32 %v170, %v2155
    %v2157 = vpop.f32.mrb[0].mxu0
    %2158 = vmatprep.mubr.f32.mxu0 0.0
    %2159 = vmatmul.mubr.f32.gmra.mrb[0].mxu0 %v2053
    %v2160 = vpop.f32.mrb[0].mxu0
    %v2161 = vadd.f32 %v171, %v2160
    %v2162 = vpop.f32.mrb[0].mxu0
    %2163 = vmatprep.mubr.f32.mxu0 0.0
    %2164 = vmatmul.mubr.f32.gmra.mrb[0].mxu0 %v2056
    %v2165 = vpop.f32.mrb[0].mxu0
    %v2166 = vadd.f32 %v172, %v2165
    %v2167 = vpop.f32.mrb[0].mxu0
    %2168 = vmatprep.mubr.f32.mxu0 0.0
    %2169 = vmatmul.mubr.f32.gmra.mrb[0].mxu0 %v2059
    %v2170 = vpop.f32.mrb[0].mxu0
    %v2171 = vadd.f32 %v173, %v2170
    %v2172 = vpop.f32.mrb[0].mxu0
    %2173 = vdwg.mxu0
    %v2174 = vsel %vm54, %v2146, -inf
    %2175 = vmax.xlane.f32.xlu0 %v2174
    %v2176 = vpop.xlane.xlu0 %2175
    %v2177 = vsel %vm54, %v2151, -inf
    %2178 = vmax.xlane.f32.xlu0 %v2177
    %v2179 = vpop.xlane.xlu0 %2178
    %v2180 = vsel %vm54, %v2156, -inf
    %2181 = vmax.xlane.f32.xlu0 %v2180
    %v2182 = vpop.xlane.xlu0 %2181
    %v2183 = vsel %vm54, %v2161, -inf
    %2184 = vmax.xlane.f32.xlu0 %v2183
    %v2185 = vpop.xlane.xlu0 %2184
    %v2186 = vsel %vm54, %v2166, -inf
    %2187 = vmax.xlane.f32.xlu0 %v2186
    %v2188 = vpop.xlane.xlu0 %2187
    %v2189 = vsel %vm54, %v2171, -inf
    %2190 = vmax.xlane.f32.xlu0 %v2189
    %v2191 = vpop.xlane.xlu0 %2190
    %v2192 = vsub.f32 %v2146, %v2176
    %v2193 = vsub.f32 %v2151, %v2179
    %v2194 = vsub.f32 %v2156, %v2182
    %v2195 = vsub.f32 %v2161, %v2185
    %v2196 = vsub.f32 %v2166, %v2188
    %v2197 = vsub.f32 %v2171, %v2191
    %v2198 = vmul.f32 %v2192, 1.442695
    %v2199 = vpow.pop %v2198
    %v2200 = vmul.f32 %v2193, 1.442695
    %v2201 = vpow.pop %v2200
    %v2202 = vmul.f32 %v2194, 1.442695
    %v2203 = vpow.pop %v2202
    %v2204 = vmul.f32 %v2195, 1.442695
    %v2205 = vpow.pop %v2204
    %v2206 = vmul.f32 %v2196, 1.442695
    %v2207 = vpow.pop %v2206
    %v2208 = vmul.f32 %v2197, 1.442695
    %v2209 = vpow.pop %v2208
    %v2210 = vsel %vm54, %v2199, 0.0
    %2211 = vadd.xlane.f32.xlu0 %v2210
    %v2212 = vpop.xlane.xlu0 %2211
    %v2213 = vsel %vm54, %v2201, 0.0
    %2214 = vadd.xlane.f32.xlu0 %v2213
    %v2215 = vpop.xlane.xlu0 %2214
    %v2216 = vsel %vm54, %v2203, 0.0
    %2217 = vadd.xlane.f32.xlu0 %v2216
    %v2218 = vpop.xlane.xlu0 %2217
    %v2219 = vsel %vm54, %v2205, 0.0
    %2220 = vadd.xlane.f32.xlu0 %v2219
    %v2221 = vpop.xlane.xlu0 %2220
    %v2222 = vsel %vm54, %v2207, 0.0
    %2223 = vadd.xlane.f32.xlu0 %v2222
    %v2224 = vpop.xlane.xlu0 %2223
    %v2225 = vsel %vm54, %v2209, 0.0
    %2226 = vadd.xlane.f32.xlu0 %v2225
    %v2227 = vpop.xlane.xlu0 %2226
    %v2228 = vrcp.pop %v2212
    %v2229 = vrcp.pop %v2215
    %v2230 = vrcp.pop %v2218
    %v2231 = vrcp.pop %v2221
    %v2232 = vrcp.pop %v2224
    %v2233 = vrcp.pop %v2227
    %v2234 = vmul.f32 %v2199, %v2228
    %v2235 = vmul.f32 %v2201, %v2229
    %v2236 = vmul.f32 %v2203, %v2230
    %v2237 = vmul.f32 %v2205, %v2231
    %v2238 = vmul.f32 %v2207, %v2232
    %v2239 = vmul.f32 %v2209, %v2233
    %v2241 = vsel %vm54, %v2234, 0
    %v2244 = vsel %vm54, %v2235, 0
    %v2247 = vsel %vm54, %v2236, 0
    %v2250 = vsel %vm54, %v2237, 0
    %v2253 = vsel %vm54, %v2238, 0
    %v2256 = vsel %vm54, %v2239, 0
    %2258 = vmatprep.subr.mxu0 0.0
    %2259 = vmatpush1.msra.mxu0 %v2015
    %2260 = vmatprep.subr.mxu0 0.0
    %2261 = vmatpush1.msra.mxu0 %v2020
    %2262 = vmatprep.subr.mxu0 0.0
    %2263 = vmatpush1.msra.mxu0 %v2025
    %2264 = vmatprep.subr.mxu0 0.0
    %2265 = vmatpush1.msra.mxu0 %v2030
    %2266 = vmatprep.subr.mxu0 0.0
    %2267 = vmatpush1.msra.mxu0 %v2035
    %2268 = vmatprep.subr.mxu0 0.0
    %2269 = vmatpush1.msra.mxu0 %v2040
    %2270 = vmatprep.subr.mxu0 0.0
    %2271 = vmatpush1.msra.mxu0 0.0
    %2272 = vmatprep.subr.mxu0 0.0
    %2273 = vmatpush1.msra.mxu0 0.0
    %2274 = vmatprep.subr.mxu0 0.0
    %2275 = vmatpush1.msra.mxu0 0.0
    %2276 = vmatprep.subr.mxu0 0.0
    %2277 = vmatpush1.msra.mxu0 0.0
    %2278 = vmatprep.subr.mxu0 0.0
    %2279 = vmatpush1.msra.mxu0 0.0
    %2280 = vmatprep.subr.mxu0 0.0
    %2281 = vmatpush1.msra.mxu0 0.0
    %2282 = vmatprep.subr.mxu0 0.0
    %2283 = vmatpush1.msra.mxu0 0.0
    %2284 = vmatprep.subr.mxu0 0.0
    %2285 = vmatpush1.msra.mxu0 0.0
    %2286 = vmatprep.subr.mxu0 0.0
    %2287 = vmatpush1.msra.mxu0 0.0
    %2288 = vmatprep.subr.mxu0 0.0
    %2289 = vmatpush1.msra.mxu0 0.0
    %2290 = vmatprep.subr.mxu0 0.0
    %2291 = vmatpush1.msra.mxu0 0.0
    %2292 = vmatprep.subr.mxu0 0.0
    %2293 = vmatpush1.msra.mxu0 0.0
    %2294 = vmatprep.subr.mxu0 0.0
    %2295 = vmatpush1.msra.mxu0 0.0
    %2296 = vmatprep.subr.mxu0 0.0
    %2297 = vmatpush1.msra.mxu0 0.0
    %2298 = vmatprep.subr.mxu0 0.0
    %2299 = vmatpush1.msra.mxu0 0.0
    %2300 = vmatprep.subr.mxu0 0.0
    %2301 = vmatpush1.msra.mxu0 0.0
    %2302 = vmatprep.subr.mxu0 0.0
    %2303 = vmatpush1.msra.mxu0 0.0
    %2304 = vmatprep.subr.mxu0 0.0
    %2305 = vmatpush1.msra.mxu0 0.0
    %2306 = vmatprep.subr.mxu0 0.0
    %2307 = vmatpush1.msra.mxu0 0.0
    %2308 = vmatprep.subr.mxu0 0.0
    %2309 = vmatpush1.msra.mxu0 0.0
    %2310 = vmatprep.subr.mxu0 0.0
    %2311 = vmatpush1.msra.mxu0 0.0
    %2312 = vmatprep.subr.mxu0 0.0
    %2313 = vmatpush1.msra.mxu0 0.0
    %2314 = vmatprep.subr.mxu0 0.0
    %2315 = vmatpush1.msra.mxu0 0.0
    %2316 = vmatprep.subr.mxu0 0.0
    %2317 = vmatpush1.msra.mxu0 0.0
    %2318 = vmatprep.subr.mxu0 0.0
    %2319 = vmatpush1.msra.mxu0 0.0
    %2320 = vmatprep.subr.mxu0 0.0
    %2321 = vmatpush1.msra.mxu0 0.0
    %2322 = vmatprep.mubr.f32.mxu0 0.0
    %2323 = vmatmul.mubr.f32.gmra.mrb[0].mxu0 %v2241
    %v2324 = vpop.f32.mrb[0].mxu0
    %v2325 = vadd.f32 0.0, %v2324
    %v2326 = vpop.f32.mrb[0].mxu0
    %2327 = vmatprep.mubr.f32.mxu0 0.0
    %2328 = vmatmul.mubr.f32.gmra.mrb[0].mxu0 %v2244
    %v2329 = vpop.f32.mrb[0].mxu0
    %v2330 = vadd.f32 0.0, %v2329
    %v2331 = vpop.f32.mrb[0].mxu0
    %2332 = vmatprep.mubr.f32.mxu0 0.0
    %2333 = vmatmul.mubr.f32.gmra.mrb[0].mxu0 %v2247
    %v2334 = vpop.f32.mrb[0].mxu0
    %v2335 = vadd.f32 0.0, %v2334
    %v2336 = vpop.f32.mrb[0].mxu0
    %2337 = vmatprep.mubr.f32.mxu0 0.0
    %2338 = vmatmul.mubr.f32.gmra.mrb[0].mxu0 %v2250
    %v2339 = vpop.f32.mrb[0].mxu0
    %v2340 = vadd.f32 0.0, %v2339
    %v2341 = vpop.f32.mrb[0].mxu0
    %2342 = vmatprep.mubr.f32.mxu0 0.0
    %2343 = vmatmul.mubr.f32.gmra.mrb[0].mxu0 %v2253
    %v2344 = vpop.f32.mrb[0].mxu0
    %v2345 = vadd.f32 0.0, %v2344
    %v2346 = vpop.f32.mrb[0].mxu0
    %2347 = vmatprep.mubr.f32.mxu0 0.0
    %2348 = vmatmul.mubr.f32.gmra.mrb[0].mxu0 %v2256
    %v2349 = vpop.f32.mrb[0].mxu0
    %v2350 = vadd.f32 0.0, %v2349
    %v2351 = vpop.f32.mrb[0].mxu0
    %2352 = vdwg.mxu0
    %s2353 = scalar_lea.vmem %s5, 16
    %v2354 = vld [vmem:[%s2353] sm:$0xff]
    %v2356 = vsel %vm593, %v2325, 0
    %v2359 = vsel %vm593, %v2330, 0
    %v2362 = vsel %vm593, %v2335, 0
    %v2365 = vsel %vm593, %v2340, 0
    %v2368 = vsel %vm593, %v2345, 0
    %v2371 = vsel %vm593, %v2350, 0
    %2373 = vmatprep.subr.mxu0 0.0
    %2374 = vmatpush1.msra.mxu0 %v2354
    %2375 = vmatprep.subr.mxu0 0.0
    %2376 = vmatpush1.msra.mxu0 0.0
    %2377 = vmatprep.subr.mxu0 0.0
    %2378 = vmatpush1.msra.mxu0 0.0
    %2379 = vmatprep.subr.mxu0 0.0
    %2380 = vmatpush1.msra.mxu0 0.0
    %2381 = vmatprep.subr.mxu0 0.0
    %2382 = vmatpush1.msra.mxu0 0.0
    %2383 = vmatprep.subr.mxu0 0.0
    %2384 = vmatpush1.msra.mxu0 0.0
    %2385 = vmatprep.subr.mxu0 0.0
    %2386 = vmatpush1.msra.mxu0 0.0
    %2387 = vmatprep.subr.mxu0 0.0
    %2388 = vmatpush1.msra.mxu0 0.0
    %2389 = vmatprep.subr.mxu0 0.0
    %2390 = vmatpush1.msra.mxu0 0.0
    %2391 = vmatprep.subr.mxu0 0.0
    %2392 = vmatpush1.msra.mxu0 0.0
    %2393 = vmatprep.subr.mxu0 0.0
    %2394 = vmatpush1.msra.mxu0 0.0
    %2395 = vmatprep.subr.mxu0 0.0
    %2396 = vmatpush1.msra.mxu0 0.0
    %2397 = vmatprep.subr.mxu0 0.0
    %2398 = vmatpush1.msra.mxu0 0.0
    %2399 = vmatprep.subr.mxu0 0.0
    %2400 = vmatpush1.msra.mxu0 0.0
    %2401 = vmatprep.subr.mxu0 0.0
    %2402 = vmatpush1.msra.mxu0 0.0
    %2403 = vmatprep.subr.mxu0 0.0
    %2404 = vmatpush1.msra.mxu0 0.0
    %2405 = vmatprep.subr.mxu0 0.0
    %2406 = vmatpush1.msra.mxu0 0.0
    %2407 = vmatprep.subr.mxu0 0.0
    %2408 = vmatpush1.msra.mxu0 0.0
    %2409 = vmatprep.subr.mxu0 0.0
    %2410 = vmatpush1.msra.mxu0 0.0
    %2411 = vmatprep.subr.mxu0 0.0
    %2412 = vmatpush1.msra.mxu0 0.0
    %2413 = vmatprep.subr.mxu0 0.0
    %2414 = vmatpush1.msra.mxu0 0.0
    %2415 = vmatprep.subr.mxu0 0.0
    %2416 = vmatpush1.msra.mxu0 0.0
    %2417 = vmatprep.subr.mxu0 0.0
    %2418 = vmatpush1.msra.mxu0 0.0
    %2419 = vmatprep.subr.mxu0 0.0
    %2420 = vmatpush1.msra.mxu0 0.0
    %2421 = vmatprep.subr.mxu0 0.0
    %2422 = vmatpush1.msra.mxu0 0.0
    %2423 = vmatprep.subr.mxu0 0.0
    %2424 = vmatpush1.msra.mxu0 0.0
    %2425 = vmatprep.subr.mxu0 0.0
    %2426 = vmatpush1.msra.mxu0 0.0
    %2427 = vmatprep.subr.mxu0 0.0
    %2428 = vmatpush1.msra.mxu0 0.0
    %2429 = vmatprep.subr.mxu0 0.0
    %2430 = vmatpush1.msra.mxu0 0.0
    %2431 = vmatprep.subr.mxu0 0.0
    %2432 = vmatpush1.msra.mxu0 0.0
    %2433 = vmatprep.subr.mxu0 0.0
    %2434 = vmatpush1.msra.mxu0 0.0
    %2435 = vmatprep.subr.mxu0 0.0
    %2436 = vmatpush1.msra.mxu0 0.0
    %2437 = vmatprep.mubr.f32.mxu0 0.0
    %2438 = vmatmul.mubr.f32.gmra.mrb[0].mxu0 %v2356
    %v2439 = vpop.f32.mrb[0].mxu0
    %v2440 = vadd.f32 0.0, %v2439
    %v2441 = vpop.f32.mrb[0].mxu0
    %2442 = vmatprep.mubr.f32.mxu0 0.0
    %2443 = vmatmul.mubr.f32.gmra.mrb[0].mxu0 %v2359
    %v2444 = vpop.f32.mrb[0].mxu0
    %v2445 = vadd.f32 0.0, %v2444
    %v2446 = vpop.f32.mrb[0].mxu0
    %2447 = vmatprep.mubr.f32.mxu0 0.0
    %2448 = vmatmul.mubr.f32.gmra.mrb[0].mxu0 %v2362
    %v2449 = vpop.f32.mrb[0].mxu0
    %v2450 = vadd.f32 0.0, %v2449
    %v2451 = vpop.f32.mrb[0].mxu0
    %2452 = vmatprep.mubr.f32.mxu0 0.0
    %2453 = vmatmul.mubr.f32.gmra.mrb[0].mxu0 %v2365
    %v2454 = vpop.f32.mrb[0].mxu0
    %v2455 = vadd.f32 0.0, %v2454
    %v2456 = vpop.f32.mrb[0].mxu0
    %2457 = vmatprep.mubr.f32.mxu0 0.0
    %2458 = vmatmul.mubr.f32.gmra.mrb[0].mxu0 %v2368
    %v2459 = vpop.f32.mrb[0].mxu0
    %v2460 = vadd.f32 0.0, %v2459
    %v2461 = vpop.f32.mrb[0].mxu0
    %2462 = vmatprep.mubr.f32.mxu0 0.0
    %2463 = vmatmul.mubr.f32.gmra.mrb[0].mxu0 %v2371
    %v2464 = vpop.f32.mrb[0].mxu0
    %v2465 = vadd.f32 0.0, %v2464
    %v2466 = vpop.f32.mrb[0].mxu0
    %2467 = vdwg.mxu0
    %v2468 = vadd.f32 %v1715, %v2440
    %v2469 = vadd.f32 %v1720, %v2445
    %v2470 = vadd.f32 %v1725, %v2450
    %v2471 = vadd.f32 %v1730, %v2455
    %v2472 = vadd.f32 %v1735, %v2460
    %v2473 = vadd.f32 %v1740, %v2465
    %s2474 = scalar_lea.vmem %s4, 96
    %v2475 = vld [vmem:[%s2474] sm:$0xff]
    %v2476 = vld [vmem:[%s2474 + $0x8] sm:$0xff]
    %v2477 = vld [vmem:[%s2474 + $0x10] sm:$0xff]
    %v2478 = vld [vmem:[%s2474 + $0x18] sm:$0xff]
    %2479 = vmatprep.subr.mxu0 0.0
    %2480 = vmatpush1.msra.mxu0 %v2475
    %2481 = vmatprep.subr.mxu0 0.0
    %2482 = vmatpush1.msra.mxu0 %v2476
    %2483 = vmatprep.subr.mxu0 0.0
    %2484 = vmatpush1.msra.mxu0 %v2477
    %2485 = vmatprep.subr.mxu0 0.0
    %2486 = vmatpush1.msra.mxu0 %v2478
    %2487 = vmatprep.subr.mxu0 0.0
    %2488 = vmatpush1.msra.mxu0 0.0
    %2489 = vmatprep.subr.mxu0 0.0
    %2490 = vmatpush1.msra.mxu0 0.0
    %2491 = vmatprep.subr.mxu0 0.0
    %2492 = vmatpush1.msra.mxu0 0.0
    %2493 = vmatprep.subr.mxu0 0.0
    %2494 = vmatpush1.msra.mxu0 0.0
    %2495 = vmatprep.subr.mxu0 0.0
    %2496 = vmatpush1.msra.mxu0 0.0
    %2497 = vmatprep.subr.mxu0 0.0
    %2498 = vmatpush1.msra.mxu0 0.0
    %2499 = vmatprep.subr.mxu0 0.0
    %2500 = vmatpush1.msra.mxu0 0.0
    %2501 = vmatprep.subr.mxu0 0.0
    %2502 = vmatpush1.msra.mxu0 0.0
    %2503 = vmatprep.subr.mxu0 0.0
    %2504 = vmatpush1.msra.mxu0 0.0
    %2505 = vmatprep.subr.mxu0 0.0
    %2506 = vmatpush1.msra.mxu0 0.0
    %2507 = vmatprep.subr.mxu0 0.0
    %2508 = vmatpush1.msra.mxu0 0.0
    %2509 = vmatprep.subr.mxu0 0.0
    %2510 = vmatpush1.msra.mxu0 0.0
    %2511 = vmatprep.subr.mxu0 0.0
    %2512 = vmatpush1.msra.mxu0 0.0
    %2513 = vmatprep.subr.mxu0 0.0
    %2514 = vmatpush1.msra.mxu0 0.0
    %2515 = vmatprep.subr.mxu0 0.0
    %2516 = vmatpush1.msra.mxu0 0.0
    %2517 = vmatprep.subr.mxu0 0.0
    %2518 = vmatpush1.msra.mxu0 0.0
    %2519 = vmatprep.subr.mxu0 0.0
    %2520 = vmatpush1.msra.mxu0 0.0
    %2521 = vmatprep.subr.mxu0 0.0
    %2522 = vmatpush1.msra.mxu0 0.0
    %2523 = vmatprep.subr.mxu0 0.0
    %2524 = vmatpush1.msra.mxu0 0.0
    %2525 = vmatprep.subr.mxu0 0.0
    %2526 = vmatpush1.msra.mxu0 0.0
    %2527 = vmatprep.subr.mxu0 0.0
    %2528 = vmatpush1.msra.mxu0 0.0
    %2529 = vmatprep.subr.mxu0 0.0
    %2530 = vmatpush1.msra.mxu0 0.0
    %2531 = vmatprep.subr.mxu0 0.0
    %2532 = vmatpush1.msra.mxu0 0.0
    %2533 = vmatprep.subr.mxu0 0.0
    %2534 = vmatpush1.msra.mxu0 0.0
    %2535 = vmatprep.subr.mxu0 0.0
    %2536 = vmatpush1.msra.mxu0 0.0
    %2537 = vmatprep.subr.mxu0 0.0
    %2538 = vmatpush1.msra.mxu0 0.0
    %2539 = vmatprep.subr.mxu0 0.0
    %2540 = vmatpush1.msra.mxu0 0.0
    %2541 = vmatprep.subr.mxu0 0.0
    %2542 = vmatpush1.msra.mxu0 0.0
    %2543 = vmatprep.mubr.f32.mxu0 0.0
    %2544 = vmatmul.mubr.f32.gmra.mrb[0].mxu0 %v281
    %v2545 = vpop.f32.mrb[0].mxu0
    %v2546 = vadd.f32 0.0, %v2545
    %v2547 = vpop.f32.mrb[0].mxu0
    %2548 = vmatprep.mubr.f32.mxu0 0.0
    %2549 = vmatmul.mubr.f32.gmra.mrb[0].mxu0 %v284
    %v2550 = vpop.f32.mrb[0].mxu0
    %v2551 = vadd.f32 0.0, %v2550
    %v2552 = vpop.f32.mrb[0].mxu0
    %2553 = vmatprep.mubr.f32.mxu0 0.0
    %2554 = vmatmul.mubr.f32.gmra.mrb[0].mxu0 %v287
    %v2555 = vpop.f32.mrb[0].mxu0
    %v2556 = vadd.f32 0.0, %v2555
    %v2557 = vpop.f32.mrb[0].mxu0
    %2558 = vmatprep.mubr.f32.mxu0 0.0
    %2559 = vmatmul.mubr.f32.gmra.mrb[0].mxu0 %v290
    %v2560 = vpop.f32.mrb[0].mxu0
    %v2561 = vadd.f32 0.0, %v2560
    %v2562 = vpop.f32.mrb[0].mxu0
    %2563 = vmatprep.mubr.f32.mxu0 0.0
    %2564 = vmatmul.mubr.f32.gmra.mrb[0].mxu0 %v293
    %v2565 = vpop.f32.mrb[0].mxu0
    %v2566 = vadd.f32 0.0, %v2565
    %v2567 = vpop.f32.mrb[0].mxu0
    %2568 = vmatprep.mubr.f32.mxu0 0.0
    %2569 = vmatmul.mubr.f32.gmra.mrb[0].mxu0 %v296
    %v2570 = vpop.f32.mrb[0].mxu0
    %v2571 = vadd.f32 0.0, %v2570
    %v2572 = vpop.f32.mrb[0].mxu0
    %2573 = vdwg.mxu0
    %s2574 = scalar_lea.vmem %s4, 224
    %v2575 = vld [vmem:[%s2574] sm:$0xff]
    %v2576 = vld [vmem:[%s2574 + $0x8] sm:$0xff]
    %v2577 = vld [vmem:[%s2574 + $0x10] sm:$0xff]
    %v2578 = vld [vmem:[%s2574 + $0x18] sm:$0xff]
    %2579 = vmatprep.subr.mxu0 0.0
    %2580 = vmatpush1.msra.mxu0 %v2575
    %2581 = vmatprep.subr.mxu0 0.0
    %2582 = vmatpush1.msra.mxu0 %v2576
    %2583 = vmatprep.subr.mxu0 0.0
    %2584 = vmatpush1.msra.mxu0 %v2577
    %2585 = vmatprep.subr.mxu0 0.0
    %2586 = vmatpush1.msra.mxu0 %v2578
    %2587 = vmatprep.subr.mxu0 0.0
    %2588 = vmatpush1.msra.mxu0 0.0
    %2589 = vmatprep.subr.mxu0 0.0
    %2590 = vmatpush1.msra.mxu0 0.0
    %2591 = vmatprep.subr.mxu0 0.0
    %2592 = vmatpush1.msra.mxu0 0.0
    %2593 = vmatprep.subr.mxu0 0.0
    %2594 = vmatpush1.msra.mxu0 0.0
    %2595 = vmatprep.subr.mxu0 0.0
    %2596 = vmatpush1.msra.mxu0 0.0
    %2597 = vmatprep.subr.mxu0 0.0
    %2598 = vmatpush1.msra.mxu0 0.0
    %2599 = vmatprep.subr.mxu0 0.0
    %2600 = vmatpush1.msra.mxu0 0.0
    %2601 = vmatprep.subr.mxu0 0.0
    %2602 = vmatpush1.msra.mxu0 0.0
    %2603 = vmatprep.subr.mxu0 0.0
    %2604 = vmatpush1.msra.mxu0 0.0
    %2605 = vmatprep.subr.mxu0 0.0
    %2606 = vmatpush1.msra.mxu0 0.0
    %2607 = vmatprep.subr.mxu0 0.0
    %2608 = vmatpush1.msra.mxu0 0.0
    %2609 = vmatprep.subr.mxu0 0.0
    %2610 = vmatpush1.msra.mxu0 0.0
    %2611 = vmatprep.subr.mxu0 0.0
    %2612 = vmatpush1.msra.mxu0 0.0
    %2613 = vmatprep.subr.mxu0 0.0
    %2614 = vmatpush1.msra.mxu0 0.0
    %2615 = vmatprep.subr.mxu0 0.0
    %2616 = vmatpush1.msra.mxu0 0.0
    %2617 = vmatprep.subr.mxu0 0.0
    %2618 = vmatpush1.msra.mxu0 0.0
    %2619 = vmatprep.subr.mxu0 0.0
    %2620 = vmatpush1.msra.mxu0 0.0
    %2621 = vmatprep.subr.mxu0 0.0
    %2622 = vmatpush1.msra.mxu0 0.0
    %2623 = vmatprep.subr.mxu0 0.0
    %2624 = vmatpush1.msra.mxu0 0.0
    %2625 = vmatprep.subr.mxu0 0.0
    %2626 = vmatpush1.msra.mxu0 0.0
    %2627 = vmatprep.subr.mxu0 0.0
    %2628 = vmatpush1.msra.mxu0 0.0
    %2629 = vmatprep.subr.mxu0 0.0
    %2630 = vmatpush1.msra.mxu0 0.0
    %2631 = vmatprep.subr.mxu0 0.0
    %2632 = vmatpush1.msra.mxu0 0.0
    %2633 = vmatprep.subr.mxu0 0.0
    %2634 = vmatpush1.msra.mxu0 0.0
    %2635 = vmatprep.subr.mxu0 0.0
    %2636 = vmatpush1.msra.mxu0 0.0
    %2637 = vmatprep.subr.mxu0 0.0
    %2638 = vmatpush1.msra.mxu0 0.0
    %2639 = vmatprep.subr.mxu0 0.0
    %2640 = vmatpush1.msra.mxu0 0.0
    %2641 = vmatprep.subr.mxu0 0.0
    %2642 = vmatpush1.msra.mxu0 0.0
    %2643 = vmatprep.mubr.f32.mxu0 0.0
    %2644 = vmatmul.mubr.f32.gmra.mrb[0].mxu0 %v281
    %v2645 = vpop.f32.mrb[0].mxu0
    %v2646 = vadd.f32 0.0, %v2645
    %v2647 = vpop.f32.mrb[0].mxu0
    %2648 = vmatprep.mubr.f32.mxu0 0.0
    %2649 = vmatmul.mubr.f32.gmra.mrb[0].mxu0 %v284
    %v2650 = vpop.f32.mrb[0].mxu0
    %v2651 = vadd.f32 0.0, %v2650
    %v2652 = vpop.f32.mrb[0].mxu0
    %2653 = vmatprep.mubr.f32.mxu0 0.0
    %2654 = vmatmul.mubr.f32.gmra.mrb[0].mxu0 %v287
    %v2655 = vpop.f32.mrb[0].mxu0
    %v2656 = vadd.f32 0.0, %v2655
    %v2657 = vpop.f32.mrb[0].mxu0
    %2658 = vmatprep.mubr.f32.mxu0 0.0
    %2659 = vmatmul.mubr.f32.gmra.mrb[0].mxu0 %v290
    %v2660 = vpop.f32.mrb[0].mxu0
    %v2661 = vadd.f32 0.0, %v2660
    %v2662 = vpop.f32.mrb[0].mxu0
    %2663 = vmatprep.mubr.f32.mxu0 0.0
    %2664 = vmatmul.mubr.f32.gmra.mrb[0].mxu0 %v293
    %v2665 = vpop.f32.mrb[0].mxu0
    %v2666 = vadd.f32 0.0, %v2665
    %v2667 = vpop.f32.mrb[0].mxu0
    %2668 = vmatprep.mubr.f32.mxu0 0.0
    %2669 = vmatmul.mubr.f32.gmra.mrb[0].mxu0 %v296
    %v2670 = vpop.f32.mrb[0].mxu0
    %v2671 = vadd.f32 0.0, %v2670
    %v2672 = vpop.f32.mrb[0].mxu0
    %2673 = vdwg.mxu0
    %s2674 = scalar_lea.vmem %s4, 352
    %v2675 = vld [vmem:[%s2674] sm:$0xff]
    %v2676 = vld [vmem:[%s2674 + $0x8] sm:$0xff]
    %v2677 = vld [vmem:[%s2674 + $0x10] sm:$0xff]
    %v2678 = vld [vmem:[%s2674 + $0x18] sm:$0xff]
    %2679 = vmatprep.subr.mxu0 0.0
    %2680 = vmatpush1.msra.mxu0 %v2675
    %2681 = vmatprep.subr.mxu0 0.0
    %2682 = vmatpush1.msra.mxu0 %v2676
    %2683 = vmatprep.subr.mxu0 0.0
    %2684 = vmatpush1.msra.mxu0 %v2677
    %2685 = vmatprep.subr.mxu0 0.0
    %2686 = vmatpush1.msra.mxu0 %v2678
    %2687 = vmatprep.subr.mxu0 0.0
    %2688 = vmatpush1.msra.mxu0 0.0
    %2689 = vmatprep.subr.mxu0 0.0
    %2690 = vmatpush1.msra.mxu0 0.0
    %2691 = vmatprep.subr.mxu0 0.0
    %2692 = vmatpush1.msra.mxu0 0.0
    %2693 = vmatprep.subr.mxu0 0.0
    %2694 = vmatpush1.msra.mxu0 0.0
    %2695 = vmatprep.subr.mxu0 0.0
    %2696 = vmatpush1.msra.mxu0 0.0
    %2697 = vmatprep.subr.mxu0 0.0
    %2698 = vmatpush1.msra.mxu0 0.0
    %2699 = vmatprep.subr.mxu0 0.0
    %2700 = vmatpush1.msra.mxu0 0.0
    %2701 = vmatprep.subr.mxu0 0.0
    %2702 = vmatpush1.msra.mxu0 0.0
    %2703 = vmatprep.subr.mxu0 0.0
    %2704 = vmatpush1.msra.mxu0 0.0
    %2705 = vmatprep.subr.mxu0 0.0
    %2706 = vmatpush1.msra.mxu0 0.0
    %2707 = vmatprep.subr.mxu0 0.0
    %2708 = vmatpush1.msra.mxu0 0.0
    %2709 = vmatprep.subr.mxu0 0.0
    %2710 = vmatpush1.msra.mxu0 0.0
    %2711 = vmatprep.subr.mxu0 0.0
    %2712 = vmatpush1.msra.mxu0 0.0
    %2713 = vmatprep.subr.mxu0 0.0
    %2714 = vmatpush1.msra.mxu0 0.0
    %2715 = vmatprep.subr.mxu0 0.0
    %2716 = vmatpush1.msra.mxu0 0.0
    %2717 = vmatprep.subr.mxu0 0.0
    %2718 = vmatpush1.msra.mxu0 0.0
    %2719 = vmatprep.subr.mxu0 0.0
    %2720 = vmatpush1.msra.mxu0 0.0
    %2721 = vmatprep.subr.mxu0 0.0
    %2722 = vmatpush1.msra.mxu0 0.0
    %2723 = vmatprep.subr.mxu0 0.0
    %2724 = vmatpush1.msra.mxu0 0.0
    %2725 = vmatprep.subr.mxu0 0.0
    %2726 = vmatpush1.msra.mxu0 0.0
    %2727 = vmatprep.subr.mxu0 0.0
    %2728 = vmatpush1.msra.mxu0 0.0
    %2729 = vmatprep.subr.mxu0 0.0
    %2730 = vmatpush1.msra.mxu0 0.0
    %2731 = vmatprep.subr.mxu0 0.0
    %2732 = vmatpush1.msra.mxu0 0.0
    %2733 = vmatprep.subr.mxu0 0.0
    %2734 = vmatpush1.msra.mxu0 0.0
    %2735 = vmatprep.subr.mxu0 0.0
    %2736 = vmatpush1.msra.mxu0 0.0
    %2737 = vmatprep.subr.mxu0 0.0
    %2738 = vmatpush1.msra.mxu0 0.0
    %2739 = vmatprep.subr.mxu0 0.0
    %2740 = vmatpush1.msra.mxu0 0.0
    %2741 = vmatprep.subr.mxu0 0.0
    %2742 = vmatpush1.msra.mxu0 0.0
    %2743 = vmatprep.mubr.f32.mxu0 0.0
    %2744 = vmatmul.mubr.f32.gmra.mrb[0].mxu0 %v281
    %v2745 = vpop.f32.mrb[0].mxu0
    %v2746 = vadd.f32 0.0, %v2745
    %v2747 = vpop.f32.mrb[0].mxu0
    %2748 = vmatprep.mubr.f32.mxu0 0.0
    %2749 = vmatmul.mubr.f32.gmra.mrb[0].mxu0 %v284
    %v2750 = vpop.f32.mrb[0].mxu0
    %v2751 = vadd.f32 0.0, %v2750
    %v2752 = vpop.f32.mrb[0].mxu0
    %2753 = vmatprep.mubr.f32.mxu0 0.0
    %2754 = vmatmul.mubr.f32.gmra.mrb[0].mxu0 %v287
    %v2755 = vpop.f32.mrb[0].mxu0
    %v2756 = vadd.f32 0.0, %v2755
    %v2757 = vpop.f32.mrb[0].mxu0
    %2758 = vmatprep.mubr.f32.mxu0 0.0
    %2759 = vmatmul.mubr.f32.gmra.mrb[0].mxu0 %v290
    %v2760 = vpop.f32.mrb[0].mxu0
    %v2761 = vadd.f32 0.0, %v2760
    %v2762 = vpop.f32.mrb[0].mxu0
    %2763 = vmatprep.mubr.f32.mxu0 0.0
    %2764 = vmatmul.mubr.f32.gmra.mrb[0].mxu0 %v293
    %v2765 = vpop.f32.mrb[0].mxu0
    %v2766 = vadd.f32 0.0, %v2765
    %v2767 = vpop.f32.mrb[0].mxu0
    %2768 = vmatprep.mubr.f32.mxu0 0.0
    %2769 = vmatmul.mubr.f32.gmra.mrb[0].mxu0 %v296
    %v2770 = vpop.f32.mrb[0].mxu0
    %v2771 = vadd.f32 0.0, %v2770
    %v2772 = vpop.f32.mrb[0].mxu0
    %2773 = vdwg.mxu0
    %v2775 = vsel %vm593, %v2546, 0
    %v2778 = vsel %vm593, %v2551, 0
    %v2781 = vsel %vm593, %v2556, 0
    %v2784 = vsel %vm593, %v2561, 0
    %v2787 = vsel %vm593, %v2566, 0
    %v2790 = vsel %vm593, %v2571, 0
    %v2793 = vsel %vm593, %v2646, 0
    %v2796 = vsel %vm593, %v2651, 0
    %v2799 = vsel %vm593, %v2656, 0
    %v2802 = vsel %vm593, %v2661, 0
    %v2805 = vsel %vm593, %v2666, 0
    %v2808 = vsel %vm593, %v2671, 0
    %2810 = vmatprep.subr.mxu0 0.0
    %2811 = vmatpush1.xpose.msra.mxu0 %v2793
    %2812 = vmatprep.subr.mxu0 0.0
    %2813 = vmatpush1.xpose.msra.mxu0 %v2796
    %2814 = vmatprep.subr.mxu0 0.0
    %2815 = vmatpush1.xpose.msra.mxu0 %v2799
    %2816 = vmatprep.subr.mxu0 0.0
    %2817 = vmatpush1.xpose.msra.mxu0 %v2802
    %2818 = vmatprep.subr.mxu0 0.0
    %2819 = vmatpush1.xpose.msra.mxu0 %v2805
    %2820 = vmatprep.subr.mxu0 0.0
    %2821 = vmatpush1.xpose.msra.mxu0 %v2808
    %2822 = vmatprep.subr.mxu0 0.0
    %2823 = vmatpush1.xpose.msra.mxu0 0.0
    %2824 = vmatprep.subr.mxu0 0.0
    %2825 = vmatpush1.xpose.msra.mxu0 0.0
    %2826 = vmatprep.subr.mxu0 0.0
    %2827 = vmatpush1.xpose.msra.mxu0 0.0
    %2828 = vmatprep.subr.mxu0 0.0
    %2829 = vmatpush1.xpose.msra.mxu0 0.0
    %2830 = vmatprep.subr.mxu0 0.0
    %2831 = vmatpush1.xpose.msra.mxu0 0.0
    %2832 = vmatprep.subr.mxu0 0.0
    %2833 = vmatpush1.xpose.msra.mxu0 0.0
    %2834 = vmatprep.subr.mxu0 0.0
    %2835 = vmatpush1.xpose.msra.mxu0 0.0
    %2836 = vmatprep.subr.mxu0 0.0
    %2837 = vmatpush1.xpose.msra.mxu0 0.0
    %2838 = vmatprep.subr.mxu0 0.0
    %2839 = vmatpush1.xpose.msra.mxu0 0.0
    %2840 = vmatprep.subr.mxu0 0.0
    %2841 = vmatpush1.xpose.msra.mxu0 0.0
    %2842 = vmatprep.subr.mxu0 0.0
    %2843 = vmatpush1.xpose.msra.mxu0 0.0
    %2844 = vmatprep.subr.mxu0 0.0
    %2845 = vmatpush1.xpose.msra.mxu0 0.0
    %2846 = vmatprep.subr.mxu0 0.0
    %2847 = vmatpush1.xpose.msra.mxu0 0.0
    %2848 = vmatprep.subr.mxu0 0.0
    %2849 = vmatpush1.xpose.msra.mxu0 0.0
    %2850 = vmatprep.subr.mxu0 0.0
    %2851 = vmatpush1.xpose.msra.mxu0 0.0
    %2852 = vmatprep.subr.mxu0 0.0
    %2853 = vmatpush1.xpose.msra.mxu0 0.0
    %2854 = vmatprep.subr.mxu0 0.0
    %2855 = vmatpush1.xpose.msra.mxu0 0.0
    %2856 = vmatprep.subr.mxu0 0.0
    %2857 = vmatpush1.xpose.msra.mxu0 0.0
    %2858 = vmatprep.subr.mxu0 0.0
    %2859 = vmatpush1.xpose.msra.mxu0 0.0
    %2860 = vmatprep.subr.mxu0 0.0
    %2861 = vmatpush1.xpose.msra.mxu0 0.0
    %2862 = vmatprep.subr.mxu0 0.0
    %2863 = vmatpush1.xpose.msra.mxu0 0.0
    %2864 = vmatprep.subr.mxu0 0.0
    %2865 = vmatpush1.xpose.msra.mxu0 0.0
    %2866 = vmatprep.subr.mxu0 0.0
    %2867 = vmatpush1.xpose.msra.mxu0 0.0
    %2868 = vmatprep.subr.mxu0 0.0
    %2869 = vmatpush1.xpose.msra.mxu0 0.0
    %2870 = vmatprep.subr.mxu0 0.0
    %2871 = vmatpush1.xpose.msra.mxu0 0.0
    %2872 = vmatprep.subr.mxu0 0.0
    %2873 = vmatpush1.xpose.msra.mxu0 0.0
    %2874 = vmatprep.mubr.f32.mxu0 0.0
    %2875 = vmatmul.mubr.f32.gmra.mrb[0].mxu0 %v2775
    %v2876 = vpop.f32.mrb[0].mxu0
    %v2877 = vadd.f32 %v168, %v2876
    %v2878 = vpop.f32.mrb[0].mxu0
    %2879 = vmatprep.mubr.f32.mxu0 0.0
    %2880 = vmatmul.mubr.f32.gmra.mrb[0].mxu0 %v2778
    %v2881 = vpop.f32.mrb[0].mxu0
    %v2882 = vadd.f32 %v169, %v2881
    %v2883 = vpop.f32.mrb[0].mxu0
    %2884 = vmatprep.mubr.f32.mxu0 0.0
    %2885 = vmatmul.mubr.f32.gmra.mrb[0].mxu0 %v2781
    %v2886 = vpop.f32.mrb[0].mxu0
    %v2887 = vadd.f32 %v170, %v2886
    %v2888 = vpop.f32.mrb[0].mxu0
    %2889 = vmatprep.mubr.f32.mxu0 0.0
    %2890 = vmatmul.mubr.f32.gmra.mrb[0].mxu0 %v2784
    %v2891 = vpop.f32.mrb[0].mxu0
    %v2892 = vadd.f32 %v171, %v2891
    %v2893 = vpop.f32.mrb[0].mxu0
    %2894 = vmatprep.mubr.f32.mxu0 0.0
    %2895 = vmatmul.mubr.f32.gmra.mrb[0].mxu0 %v2787
    %v2896 = vpop.f32.mrb[0].mxu0
    %v2897 = vadd.f32 %v172, %v2896
    %v2898 = vpop.f32.mrb[0].mxu0
    %2899 = vmatprep.mubr.f32.mxu0 0.0
    %2900 = vmatmul.mubr.f32.gmra.mrb[0].mxu0 %v2790
    %v2901 = vpop.f32.mrb[0].mxu0
    %v2902 = vadd.f32 %v173, %v2901
    %v2903 = vpop.f32.mrb[0].mxu0
    %2904 = vdwg.mxu0
    %v2905 = vsel %vm54, %v2877, -inf
    %2906 = vmax.xlane.f32.xlu0 %v2905
    %v2907 = vpop.xlane.xlu0 %2906
    %v2908 = vsel %vm54, %v2882, -inf
    %2909 = vmax.xlane.f32.xlu0 %v2908
    %v2910 = vpop.xlane.xlu0 %2909
    %v2911 = vsel %vm54, %v2887, -inf
    %2912 = vmax.xlane.f32.xlu0 %v2911
    %v2913 = vpop.xlane.xlu0 %2912
    %v2914 = vsel %vm54, %v2892, -inf
    %2915 = vmax.xlane.f32.xlu0 %v2914
    %v2916 = vpop.xlane.xlu0 %2915
    %v2917 = vsel %vm54, %v2897, -inf
    %2918 = vmax.xlane.f32.xlu0 %v2917
    %v2919 = vpop.xlane.xlu0 %2918
    %v2920 = vsel %vm54, %v2902, -inf
    %2921 = vmax.xlane.f32.xlu0 %v2920
    %v2922 = vpop.xlane.xlu0 %2921
    %v2923 = vsub.f32 %v2877, %v2907
    %v2924 = vsub.f32 %v2882, %v2910
    %v2925 = vsub.f32 %v2887, %v2913
    %v2926 = vsub.f32 %v2892, %v2916
    %v2927 = vsub.f32 %v2897, %v2919
    %v2928 = vsub.f32 %v2902, %v2922
    %v2929 = vmul.f32 %v2923, 1.442695
    %v2930 = vpow.pop %v2929
    %v2931 = vmul.f32 %v2924, 1.442695
    %v2932 = vpow.pop %v2931
    %v2933 = vmul.f32 %v2925, 1.442695
    %v2934 = vpow.pop %v2933
    %v2935 = vmul.f32 %v2926, 1.442695
    %v2936 = vpow.pop %v2935
    %v2937 = vmul.f32 %v2927, 1.442695
    %v2938 = vpow.pop %v2937
    %v2939 = vmul.f32 %v2928, 1.442695
    %v2940 = vpow.pop %v2939
    %v2941 = vsel %vm54, %v2930, 0.0
    %2942 = vadd.xlane.f32.xlu0 %v2941
    %v2943 = vpop.xlane.xlu0 %2942
    %v2944 = vsel %vm54, %v2932, 0.0
    %2945 = vadd.xlane.f32.xlu0 %v2944
    %v2946 = vpop.xlane.xlu0 %2945
    %v2947 = vsel %vm54, %v2934, 0.0
    %2948 = vadd.xlane.f32.xlu0 %v2947
    %v2949 = vpop.xlane.xlu0 %2948
    %v2950 = vsel %vm54, %v2936, 0.0
    %2951 = vadd.xlane.f32.xlu0 %v2950
    %v2952 = vpop.xlane.xlu0 %2951
    %v2953 = vsel %vm54, %v2938, 0.0
    %2954 = vadd.xlane.f32.xlu0 %v2953
    %v2955 = vpop.xlane.xlu0 %2954
    %v2956 = vsel %vm54, %v2940, 0.0
    %2957 = vadd.xlane.f32.xlu0 %v2956
    %v2958 = vpop.xlane.xlu0 %2957
    %v2959 = vrcp.pop %v2943
    %v2960 = vrcp.pop %v2946
    %v2961 = vrcp.pop %v2949
    %v2962 = vrcp.pop %v2952
    %v2963 = vrcp.pop %v2955
    %v2964 = vrcp.pop %v2958
    %v2965 = vmul.f32 %v2930, %v2959
    %v2966 = vmul.f32 %v2932, %v2960
    %v2967 = vmul.f32 %v2934, %v2961
    %v2968 = vmul.f32 %v2936, %v2962
    %v2969 = vmul.f32 %v2938, %v2963
    %v2970 = vmul.f32 %v2940, %v2964
    %v2972 = vsel %vm54, %v2965, 0
    %v2975 = vsel %vm54, %v2966, 0
    %v2978 = vsel %vm54, %v2967, 0
    %v2981 = vsel %vm54, %v2968, 0
    %v2984 = vsel %vm54, %v2969, 0
    %v2987 = vsel %vm54, %v2970, 0
    %2989 = vmatprep.subr.mxu0 0.0
    %2990 = vmatpush1.msra.mxu0 %v2746
    %2991 = vmatprep.subr.mxu0 0.0
    %2992 = vmatpush1.msra.mxu0 %v2751
    %2993 = vmatprep.subr.mxu0 0.0
    %2994 = vmatpush1.msra.mxu0 %v2756
    %2995 = vmatprep.subr.mxu0 0.0
    %2996 = vmatpush1.msra.mxu0 %v2761
    %2997 = vmatprep.subr.mxu0 0.0
    %2998 = vmatpush1.msra.mxu0 %v2766
    %2999 = vmatprep.subr.mxu0 0.0
    %3000 = vmatpush1.msra.mxu0 %v2771
    %3001 = vmatprep.subr.mxu0 0.0
    %3002 = vmatpush1.msra.mxu0 0.0
    %3003 = vmatprep.subr.mxu0 0.0
    %3004 = vmatpush1.msra.mxu0 0.0
    %3005 = vmatprep.subr.mxu0 0.0
    %3006 = vmatpush1.msra.mxu0 0.0
    %3007 = vmatprep.subr.mxu0 0.0
    %3008 = vmatpush1.msra.mxu0 0.0
    %3009 = vmatprep.subr.mxu0 0.0
    %3010 = vmatpush1.msra.mxu0 0.0
    %3011 = vmatprep.subr.mxu0 0.0
    %3012 = vmatpush1.msra.mxu0 0.0
    %3013 = vmatprep.subr.mxu0 0.0
    %3014 = vmatpush1.msra.mxu0 0.0
    %3015 = vmatprep.subr.mxu0 0.0
    %3016 = vmatpush1.msra.mxu0 0.0
    %3017 = vmatprep.subr.mxu0 0.0
    %3018 = vmatpush1.msra.mxu0 0.0
    %3019 = vmatprep.subr.mxu0 0.0
    %3020 = vmatpush1.msra.mxu0 0.0
    %3021 = vmatprep.subr.mxu0 0.0
    %3022 = vmatpush1.msra.mxu0 0.0
    %3023 = vmatprep.subr.mxu0 0.0
    %3024 = vmatpush1.msra.mxu0 0.0
    %3025 = vmatprep.subr.mxu0 0.0
    %3026 = vmatpush1.msra.mxu0 0.0
    %3027 = vmatprep.subr.mxu0 0.0
    %3028 = vmatpush1.msra.mxu0 0.0
    %3029 = vmatprep.subr.mxu0 0.0
    %3030 = vmatpush1.msra.mxu0 0.0
    %3031 = vmatprep.subr.mxu0 0.0
    %3032 = vmatpush1.msra.mxu0 0.0
    %3033 = vmatprep.subr.mxu0 0.0
    %3034 = vmatpush1.msra.mxu0 0.0
    %3035 = vmatprep.subr.mxu0 0.0
    %3036 = vmatpush1.msra.mxu0 0.0
    %3037 = vmatprep.subr.mxu0 0.0
    %3038 = vmatpush1.msra.mxu0 0.0
    %3039 = vmatprep.subr.mxu0 0.0
    %3040 = vmatpush1.msra.mxu0 0.0
    %3041 = vmatprep.subr.mxu0 0.0
    %3042 = vmatpush1.msra.mxu0 0.0
    %3043 = vmatprep.subr.mxu0 0.0
    %3044 = vmatpush1.msra.mxu0 0.0
    %3045 = vmatprep.subr.mxu0 0.0
    %3046 = vmatpush1.msra.mxu0 0.0
    %3047 = vmatprep.subr.mxu0 0.0
    %3048 = vmatpush1.msra.mxu0 0.0
    %3049 = vmatprep.subr.mxu0 0.0
    %3050 = vmatpush1.msra.mxu0 0.0
    %3051 = vmatprep.subr.mxu0 0.0
    %3052 = vmatpush1.msra.mxu0 0.0
    %3053 = vmatprep.mubr.f32.mxu0 0.0
    %3054 = vmatmul.mubr.f32.gmra.mrb[0].mxu0 %v2972
    %v3055 = vpop.f32.mrb[0].mxu0
    %v3056 = vadd.f32 0.0, %v3055
    %v3057 = vpop.f32.mrb[0].mxu0
    %3058 = vmatprep.mubr.f32.mxu0 0.0
    %3059 = vmatmul.mubr.f32.gmra.mrb[0].mxu0 %v2975
    %v3060 = vpop.f32.mrb[0].mxu0
    %v3061 = vadd.f32 0.0, %v3060
    %v3062 = vpop.f32.mrb[0].mxu0
    %3063 = vmatprep.mubr.f32.mxu0 0.0
    %3064 = vmatmul.mubr.f32.gmra.mrb[0].mxu0 %v2978
    %v3065 = vpop.f32.mrb[0].mxu0
    %v3066 = vadd.f32 0.0, %v3065
    %v3067 = vpop.f32.mrb[0].mxu0
    %3068 = vmatprep.mubr.f32.mxu0 0.0
    %3069 = vmatmul.mubr.f32.gmra.mrb[0].mxu0 %v2981
    %v3070 = vpop.f32.mrb[0].mxu0
    %v3071 = vadd.f32 0.0, %v3070
    %v3072 = vpop.f32.mrb[0].mxu0
    %3073 = vmatprep.mubr.f32.mxu0 0.0
    %3074 = vmatmul.mubr.f32.gmra.mrb[0].mxu0 %v2984
    %v3075 = vpop.f32.mrb[0].mxu0
    %v3076 = vadd.f32 0.0, %v3075
    %v3077 = vpop.f32.mrb[0].mxu0
    %3078 = vmatprep.mubr.f32.mxu0 0.0
    %3079 = vmatmul.mubr.f32.gmra.mrb[0].mxu0 %v2987
    %v3080 = vpop.f32.mrb[0].mxu0
    %v3081 = vadd.f32 0.0, %v3080
    %v3082 = vpop.f32.mrb[0].mxu0
    %3083 = vdwg.mxu0
    %s3084 = scalar_lea.vmem %s5, 24
    %v3085 = vld [vmem:[%s3084] sm:$0xff]
    %v3087 = vsel %vm593, %v3056, 0
    %v3090 = vsel %vm593, %v3061, 0
    %v3093 = vsel %vm593, %v3066, 0
    %v3096 = vsel %vm593, %v3071, 0
    %v3099 = vsel %vm593, %v3076, 0
    %v3102 = vsel %vm593, %v3081, 0
    %3104 = vmatprep.subr.mxu0 0.0
    %3105 = vmatpush1.msra.mxu0 %v3085
    %3106 = vmatprep.subr.mxu0 0.0
    %3107 = vmatpush1.msra.mxu0 0.0
    %3108 = vmatprep.subr.mxu0 0.0
    %3109 = vmatpush1.msra.mxu0 0.0
    %3110 = vmatprep.subr.mxu0 0.0
    %3111 = vmatpush1.msra.mxu0 0.0
    %3112 = vmatprep.subr.mxu0 0.0
    %3113 = vmatpush1.msra.mxu0 0.0
    %3114 = vmatprep.subr.mxu0 0.0
    %3115 = vmatpush1.msra.mxu0 0.0
    %3116 = vmatprep.subr.mxu0 0.0
    %3117 = vmatpush1.msra.mxu0 0.0
    %3118 = vmatprep.subr.mxu0 0.0
    %3119 = vmatpush1.msra.mxu0 0.0
    %3120 = vmatprep.subr.mxu0 0.0
    %3121 = vmatpush1.msra.mxu0 0.0
    %3122 = vmatprep.subr.mxu0 0.0
    %3123 = vmatpush1.msra.mxu0 0.0
    %3124 = vmatprep.subr.mxu0 0.0
    %3125 = vmatpush1.msra.mxu0 0.0
    %3126 = vmatprep.subr.mxu0 0.0
    %3127 = vmatpush1.msra.mxu0 0.0
    %3128 = vmatprep.subr.mxu0 0.0
    %3129 = vmatpush1.msra.mxu0 0.0
    %3130 = vmatprep.subr.mxu0 0.0
    %3131 = vmatpush1.msra.mxu0 0.0
    %3132 = vmatprep.subr.mxu0 0.0
    %3133 = vmatpush1.msra.mxu0 0.0
    %3134 = vmatprep.subr.mxu0 0.0
    %3135 = vmatpush1.msra.mxu0 0.0
    %3136 = vmatprep.subr.mxu0 0.0
    %3137 = vmatpush1.msra.mxu0 0.0
    %3138 = vmatprep.subr.mxu0 0.0
    %3139 = vmatpush1.msra.mxu0 0.0
    %3140 = vmatprep.subr.mxu0 0.0
    %3141 = vmatpush1.msra.mxu0 0.0
    %3142 = vmatprep.subr.mxu0 0.0
    %3143 = vmatpush1.msra.mxu0 0.0
    %3144 = vmatprep.subr.mxu0 0.0
    %3145 = vmatpush1.msra.mxu0 0.0
    %3146 = vmatprep.subr.mxu0 0.0
    %3147 = vmatpush1.msra.mxu0 0.0
    %3148 = vmatprep.subr.mxu0 0.0
    %3149 = vmatpush1.msra.mxu0 0.0
    %3150 = vmatprep.subr.mxu0 0.0
    %3151 = vmatpush1.msra.mxu0 0.0
    %3152 = vmatprep.subr.mxu0 0.0
    %3153 = vmatpush1.msra.mxu0 0.0
    %3154 = vmatprep.subr.mxu0 0.0
    %3155 = vmatpush1.msra.mxu0 0.0
    %3156 = vmatprep.subr.mxu0 0.0
    %3157 = vmatpush1.msra.mxu0 0.0
    %3158 = vmatprep.subr.mxu0 0.0
    %3159 = vmatpush1.msra.mxu0 0.0
    %3160 = vmatprep.subr.mxu0 0.0
    %3161 = vmatpush1.msra.mxu0 0.0
    %3162 = vmatprep.subr.mxu0 0.0
    %3163 = vmatpush1.msra.mxu0 0.0
    %3164 = vmatprep.subr.mxu0 0.0
    %3165 = vmatpush1.msra.mxu0 0.0
    %3166 = vmatprep.subr.mxu0 0.0
    %3167 = vmatpush1.msra.mxu0 0.0
    %3168 = vmatprep.mubr.f32.mxu0 0.0
    %3169 = vmatmul.mubr.f32.gmra.mrb[0].mxu0 %v3087
    %v3170 = vpop.f32.mrb[0].mxu0
    %v3171 = vadd.f32 0.0, %v3170
    %v3172 = vpop.f32.mrb[0].mxu0
    %3173 = vmatprep.mubr.f32.mxu0 0.0
    %3174 = vmatmul.mubr.f32.gmra.mrb[0].mxu0 %v3090
    %v3175 = vpop.f32.mrb[0].mxu0
    %v3176 = vadd.f32 0.0, %v3175
    %v3177 = vpop.f32.mrb[0].mxu0
    %3178 = vmatprep.mubr.f32.mxu0 0.0
    %3179 = vmatmul.mubr.f32.gmra.mrb[0].mxu0 %v3093
    %v3180 = vpop.f32.mrb[0].mxu0
    %v3181 = vadd.f32 0.0, %v3180
    %v3182 = vpop.f32.mrb[0].mxu0
    %3183 = vmatprep.mubr.f32.mxu0 0.0
    %3184 = vmatmul.mubr.f32.gmra.mrb[0].mxu0 %v3096
    %v3185 = vpop.f32.mrb[0].mxu0
    %v3186 = vadd.f32 0.0, %v3185
    %v3187 = vpop.f32.mrb[0].mxu0
    %3188 = vmatprep.mubr.f32.mxu0 0.0
    %3189 = vmatmul.mubr.f32.gmra.mrb[0].mxu0 %v3099
    %v3190 = vpop.f32.mrb[0].mxu0
    %v3191 = vadd.f32 0.0, %v3190
    %v3192 = vpop.f32.mrb[0].mxu0
    %3193 = vmatprep.mubr.f32.mxu0 0.0
    %3194 = vmatmul.mubr.f32.gmra.mrb[0].mxu0 %v3102
    %v3195 = vpop.f32.mrb[0].mxu0
    %v3196 = vadd.f32 0.0, %v3195
    %v3197 = vpop.f32.mrb[0].mxu0
    %3198 = vdwg.mxu0
    %v3199 = vadd.f32 %v2468, %v3171
    %v3200 = vadd.f32 %v2469, %v3176
    %v3201 = vadd.f32 %v2470, %v3181
    %v3202 = vadd.f32 %v2471, %v3186
    %v3203 = vadd.f32 %v2472, %v3191
    %v3204 = vadd.f32 %v2473, %v3196
    %v3205 = vadd.f32 %v140, %v3199
    %v3206 = vadd.f32 %v145, %v3200
    %v3207 = vadd.f32 %v150, %v3201
    %v3208 = vadd.f32 %v155, %v3202
    %v3209 = vadd.f32 %v160, %v3203
    %v3210 = vadd.f32 %v165, %v3204
    %v3211 = vld [vmem:[%s9 + $0x2] sm:$0x1]
    %v3212 = vlaneseq
    %v3213 = vshrl.u32 %v3212, 7
    %v3214 = vsub.s32 0, %v3213
    %v3215 = vrot.slane %v3211, %v3214
    %v3216 = vadd.f32 %v3205, %v3215
    %v3217 = vadd.f32 %v3206, %v3215
    %v3218 = vadd.f32 %v3207, %v3215
    %v3219 = vadd.f32 %v3208, %v3215
    %v3220 = vadd.f32 %v3209, %v3215
    %v3221 = vadd.f32 %v3210, %v3215
    %v3222 = vld [vmem:[%s9 + $0x3] sm:$0x1]
    %v3223 = vld [vmem:[%s9 + $0x4] sm:$0x1]
    %v3224 = vsel %vm176, %v3216, 0.0
    %3225 = vadd.xlane.f32.xlu0 %v3224
    %v3226 = vpop.xlane.xlu0 %3225
    %v3227 = vsel %vm176, %v3217, 0.0
    %3228 = vadd.xlane.f32.xlu0 %v3227
    %v3229 = vpop.xlane.xlu0 %3228
    %v3230 = vsel %vm176, %v3218, 0.0
    %3231 = vadd.xlane.f32.xlu0 %v3230
    %v3232 = vpop.xlane.xlu0 %3231
    %v3233 = vsel %vm176, %v3219, 0.0
    %3234 = vadd.xlane.f32.xlu0 %v3233
    %v3235 = vpop.xlane.xlu0 %3234
    %v3236 = vsel %vm176, %v3220, 0.0
    %3237 = vadd.xlane.f32.xlu0 %v3236
    %v3238 = vpop.xlane.xlu0 %3237
    %v3239 = vsel %vm176, %v3221, 0.0
    %3240 = vadd.xlane.f32.xlu0 %v3239
    %v3241 = vpop.xlane.xlu0 %3240
    %v3242 = vmul.f32 %v3226, %v195
    %v3243 = vmul.f32 %v3229, %v195
    %v3244 = vmul.f32 %v3232, %v195
    %v3245 = vmul.f32 %v3235, %v195
    %v3246 = vmul.f32 %v3238, %v195
    %v3247 = vmul.f32 %v3241, %v195
    %v3248 = vsub.f32 %v3216, %v3242
    %v3249 = vsub.f32 %v3217, %v3243
    %v3250 = vsub.f32 %v3218, %v3244
    %v3251 = vsub.f32 %v3219, %v3245
    %v3252 = vsub.f32 %v3220, %v3246
    %v3253 = vsub.f32 %v3221, %v3247
    %v3254 = vmul.f32 %v3248, %v3248
    %v3255 = vmul.f32 %v3249, %v3249
    %v3256 = vmul.f32 %v3250, %v3250
    %v3257 = vmul.f32 %v3251, %v3251
    %v3258 = vmul.f32 %v3252, %v3252
    %v3259 = vmul.f32 %v3253, %v3253
    %v3260 = vsel %vm176, %v3254, 0.0
    %3261 = vadd.xlane.f32.xlu0 %v3260
    %v3262 = vpop.xlane.xlu0 %3261
    %v3263 = vsel %vm176, %v3255, 0.0
    %3264 = vadd.xlane.f32.xlu0 %v3263
    %v3265 = vpop.xlane.xlu0 %3264
    %v3266 = vsel %vm176, %v3256, 0.0
    %3267 = vadd.xlane.f32.xlu0 %v3266
    %v3268 = vpop.xlane.xlu0 %3267
    %v3269 = vsel %vm176, %v3257, 0.0
    %3270 = vadd.xlane.f32.xlu0 %v3269
    %v3271 = vpop.xlane.xlu0 %3270
    %v3272 = vsel %vm176, %v3258, 0.0
    %3273 = vadd.xlane.f32.xlu0 %v3272
    %v3274 = vpop.xlane.xlu0 %3273
    %v3275 = vsel %vm176, %v3259, 0.0
    %3276 = vadd.xlane.f32.xlu0 %v3275
    %v3277 = vpop.xlane.xlu0 %3276
    %v3278 = vmul.f32 %v3262, %v195
    %v3279 = vmul.f32 %v3265, %v195
    %v3280 = vmul.f32 %v3268, %v195
    %v3281 = vmul.f32 %v3271, %v195
    %v3282 = vmul.f32 %v3274, %v195
    %v3283 = vmul.f32 %v3277, %v195
    %v3284 = vadd.f32 %v3278, 1e-06
    %v3285 = vadd.f32 %v3279, 1e-06
    %v3286 = vadd.f32 %v3280, 1e-06
    %v3287 = vadd.f32 %v3281, 1e-06
    %v3288 = vadd.f32 %v3282, 1e-06
    %v3289 = vadd.f32 %v3283, 1e-06
    %v3290 = vrsqrt.pop %v3284
    %v3291 = vrsqrt.pop %v3285
    %v3292 = vrsqrt.pop %v3286
    %v3293 = vrsqrt.pop %v3287
    %v3294 = vrsqrt.pop %v3288
    %v3295 = vrsqrt.pop %v3289
    %v3296 = vmul.f32 %v3248, %v3290
    %v3297 = vmul.f32 %v3249, %v3291
    %v3298 = vmul.f32 %v3250, %v3292
    %v3299 = vmul.f32 %v3251, %v3293
    %v3300 = vmul.f32 %v3252, %v3294
    %v3301 = vmul.f32 %v3253, %v3295
    %v3302 = vlaneseq
    %v3303 = vshrl.u32 %v3302, 7
    %v3304 = vsub.s32 0, %v3303
    %v3305 = vrot.slane %v3222, %v3304
    %v3306 = vmul.f32 %v3296, %v3305
    %v3307 = vmul.f32 %v3297, %v3305
    %v3308 = vmul.f32 %v3298, %v3305
    %v3309 = vmul.f32 %v3299, %v3305
    %v3310 = vmul.f32 %v3300, %v3305
    %v3311 = vmul.f32 %v3301, %v3305
    %v3312 = vlaneseq
    %v3313 = vshrl.u32 %v3312, 7
    %v3314 = vsub.s32 0, %v3313
    %v3315 = vrot.slane %v3223, %v3314
    %v3316 = vadd.f32 %v3306, %v3315
    %v3317 = vadd.f32 %v3307, %v3315
    %v3318 = vadd.f32 %v3308, %v3315
    %v3319 = vadd.f32 %v3309, %v3315
    %v3320 = vadd.f32 %v3310, %v3315
    %v3321 = vadd.f32 %v3311, %v3315
    %v3322 = vld [vmem:[%s6] sm:$0xff]
    %v3323 = vld [vmem:[%s6 + $0x8] sm:$0xff]
    %v3324 = vld [vmem:[%s6 + $0x10] sm:$0xff]
    %v3325 = vld [vmem:[%s6 + $0x18] sm:$0xff]
    %v3326 = vld [vmem:[%s10] sm:$0x1]
    %v3327 = vlaneseq
    %v3328 = vshrl.u32 %v3327, 7
    %v3329 = vsub.s32 0, %v3328
    %v3330 = vrot.slane %v3326, %v3329
    %v3332 = vsel %vm176, %v3316, 0
    %v3335 = vsel %vm176, %v3317, 0
    %v3338 = vsel %vm176, %v3318, 0
    %v3341 = vsel %vm176, %v3319, 0
    %v3344 = vsel %vm176, %v3320, 0
    %v3347 = vsel %vm176, %v3321, 0
    %3349 = vmatprep.subr.mxu0 0.0
    %3350 = vmatpush1.msra.mxu0 %v3322
    %3351 = vmatprep.subr.mxu0 0.0
    %3352 = vmatpush1.msra.mxu0 %v3323
    %3353 = vmatprep.subr.mxu0 0.0
    %3354 = vmatpush1.msra.mxu0 %v3324
    %3355 = vmatprep.subr.mxu0 0.0
    %3356 = vmatpush1.msra.mxu0 %v3325
    %3357 = vmatprep.subr.mxu0 0.0
    %3358 = vmatpush1.msra.mxu0 0.0
    %3359 = vmatprep.subr.mxu0 0.0
    %3360 = vmatpush1.msra.mxu0 0.0
    %3361 = vmatprep.subr.mxu0 0.0
    %3362 = vmatpush1.msra.mxu0 0.0
    %3363 = vmatprep.subr.mxu0 0.0
    %3364 = vmatpush1.msra.mxu0 0.0
    %3365 = vmatprep.subr.mxu0 0.0
    %3366 = vmatpush1.msra.mxu0 0.0
    %3367 = vmatprep.subr.mxu0 0.0
    %3368 = vmatpush1.msra.mxu0 0.0
    %3369 = vmatprep.subr.mxu0 0.0
    %3370 = vmatpush1.msra.mxu0 0.0
    %3371 = vmatprep.subr.mxu0 0.0
    %3372 = vmatpush1.msra.mxu0 0.0
    %3373 = vmatprep.subr.mxu0 0.0
    %3374 = vmatpush1.msra.mxu0 0.0
    %3375 = vmatprep.subr.mxu0 0.0
    %3376 = vmatpush1.msra.mxu0 0.0
    %3377 = vmatprep.subr.mxu0 0.0
    %3378 = vmatpush1.msra.mxu0 0.0
    %3379 = vmatprep.subr.mxu0 0.0
    %3380 = vmatpush1.msra.mxu0 0.0
    %3381 = vmatprep.subr.mxu0 0.0
    %3382 = vmatpush1.msra.mxu0 0.0
    %3383 = vmatprep.subr.mxu0 0.0
    %3384 = vmatpush1.msra.mxu0 0.0
    %3385 = vmatprep.subr.mxu0 0.0
    %3386 = vmatpush1.msra.mxu0 0.0
    %3387 = vmatprep.subr.mxu0 0.0
    %3388 = vmatpush1.msra.mxu0 0.0
    %3389 = vmatprep.subr.mxu0 0.0
    %3390 = vmatpush1.msra.mxu0 0.0
    %3391 = vmatprep.subr.mxu0 0.0
    %3392 = vmatpush1.msra.mxu0 0.0
    %3393 = vmatprep.subr.mxu0 0.0
    %3394 = vmatpush1.msra.mxu0 0.0
    %3395 = vmatprep.subr.mxu0 0.0
    %3396 = vmatpush1.msra.mxu0 0.0
    %3397 = vmatprep.subr.mxu0 0.0
    %3398 = vmatpush1.msra.mxu0 0.0
    %3399 = vmatprep.subr.mxu0 0.0
    %3400 = vmatpush1.msra.mxu0 0.0
    %3401 = vmatprep.subr.mxu0 0.0
    %3402 = vmatpush1.msra.mxu0 0.0
    %3403 = vmatprep.subr.mxu0 0.0
    %3404 = vmatpush1.msra.mxu0 0.0
    %3405 = vmatprep.subr.mxu0 0.0
    %3406 = vmatpush1.msra.mxu0 0.0
    %3407 = vmatprep.subr.mxu0 0.0
    %3408 = vmatpush1.msra.mxu0 0.0
    %3409 = vmatprep.subr.mxu0 0.0
    %3410 = vmatpush1.msra.mxu0 0.0
    %3411 = vmatprep.subr.mxu0 0.0
    %3412 = vmatpush1.msra.mxu0 0.0
    %3413 = vmatprep.mubr.f32.mxu0 0.0
    %3414 = vmatmul.mubr.f32.gmra.mrb[0].mxu0 %v3332
    %v3415 = vpop.f32.mrb[0].mxu0
    %v3416 = vadd.f32 %v3330, %v3415
    %v3417 = vpop.f32.mrb[0].mxu0
    %3418 = vmatprep.mubr.f32.mxu0 0.0
    %3419 = vmatmul.mubr.f32.gmra.mrb[0].mxu0 %v3335
    %v3420 = vpop.f32.mrb[0].mxu0
    %v3421 = vadd.f32 %v3330, %v3420
    %v3422 = vpop.f32.mrb[0].mxu0
    %3423 = vmatprep.mubr.f32.mxu0 0.0
    %3424 = vmatmul.mubr.f32.gmra.mrb[0].mxu0 %v3338
    %v3425 = vpop.f32.mrb[0].mxu0
    %v3426 = vadd.f32 %v3330, %v3425
    %v3427 = vpop.f32.mrb[0].mxu0
    %3428 = vmatprep.mubr.f32.mxu0 0.0
    %3429 = vmatmul.mubr.f32.gmra.mrb[0].mxu0 %v3341
    %v3430 = vpop.f32.mrb[0].mxu0
    %v3431 = vadd.f32 %v3330, %v3430
    %v3432 = vpop.f32.mrb[0].mxu0
    %3433 = vmatprep.mubr.f32.mxu0 0.0
    %3434 = vmatmul.mubr.f32.gmra.mrb[0].mxu0 %v3344
    %v3435 = vpop.f32.mrb[0].mxu0
    %v3436 = vadd.f32 %v3330, %v3435
    %v3437 = vpop.f32.mrb[0].mxu0
    %3438 = vmatprep.mubr.f32.mxu0 0.0
    %3439 = vmatmul.mubr.f32.gmra.mrb[0].mxu0 %v3347
    %v3440 = vpop.f32.mrb[0].mxu0
    %v3441 = vadd.f32 %v3330, %v3440
    %v3442 = vpop.f32.mrb[0].mxu0
    %3443 = vdwg.mxu0
    %v3444 = vmul.f32 %v3416, 0.70710677
    %v3445 = vmul.f32 %v3421, 0.70710677
    %v3446 = vmul.f32 %v3426, 0.70710677
    %v3447 = vmul.f32 %v3431, 0.70710677
    %v3448 = vmul.f32 %v3436, 0.70710677
    %v3449 = vmul.f32 %v3441, 0.70710677
    %v3450 = vand.u32 2147483647, %v3444
    %v3451 = vand.u32 2147483647, %v3445
    %v3452 = vand.u32 2147483647, %v3446
    %v3453 = vand.u32 2147483647, %v3447
    %v3454 = vand.u32 2147483647, %v3448
    %v3455 = vand.u32 2147483647, %v3449
    %v3456 = vmul.f32 %v3450, 0.3275911
    %v3457 = vmul.f32 %v3451, 0.3275911
    %v3458 = vmul.f32 %v3452, 0.3275911
    %v3459 = vmul.f32 %v3453, 0.3275911
    %v3460 = vmul.f32 %v3454, 0.3275911
    %v3461 = vmul.f32 %v3455, 0.3275911
    %v3462 = vadd.f32 %v3456, 1.0
    %v3463 = vadd.f32 %v3457, 1.0
    %v3464 = vadd.f32 %v3458, 1.0
    %v3465 = vadd.f32 %v3459, 1.0
    %v3466 = vadd.f32 %v3460, 1.0
    %v3467 = vadd.f32 %v3461, 1.0
    %v3468 = vrcp.pop %v3462
    %v3469 = vrcp.pop %v3463
    %v3470 = vrcp.pop %v3464
    %v3471 = vrcp.pop %v3465
    %v3472 = vrcp.pop %v3466
    %v3473 = vrcp.pop %v3467
    %v3474 = vmul.f32 %v3468, 1.0614054
    %v3475 = vmul.f32 %v3469, 1.0614054
    %v3476 = vmul.f32 %v3470, 1.0614054
    %v3477 = vmul.f32 %v3471, 1.0614054
    %v3478 = vmul.f32 %v3472, 1.0614054
    %v3479 = vmul.f32 %v3473, 1.0614054
    %v3480 = vsub.f32 %v3474, 1.4531521
    %v3481 = vsub.f32 %v3475, 1.4531521
    %v3482 = vsub.f32 %v3476, 1.4531521
    %v3483 = vsub.f32 %v3477, 1.4531521
    %v3484 = vsub.f32 %v3478, 1.4531521
    %v3485 = vsub.f32 %v3479, 1.4531521
    %v3486 = vmul.f32 %v3480, %v3468
    %v3487 = vmul.f32 %v3481, %v3469
    %v3488 = vmul.f32 %v3482, %v3470
    %v3489 = vmul.f32 %v3483, %v3471
    %v3490 = vmul.f32 %v3484, %v3472
    %v3491 = vmul.f32 %v3485, %v3473
    %v3492 = vadd.f32 %v3486, 1.4214138
    %v3493 = vadd.f32 %v3487, 1.4214138
    %v3494 = vadd.f32 %v3488, 1.4214138
    %v3495 = vadd.f32 %v3489, 1.4214138
    %v3496 = vadd.f32 %v3490, 1.4214138
    %v3497 = vadd.f32 %v3491, 1.4214138
    %v3498 = vmul.f32 %v3492, %v3468
    %v3499 = vmul.f32 %v3493, %v3469
    %v3500 = vmul.f32 %v3494, %v3470
    %v3501 = vmul.f32 %v3495, %v3471
    %v3502 = vmul.f32 %v3496, %v3472
    %v3503 = vmul.f32 %v3497, %v3473
    %v3504 = vsub.f32 %v3498, 0.28449672
    %v3505 = vsub.f32 %v3499, 0.28449672
    %v3506 = vsub.f32 %v3500, 0.28449672
    %v3507 = vsub.f32 %v3501, 0.28449672
    %v3508 = vsub.f32 %v3502, 0.28449672
    %v3509 = vsub.f32 %v3503, 0.28449672
    %v3510 = vmul.f32 %v3504, %v3468
    %v3511 = vmul.f32 %v3505, %v3469
    %v3512 = vmul.f32 %v3506, %v3470
    %v3513 = vmul.f32 %v3507, %v3471
    %v3514 = vmul.f32 %v3508, %v3472
    %v3515 = vmul.f32 %v3509, %v3473
    %v3516 = vadd.f32 %v3510, 0.2548296
    %v3517 = vadd.f32 %v3511, 0.2548296
    %v3518 = vadd.f32 %v3512, 0.2548296
    %v3519 = vadd.f32 %v3513, 0.2548296
    %v3520 = vadd.f32 %v3514, 0.2548296
    %v3521 = vadd.f32 %v3515, 0.2548296
    %v3522 = vmul.f32 %v3516, %v3468
    %v3523 = vmul.f32 %v3517, %v3469
    %v3524 = vmul.f32 %v3518, %v3470
    %v3525 = vmul.f32 %v3519, %v3471
    %v3526 = vmul.f32 %v3520, %v3472
    %v3527 = vmul.f32 %v3521, %v3473
    %v3528 = vsub.f32 0.0, %v3450
    %v3529 = vsub.f32 0.0, %v3451
    %v3530 = vsub.f32 0.0, %v3452
    %v3531 = vsub.f32 0.0, %v3453
    %v3532 = vsub.f32 0.0, %v3454
    %v3533 = vsub.f32 0.0, %v3455
    %v3534 = vmul.f32 %v3528, %v3450
    %v3535 = vmul.f32 %v3529, %v3451
    %v3536 = vmul.f32 %v3530, %v3452
    %v3537 = vmul.f32 %v3531, %v3453
    %v3538 = vmul.f32 %v3532, %v3454
    %v3539 = vmul.f32 %v3533, %v3455
    %v3540 = vmul.f32 %v3534, 1.442695
    %v3541 = vpow.pop %v3540
    %v3542 = vmul.f32 %v3535, 1.442695
    %v3543 = vpow.pop %v3542
    %v3544 = vmul.f32 %v3536, 1.442695
    %v3545 = vpow.pop %v3544
    %v3546 = vmul.f32 %v3537, 1.442695
    %v3547 = vpow.pop %v3546
    %v3548 = vmul.f32 %v3538, 1.442695
    %v3549 = vpow.pop %v3548
    %v3550 = vmul.f32 %v3539, 1.442695
    %v3551 = vpow.pop %v3550
    %v3552 = vmul.f32 %v3522, %v3541
    %v3553 = vmul.f32 %v3523, %v3543
    %v3554 = vmul.f32 %v3524, %v3545
    %v3555 = vmul.f32 %v3525, %v3547
    %v3556 = vmul.f32 %v3526, %v3549
    %v3557 = vmul.f32 %v3527, %v3551
    %vm3558 = vcmp.ge.f32.partialorder %v3444, 0.0
    %vm3559 = vcmp.ge.f32.partialorder %v3445, 0.0
    %vm3560 = vcmp.ge.f32.partialorder %v3446, 0.0
    %vm3561 = vcmp.ge.f32.partialorder %v3447, 0.0
    %vm3562 = vcmp.ge.f32.partialorder %v3448, 0.0
    %vm3563 = vcmp.ge.f32.partialorder %v3449, 0.0
    %v3564 = vmul.f32 %v3552, 0.5
    %v3565 = vmul.f32 %v3553, 0.5
    %v3566 = vmul.f32 %v3554, 0.5
    %v3567 = vmul.f32 %v3555, 0.5
    %v3568 = vmul.f32 %v3556, 0.5
    %v3569 = vmul.f32 %v3557, 0.5
    %v3570 = vsub.f32 1.0, %v3564
    %v3571 = vsub.f32 1.0, %v3565
    %v3572 = vsub.f32 1.0, %v3566
    %v3573 = vsub.f32 1.0, %v3567
    %v3574 = vsub.f32 1.0, %v3568
    %v3575 = vsub.f32 1.0, %v3569
    %v3576 = vsel %vm3558, %v3570, %v3564
    %v3577 = vsel %vm3559, %v3571, %v3565
    %v3578 = vsel %vm3560, %v3572, %v3566
    %v3579 = vsel %vm3561, %v3573, %v3567
    %v3580 = vsel %vm3562, %v3574, %v3568
    %v3581 = vsel %vm3563, %v3575, %v3569
    %v3582 = vmul.f32 %v3416, %v3576
    %v3583 = vmul.f32 %v3421, %v3577
    %v3584 = vmul.f32 %v3426, %v3578
    %v3585 = vmul.f32 %v3431, %v3579
    %v3586 = vmul.f32 %v3436, %v3580
    %v3587 = vmul.f32 %v3441, %v3581
    %v3588 = vld [vmem:[%s7] sm:$0xff]
    %v3589 = vld [vmem:[%s7 + $0x8] sm:$0xff]
    %v3590 = vld [vmem:[%s7 + $0x10] sm:$0xff]
    %v3591 = vld [vmem:[%s7 + $0x18] sm:$0xff]
    %v3592 = vld [vmem:[%s7 + $0x20] sm:$0xff]
    %v3593 = vld [vmem:[%s7 + $0x28] sm:$0xff]
    %v3594 = vld [vmem:[%s7 + $0x30] sm:$0xff]
    %v3595 = vld [vmem:[%s7 + $0x38] sm:$0xff]
    %v3596 = vld [vmem:[%s7 + $0x40] sm:$0xff]
    %v3597 = vld [vmem:[%s7 + $0x48] sm:$0xff]
    %v3598 = vld [vmem:[%s7 + $0x50] sm:$0xff]
    %v3599 = vld [vmem:[%s7 + $0x58] sm:$0xff]
    %v3600 = vld [vmem:[%s7 + $0x60] sm:$0xff]
    %v3601 = vld [vmem:[%s7 + $0x68] sm:$0xff]
    %v3602 = vld [vmem:[%s7 + $0x70] sm:$0xff]
    %v3603 = vld [vmem:[%s7 + $0x78] sm:$0xff]
    %v3604 = vld [vmem:[%s9 + $0x5] sm:$0x1]
    %v3605 = vlaneseq
    %v3606 = vshrl.u32 %v3605, 7
    %v3607 = vsub.s32 0, %v3606
    %v3608 = vrot.slane %v3604, %v3607
    %3609 = vmatprep.subr.mxu0 0.0
    %3610 = vmatpush1.msra.mxu0 %v3588
    %3611 = vmatprep.subr.mxu0 0.0
    %3612 = vmatpush1.msra.mxu0 %v3589
    %3613 = vmatprep.subr.mxu0 0.0
    %3614 = vmatpush1.msra.mxu0 %v3590
    %3615 = vmatprep.subr.mxu0 0.0
    %3616 = vmatpush1.msra.mxu0 %v3591
    %3617 = vmatprep.subr.mxu0 0.0
    %3618 = vmatpush1.msra.mxu0 %v3592
    %3619 = vmatprep.subr.mxu0 0.0
    %3620 = vmatpush1.msra.mxu0 %v3593
    %3621 = vmatprep.subr.mxu0 0.0
    %3622 = vmatpush1.msra.mxu0 %v3594
    %3623 = vmatprep.subr.mxu0 0.0
    %3624 = vmatpush1.msra.mxu0 %v3595
    %3625 = vmatprep.subr.mxu0 0.0
    %3626 = vmatpush1.msra.mxu0 %v3596
    %3627 = vmatprep.subr.mxu0 0.0
    %3628 = vmatpush1.msra.mxu0 %v3597
    %3629 = vmatprep.subr.mxu0 0.0
    %3630 = vmatpush1.msra.mxu0 %v3598
    %3631 = vmatprep.subr.mxu0 0.0
    %3632 = vmatpush1.msra.mxu0 %v3599
    %3633 = vmatprep.subr.mxu0 0.0
    %3634 = vmatpush1.msra.mxu0 %v3600
    %3635 = vmatprep.subr.mxu0 0.0
    %3636 = vmatpush1.msra.mxu0 %v3601
    %3637 = vmatprep.subr.mxu0 0.0
    %3638 = vmatpush1.msra.mxu0 %v3602
    %3639 = vmatprep.subr.mxu0 0.0
    %3640 = vmatpush1.msra.mxu0 %v3603
    %3641 = vmatprep.subr.mxu0 0.0
    %3642 = vmatpush1.msra.mxu0 0.0
    %3643 = vmatprep.subr.mxu0 0.0
    %3644 = vmatpush1.msra.mxu0 0.0
    %3645 = vmatprep.subr.mxu0 0.0
    %3646 = vmatpush1.msra.mxu0 0.0
    %3647 = vmatprep.subr.mxu0 0.0
    %3648 = vmatpush1.msra.mxu0 0.0
    %3649 = vmatprep.subr.mxu0 0.0
    %3650 = vmatpush1.msra.mxu0 0.0
    %3651 = vmatprep.subr.mxu0 0.0
    %3652 = vmatpush1.msra.mxu0 0.0
    %3653 = vmatprep.subr.mxu0 0.0
    %3654 = vmatpush1.msra.mxu0 0.0
    %3655 = vmatprep.subr.mxu0 0.0
    %3656 = vmatpush1.msra.mxu0 0.0
    %3657 = vmatprep.subr.mxu0 0.0
    %3658 = vmatpush1.msra.mxu0 0.0
    %3659 = vmatprep.subr.mxu0 0.0
    %3660 = vmatpush1.msra.mxu0 0.0
    %3661 = vmatprep.subr.mxu0 0.0
    %3662 = vmatpush1.msra.mxu0 0.0
    %3663 = vmatprep.subr.mxu0 0.0
    %3664 = vmatpush1.msra.mxu0 0.0
    %3665 = vmatprep.subr.mxu0 0.0
    %3666 = vmatpush1.msra.mxu0 0.0
    %3667 = vmatprep.subr.mxu0 0.0
    %3668 = vmatpush1.msra.mxu0 0.0
    %3669 = vmatprep.subr.mxu0 0.0
    %3670 = vmatpush1.msra.mxu0 0.0
    %3671 = vmatprep.subr.mxu0 0.0
    %3672 = vmatpush1.msra.mxu0 0.0
    %3673 = vmatprep.mubr.f32.mxu0 0.0
    %3674 = vmatmul.mubr.f32.gmra.mrb[0].mxu0 %v3582
    %v3675 = vpop.f32.mrb[0].mxu0
    %v3676 = vadd.f32 %v3608, %v3675
    %v3677 = vpop.f32.mrb[0].mxu0
    %3678 = vmatprep.mubr.f32.mxu0 0.0
    %3679 = vmatmul.mubr.f32.gmra.mrb[0].mxu0 %v3583
    %v3680 = vpop.f32.mrb[0].mxu0
    %v3681 = vadd.f32 %v3608, %v3680
    %v3682 = vpop.f32.mrb[0].mxu0
    %3683 = vmatprep.mubr.f32.mxu0 0.0
    %3684 = vmatmul.mubr.f32.gmra.mrb[0].mxu0 %v3584
    %v3685 = vpop.f32.mrb[0].mxu0
    %v3686 = vadd.f32 %v3608, %v3685
    %v3687 = vpop.f32.mrb[0].mxu0
    %3688 = vmatprep.mubr.f32.mxu0 0.0
    %3689 = vmatmul.mubr.f32.gmra.mrb[0].mxu0 %v3585
    %v3690 = vpop.f32.mrb[0].mxu0
    %v3691 = vadd.f32 %v3608, %v3690
    %v3692 = vpop.f32.mrb[0].mxu0
    %3693 = vmatprep.mubr.f32.mxu0 0.0
    %3694 = vmatmul.mubr.f32.gmra.mrb[0].mxu0 %v3586
    %v3695 = vpop.f32.mrb[0].mxu0
    %v3696 = vadd.f32 %v3608, %v3695
    %v3697 = vpop.f32.mrb[0].mxu0
    %3698 = vmatprep.mubr.f32.mxu0 0.0
    %3699 = vmatmul.mubr.f32.gmra.mrb[0].mxu0 %v3587
    %v3700 = vpop.f32.mrb[0].mxu0
    %v3701 = vadd.f32 %v3608, %v3700
    %v3702 = vpop.f32.mrb[0].mxu0
    %3703 = vdwg.mxu0
    %v3704 = vadd.f32 %v3216, %v3676
    %v3705 = vadd.f32 %v3217, %v3681
    %v3706 = vadd.f32 %v3218, %v3686
    %v3707 = vadd.f32 %v3219, %v3691
    %v3708 = vadd.f32 %v3220, %v3696
    %v3709 = vadd.f32 %v3221, %v3701
    %v3710 = vld [vmem:[%s9 + $0x6] sm:$0x1]
    %v3711 = vld [vmem:[%s9 + $0x7] sm:$0x1]
    %v3712 = vsel %vm176, %v3704, 0.0
    %3713 = vadd.xlane.f32.xlu0 %v3712
    %v3714 = vpop.xlane.xlu0 %3713
    %v3715 = vsel %vm176, %v3705, 0.0
    %3716 = vadd.xlane.f32.xlu0 %v3715
    %v3717 = vpop.xlane.xlu0 %3716
    %v3718 = vsel %vm176, %v3706, 0.0
    %3719 = vadd.xlane.f32.xlu0 %v3718
    %v3720 = vpop.xlane.xlu0 %3719
    %v3721 = vsel %vm176, %v3707, 0.0
    %3722 = vadd.xlane.f32.xlu0 %v3721
    %v3723 = vpop.xlane.xlu0 %3722
    %v3724 = vsel %vm176, %v3708, 0.0
    %3725 = vadd.xlane.f32.xlu0 %v3724
    %v3726 = vpop.xlane.xlu0 %3725
    %v3727 = vsel %vm176, %v3709, 0.0
    %3728 = vadd.xlane.f32.xlu0 %v3727
    %v3729 = vpop.xlane.xlu0 %3728
    %v3730 = vmul.f32 %v3714, %v195
    %v3731 = vmul.f32 %v3717, %v195
    %v3732 = vmul.f32 %v3720, %v195
    %v3733 = vmul.f32 %v3723, %v195
    %v3734 = vmul.f32 %v3726, %v195
    %v3735 = vmul.f32 %v3729, %v195
    %v3736 = vsub.f32 %v3704, %v3730
    %v3737 = vsub.f32 %v3705, %v3731
    %v3738 = vsub.f32 %v3706, %v3732
    %v3739 = vsub.f32 %v3707, %v3733
    %v3740 = vsub.f32 %v3708, %v3734
    %v3741 = vsub.f32 %v3709, %v3735
    %v3742 = vmul.f32 %v3736, %v3736
    %v3743 = vmul.f32 %v3737, %v3737
    %v3744 = vmul.f32 %v3738, %v3738
    %v3745 = vmul.f32 %v3739, %v3739
    %v3746 = vmul.f32 %v3740, %v3740
    %v3747 = vmul.f32 %v3741, %v3741
    %v3748 = vsel %vm176, %v3742, 0.0
    %3749 = vadd.xlane.f32.xlu0 %v3748
    %v3750 = vpop.xlane.xlu0 %3749
    %v3751 = vsel %vm176, %v3743, 0.0
    %3752 = vadd.xlane.f32.xlu0 %v3751
    %v3753 = vpop.xlane.xlu0 %3752
    %v3754 = vsel %vm176, %v3744, 0.0
    %3755 = vadd.xlane.f32.xlu0 %v3754
    %v3756 = vpop.xlane.xlu0 %3755
    %v3757 = vsel %vm176, %v3745, 0.0
    %3758 = vadd.xlane.f32.xlu0 %v3757
    %v3759 = vpop.xlane.xlu0 %3758
    %v3760 = vsel %vm176, %v3746, 0.0
    %3761 = vadd.xlane.f32.xlu0 %v3760
    %v3762 = vpop.xlane.xlu0 %3761
    %v3763 = vsel %vm176, %v3747, 0.0
    %3764 = vadd.xlane.f32.xlu0 %v3763
    %v3765 = vpop.xlane.xlu0 %3764
    %v3766 = vmul.f32 %v3750, %v195
    %v3767 = vmul.f32 %v3753, %v195
    %v3768 = vmul.f32 %v3756, %v195
    %v3769 = vmul.f32 %v3759, %v195
    %v3770 = vmul.f32 %v3762, %v195
    %v3771 = vmul.f32 %v3765, %v195
    %v3772 = vadd.f32 %v3766, 1e-06
    %v3773 = vadd.f32 %v3767, 1e-06
    %v3774 = vadd.f32 %v3768, 1e-06
    %v3775 = vadd.f32 %v3769, 1e-06
    %v3776 = vadd.f32 %v3770, 1e-06
    %v3777 = vadd.f32 %v3771, 1e-06
    %v3778 = vrsqrt.pop %v3772
    %v3779 = vrsqrt.pop %v3773
    %v3780 = vrsqrt.pop %v3774
    %v3781 = vrsqrt.pop %v3775
    %v3782 = vrsqrt.pop %v3776
    %v3783 = vrsqrt.pop %v3777
    %v3784 = vmul.f32 %v3736, %v3778
    %v3785 = vmul.f32 %v3737, %v3779
    %v3786 = vmul.f32 %v3738, %v3780
    %v3787 = vmul.f32 %v3739, %v3781
    %v3788 = vmul.f32 %v3740, %v3782
    %v3789 = vmul.f32 %v3741, %v3783
    %v3790 = vlaneseq
    %v3791 = vshrl.u32 %v3790, 7
    %v3792 = vsub.s32 0, %v3791
    %v3793 = vrot.slane %v3710, %v3792
    %v3794 = vmul.f32 %v3784, %v3793
    %v3795 = vmul.f32 %v3785, %v3793
    %v3796 = vmul.f32 %v3786, %v3793
    %v3797 = vmul.f32 %v3787, %v3793
    %v3798 = vmul.f32 %v3788, %v3793
    %v3799 = vmul.f32 %v3789, %v3793
    %v3800 = vlaneseq
    %v3801 = vshrl.u32 %v3800, 7
    %v3802 = vsub.s32 0, %v3801
    %v3803 = vrot.slane %v3711, %v3802
    %v3804 = vadd.f32 %v3794, %v3803
    %v3805 = vadd.f32 %v3795, %v3803
    %v3806 = vadd.f32 %v3796, %v3803
    %v3807 = vadd.f32 %v3797, %v3803
    %v3808 = vadd.f32 %v3798, %v3803
    %v3809 = vadd.f32 %v3799, %v3803
    %s3810 = scalar_lea.vmem %s4, 384
    %v3811 = vld [vmem:[%s3810] sm:$0xff]
    %v3812 = vld [vmem:[%s3810 + $0x8] sm:$0xff]
    %v3813 = vld [vmem:[%s3810 + $0x10] sm:$0xff]
    %v3814 = vld [vmem:[%s3810 + $0x18] sm:$0xff]
    %v3816 = vsel %vm176, %v3804, 0
    %v3819 = vsel %vm176, %v3805, 0
    %v3822 = vsel %vm176, %v3806, 0
    %v3825 = vsel %vm176, %v3807, 0
    %v3828 = vsel %vm176, %v3808, 0
    %v3831 = vsel %vm176, %v3809, 0
    %3833 = vmatprep.subr.mxu0 0.0
    %3834 = vmatpush1.msra.mxu0 %v3811
    %3835 = vmatprep.subr.mxu0 0.0
    %3836 = vmatpush1.msra.mxu0 %v3812
    %3837 = vmatprep.subr.mxu0 0.0
    %3838 = vmatpush1.msra.mxu0 %v3813
    %3839 = vmatprep.subr.mxu0 0.0
    %3840 = vmatpush1.msra.mxu0 %v3814
    %3841 = vmatprep.subr.mxu0 0.0
    %3842 = vmatpush1.msra.mxu0 0.0
    %3843 = vmatprep.subr.mxu0 0.0
    %3844 = vmatpush1.msra.mxu0 0.0
    %3845 = vmatprep.subr.mxu0 0.0
    %3846 = vmatpush1.msra.mxu0 0.0
    %3847 = vmatprep.subr.mxu0 0.0
    %3848 = vmatpush1.msra.mxu0 0.0
    %3849 = vmatprep.subr.mxu0 0.0
    %3850 = vmatpush1.msra.mxu0 0.0
    %3851 = vmatprep.subr.mxu0 0.0
    %3852 = vmatpush1.msra.mxu0 0.0
    %3853 = vmatprep.subr.mxu0 0.0
    %3854 = vmatpush1.msra.mxu0 0.0
    %3855 = vmatprep.subr.mxu0 0.0
    %3856 = vmatpush1.msra.mxu0 0.0
    %3857 = vmatprep.subr.mxu0 0.0
    %3858 = vmatpush1.msra.mxu0 0.0
    %3859 = vmatprep.subr.mxu0 0.0
    %3860 = vmatpush1.msra.mxu0 0.0
    %3861 = vmatprep.subr.mxu0 0.0
    %3862 = vmatpush1.msra.mxu0 0.0
    %3863 = vmatprep.subr.mxu0 0.0
    %3864 = vmatpush1.msra.mxu0 0.0
    %3865 = vmatprep.subr.mxu0 0.0
    %3866 = vmatpush1.msra.mxu0 0.0
    %3867 = vmatprep.subr.mxu0 0.0
    %3868 = vmatpush1.msra.mxu0 0.0
    %3869 = vmatprep.subr.mxu0 0.0
    %3870 = vmatpush1.msra.mxu0 0.0
    %3871 = vmatprep.subr.mxu0 0.0
    %3872 = vmatpush1.msra.mxu0 0.0
    %3873 = vmatprep.subr.mxu0 0.0
    %3874 = vmatpush1.msra.mxu0 0.0
    %3875 = vmatprep.subr.mxu0 0.0
    %3876 = vmatpush1.msra.mxu0 0.0
    %3877 = vmatprep.subr.mxu0 0.0
    %3878 = vmatpush1.msra.mxu0 0.0
    %3879 = vmatprep.subr.mxu0 0.0
    %3880 = vmatpush1.msra.mxu0 0.0
    %3881 = vmatprep.subr.mxu0 0.0
    %3882 = vmatpush1.msra.mxu0 0.0
    %3883 = vmatprep.subr.mxu0 0.0
    %3884 = vmatpush1.msra.mxu0 0.0
    %3885 = vmatprep.subr.mxu0 0.0
    %3886 = vmatpush1.msra.mxu0 0.0
    %3887 = vmatprep.subr.mxu0 0.0
    %3888 = vmatpush1.msra.mxu0 0.0
    %3889 = vmatprep.subr.mxu0 0.0
    %3890 = vmatpush1.msra.mxu0 0.0
    %3891 = vmatprep.subr.mxu0 0.0
    %3892 = vmatpush1.msra.mxu0 0.0
    %3893 = vmatprep.subr.mxu0 0.0
    %3894 = vmatpush1.msra.mxu0 0.0
    %3895 = vmatprep.subr.mxu0 0.0
    %3896 = vmatpush1.msra.mxu0 0.0
    %3897 = vmatprep.mubr.f32.mxu0 0.0
    %3898 = vmatmul.mubr.f32.gmra.mrb[0].mxu0 %v3816
    %v3899 = vpop.f32.mrb[0].mxu0
    %v3900 = vadd.f32 0.0, %v3899
    %v3901 = vpop.f32.mrb[0].mxu0
    %3902 = vmatprep.mubr.f32.mxu0 0.0
    %3903 = vmatmul.mubr.f32.gmra.mrb[0].mxu0 %v3819
    %v3904 = vpop.f32.mrb[0].mxu0
    %v3905 = vadd.f32 0.0, %v3904
    %v3906 = vpop.f32.mrb[0].mxu0
    %3907 = vmatprep.mubr.f32.mxu0 0.0
    %3908 = vmatmul.mubr.f32.gmra.mrb[0].mxu0 %v3822
    %v3909 = vpop.f32.mrb[0].mxu0
    %v3910 = vadd.f32 0.0, %v3909
    %v3911 = vpop.f32.mrb[0].mxu0
    %3912 = vmatprep.mubr.f32.mxu0 0.0
    %3913 = vmatmul.mubr.f32.gmra.mrb[0].mxu0 %v3825
    %v3914 = vpop.f32.mrb[0].mxu0
    %v3915 = vadd.f32 0.0, %v3914
    %v3916 = vpop.f32.mrb[0].mxu0
    %3917 = vmatprep.mubr.f32.mxu0 0.0
    %3918 = vmatmul.mubr.f32.gmra.mrb[0].mxu0 %v3828
    %v3919 = vpop.f32.mrb[0].mxu0
    %v3920 = vadd.f32 0.0, %v3919
    %v3921 = vpop.f32.mrb[0].mxu0
    %3922 = vmatprep.mubr.f32.mxu0 0.0
    %3923 = vmatmul.mubr.f32.gmra.mrb[0].mxu0 %v3831
    %v3924 = vpop.f32.mrb[0].mxu0
    %v3925 = vadd.f32 0.0, %v3924
    %v3926 = vpop.f32.mrb[0].mxu0
    %3927 = vdwg.mxu0
    %s3928 = scalar_lea.vmem %s4, 512
    %v3929 = vld [vmem:[%s3928] sm:$0xff]
    %v3930 = vld [vmem:[%s3928 + $0x8] sm:$0xff]
    %v3931 = vld [vmem:[%s3928 + $0x10] sm:$0xff]
    %v3932 = vld [vmem:[%s3928 + $0x18] sm:$0xff]
    %3933 = vmatprep.subr.mxu0 0.0
    %3934 = vmatpush1.msra.mxu0 %v3929
    %3935 = vmatprep.subr.mxu0 0.0
    %3936 = vmatpush1.msra.mxu0 %v3930
    %3937 = vmatprep.subr.mxu0 0.0
    %3938 = vmatpush1.msra.mxu0 %v3931
    %3939 = vmatprep.subr.mxu0 0.0
    %3940 = vmatpush1.msra.mxu0 %v3932
    %3941 = vmatprep.subr.mxu0 0.0
    %3942 = vmatpush1.msra.mxu0 0.0
    %3943 = vmatprep.subr.mxu0 0.0
    %3944 = vmatpush1.msra.mxu0 0.0
    %3945 = vmatprep.subr.mxu0 0.0
    %3946 = vmatpush1.msra.mxu0 0.0
    %3947 = vmatprep.subr.mxu0 0.0
    %3948 = vmatpush1.msra.mxu0 0.0
    %3949 = vmatprep.subr.mxu0 0.0
    %3950 = vmatpush1.msra.mxu0 0.0
    %3951 = vmatprep.subr.mxu0 0.0
    %3952 = vmatpush1.msra.mxu0 0.0
    %3953 = vmatprep.subr.mxu0 0.0
    %3954 = vmatpush1.msra.mxu0 0.0
    %3955 = vmatprep.subr.mxu0 0.0
    %3956 = vmatpush1.msra.mxu0 0.0
    %3957 = vmatprep.subr.mxu0 0.0
    %3958 = vmatpush1.msra.mxu0 0.0
    %3959 = vmatprep.subr.mxu0 0.0
    %3960 = vmatpush1.msra.mxu0 0.0
    %3961 = vmatprep.subr.mxu0 0.0
    %3962 = vmatpush1.msra.mxu0 0.0
    %3963 = vmatprep.subr.mxu0 0.0
    %3964 = vmatpush1.msra.mxu0 0.0
    %3965 = vmatprep.subr.mxu0 0.0
    %3966 = vmatpush1.msra.mxu0 0.0
    %3967 = vmatprep.subr.mxu0 0.0
    %3968 = vmatpush1.msra.mxu0 0.0
    %3969 = vmatprep.subr.mxu0 0.0
    %3970 = vmatpush1.msra.mxu0 0.0
    %3971 = vmatprep.subr.mxu0 0.0
    %3972 = vmatpush1.msra.mxu0 0.0
    %3973 = vmatprep.subr.mxu0 0.0
    %3974 = vmatpush1.msra.mxu0 0.0
    %3975 = vmatprep.subr.mxu0 0.0
    %3976 = vmatpush1.msra.mxu0 0.0
    %3977 = vmatprep.subr.mxu0 0.0
    %3978 = vmatpush1.msra.mxu0 0.0
    %3979 = vmatprep.subr.mxu0 0.0
    %3980 = vmatpush1.msra.mxu0 0.0
    %3981 = vmatprep.subr.mxu0 0.0
    %3982 = vmatpush1.msra.mxu0 0.0
    %3983 = vmatprep.subr.mxu0 0.0
    %3984 = vmatpush1.msra.mxu0 0.0
    %3985 = vmatprep.subr.mxu0 0.0
    %3986 = vmatpush1.msra.mxu0 0.0
    %3987 = vmatprep.subr.mxu0 0.0
    %3988 = vmatpush1.msra.mxu0 0.0
    %3989 = vmatprep.subr.mxu0 0.0
    %3990 = vmatpush1.msra.mxu0 0.0
    %3991 = vmatprep.subr.mxu0 0.0
    %3992 = vmatpush1.msra.mxu0 0.0
    %3993 = vmatprep.subr.mxu0 0.0
    %3994 = vmatpush1.msra.mxu0 0.0
    %3995 = vmatprep.subr.mxu0 0.0
    %3996 = vmatpush1.msra.mxu0 0.0
    %3997 = vmatprep.mubr.f32.mxu0 0.0
    %3998 = vmatmul.mubr.f32.gmra.mrb[0].mxu0 %v3816
    %v3999 = vpop.f32.mrb[0].mxu0
    %v4000 = vadd.f32 0.0, %v3999
    %v4001 = vpop.f32.mrb[0].mxu0
    %4002 = vmatprep.mubr.f32.mxu0 0.0
    %4003 = vmatmul.mubr.f32.gmra.mrb[0].mxu0 %v3819
    %v4004 = vpop.f32.mrb[0].mxu0
    %v4005 = vadd.f32 0.0, %v4004
    %v4006 = vpop.f32.mrb[0].mxu0
    %4007 = vmatprep.mubr.f32.mxu0 0.0
    %4008 = vmatmul.mubr.f32.gmra.mrb[0].mxu0 %v3822
    %v4009 = vpop.f32.mrb[0].mxu0
    %v4010 = vadd.f32 0.0, %v4009
    %v4011 = vpop.f32.mrb[0].mxu0
    %4012 = vmatprep.mubr.f32.mxu0 0.0
    %4013 = vmatmul.mubr.f32.gmra.mrb[0].mxu0 %v3825
    %v4014 = vpop.f32.mrb[0].mxu0
    %v4015 = vadd.f32 0.0, %v4014
    %v4016 = vpop.f32.mrb[0].mxu0
    %4017 = vmatprep.mubr.f32.mxu0 0.0
    %4018 = vmatmul.mubr.f32.gmra.mrb[0].mxu0 %v3828
    %v4019 = vpop.f32.mrb[0].mxu0
    %v4020 = vadd.f32 0.0, %v4019
    %v4021 = vpop.f32.mrb[0].mxu0
    %4022 = vmatprep.mubr.f32.mxu0 0.0
    %4023 = vmatmul.mubr.f32.gmra.mrb[0].mxu0 %v3831
    %v4024 = vpop.f32.mrb[0].mxu0
    %v4025 = vadd.f32 0.0, %v4024
    %v4026 = vpop.f32.mrb[0].mxu0
    %4027 = vdwg.mxu0
    %s4028 = scalar_lea.vmem %s4, 640
    %v4029 = vld [vmem:[%s4028] sm:$0xff]
    %v4030 = vld [vmem:[%s4028 + $0x8] sm:$0xff]
    %v4031 = vld [vmem:[%s4028 + $0x10] sm:$0xff]
    %v4032 = vld [vmem:[%s4028 + $0x18] sm:$0xff]
    %4033 = vmatprep.subr.mxu0 0.0
    %4034 = vmatpush1.msra.mxu0 %v4029
    %4035 = vmatprep.subr.mxu0 0.0
    %4036 = vmatpush1.msra.mxu0 %v4030
    %4037 = vmatprep.subr.mxu0 0.0
    %4038 = vmatpush1.msra.mxu0 %v4031
    %4039 = vmatprep.subr.mxu0 0.0
    %4040 = vmatpush1.msra.mxu0 %v4032
    %4041 = vmatprep.subr.mxu0 0.0
    %4042 = vmatpush1.msra.mxu0 0.0
    %4043 = vmatprep.subr.mxu0 0.0
    %4044 = vmatpush1.msra.mxu0 0.0
    %4045 = vmatprep.subr.mxu0 0.0
    %4046 = vmatpush1.msra.mxu0 0.0
    %4047 = vmatprep.subr.mxu0 0.0
    %4048 = vmatpush1.msra.mxu0 0.0
    %4049 = vmatprep.subr.mxu0 0.0
    %4050 = vmatpush1.msra.mxu0 0.0
    %4051 = vmatprep.subr.mxu0 0.0
    %4052 = vmatpush1.msra.mxu0 0.0
    %4053 = vmatprep.subr.mxu0 0.0
    %4054 = vmatpush1.msra.mxu0 0.0
    %4055 = vmatprep.subr.mxu0 0.0
    %4056 = vmatpush1.msra.mxu0 0.0
    %4057 = vmatprep.subr.mxu0 0.0
    %4058 = vmatpush1.msra.mxu0 0.0
    %4059 = vmatprep.subr.mxu0 0.0
    %4060 = vmatpush1.msra.mxu0 0.0
    %4061 = vmatprep.subr.mxu0 0.0
    %4062 = vmatpush1.msra.mxu0 0.0
    %4063 = vmatprep.subr.mxu0 0.0
    %4064 = vmatpush1.msra.mxu0 0.0
    %4065 = vmatprep.subr.mxu0 0.0
    %4066 = vmatpush1.msra.mxu0 0.0
    %4067 = vmatprep.subr.mxu0 0.0
    %4068 = vmatpush1.msra.mxu0 0.0
    %4069 = vmatprep.subr.mxu0 0.0
    %4070 = vmatpush1.msra.mxu0 0.0
    %4071 = vmatprep.subr.mxu0 0.0
    %4072 = vmatpush1.msra.mxu0 0.0
    %4073 = vmatprep.subr.mxu0 0.0
    %4074 = vmatpush1.msra.mxu0 0.0
    %4075 = vmatprep.subr.mxu0 0.0
    %4076 = vmatpush1.msra.mxu0 0.0
    %4077 = vmatprep.subr.mxu0 0.0
    %4078 = vmatpush1.msra.mxu0 0.0
    %4079 = vmatprep.subr.mxu0 0.0
    %4080 = vmatpush1.msra.mxu0 0.0
    %4081 = vmatprep.subr.mxu0 0.0
    %4082 = vmatpush1.msra.mxu0 0.0
    %4083 = vmatprep.subr.mxu0 0.0
    %4084 = vmatpush1.msra.mxu0 0.0
    %4085 = vmatprep.subr.mxu0 0.0
    %4086 = vmatpush1.msra.mxu0 0.0
    %4087 = vmatprep.subr.mxu0 0.0
    %4088 = vmatpush1.msra.mxu0 0.0
    %4089 = vmatprep.subr.mxu0 0.0
    %4090 = vmatpush1.msra.mxu0 0.0
    %4091 = vmatprep.subr.mxu0 0.0
    %4092 = vmatpush1.msra.mxu0 0.0
    %4093 = vmatprep.subr.mxu0 0.0
    %4094 = vmatpush1.msra.mxu0 0.0
    %4095 = vmatprep.subr.mxu0 0.0
    %4096 = vmatpush1.msra.mxu0 0.0
    %4097 = vmatprep.mubr.f32.mxu0 0.0
    %4098 = vmatmul.mubr.f32.gmra.mrb[0].mxu0 %v3816
    %v4099 = vpop.f32.mrb[0].mxu0
    %v4100 = vadd.f32 0.0, %v4099
    %v4101 = vpop.f32.mrb[0].mxu0
    %4102 = vmatprep.mubr.f32.mxu0 0.0
    %4103 = vmatmul.mubr.f32.gmra.mrb[0].mxu0 %v3819
    %v4104 = vpop.f32.mrb[0].mxu0
    %v4105 = vadd.f32 0.0, %v4104
    %v4106 = vpop.f32.mrb[0].mxu0
    %4107 = vmatprep.mubr.f32.mxu0 0.0
    %4108 = vmatmul.mubr.f32.gmra.mrb[0].mxu0 %v3822
    %v4109 = vpop.f32.mrb[0].mxu0
    %v4110 = vadd.f32 0.0, %v4109
    %v4111 = vpop.f32.mrb[0].mxu0
    %4112 = vmatprep.mubr.f32.mxu0 0.0
    %4113 = vmatmul.mubr.f32.gmra.mrb[0].mxu0 %v3825
    %v4114 = vpop.f32.mrb[0].mxu0
    %v4115 = vadd.f32 0.0, %v4114
    %v4116 = vpop.f32.mrb[0].mxu0
    %4117 = vmatprep.mubr.f32.mxu0 0.0
    %4118 = vmatmul.mubr.f32.gmra.mrb[0].mxu0 %v3828
    %v4119 = vpop.f32.mrb[0].mxu0
    %v4120 = vadd.f32 0.0, %v4119
    %v4121 = vpop.f32.mrb[0].mxu0
    %4122 = vmatprep.mubr.f32.mxu0 0.0
    %4123 = vmatmul.mubr.f32.gmra.mrb[0].mxu0 %v3831
    %v4124 = vpop.f32.mrb[0].mxu0
    %v4125 = vadd.f32 0.0, %v4124
    %v4126 = vpop.f32.mrb[0].mxu0
    %4127 = vdwg.mxu0
    %v4129 = vsel %vm593, %v3900, 0
    %v4132 = vsel %vm593, %v3905, 0
    %v4135 = vsel %vm593, %v3910, 0
    %v4138 = vsel %vm593, %v3915, 0
    %v4141 = vsel %vm593, %v3920, 0
    %v4144 = vsel %vm593, %v3925, 0
    %v4147 = vsel %vm593, %v4000, 0
    %v4150 = vsel %vm593, %v4005, 0
    %v4153 = vsel %vm593, %v4010, 0
    %v4156 = vsel %vm593, %v4015, 0
    %v4159 = vsel %vm593, %v4020, 0
    %v4162 = vsel %vm593, %v4025, 0
    %4164 = vmatprep.subr.mxu0 0.0
    %4165 = vmatpush1.xpose.msra.mxu0 %v4147
    %4166 = vmatprep.subr.mxu0 0.0
    %4167 = vmatpush1.xpose.msra.mxu0 %v4150
    %4168 = vmatprep.subr.mxu0 0.0
    %4169 = vmatpush1.xpose.msra.mxu0 %v4153
    %4170 = vmatprep.subr.mxu0 0.0
    %4171 = vmatpush1.xpose.msra.mxu0 %v4156
    %4172 = vmatprep.subr.mxu0 0.0
    %4173 = vmatpush1.xpose.msra.mxu0 %v4159
    %4174 = vmatprep.subr.mxu0 0.0
    %4175 = vmatpush1.xpose.msra.mxu0 %v4162
    %4176 = vmatprep.subr.mxu0 0.0
    %4177 = vmatpush1.xpose.msra.mxu0 0.0
    %4178 = vmatprep.subr.mxu0 0.0
    %4179 = vmatpush1.xpose.msra.mxu0 0.0
    %4180 = vmatprep.subr.mxu0 0.0
    %4181 = vmatpush1.xpose.msra.mxu0 0.0
    %4182 = vmatprep.subr.mxu0 0.0
    %4183 = vmatpush1.xpose.msra.mxu0 0.0
    %4184 = vmatprep.subr.mxu0 0.0
    %4185 = vmatpush1.xpose.msra.mxu0 0.0
    %4186 = vmatprep.subr.mxu0 0.0
    %4187 = vmatpush1.xpose.msra.mxu0 0.0
    %4188 = vmatprep.subr.mxu0 0.0
    %4189 = vmatpush1.xpose.msra.mxu0 0.0
    %4190 = vmatprep.subr.mxu0 0.0
    %4191 = vmatpush1.xpose.msra.mxu0 0.0
    %4192 = vmatprep.subr.mxu0 0.0
    %4193 = vmatpush1.xpose.msra.mxu0 0.0
    %4194 = vmatprep.subr.mxu0 0.0
    %4195 = vmatpush1.xpose.msra.mxu0 0.0
    %4196 = vmatprep.subr.mxu0 0.0
    %4197 = vmatpush1.xpose.msra.mxu0 0.0
    %4198 = vmatprep.subr.mxu0 0.0
    %4199 = vmatpush1.xpose.msra.mxu0 0.0
    %4200 = vmatprep.subr.mxu0 0.0
    %4201 = vmatpush1.xpose.msra.mxu0 0.0
    %4202 = vmatprep.subr.mxu0 0.0
    %4203 = vmatpush1.xpose.msra.mxu0 0.0
    %4204 = vmatprep.subr.mxu0 0.0
    %4205 = vmatpush1.xpose.msra.mxu0 0.0
    %4206 = vmatprep.subr.mxu0 0.0
    %4207 = vmatpush1.xpose.msra.mxu0 0.0
    %4208 = vmatprep.subr.mxu0 0.0
    %4209 = vmatpush1.xpose.msra.mxu0 0.0
    %4210 = vmatprep.subr.mxu0 0.0
    %4211 = vmatpush1.xpose.msra.mxu0 0.0
    %4212 = vmatprep.subr.mxu0 0.0
    %4213 = vmatpush1.xpose.msra.mxu0 0.0
    %4214 = vmatprep.subr.mxu0 0.0
    %4215 = vmatpush1.xpose.msra.mxu0 0.0
    %4216 = vmatprep.subr.mxu0 0.0
    %4217 = vmatpush1.xpose.msra.mxu0 0.0
    %4218 = vmatprep.subr.mxu0 0.0
    %4219 = vmatpush1.xpose.msra.mxu0 0.0
    %4220 = vmatprep.subr.mxu0 0.0
    %4221 = vmatpush1.xpose.msra.mxu0 0.0
    %4222 = vmatprep.subr.mxu0 0.0
    %4223 = vmatpush1.xpose.msra.mxu0 0.0
    %4224 = vmatprep.subr.mxu0 0.0
    %4225 = vmatpush1.xpose.msra.mxu0 0.0
    %4226 = vmatprep.subr.mxu0 0.0
    %4227 = vmatpush1.xpose.msra.mxu0 0.0
    %4228 = vmatprep.mubr.f32.mxu0 0.0
    %4229 = vmatmul.mubr.f32.gmra.mrb[0].mxu0 %v4129
    %v4230 = vpop.f32.mrb[0].mxu0
    %v4231 = vadd.f32 %v168, %v4230
    %v4232 = vpop.f32.mrb[0].mxu0
    %4233 = vmatprep.mubr.f32.mxu0 0.0
    %4234 = vmatmul.mubr.f32.gmra.mrb[0].mxu0 %v4132
    %v4235 = vpop.f32.mrb[0].mxu0
    %v4236 = vadd.f32 %v169, %v4235
    %v4237 = vpop.f32.mrb[0].mxu0
    %4238 = vmatprep.mubr.f32.mxu0 0.0
    %4239 = vmatmul.mubr.f32.gmra.mrb[0].mxu0 %v4135
    %v4240 = vpop.f32.mrb[0].mxu0
    %v4241 = vadd.f32 %v170, %v4240
    %v4242 = vpop.f32.mrb[0].mxu0
    %4243 = vmatprep.mubr.f32.mxu0 0.0
    %4244 = vmatmul.mubr.f32.gmra.mrb[0].mxu0 %v4138
    %v4245 = vpop.f32.mrb[0].mxu0
    %v4246 = vadd.f32 %v171, %v4245
    %v4247 = vpop.f32.mrb[0].mxu0
    %4248 = vmatprep.mubr.f32.mxu0 0.0
    %4249 = vmatmul.mubr.f32.gmra.mrb[0].mxu0 %v4141
    %v4250 = vpop.f32.mrb[0].mxu0
    %v4251 = vadd.f32 %v172, %v4250
    %v4252 = vpop.f32.mrb[0].mxu0
    %4253 = vmatprep.mubr.f32.mxu0 0.0
    %4254 = vmatmul.mubr.f32.gmra.mrb[0].mxu0 %v4144
    %v4255 = vpop.f32.mrb[0].mxu0
    %v4256 = vadd.f32 %v173, %v4255
    %v4257 = vpop.f32.mrb[0].mxu0
    %4258 = vdwg.mxu0
    %v4259 = vsel %vm54, %v4231, -inf
    %4260 = vmax.xlane.f32.xlu0 %v4259
    %v4261 = vpop.xlane.xlu0 %4260
    %v4262 = vsel %vm54, %v4236, -inf
    %4263 = vmax.xlane.f32.xlu0 %v4262
    %v4264 = vpop.xlane.xlu0 %4263
    %v4265 = vsel %vm54, %v4241, -inf
    %4266 = vmax.xlane.f32.xlu0 %v4265
    %v4267 = vpop.xlane.xlu0 %4266
    %v4268 = vsel %vm54, %v4246, -inf
    %4269 = vmax.xlane.f32.xlu0 %v4268
    %v4270 = vpop.xlane.xlu0 %4269
    %v4271 = vsel %vm54, %v4251, -inf
    %4272 = vmax.xlane.f32.xlu0 %v4271
    %v4273 = vpop.xlane.xlu0 %4272
    %v4274 = vsel %vm54, %v4256, -inf
    %4275 = vmax.xlane.f32.xlu0 %v4274
    %v4276 = vpop.xlane.xlu0 %4275
    %v4277 = vsub.f32 %v4231, %v4261
    %v4278 = vsub.f32 %v4236, %v4264
    %v4279 = vsub.f32 %v4241, %v4267
    %v4280 = vsub.f32 %v4246, %v4270
    %v4281 = vsub.f32 %v4251, %v4273
    %v4282 = vsub.f32 %v4256, %v4276
    %v4283 = vmul.f32 %v4277, 1.442695
    %v4284 = vpow.pop %v4283
    %v4285 = vmul.f32 %v4278, 1.442695
    %v4286 = vpow.pop %v4285
    %v4287 = vmul.f32 %v4279, 1.442695
    %v4288 = vpow.pop %v4287
    %v4289 = vmul.f32 %v4280, 1.442695
    %v4290 = vpow.pop %v4289
    %v4291 = vmul.f32 %v4281, 1.442695
    %v4292 = vpow.pop %v4291
    %v4293 = vmul.f32 %v4282, 1.442695
    %v4294 = vpow.pop %v4293
    %v4295 = vsel %vm54, %v4284, 0.0
    %4296 = vadd.xlane.f32.xlu0 %v4295
    %v4297 = vpop.xlane.xlu0 %4296
    %v4298 = vsel %vm54, %v4286, 0.0
    %4299 = vadd.xlane.f32.xlu0 %v4298
    %v4300 = vpop.xlane.xlu0 %4299
    %v4301 = vsel %vm54, %v4288, 0.0
    %4302 = vadd.xlane.f32.xlu0 %v4301
    %v4303 = vpop.xlane.xlu0 %4302
    %v4304 = vsel %vm54, %v4290, 0.0
    %4305 = vadd.xlane.f32.xlu0 %v4304
    %v4306 = vpop.xlane.xlu0 %4305
    %v4307 = vsel %vm54, %v4292, 0.0
    %4308 = vadd.xlane.f32.xlu0 %v4307
    %v4309 = vpop.xlane.xlu0 %4308
    %v4310 = vsel %vm54, %v4294, 0.0
    %4311 = vadd.xlane.f32.xlu0 %v4310
    %v4312 = vpop.xlane.xlu0 %4311
    %v4313 = vrcp.pop %v4297
    %v4314 = vrcp.pop %v4300
    %v4315 = vrcp.pop %v4303
    %v4316 = vrcp.pop %v4306
    %v4317 = vrcp.pop %v4309
    %v4318 = vrcp.pop %v4312
    %v4319 = vmul.f32 %v4284, %v4313
    %v4320 = vmul.f32 %v4286, %v4314
    %v4321 = vmul.f32 %v4288, %v4315
    %v4322 = vmul.f32 %v4290, %v4316
    %v4323 = vmul.f32 %v4292, %v4317
    %v4324 = vmul.f32 %v4294, %v4318
    %v4326 = vsel %vm54, %v4319, 0
    %v4329 = vsel %vm54, %v4320, 0
    %v4332 = vsel %vm54, %v4321, 0
    %v4335 = vsel %vm54, %v4322, 0
    %v4338 = vsel %vm54, %v4323, 0
    %v4341 = vsel %vm54, %v4324, 0
    %4343 = vmatprep.subr.mxu0 0.0
    %4344 = vmatpush1.msra.mxu0 %v4100
    %4345 = vmatprep.subr.mxu0 0.0
    %4346 = vmatpush1.msra.mxu0 %v4105
    %4347 = vmatprep.subr.mxu0 0.0
    %4348 = vmatpush1.msra.mxu0 %v4110
    %4349 = vmatprep.subr.mxu0 0.0
    %4350 = vmatpush1.msra.mxu0 %v4115
    %4351 = vmatprep.subr.mxu0 0.0
    %4352 = vmatpush1.msra.mxu0 %v4120
    %4353 = vmatprep.subr.mxu0 0.0
    %4354 = vmatpush1.msra.mxu0 %v4125
    %4355 = vmatprep.subr.mxu0 0.0
    %4356 = vmatpush1.msra.mxu0 0.0
    %4357 = vmatprep.subr.mxu0 0.0
    %4358 = vmatpush1.msra.mxu0 0.0
    %4359 = vmatprep.subr.mxu0 0.0
    %4360 = vmatpush1.msra.mxu0 0.0
    %4361 = vmatprep.subr.mxu0 0.0
    %4362 = vmatpush1.msra.mxu0 0.0
    %4363 = vmatprep.subr.mxu0 0.0
    %4364 = vmatpush1.msra.mxu0 0.0
    %4365 = vmatprep.subr.mxu0 0.0
    %4366 = vmatpush1.msra.mxu0 0.0
    %4367 = vmatprep.subr.mxu0 0.0
    %4368 = vmatpush1.msra.mxu0 0.0
    %4369 = vmatprep.subr.mxu0 0.0
    %4370 = vmatpush1.msra.mxu0 0.0
    %4371 = vmatprep.subr.mxu0 0.0
    %4372 = vmatpush1.msra.mxu0 0.0
    %4373 = vmatprep.subr.mxu0 0.0
    %4374 = vmatpush1.msra.mxu0 0.0
    %4375 = vmatprep.subr.mxu0 0.0
    %4376 = vmatpush1.msra.mxu0 0.0
    %4377 = vmatprep.subr.mxu0 0.0
    %4378 = vmatpush1.msra.mxu0 0.0
    %4379 = vmatprep.subr.mxu0 0.0
    %4380 = vmatpush1.msra.mxu0 0.0
    %4381 = vmatprep.subr.mxu0 0.0
    %4382 = vmatpush1.msra.mxu0 0.0
    %4383 = vmatprep.subr.mxu0 0.0
    %4384 = vmatpush1.msra.mxu0 0.0
    %4385 = vmatprep.subr.mxu0 0.0
    %4386 = vmatpush1.msra.mxu0 0.0
    %4387 = vmatprep.subr.mxu0 0.0
    %4388 = vmatpush1.msra.mxu0 0.0
    %4389 = vmatprep.subr.mxu0 0.0
    %4390 = vmatpush1.msra.mxu0 0.0
    %4391 = vmatprep.subr.mxu0 0.0
    %4392 = vmatpush1.msra.mxu0 0.0
    %4393 = vmatprep.subr.mxu0 0.0
    %4394 = vmatpush1.msra.mxu0 0.0
    %4395 = vmatprep.subr.mxu0 0.0
    %4396 = vmatpush1.msra.mxu0 0.0
    %4397 = vmatprep.subr.mxu0 0.0
    %4398 = vmatpush1.msra.mxu0 0.0
    %4399 = vmatprep.subr.mxu0 0.0
    %4400 = vmatpush1.msra.mxu0 0.0
    %4401 = vmatprep.subr.mxu0 0.0
    %4402 = vmatpush1.msra.mxu0 0.0
    %4403 = vmatprep.subr.mxu0 0.0
    %4404 = vmatpush1.msra.mxu0 0.0
    %4405 = vmatprep.subr.mxu0 0.0
    %4406 = vmatpush1.msra.mxu0 0.0
    %4407 = vmatprep.mubr.f32.mxu0 0.0
    %4408 = vmatmul.mubr.f32.gmra.mrb[0].mxu0 %v4326
    %v4409 = vpop.f32.mrb[0].mxu0
    %v4410 = vadd.f32 0.0, %v4409
    %v4411 = vpop.f32.mrb[0].mxu0
    %4412 = vmatprep.mubr.f32.mxu0 0.0
    %4413 = vmatmul.mubr.f32.gmra.mrb[0].mxu0 %v4329
    %v4414 = vpop.f32.mrb[0].mxu0
    %v4415 = vadd.f32 0.0, %v4414
    %v4416 = vpop.f32.mrb[0].mxu0
    %4417 = vmatprep.mubr.f32.mxu0 0.0
    %4418 = vmatmul.mubr.f32.gmra.mrb[0].mxu0 %v4332
    %v4419 = vpop.f32.mrb[0].mxu0
    %v4420 = vadd.f32 0.0, %v4419
    %v4421 = vpop.f32.mrb[0].mxu0
    %4422 = vmatprep.mubr.f32.mxu0 0.0
    %4423 = vmatmul.mubr.f32.gmra.mrb[0].mxu0 %v4335
    %v4424 = vpop.f32.mrb[0].mxu0
    %v4425 = vadd.f32 0.0, %v4424
    %v4426 = vpop.f32.mrb[0].mxu0
    %4427 = vmatprep.mubr.f32.mxu0 0.0
    %4428 = vmatmul.mubr.f32.gmra.mrb[0].mxu0 %v4338
    %v4429 = vpop.f32.mrb[0].mxu0
    %v4430 = vadd.f32 0.0, %v4429
    %v4431 = vpop.f32.mrb[0].mxu0
    %4432 = vmatprep.mubr.f32.mxu0 0.0
    %4433 = vmatmul.mubr.f32.gmra.mrb[0].mxu0 %v4341
    %v4434 = vpop.f32.mrb[0].mxu0
    %v4435 = vadd.f32 0.0, %v4434
    %v4436 = vpop.f32.mrb[0].mxu0
    %4437 = vdwg.mxu0
    %s4438 = scalar_lea.vmem %s5, 32
    %v4439 = vld [vmem:[%s4438] sm:$0xff]
    %s4440 = scalar_lea.vmem %s4, 416
    %v4441 = vld [vmem:[%s4440] sm:$0xff]
    %v4442 = vld [vmem:[%s4440 + $0x8] sm:$0xff]
    %v4443 = vld [vmem:[%s4440 + $0x10] sm:$0xff]
    %v4444 = vld [vmem:[%s4440 + $0x18] sm:$0xff]
    %4445 = vmatprep.subr.mxu0 0.0
    %4446 = vmatpush1.msra.mxu0 %v4441
    %4447 = vmatprep.subr.mxu0 0.0
    %4448 = vmatpush1.msra.mxu0 %v4442
    %4449 = vmatprep.subr.mxu0 0.0
    %4450 = vmatpush1.msra.mxu0 %v4443
    %4451 = vmatprep.subr.mxu0 0.0
    %4452 = vmatpush1.msra.mxu0 %v4444
    %4453 = vmatprep.subr.mxu0 0.0
    %4454 = vmatpush1.msra.mxu0 0.0
    %4455 = vmatprep.subr.mxu0 0.0
    %4456 = vmatpush1.msra.mxu0 0.0
    %4457 = vmatprep.subr.mxu0 0.0
    %4458 = vmatpush1.msra.mxu0 0.0
    %4459 = vmatprep.subr.mxu0 0.0
    %4460 = vmatpush1.msra.mxu0 0.0
    %4461 = vmatprep.subr.mxu0 0.0
    %4462 = vmatpush1.msra.mxu0 0.0
    %4463 = vmatprep.subr.mxu0 0.0
    %4464 = vmatpush1.msra.mxu0 0.0
    %4465 = vmatprep.subr.mxu0 0.0
    %4466 = vmatpush1.msra.mxu0 0.0
    %4467 = vmatprep.subr.mxu0 0.0
    %4468 = vmatpush1.msra.mxu0 0.0
    %4469 = vmatprep.subr.mxu0 0.0
    %4470 = vmatpush1.msra.mxu0 0.0
    %4471 = vmatprep.subr.mxu0 0.0
    %4472 = vmatpush1.msra.mxu0 0.0
    %4473 = vmatprep.subr.mxu0 0.0
    %4474 = vmatpush1.msra.mxu0 0.0
    %4475 = vmatprep.subr.mxu0 0.0
    %4476 = vmatpush1.msra.mxu0 0.0
    %4477 = vmatprep.subr.mxu0 0.0
    %4478 = vmatpush1.msra.mxu0 0.0
    %4479 = vmatprep.subr.mxu0 0.0
    %4480 = vmatpush1.msra.mxu0 0.0
    %4481 = vmatprep.subr.mxu0 0.0
    %4482 = vmatpush1.msra.mxu0 0.0
    %4483 = vmatprep.subr.mxu0 0.0
    %4484 = vmatpush1.msra.mxu0 0.0
    %4485 = vmatprep.subr.mxu0 0.0
    %4486 = vmatpush1.msra.mxu0 0.0
    %4487 = vmatprep.subr.mxu0 0.0
    %4488 = vmatpush1.msra.mxu0 0.0
    %4489 = vmatprep.subr.mxu0 0.0
    %4490 = vmatpush1.msra.mxu0 0.0
    %4491 = vmatprep.subr.mxu0 0.0
    %4492 = vmatpush1.msra.mxu0 0.0
    %4493 = vmatprep.subr.mxu0 0.0
    %4494 = vmatpush1.msra.mxu0 0.0
    %4495 = vmatprep.subr.mxu0 0.0
    %4496 = vmatpush1.msra.mxu0 0.0
    %4497 = vmatprep.subr.mxu0 0.0
    %4498 = vmatpush1.msra.mxu0 0.0
    %4499 = vmatprep.subr.mxu0 0.0
    %4500 = vmatpush1.msra.mxu0 0.0
    %4501 = vmatprep.subr.mxu0 0.0
    %4502 = vmatpush1.msra.mxu0 0.0
    %4503 = vmatprep.subr.mxu0 0.0
    %4504 = vmatpush1.msra.mxu0 0.0
    %4505 = vmatprep.subr.mxu0 0.0
    %4506 = vmatpush1.msra.mxu0 0.0
    %4507 = vmatprep.subr.mxu0 0.0
    %4508 = vmatpush1.msra.mxu0 0.0
    %4509 = vmatprep.mubr.f32.mxu0 0.0
    %4510 = vmatmul.mubr.f32.gmra.mrb[0].mxu0 %v3816
    %v4511 = vpop.f32.mrb[0].mxu0
    %v4512 = vadd.f32 0.0, %v4511
    %v4513 = vpop.f32.mrb[0].mxu0
    %4514 = vmatprep.mubr.f32.mxu0 0.0
    %4515 = vmatmul.mubr.f32.gmra.mrb[0].mxu0 %v3819
    %v4516 = vpop.f32.mrb[0].mxu0
    %v4517 = vadd.f32 0.0, %v4516
    %v4518 = vpop.f32.mrb[0].mxu0
    %4519 = vmatprep.mubr.f32.mxu0 0.0
    %4520 = vmatmul.mubr.f32.gmra.mrb[0].mxu0 %v3822
    %v4521 = vpop.f32.mrb[0].mxu0
    %v4522 = vadd.f32 0.0, %v4521
    %v4523 = vpop.f32.mrb[0].mxu0
    %4524 = vmatprep.mubr.f32.mxu0 0.0
    %4525 = vmatmul.mubr.f32.gmra.mrb[0].mxu0 %v3825
    %v4526 = vpop.f32.mrb[0].mxu0
    %v4527 = vadd.f32 0.0, %v4526
    %v4528 = vpop.f32.mrb[0].mxu0
    %4529 = vmatprep.mubr.f32.mxu0 0.0
    %4530 = vmatmul.mubr.f32.gmra.mrb[0].mxu0 %v3828
    %v4531 = vpop.f32.mrb[0].mxu0
    %v4532 = vadd.f32 0.0, %v4531
    %v4533 = vpop.f32.mrb[0].mxu0
    %4534 = vmatprep.mubr.f32.mxu0 0.0
    %4535 = vmatmul.mubr.f32.gmra.mrb[0].mxu0 %v3831
    %v4536 = vpop.f32.mrb[0].mxu0
    %v4537 = vadd.f32 0.0, %v4536
    %v4538 = vpop.f32.mrb[0].mxu0
    %4539 = vdwg.mxu0
    %s4540 = scalar_lea.vmem %s4, 544
    %v4541 = vld [vmem:[%s4540] sm:$0xff]
    %v4542 = vld [vmem:[%s4540 + $0x8] sm:$0xff]
    %v4543 = vld [vmem:[%s4540 + $0x10] sm:$0xff]
    %v4544 = vld [vmem:[%s4540 + $0x18] sm:$0xff]
    %4545 = vmatprep.subr.mxu0 0.0
    %4546 = vmatpush1.msra.mxu0 %v4541
    %4547 = vmatprep.subr.mxu0 0.0
    %4548 = vmatpush1.msra.mxu0 %v4542
    %4549 = vmatprep.subr.mxu0 0.0
    %4550 = vmatpush1.msra.mxu0 %v4543
    %4551 = vmatprep.subr.mxu0 0.0
    %4552 = vmatpush1.msra.mxu0 %v4544
    %4553 = vmatprep.subr.mxu0 0.0
    %4554 = vmatpush1.msra.mxu0 0.0
    %4555 = vmatprep.subr.mxu0 0.0
    %4556 = vmatpush1.msra.mxu0 0.0
    %4557 = vmatprep.subr.mxu0 0.0
    %4558 = vmatpush1.msra.mxu0 0.0
    %4559 = vmatprep.subr.mxu0 0.0
    %4560 = vmatpush1.msra.mxu0 0.0
    %4561 = vmatprep.subr.mxu0 0.0
    %4562 = vmatpush1.msra.mxu0 0.0
    %4563 = vmatprep.subr.mxu0 0.0
    %4564 = vmatpush1.msra.mxu0 0.0
    %4565 = vmatprep.subr.mxu0 0.0
    %4566 = vmatpush1.msra.mxu0 0.0
    %4567 = vmatprep.subr.mxu0 0.0
    %4568 = vmatpush1.msra.mxu0 0.0
    %4569 = vmatprep.subr.mxu0 0.0
    %4570 = vmatpush1.msra.mxu0 0.0
    %4571 = vmatprep.subr.mxu0 0.0
    %4572 = vmatpush1.msra.mxu0 0.0
    %4573 = vmatprep.subr.mxu0 0.0
    %4574 = vmatpush1.msra.mxu0 0.0
    %4575 = vmatprep.subr.mxu0 0.0
    %4576 = vmatpush1.msra.mxu0 0.0
    %4577 = vmatprep.subr.mxu0 0.0
    %4578 = vmatpush1.msra.mxu0 0.0
    %4579 = vmatprep.subr.mxu0 0.0
    %4580 = vmatpush1.msra.mxu0 0.0
    %4581 = vmatprep.subr.mxu0 0.0
    %4582 = vmatpush1.msra.mxu0 0.0
    %4583 = vmatprep.subr.mxu0 0.0
    %4584 = vmatpush1.msra.mxu0 0.0
    %4585 = vmatprep.subr.mxu0 0.0
    %4586 = vmatpush1.msra.mxu0 0.0
    %4587 = vmatprep.subr.mxu0 0.0
    %4588 = vmatpush1.msra.mxu0 0.0
    %4589 = vmatprep.subr.mxu0 0.0
    %4590 = vmatpush1.msra.mxu0 0.0
    %4591 = vmatprep.subr.mxu0 0.0
    %4592 = vmatpush1.msra.mxu0 0.0
    %4593 = vmatprep.subr.mxu0 0.0
    %4594 = vmatpush1.msra.mxu0 0.0
    %4595 = vmatprep.subr.mxu0 0.0
    %4596 = vmatpush1.msra.mxu0 0.0
    %4597 = vmatprep.subr.mxu0 0.0
    %4598 = vmatpush1.msra.mxu0 0.0
    %4599 = vmatprep.subr.mxu0 0.0
    %4600 = vmatpush1.msra.mxu0 0.0
    %4601 = vmatprep.subr.mxu0 0.0
    %4602 = vmatpush1.msra.mxu0 0.0
    %4603 = vmatprep.subr.mxu0 0.0
    %4604 = vmatpush1.msra.mxu0 0.0
    %4605 = vmatprep.subr.mxu0 0.0
    %4606 = vmatpush1.msra.mxu0 0.0
    %4607 = vmatprep.subr.mxu0 0.0
    %4608 = vmatpush1.msra.mxu0 0.0
    %4609 = vmatprep.mubr.f32.mxu0 0.0
    %4610 = vmatmul.mubr.f32.gmra.mrb[0].mxu0 %v3816
    %v4611 = vpop.f32.mrb[0].mxu0
    %v4612 = vadd.f32 0.0, %v4611
    %v4613 = vpop.f32.mrb[0].mxu0
    %4614 = vmatprep.mubr.f32.mxu0 0.0
    %4615 = vmatmul.mubr.f32.gmra.mrb[0].mxu0 %v3819
    %v4616 = vpop.f32.mrb[0].mxu0
    %v4617 = vadd.f32 0.0, %v4616
    %v4618 = vpop.f32.mrb[0].mxu0
    %4619 = vmatprep.mubr.f32.mxu0 0.0
    %4620 = vmatmul.mubr.f32.gmra.mrb[0].mxu0 %v3822
    %v4621 = vpop.f32.mrb[0].mxu0
    %v4622 = vadd.f32 0.0, %v4621
    %v4623 = vpop.f32.mrb[0].mxu0
    %4624 = vmatprep.mubr.f32.mxu0 0.0
    %4625 = vmatmul.mubr.f32.gmra.mrb[0].mxu0 %v3825
    %v4626 = vpop.f32.mrb[0].mxu0
    %v4627 = vadd.f32 0.0, %v4626
    %v4628 = vpop.f32.mrb[0].mxu0
    %4629 = vmatprep.mubr.f32.mxu0 0.0
    %4630 = vmatmul.mubr.f32.gmra.mrb[0].mxu0 %v3828
    %v4631 = vpop.f32.mrb[0].mxu0
    %v4632 = vadd.f32 0.0, %v4631
    %v4633 = vpop.f32.mrb[0].mxu0
    %4634 = vmatprep.mubr.f32.mxu0 0.0
    %4635 = vmatmul.mubr.f32.gmra.mrb[0].mxu0 %v3831
    %v4636 = vpop.f32.mrb[0].mxu0
    %v4637 = vadd.f32 0.0, %v4636
    %v4638 = vpop.f32.mrb[0].mxu0
    %4639 = vdwg.mxu0
    %s4640 = scalar_lea.vmem %s4, 672
    %v4641 = vld [vmem:[%s4640] sm:$0xff]
    %v4642 = vld [vmem:[%s4640 + $0x8] sm:$0xff]
    %v4643 = vld [vmem:[%s4640 + $0x10] sm:$0xff]
    %v4644 = vld [vmem:[%s4640 + $0x18] sm:$0xff]
    %4645 = vmatprep.subr.mxu0 0.0
    %4646 = vmatpush1.msra.mxu0 %v4641
    %4647 = vmatprep.subr.mxu0 0.0
    %4648 = vmatpush1.msra.mxu0 %v4642
    %4649 = vmatprep.subr.mxu0 0.0
    %4650 = vmatpush1.msra.mxu0 %v4643
    %4651 = vmatprep.subr.mxu0 0.0
    %4652 = vmatpush1.msra.mxu0 %v4644
    %4653 = vmatprep.subr.mxu0 0.0
    %4654 = vmatpush1.msra.mxu0 0.0
    %4655 = vmatprep.subr.mxu0 0.0
    %4656 = vmatpush1.msra.mxu0 0.0
    %4657 = vmatprep.subr.mxu0 0.0
    %4658 = vmatpush1.msra.mxu0 0.0
    %4659 = vmatprep.subr.mxu0 0.0
    %4660 = vmatpush1.msra.mxu0 0.0
    %4661 = vmatprep.subr.mxu0 0.0
    %4662 = vmatpush1.msra.mxu0 0.0
    %4663 = vmatprep.subr.mxu0 0.0
    %4664 = vmatpush1.msra.mxu0 0.0
    %4665 = vmatprep.subr.mxu0 0.0
    %4666 = vmatpush1.msra.mxu0 0.0
    %4667 = vmatprep.subr.mxu0 0.0
    %4668 = vmatpush1.msra.mxu0 0.0
    %4669 = vmatprep.subr.mxu0 0.0
    %4670 = vmatpush1.msra.mxu0 0.0
    %4671 = vmatprep.subr.mxu0 0.0
    %4672 = vmatpush1.msra.mxu0 0.0
    %4673 = vmatprep.subr.mxu0 0.0
    %4674 = vmatpush1.msra.mxu0 0.0
    %4675 = vmatprep.subr.mxu0 0.0
    %4676 = vmatpush1.msra.mxu0 0.0
    %4677 = vmatprep.subr.mxu0 0.0
    %4678 = vmatpush1.msra.mxu0 0.0
    %4679 = vmatprep.subr.mxu0 0.0
    %4680 = vmatpush1.msra.mxu0 0.0
    %4681 = vmatprep.subr.mxu0 0.0
    %4682 = vmatpush1.msra.mxu0 0.0
    %4683 = vmatprep.subr.mxu0 0.0
    %4684 = vmatpush1.msra.mxu0 0.0
    %4685 = vmatprep.subr.mxu0 0.0
    %4686 = vmatpush1.msra.mxu0 0.0
    %4687 = vmatprep.subr.mxu0 0.0
    %4688 = vmatpush1.msra.mxu0 0.0
    %4689 = vmatprep.subr.mxu0 0.0
    %4690 = vmatpush1.msra.mxu0 0.0
    %4691 = vmatprep.subr.mxu0 0.0
    %4692 = vmatpush1.msra.mxu0 0.0
    %4693 = vmatprep.subr.mxu0 0.0
    %4694 = vmatpush1.msra.mxu0 0.0
    %4695 = vmatprep.subr.mxu0 0.0
    %4696 = vmatpush1.msra.mxu0 0.0
    %4697 = vmatprep.subr.mxu0 0.0
    %4698 = vmatpush1.msra.mxu0 0.0
    %4699 = vmatprep.subr.mxu0 0.0
    %4700 = vmatpush1.msra.mxu0 0.0
    %4701 = vmatprep.subr.mxu0 0.0
    %4702 = vmatpush1.msra.mxu0 0.0
    %4703 = vmatprep.subr.mxu0 0.0
    %4704 = vmatpush1.msra.mxu0 0.0
    %4705 = vmatprep.subr.mxu0 0.0
    %4706 = vmatpush1.msra.mxu0 0.0
    %4707 = vmatprep.subr.mxu0 0.0
    %4708 = vmatpush1.msra.mxu0 0.0
    %4709 = vmatprep.mubr.f32.mxu0 0.0
    %4710 = vmatmul.mubr.f32.gmra.mrb[0].mxu0 %v3816
    %v4711 = vpop.f32.mrb[0].mxu0
    %v4712 = vadd.f32 0.0, %v4711
    %v4713 = vpop.f32.mrb[0].mxu0
    %4714 = vmatprep.mubr.f32.mxu0 0.0
    %4715 = vmatmul.mubr.f32.gmra.mrb[0].mxu0 %v3819
    %v4716 = vpop.f32.mrb[0].mxu0
    %v4717 = vadd.f32 0.0, %v4716
    %v4718 = vpop.f32.mrb[0].mxu0
    %4719 = vmatprep.mubr.f32.mxu0 0.0
    %4720 = vmatmul.mubr.f32.gmra.mrb[0].mxu0 %v3822
    %v4721 = vpop.f32.mrb[0].mxu0
    %v4722 = vadd.f32 0.0, %v4721
    %v4723 = vpop.f32.mrb[0].mxu0
    %4724 = vmatprep.mubr.f32.mxu0 0.0
    %4725 = vmatmul.mubr.f32.gmra.mrb[0].mxu0 %v3825
    %v4726 = vpop.f32.mrb[0].mxu0
    %v4727 = vadd.f32 0.0, %v4726
    %v4728 = vpop.f32.mrb[0].mxu0
    %4729 = vmatprep.mubr.f32.mxu0 0.0
    %4730 = vmatmul.mubr.f32.gmra.mrb[0].mxu0 %v3828
    %v4731 = vpop.f32.mrb[0].mxu0
    %v4732 = vadd.f32 0.0, %v4731
    %v4733 = vpop.f32.mrb[0].mxu0
    %4734 = vmatprep.mubr.f32.mxu0 0.0
    %4735 = vmatmul.mubr.f32.gmra.mrb[0].mxu0 %v3831
    %v4736 = vpop.f32.mrb[0].mxu0
    %v4737 = vadd.f32 0.0, %v4736
    %v4738 = vpop.f32.mrb[0].mxu0
    %4739 = vdwg.mxu0
    %v4741 = vsel %vm593, %v4512, 0
    %v4744 = vsel %vm593, %v4517, 0
    %v4747 = vsel %vm593, %v4522, 0
    %v4750 = vsel %vm593, %v4527, 0
    %v4753 = vsel %vm593, %v4532, 0
    %v4756 = vsel %vm593, %v4537, 0
    %v4759 = vsel %vm593, %v4612, 0
    %v4762 = vsel %vm593, %v4617, 0
    %v4765 = vsel %vm593, %v4622, 0
    %v4768 = vsel %vm593, %v4627, 0
    %v4771 = vsel %vm593, %v4632, 0
    %v4774 = vsel %vm593, %v4637, 0
    %4776 = vmatprep.subr.mxu0 0.0
    %4777 = vmatpush1.xpose.msra.mxu0 %v4759
    %4778 = vmatprep.subr.mxu0 0.0
    %4779 = vmatpush1.xpose.msra.mxu0 %v4762
    %4780 = vmatprep.subr.mxu0 0.0
    %4781 = vmatpush1.xpose.msra.mxu0 %v4765
    %4782 = vmatprep.subr.mxu0 0.0
    %4783 = vmatpush1.xpose.msra.mxu0 %v4768
    %4784 = vmatprep.subr.mxu0 0.0
    %4785 = vmatpush1.xpose.msra.mxu0 %v4771
    %4786 = vmatprep.subr.mxu0 0.0
    %4787 = vmatpush1.xpose.msra.mxu0 %v4774
    %4788 = vmatprep.subr.mxu0 0.0
    %4789 = vmatpush1.xpose.msra.mxu0 0.0
    %4790 = vmatprep.subr.mxu0 0.0
    %4791 = vmatpush1.xpose.msra.mxu0 0.0
    %4792 = vmatprep.subr.mxu0 0.0
    %4793 = vmatpush1.xpose.msra.mxu0 0.0
    %4794 = vmatprep.subr.mxu0 0.0
    %4795 = vmatpush1.xpose.msra.mxu0 0.0
    %4796 = vmatprep.subr.mxu0 0.0
    %4797 = vmatpush1.xpose.msra.mxu0 0.0
    %4798 = vmatprep.subr.mxu0 0.0
    %4799 = vmatpush1.xpose.msra.mxu0 0.0
    %4800 = vmatprep.subr.mxu0 0.0
    %4801 = vmatpush1.xpose.msra.mxu0 0.0
    %4802 = vmatprep.subr.mxu0 0.0
    %4803 = vmatpush1.xpose.msra.mxu0 0.0
    %4804 = vmatprep.subr.mxu0 0.0
    %4805 = vmatpush1.xpose.msra.mxu0 0.0
    %4806 = vmatprep.subr.mxu0 0.0
    %4807 = vmatpush1.xpose.msra.mxu0 0.0
    %4808 = vmatprep.subr.mxu0 0.0
    %4809 = vmatpush1.xpose.msra.mxu0 0.0
    %4810 = vmatprep.subr.mxu0 0.0
    %4811 = vmatpush1.xpose.msra.mxu0 0.0
    %4812 = vmatprep.subr.mxu0 0.0
    %4813 = vmatpush1.xpose.msra.mxu0 0.0
    %4814 = vmatprep.subr.mxu0 0.0
    %4815 = vmatpush1.xpose.msra.mxu0 0.0
    %4816 = vmatprep.subr.mxu0 0.0
    %4817 = vmatpush1.xpose.msra.mxu0 0.0
    %4818 = vmatprep.subr.mxu0 0.0
    %4819 = vmatpush1.xpose.msra.mxu0 0.0
    %4820 = vmatprep.subr.mxu0 0.0
    %4821 = vmatpush1.xpose.msra.mxu0 0.0
    %4822 = vmatprep.subr.mxu0 0.0
    %4823 = vmatpush1.xpose.msra.mxu0 0.0
    %4824 = vmatprep.subr.mxu0 0.0
    %4825 = vmatpush1.xpose.msra.mxu0 0.0
    %4826 = vmatprep.subr.mxu0 0.0
    %4827 = vmatpush1.xpose.msra.mxu0 0.0
    %4828 = vmatprep.subr.mxu0 0.0
    %4829 = vmatpush1.xpose.msra.mxu0 0.0
    %4830 = vmatprep.subr.mxu0 0.0
    %4831 = vmatpush1.xpose.msra.mxu0 0.0
    %4832 = vmatprep.subr.mxu0 0.0
    %4833 = vmatpush1.xpose.msra.mxu0 0.0
    %4834 = vmatprep.subr.mxu0 0.0
    %4835 = vmatpush1.xpose.msra.mxu0 0.0
    %4836 = vmatprep.subr.mxu0 0.0
    %4837 = vmatpush1.xpose.msra.mxu0 0.0
    %4838 = vmatprep.subr.mxu0 0.0
    %4839 = vmatpush1.xpose.msra.mxu0 0.0
    %4840 = vmatprep.mubr.f32.mxu0 0.0
    %4841 = vmatmul.mubr.f32.gmra.mrb[0].mxu0 %v4741
    %v4842 = vpop.f32.mrb[0].mxu0
    %v4843 = vadd.f32 %v168, %v4842
    %v4844 = vpop.f32.mrb[0].mxu0
    %4845 = vmatprep.mubr.f32.mxu0 0.0
    %4846 = vmatmul.mubr.f32.gmra.mrb[0].mxu0 %v4744
    %v4847 = vpop.f32.mrb[0].mxu0
    %v4848 = vadd.f32 %v169, %v4847
    %v4849 = vpop.f32.mrb[0].mxu0
    %4850 = vmatprep.mubr.f32.mxu0 0.0
    %4851 = vmatmul.mubr.f32.gmra.mrb[0].mxu0 %v4747
    %v4852 = vpop.f32.mrb[0].mxu0
    %v4853 = vadd.f32 %v170, %v4852
    %v4854 = vpop.f32.mrb[0].mxu0
    %4855 = vmatprep.mubr.f32.mxu0 0.0
    %4856 = vmatmul.mubr.f32.gmra.mrb[0].mxu0 %v4750
    %v4857 = vpop.f32.mrb[0].mxu0
    %v4858 = vadd.f32 %v171, %v4857
    %v4859 = vpop.f32.mrb[0].mxu0
    %4860 = vmatprep.mubr.f32.mxu0 0.0
    %4861 = vmatmul.mubr.f32.gmra.mrb[0].mxu0 %v4753
    %v4862 = vpop.f32.mrb[0].mxu0
    %v4863 = vadd.f32 %v172, %v4862
    %v4864 = vpop.f32.mrb[0].mxu0
    %4865 = vmatprep.mubr.f32.mxu0 0.0
    %4866 = vmatmul.mubr.f32.gmra.mrb[0].mxu0 %v4756
    %v4867 = vpop.f32.mrb[0].mxu0
    %v4868 = vadd.f32 %v173, %v4867
    %v4869 = vpop.f32.mrb[0].mxu0
    %4870 = vdwg.mxu0
    %v4871 = vsel %vm54, %v4843, -inf
    %4872 = vmax.xlane.f32.xlu0 %v4871
    %v4873 = vpop.xlane.xlu0 %4872
    %v4874 = vsel %vm54, %v4848, -inf
    %4875 = vmax.xlane.f32.xlu0 %v4874
    %v4876 = vpop.xlane.xlu0 %4875
    %v4877 = vsel %vm54, %v4853, -inf
    %4878 = vmax.xlane.f32.xlu0 %v4877
    %v4879 = vpop.xlane.xlu0 %4878
    %v4880 = vsel %vm54, %v4858, -inf
    %4881 = vmax.xlane.f32.xlu0 %v4880
    %v4882 = vpop.xlane.xlu0 %4881
    %v4883 = vsel %vm54, %v4863, -inf
    %4884 = vmax.xlane.f32.xlu0 %v4883
    %v4885 = vpop.xlane.xlu0 %4884
    %v4886 = vsel %vm54, %v4868, -inf
    %4887 = vmax.xlane.f32.xlu0 %v4886
    %v4888 = vpop.xlane.xlu0 %4887
    %v4889 = vsub.f32 %v4843, %v4873
    %v4890 = vsub.f32 %v4848, %v4876
    %v4891 = vsub.f32 %v4853, %v4879
    %v4892 = vsub.f32 %v4858, %v4882
    %v4893 = vsub.f32 %v4863, %v4885
    %v4894 = vsub.f32 %v4868, %v4888
    %v4895 = vmul.f32 %v4889, 1.442695
    %v4896 = vpow.pop %v4895
    %v4897 = vmul.f32 %v4890, 1.442695
    %v4898 = vpow.pop %v4897
    %v4899 = vmul.f32 %v4891, 1.442695
    %v4900 = vpow.pop %v4899
    %v4901 = vmul.f32 %v4892, 1.442695
    %v4902 = vpow.pop %v4901
    %v4903 = vmul.f32 %v4893, 1.442695
    %v4904 = vpow.pop %v4903
    %v4905 = vmul.f32 %v4894, 1.442695
    %v4906 = vpow.pop %v4905
    %v4907 = vsel %vm54, %v4896, 0.0
    %4908 = vadd.xlane.f32.xlu0 %v4907
    %v4909 = vpop.xlane.xlu0 %4908
    %v4910 = vsel %vm54, %v4898, 0.0
    %4911 = vadd.xlane.f32.xlu0 %v4910
    %v4912 = vpop.xlane.xlu0 %4911
    %v4913 = vsel %vm54, %v4900, 0.0
    %4914 = vadd.xlane.f32.xlu0 %v4913
    %v4915 = vpop.xlane.xlu0 %4914
    %v4916 = vsel %vm54, %v4902, 0.0
    %4917 = vadd.xlane.f32.xlu0 %v4916
    %v4918 = vpop.xlane.xlu0 %4917
    %v4919 = vsel %vm54, %v4904, 0.0
    %4920 = vadd.xlane.f32.xlu0 %v4919
    %v4921 = vpop.xlane.xlu0 %4920
    %v4922 = vsel %vm54, %v4906, 0.0
    %4923 = vadd.xlane.f32.xlu0 %v4922
    %v4924 = vpop.xlane.xlu0 %4923
    %v4925 = vrcp.pop %v4909
    %v4926 = vrcp.pop %v4912
    %v4927 = vrcp.pop %v4915
    %v4928 = vrcp.pop %v4918
    %v4929 = vrcp.pop %v4921
    %v4930 = vrcp.pop %v4924
    %v4931 = vmul.f32 %v4896, %v4925
    %v4932 = vmul.f32 %v4898, %v4926
    %v4933 = vmul.f32 %v4900, %v4927
    %v4934 = vmul.f32 %v4902, %v4928
    %v4935 = vmul.f32 %v4904, %v4929
    %v4936 = vmul.f32 %v4906, %v4930
    %v4938 = vsel %vm54, %v4931, 0
    %v4941 = vsel %vm54, %v4932, 0
    %v4944 = vsel %vm54, %v4933, 0
    %v4947 = vsel %vm54, %v4934, 0
    %v4950 = vsel %vm54, %v4935, 0
    %v4953 = vsel %vm54, %v4936, 0
    %4955 = vmatprep.subr.mxu0 0.0
    %4956 = vmatpush1.msra.mxu0 %v4712
    %4957 = vmatprep.subr.mxu0 0.0
    %4958 = vmatpush1.msra.mxu0 %v4717
    %4959 = vmatprep.subr.mxu0 0.0
    %4960 = vmatpush1.msra.mxu0 %v4722
    %4961 = vmatprep.subr.mxu0 0.0
    %4962 = vmatpush1.msra.mxu0 %v4727
    %4963 = vmatprep.subr.mxu0 0.0
    %4964 = vmatpush1.msra.mxu0 %v4732
    %4965 = vmatprep.subr.mxu0 0.0
    %4966 = vmatpush1.msra.mxu0 %v4737
    %4967 = vmatprep.subr.mxu0 0.0
    %4968 = vmatpush1.msra.mxu0 0.0
    %4969 = vmatprep.subr.mxu0 0.0
    %4970 = vmatpush1.msra.mxu0 0.0
    %4971 = vmatprep.subr.mxu0 0.0
    %4972 = vmatpush1.msra.mxu0 0.0
    %4973 = vmatprep.subr.mxu0 0.0
    %4974 = vmatpush1.msra.mxu0 0.0
    %4975 = vmatprep.subr.mxu0 0.0
    %4976 = vmatpush1.msra.mxu0 0.0
    %4977 = vmatprep.subr.mxu0 0.0
    %4978 = vmatpush1.msra.mxu0 0.0
    %4979 = vmatprep.subr.mxu0 0.0
    %4980 = vmatpush1.msra.mxu0 0.0
    %4981 = vmatprep.subr.mxu0 0.0
    %4982 = vmatpush1.msra.mxu0 0.0
    %4983 = vmatprep.subr.mxu0 0.0
    %4984 = vmatpush1.msra.mxu0 0.0
    %4985 = vmatprep.subr.mxu0 0.0
    %4986 = vmatpush1.msra.mxu0 0.0
    %4987 = vmatprep.subr.mxu0 0.0
    %4988 = vmatpush1.msra.mxu0 0.0
    %4989 = vmatprep.subr.mxu0 0.0
    %4990 = vmatpush1.msra.mxu0 0.0
    %4991 = vmatprep.subr.mxu0 0.0
    %4992 = vmatpush1.msra.mxu0 0.0
    %4993 = vmatprep.subr.mxu0 0.0
    %4994 = vmatpush1.msra.mxu0 0.0
    %4995 = vmatprep.subr.mxu0 0.0
    %4996 = vmatpush1.msra.mxu0 0.0
    %4997 = vmatprep.subr.mxu0 0.0
    %4998 = vmatpush1.msra.mxu0 0.0
    %4999 = vmatprep.subr.mxu0 0.0
    %5000 = vmatpush1.msra.mxu0 0.0
    %5001 = vmatprep.subr.mxu0 0.0
    %5002 = vmatpush1.msra.mxu0 0.0
    %5003 = vmatprep.subr.mxu0 0.0
    %5004 = vmatpush1.msra.mxu0 0.0
    %5005 = vmatprep.subr.mxu0 0.0
    %5006 = vmatpush1.msra.mxu0 0.0
    %5007 = vmatprep.subr.mxu0 0.0
    %5008 = vmatpush1.msra.mxu0 0.0
    %5009 = vmatprep.subr.mxu0 0.0
    %5010 = vmatpush1.msra.mxu0 0.0
    %5011 = vmatprep.subr.mxu0 0.0
    %5012 = vmatpush1.msra.mxu0 0.0
    %5013 = vmatprep.subr.mxu0 0.0
    %5014 = vmatpush1.msra.mxu0 0.0
    %5015 = vmatprep.subr.mxu0 0.0
    %5016 = vmatpush1.msra.mxu0 0.0
    %5017 = vmatprep.subr.mxu0 0.0
    %5018 = vmatpush1.msra.mxu0 0.0
    %5019 = vmatprep.mubr.f32.mxu0 0.0
    %5020 = vmatmul.mubr.f32.gmra.mrb[0].mxu0 %v4938
    %v5021 = vpop.f32.mrb[0].mxu0
    %v5022 = vadd.f32 0.0, %v5021
    %v5023 = vpop.f32.mrb[0].mxu0
    %5024 = vmatprep.mubr.f32.mxu0 0.0
    %5025 = vmatmul.mubr.f32.gmra.mrb[0].mxu0 %v4941
    %v5026 = vpop.f32.mrb[0].mxu0
    %v5027 = vadd.f32 0.0, %v5026
    %v5028 = vpop.f32.mrb[0].mxu0
    %5029 = vmatprep.mubr.f32.mxu0 0.0
    %5030 = vmatmul.mubr.f32.gmra.mrb[0].mxu0 %v4944
    %v5031 = vpop.f32.mrb[0].mxu0
    %v5032 = vadd.f32 0.0, %v5031
    %v5033 = vpop.f32.mrb[0].mxu0
    %5034 = vmatprep.mubr.f32.mxu0 0.0
    %5035 = vmatmul.mubr.f32.gmra.mrb[0].mxu0 %v4947
    %v5036 = vpop.f32.mrb[0].mxu0
    %v5037 = vadd.f32 0.0, %v5036
    %v5038 = vpop.f32.mrb[0].mxu0
    %5039 = vmatprep.mubr.f32.mxu0 0.0
    %5040 = vmatmul.mubr.f32.gmra.mrb[0].mxu0 %v4950
    %v5041 = vpop.f32.mrb[0].mxu0
    %v5042 = vadd.f32 0.0, %v5041
    %v5043 = vpop.f32.mrb[0].mxu0
    %5044 = vmatprep.mubr.f32.mxu0 0.0
    %5045 = vmatmul.mubr.f32.gmra.mrb[0].mxu0 %v4953
    %v5046 = vpop.f32.mrb[0].mxu0
    %v5047 = vadd.f32 0.0, %v5046
    %v5048 = vpop.f32.mrb[0].mxu0
    %5049 = vdwg.mxu0
    %s5050 = scalar_lea.vmem %s5, 40
    %v5051 = vld [vmem:[%s5050] sm:$0xff]
    %v5053 = vsel %vm593, %v5022, 0
    %v5056 = vsel %vm593, %v5027, 0
    %v5059 = vsel %vm593, %v5032, 0
    %v5062 = vsel %vm593, %v5037, 0
    %v5065 = vsel %vm593, %v5042, 0
    %v5068 = vsel %vm593, %v5047, 0
    %5070 = vmatprep.subr.mxu0 0.0
    %5071 = vmatpush1.msra.mxu0 %v5051
    %5072 = vmatprep.subr.mxu0 0.0
    %5073 = vmatpush1.msra.mxu0 0.0
    %5074 = vmatprep.subr.mxu0 0.0
    %5075 = vmatpush1.msra.mxu0 0.0
    %5076 = vmatprep.subr.mxu0 0.0
    %5077 = vmatpush1.msra.mxu0 0.0
    %5078 = vmatprep.subr.mxu0 0.0
    %5079 = vmatpush1.msra.mxu0 0.0
    %5080 = vmatprep.subr.mxu0 0.0
    %5081 = vmatpush1.msra.mxu0 0.0
    %5082 = vmatprep.subr.mxu0 0.0
    %5083 = vmatpush1.msra.mxu0 0.0
    %5084 = vmatprep.subr.mxu0 0.0
    %5085 = vmatpush1.msra.mxu0 0.0
    %5086 = vmatprep.subr.mxu0 0.0
    %5087 = vmatpush1.msra.mxu0 0.0
    %5088 = vmatprep.subr.mxu0 0.0
    %5089 = vmatpush1.msra.mxu0 0.0
    %5090 = vmatprep.subr.mxu0 0.0
    %5091 = vmatpush1.msra.mxu0 0.0
    %5092 = vmatprep.subr.mxu0 0.0
    %5093 = vmatpush1.msra.mxu0 0.0
    %5094 = vmatprep.subr.mxu0 0.0
    %5095 = vmatpush1.msra.mxu0 0.0
    %5096 = vmatprep.subr.mxu0 0.0
    %5097 = vmatpush1.msra.mxu0 0.0
    %5098 = vmatprep.subr.mxu0 0.0
    %5099 = vmatpush1.msra.mxu0 0.0
    %5100 = vmatprep.subr.mxu0 0.0
    %5101 = vmatpush1.msra.mxu0 0.0
    %5102 = vmatprep.subr.mxu0 0.0
    %5103 = vmatpush1.msra.mxu0 0.0
    %5104 = vmatprep.subr.mxu0 0.0
    %5105 = vmatpush1.msra.mxu0 0.0
    %5106 = vmatprep.subr.mxu0 0.0
    %5107 = vmatpush1.msra.mxu0 0.0
    %5108 = vmatprep.subr.mxu0 0.0
    %5109 = vmatpush1.msra.mxu0 0.0
    %5110 = vmatprep.subr.mxu0 0.0
    %5111 = vmatpush1.msra.mxu0 0.0
    %5112 = vmatprep.subr.mxu0 0.0
    %5113 = vmatpush1.msra.mxu0 0.0
    %5114 = vmatprep.subr.mxu0 0.0
    %5115 = vmatpush1.msra.mxu0 0.0
    %5116 = vmatprep.subr.mxu0 0.0
    %5117 = vmatpush1.msra.mxu0 0.0
    %5118 = vmatprep.subr.mxu0 0.0
    %5119 = vmatpush1.msra.mxu0 0.0
    %5120 = vmatprep.subr.mxu0 0.0
    %5121 = vmatpush1.msra.mxu0 0.0
    %5122 = vmatprep.subr.mxu0 0.0
    %5123 = vmatpush1.msra.mxu0 0.0
    %5124 = vmatprep.subr.mxu0 0.0
    %5125 = vmatpush1.msra.mxu0 0.0
    %5126 = vmatprep.subr.mxu0 0.0
    %5127 = vmatpush1.msra.mxu0 0.0
    %5128 = vmatprep.subr.mxu0 0.0
    %5129 = vmatpush1.msra.mxu0 0.0
    %5130 = vmatprep.subr.mxu0 0.0
    %5131 = vmatpush1.msra.mxu0 0.0
    %5132 = vmatprep.subr.mxu0 0.0
    %5133 = vmatpush1.msra.mxu0 0.0
    %5134 = vmatprep.mubr.f32.mxu0 0.0
    %5135 = vmatmul.mubr.f32.gmra.mrb[0].mxu0 %v5053
    %v5136 = vpop.f32.mrb[0].mxu0
    %v5137 = vadd.f32 0.0, %v5136
    %v5138 = vpop.f32.mrb[0].mxu0
    %5139 = vmatprep.mubr.f32.mxu0 0.0
    %5140 = vmatmul.mubr.f32.gmra.mrb[0].mxu0 %v5056
    %v5141 = vpop.f32.mrb[0].mxu0
    %v5142 = vadd.f32 0.0, %v5141
    %v5143 = vpop.f32.mrb[0].mxu0
    %5144 = vmatprep.mubr.f32.mxu0 0.0
    %5145 = vmatmul.mubr.f32.gmra.mrb[0].mxu0 %v5059
    %v5146 = vpop.f32.mrb[0].mxu0
    %v5147 = vadd.f32 0.0, %v5146
    %v5148 = vpop.f32.mrb[0].mxu0
    %5149 = vmatprep.mubr.f32.mxu0 0.0
    %5150 = vmatmul.mubr.f32.gmra.mrb[0].mxu0 %v5062
    %v5151 = vpop.f32.mrb[0].mxu0
    %v5152 = vadd.f32 0.0, %v5151
    %v5153 = vpop.f32.mrb[0].mxu0
    %5154 = vmatprep.mubr.f32.mxu0 0.0
    %5155 = vmatmul.mubr.f32.gmra.mrb[0].mxu0 %v5065
    %v5156 = vpop.f32.mrb[0].mxu0
    %v5157 = vadd.f32 0.0, %v5156
    %v5158 = vpop.f32.mrb[0].mxu0
    %5159 = vmatprep.mubr.f32.mxu0 0.0
    %5160 = vmatmul.mubr.f32.gmra.mrb[0].mxu0 %v5068
    %v5161 = vpop.f32.mrb[0].mxu0
    %v5162 = vadd.f32 0.0, %v5161
    %v5163 = vpop.f32.mrb[0].mxu0
    %5164 = vdwg.mxu0
    %v5166 = vsel %vm593, %v4410, 0
    %v5169 = vsel %vm593, %v4415, 0
    %v5172 = vsel %vm593, %v4420, 0
    %v5175 = vsel %vm593, %v4425, 0
    %v5178 = vsel %vm593, %v4430, 0
    %v5181 = vsel %vm593, %v4435, 0
    %5183 = vmatprep.subr.mxu0 0.0
    %5184 = vmatpush1.msra.mxu0 %v4439
    %5185 = vmatprep.subr.mxu0 0.0
    %5186 = vmatpush1.msra.mxu0 0.0
    %5187 = vmatprep.subr.mxu0 0.0
    %5188 = vmatpush1.msra.mxu0 0.0
    %5189 = vmatprep.subr.mxu0 0.0
    %5190 = vmatpush1.msra.mxu0 0.0
    %5191 = vmatprep.subr.mxu0 0.0
    %5192 = vmatpush1.msra.mxu0 0.0
    %5193 = vmatprep.subr.mxu0 0.0
    %5194 = vmatpush1.msra.mxu0 0.0
    %5195 = vmatprep.subr.mxu0 0.0
    %5196 = vmatpush1.msra.mxu0 0.0
    %5197 = vmatprep.subr.mxu0 0.0
    %5198 = vmatpush1.msra.mxu0 0.0
    %5199 = vmatprep.subr.mxu0 0.0
    %5200 = vmatpush1.msra.mxu0 0.0
    %5201 = vmatprep.subr.mxu0 0.0
    %5202 = vmatpush1.msra.mxu0 0.0
    %5203 = vmatprep.subr.mxu0 0.0
    %5204 = vmatpush1.msra.mxu0 0.0
    %5205 = vmatprep.subr.mxu0 0.0
    %5206 = vmatpush1.msra.mxu0 0.0
    %5207 = vmatprep.subr.mxu0 0.0
    %5208 = vmatpush1.msra.mxu0 0.0
    %5209 = vmatprep.subr.mxu0 0.0
    %5210 = vmatpush1.msra.mxu0 0.0
    %5211 = vmatprep.subr.mxu0 0.0
    %5212 = vmatpush1.msra.mxu0 0.0
    %5213 = vmatprep.subr.mxu0 0.0
    %5214 = vmatpush1.msra.mxu0 0.0
    %5215 = vmatprep.subr.mxu0 0.0
    %5216 = vmatpush1.msra.mxu0 0.0
    %5217 = vmatprep.subr.mxu0 0.0
    %5218 = vmatpush1.msra.mxu0 0.0
    %5219 = vmatprep.subr.mxu0 0.0
    %5220 = vmatpush1.msra.mxu0 0.0
    %5221 = vmatprep.subr.mxu0 0.0
    %5222 = vmatpush1.msra.mxu0 0.0
    %5223 = vmatprep.subr.mxu0 0.0
    %5224 = vmatpush1.msra.mxu0 0.0
    %5225 = vmatprep.subr.mxu0 0.0
    %5226 = vmatpush1.msra.mxu0 0.0
    %5227 = vmatprep.subr.mxu0 0.0
    %5228 = vmatpush1.msra.mxu0 0.0
    %5229 = vmatprep.subr.mxu0 0.0
    %5230 = vmatpush1.msra.mxu0 0.0
    %5231 = vmatprep.subr.mxu0 0.0
    %5232 = vmatpush1.msra.mxu0 0.0
    %5233 = vmatprep.subr.mxu0 0.0
    %5234 = vmatpush1.msra.mxu0 0.0
    %5235 = vmatprep.subr.mxu0 0.0
    %5236 = vmatpush1.msra.mxu0 0.0
    %5237 = vmatprep.subr.mxu0 0.0
    %5238 = vmatpush1.msra.mxu0 0.0
    %5239 = vmatprep.subr.mxu0 0.0
    %5240 = vmatpush1.msra.mxu0 0.0
    %5241 = vmatprep.subr.mxu0 0.0
    %5242 = vmatpush1.msra.mxu0 0.0
    %5243 = vmatprep.subr.mxu0 0.0
    %5244 = vmatpush1.msra.mxu0 0.0
    %5245 = vmatprep.subr.mxu0 0.0
    %5246 = vmatpush1.msra.mxu0 0.0
    %5247 = vmatprep.mubr.f32.mxu0 0.0
    %5248 = vmatmul.mubr.f32.gmra.mrb[0].mxu0 %v5166
    %v5249 = vpop.f32.mrb[0].mxu0
    %v5250 = vadd.f32 %v5137, %v5249
    %v5251 = vpop.f32.mrb[0].mxu0
    %5252 = vmatprep.mubr.f32.mxu0 0.0
    %5253 = vmatmul.mubr.f32.gmra.mrb[0].mxu0 %v5169
    %v5254 = vpop.f32.mrb[0].mxu0
    %v5255 = vadd.f32 %v5142, %v5254
    %v5256 = vpop.f32.mrb[0].mxu0
    %5257 = vmatprep.mubr.f32.mxu0 0.0
    %5258 = vmatmul.mubr.f32.gmra.mrb[0].mxu0 %v5172
    %v5259 = vpop.f32.mrb[0].mxu0
    %v5260 = vadd.f32 %v5147, %v5259
    %v5261 = vpop.f32.mrb[0].mxu0
    %5262 = vmatprep.mubr.f32.mxu0 0.0
    %5263 = vmatmul.mubr.f32.gmra.mrb[0].mxu0 %v5175
    %v5264 = vpop.f32.mrb[0].mxu0
    %v5265 = vadd.f32 %v5152, %v5264
    %v5266 = vpop.f32.mrb[0].mxu0
    %5267 = vmatprep.mubr.f32.mxu0 0.0
    %5268 = vmatmul.mubr.f32.gmra.mrb[0].mxu0 %v5178
    %v5269 = vpop.f32.mrb[0].mxu0
    %v5270 = vadd.f32 %v5157, %v5269
    %v5271 = vpop.f32.mrb[0].mxu0
    %5272 = vmatprep.mubr.f32.mxu0 0.0
    %5273 = vmatmul.mubr.f32.gmra.mrb[0].mxu0 %v5181
    %v5274 = vpop.f32.mrb[0].mxu0
    %v5275 = vadd.f32 %v5162, %v5274
    %v5276 = vpop.f32.mrb[0].mxu0
    %5277 = vdwg.mxu0
    %s5278 = scalar_lea.vmem %s4, 448
    %v5279 = vld [vmem:[%s5278] sm:$0xff]
    %v5280 = vld [vmem:[%s5278 + $0x8] sm:$0xff]
    %v5281 = vld [vmem:[%s5278 + $0x10] sm:$0xff]
    %v5282 = vld [vmem:[%s5278 + $0x18] sm:$0xff]
    %5283 = vmatprep.subr.mxu0 0.0
    %5284 = vmatpush1.msra.mxu0 %v5279
    %5285 = vmatprep.subr.mxu0 0.0
    %5286 = vmatpush1.msra.mxu0 %v5280
    %5287 = vmatprep.subr.mxu0 0.0
    %5288 = vmatpush1.msra.mxu0 %v5281
    %5289 = vmatprep.subr.mxu0 0.0
    %5290 = vmatpush1.msra.mxu0 %v5282
    %5291 = vmatprep.subr.mxu0 0.0
    %5292 = vmatpush1.msra.mxu0 0.0
    %5293 = vmatprep.subr.mxu0 0.0
    %5294 = vmatpush1.msra.mxu0 0.0
    %5295 = vmatprep.subr.mxu0 0.0
    %5296 = vmatpush1.msra.mxu0 0.0
    %5297 = vmatprep.subr.mxu0 0.0
    %5298 = vmatpush1.msra.mxu0 0.0
    %5299 = vmatprep.subr.mxu0 0.0
    %5300 = vmatpush1.msra.mxu0 0.0
    %5301 = vmatprep.subr.mxu0 0.0
    %5302 = vmatpush1.msra.mxu0 0.0
    %5303 = vmatprep.subr.mxu0 0.0
    %5304 = vmatpush1.msra.mxu0 0.0
    %5305 = vmatprep.subr.mxu0 0.0
    %5306 = vmatpush1.msra.mxu0 0.0
    %5307 = vmatprep.subr.mxu0 0.0
    %5308 = vmatpush1.msra.mxu0 0.0
    %5309 = vmatprep.subr.mxu0 0.0
    %5310 = vmatpush1.msra.mxu0 0.0
    %5311 = vmatprep.subr.mxu0 0.0
    %5312 = vmatpush1.msra.mxu0 0.0
    %5313 = vmatprep.subr.mxu0 0.0
    %5314 = vmatpush1.msra.mxu0 0.0
    %5315 = vmatprep.subr.mxu0 0.0
    %5316 = vmatpush1.msra.mxu0 0.0
    %5317 = vmatprep.subr.mxu0 0.0
    %5318 = vmatpush1.msra.mxu0 0.0
    %5319 = vmatprep.subr.mxu0 0.0
    %5320 = vmatpush1.msra.mxu0 0.0
    %5321 = vmatprep.subr.mxu0 0.0
    %5322 = vmatpush1.msra.mxu0 0.0
    %5323 = vmatprep.subr.mxu0 0.0
    %5324 = vmatpush1.msra.mxu0 0.0
    %5325 = vmatprep.subr.mxu0 0.0
    %5326 = vmatpush1.msra.mxu0 0.0
    %5327 = vmatprep.subr.mxu0 0.0
    %5328 = vmatpush1.msra.mxu0 0.0
    %5329 = vmatprep.subr.mxu0 0.0
    %5330 = vmatpush1.msra.mxu0 0.0
    %5331 = vmatprep.subr.mxu0 0.0
    %5332 = vmatpush1.msra.mxu0 0.0
    %5333 = vmatprep.subr.mxu0 0.0
    %5334 = vmatpush1.msra.mxu0 0.0
    %5335 = vmatprep.subr.mxu0 0.0
    %5336 = vmatpush1.msra.mxu0 0.0
    %5337 = vmatprep.subr.mxu0 0.0
    %5338 = vmatpush1.msra.mxu0 0.0
    %5339 = vmatprep.subr.mxu0 0.0
    %5340 = vmatpush1.msra.mxu0 0.0
    %5341 = vmatprep.subr.mxu0 0.0
    %5342 = vmatpush1.msra.mxu0 0.0
    %5343 = vmatprep.subr.mxu0 0.0
    %5344 = vmatpush1.msra.mxu0 0.0
    %5345 = vmatprep.subr.mxu0 0.0
    %5346 = vmatpush1.msra.mxu0 0.0
    %5347 = vmatprep.mubr.f32.mxu0 0.0
    %5348 = vmatmul.mubr.f32.gmra.mrb[0].mxu0 %v3816
    %v5349 = vpop.f32.mrb[0].mxu0
    %v5350 = vadd.f32 0.0, %v5349
    %v5351 = vpop.f32.mrb[0].mxu0
    %5352 = vmatprep.mubr.f32.mxu0 0.0
    %5353 = vmatmul.mubr.f32.gmra.mrb[0].mxu0 %v3819
    %v5354 = vpop.f32.mrb[0].mxu0
    %v5355 = vadd.f32 0.0, %v5354
    %v5356 = vpop.f32.mrb[0].mxu0
    %5357 = vmatprep.mubr.f32.mxu0 0.0
    %5358 = vmatmul.mubr.f32.gmra.mrb[0].mxu0 %v3822
    %v5359 = vpop.f32.mrb[0].mxu0
    %v5360 = vadd.f32 0.0, %v5359
    %v5361 = vpop.f32.mrb[0].mxu0
    %5362 = vmatprep.mubr.f32.mxu0 0.0
    %5363 = vmatmul.mubr.f32.gmra.mrb[0].mxu0 %v3825
    %v5364 = vpop.f32.mrb[0].mxu0
    %v5365 = vadd.f32 0.0, %v5364
    %v5366 = vpop.f32.mrb[0].mxu0
    %5367 = vmatprep.mubr.f32.mxu0 0.0
    %5368 = vmatmul.mubr.f32.gmra.mrb[0].mxu0 %v3828
    %v5369 = vpop.f32.mrb[0].mxu0
    %v5370 = vadd.f32 0.0, %v5369
    %v5371 = vpop.f32.mrb[0].mxu0
    %5372 = vmatprep.mubr.f32.mxu0 0.0
    %5373 = vmatmul.mubr.f32.gmra.mrb[0].mxu0 %v3831
    %v5374 = vpop.f32.mrb[0].mxu0
    %v5375 = vadd.f32 0.0, %v5374
    %v5376 = vpop.f32.mrb[0].mxu0
    %5377 = vdwg.mxu0
    %s5378 = scalar_lea.vmem %s4, 576
    %v5379 = vld [vmem:[%s5378] sm:$0xff]
    %v5380 = vld [vmem:[%s5378 + $0x8] sm:$0xff]
    %v5381 = vld [vmem:[%s5378 + $0x10] sm:$0xff]
    %v5382 = vld [vmem:[%s5378 + $0x18] sm:$0xff]
    %5383 = vmatprep.subr.mxu0 0.0
    %5384 = vmatpush1.msra.mxu0 %v5379
    %5385 = vmatprep.subr.mxu0 0.0
    %5386 = vmatpush1.msra.mxu0 %v5380
    %5387 = vmatprep.subr.mxu0 0.0
    %5388 = vmatpush1.msra.mxu0 %v5381
    %5389 = vmatprep.subr.mxu0 0.0
    %5390 = vmatpush1.msra.mxu0 %v5382
    %5391 = vmatprep.subr.mxu0 0.0
    %5392 = vmatpush1.msra.mxu0 0.0
    %5393 = vmatprep.subr.mxu0 0.0
    %5394 = vmatpush1.msra.mxu0 0.0
    %5395 = vmatprep.subr.mxu0 0.0
    %5396 = vmatpush1.msra.mxu0 0.0
    %5397 = vmatprep.subr.mxu0 0.0
    %5398 = vmatpush1.msra.mxu0 0.0
    %5399 = vmatprep.subr.mxu0 0.0
    %5400 = vmatpush1.msra.mxu0 0.0
    %5401 = vmatprep.subr.mxu0 0.0
    %5402 = vmatpush1.msra.mxu0 0.0
    %5403 = vmatprep.subr.mxu0 0.0
    %5404 = vmatpush1.msra.mxu0 0.0
    %5405 = vmatprep.subr.mxu0 0.0
    %5406 = vmatpush1.msra.mxu0 0.0
    %5407 = vmatprep.subr.mxu0 0.0
    %5408 = vmatpush1.msra.mxu0 0.0
    %5409 = vmatprep.subr.mxu0 0.0
    %5410 = vmatpush1.msra.mxu0 0.0
    %5411 = vmatprep.subr.mxu0 0.0
    %5412 = vmatpush1.msra.mxu0 0.0
    %5413 = vmatprep.subr.mxu0 0.0
    %5414 = vmatpush1.msra.mxu0 0.0
    %5415 = vmatprep.subr.mxu0 0.0
    %5416 = vmatpush1.msra.mxu0 0.0
    %5417 = vmatprep.subr.mxu0 0.0
    %5418 = vmatpush1.msra.mxu0 0.0
    %5419 = vmatprep.subr.mxu0 0.0
    %5420 = vmatpush1.msra.mxu0 0.0
    %5421 = vmatprep.subr.mxu0 0.0
    %5422 = vmatpush1.msra.mxu0 0.0
    %5423 = vmatprep.subr.mxu0 0.0
    %5424 = vmatpush1.msra.mxu0 0.0
    %5425 = vmatprep.subr.mxu0 0.0
    %5426 = vmatpush1.msra.mxu0 0.0
    %5427 = vmatprep.subr.mxu0 0.0
    %5428 = vmatpush1.msra.mxu0 0.0
    %5429 = vmatprep.subr.mxu0 0.0
    %5430 = vmatpush1.msra.mxu0 0.0
    %5431 = vmatprep.subr.mxu0 0.0
    %5432 = vmatpush1.msra.mxu0 0.0
    %5433 = vmatprep.subr.mxu0 0.0
    %5434 = vmatpush1.msra.mxu0 0.0
    %5435 = vmatprep.subr.mxu0 0.0
    %5436 = vmatpush1.msra.mxu0 0.0
    %5437 = vmatprep.subr.mxu0 0.0
    %5438 = vmatpush1.msra.mxu0 0.0
    %5439 = vmatprep.subr.mxu0 0.0
    %5440 = vmatpush1.msra.mxu0 0.0
    %5441 = vmatprep.subr.mxu0 0.0
    %5442 = vmatpush1.msra.mxu0 0.0
    %5443 = vmatprep.subr.mxu0 0.0
    %5444 = vmatpush1.msra.mxu0 0.0
    %5445 = vmatprep.subr.mxu0 0.0
    %5446 = vmatpush1.msra.mxu0 0.0
    %5447 = vmatprep.mubr.f32.mxu0 0.0
    %5448 = vmatmul.mubr.f32.gmra.mrb[0].mxu0 %v3816
    %v5449 = vpop.f32.mrb[0].mxu0
    %v5450 = vadd.f32 0.0, %v5449
    %v5451 = vpop.f32.mrb[0].mxu0
    %5452 = vmatprep.mubr.f32.mxu0 0.0
    %5453 = vmatmul.mubr.f32.gmra.mrb[0].mxu0 %v3819
    %v5454 = vpop.f32.mrb[0].mxu0
    %v5455 = vadd.f32 0.0, %v5454
    %v5456 = vpop.f32.mrb[0].mxu0
    %5457 = vmatprep.mubr.f32.mxu0 0.0
    %5458 = vmatmul.mubr.f32.gmra.mrb[0].mxu0 %v3822
    %v5459 = vpop.f32.mrb[0].mxu0
    %v5460 = vadd.f32 0.0, %v5459
    %v5461 = vpop.f32.mrb[0].mxu0
    %5462 = vmatprep.mubr.f32.mxu0 0.0
    %5463 = vmatmul.mubr.f32.gmra.mrb[0].mxu0 %v3825
    %v5464 = vpop.f32.mrb[0].mxu0
    %v5465 = vadd.f32 0.0, %v5464
    %v5466 = vpop.f32.mrb[0].mxu0
    %5467 = vmatprep.mubr.f32.mxu0 0.0
    %5468 = vmatmul.mubr.f32.gmra.mrb[0].mxu0 %v3828
    %v5469 = vpop.f32.mrb[0].mxu0
    %v5470 = vadd.f32 0.0, %v5469
    %v5471 = vpop.f32.mrb[0].mxu0
    %5472 = vmatprep.mubr.f32.mxu0 0.0
    %5473 = vmatmul.mubr.f32.gmra.mrb[0].mxu0 %v3831
    %v5474 = vpop.f32.mrb[0].mxu0
    %v5475 = vadd.f32 0.0, %v5474
    %v5476 = vpop.f32.mrb[0].mxu0
    %5477 = vdwg.mxu0
    %s5478 = scalar_lea.vmem %s4, 704
    %v5479 = vld [vmem:[%s5478] sm:$0xff]
    %v5480 = vld [vmem:[%s5478 + $0x8] sm:$0xff]
    %v5481 = vld [vmem:[%s5478 + $0x10] sm:$0xff]
    %v5482 = vld [vmem:[%s5478 + $0x18] sm:$0xff]
    %5483 = vmatprep.subr.mxu0 0.0
    %5484 = vmatpush1.msra.mxu0 %v5479
    %5485 = vmatprep.subr.mxu0 0.0
    %5486 = vmatpush1.msra.mxu0 %v5480
    %5487 = vmatprep.subr.mxu0 0.0
    %5488 = vmatpush1.msra.mxu0 %v5481
    %5489 = vmatprep.subr.mxu0 0.0
    %5490 = vmatpush1.msra.mxu0 %v5482
    %5491 = vmatprep.subr.mxu0 0.0
    %5492 = vmatpush1.msra.mxu0 0.0
    %5493 = vmatprep.subr.mxu0 0.0
    %5494 = vmatpush1.msra.mxu0 0.0
    %5495 = vmatprep.subr.mxu0 0.0
    %5496 = vmatpush1.msra.mxu0 0.0
    %5497 = vmatprep.subr.mxu0 0.0
    %5498 = vmatpush1.msra.mxu0 0.0
    %5499 = vmatprep.subr.mxu0 0.0
    %5500 = vmatpush1.msra.mxu0 0.0
    %5501 = vmatprep.subr.mxu0 0.0
    %5502 = vmatpush1.msra.mxu0 0.0
    %5503 = vmatprep.subr.mxu0 0.0
    %5504 = vmatpush1.msra.mxu0 0.0
    %5505 = vmatprep.subr.mxu0 0.0
    %5506 = vmatpush1.msra.mxu0 0.0
    %5507 = vmatprep.subr.mxu0 0.0
    %5508 = vmatpush1.msra.mxu0 0.0
    %5509 = vmatprep.subr.mxu0 0.0
    %5510 = vmatpush1.msra.mxu0 0.0
    %5511 = vmatprep.subr.mxu0 0.0
    %5512 = vmatpush1.msra.mxu0 0.0
    %5513 = vmatprep.subr.mxu0 0.0
    %5514 = vmatpush1.msra.mxu0 0.0
    %5515 = vmatprep.subr.mxu0 0.0
    %5516 = vmatpush1.msra.mxu0 0.0
    %5517 = vmatprep.subr.mxu0 0.0
    %5518 = vmatpush1.msra.mxu0 0.0
    %5519 = vmatprep.subr.mxu0 0.0
    %5520 = vmatpush1.msra.mxu0 0.0
    %5521 = vmatprep.subr.mxu0 0.0
    %5522 = vmatpush1.msra.mxu0 0.0
    %5523 = vmatprep.subr.mxu0 0.0
    %5524 = vmatpush1.msra.mxu0 0.0
    %5525 = vmatprep.subr.mxu0 0.0
    %5526 = vmatpush1.msra.mxu0 0.0
    %5527 = vmatprep.subr.mxu0 0.0
    %5528 = vmatpush1.msra.mxu0 0.0
    %5529 = vmatprep.subr.mxu0 0.0
    %5530 = vmatpush1.msra.mxu0 0.0
    %5531 = vmatprep.subr.mxu0 0.0
    %5532 = vmatpush1.msra.mxu0 0.0
    %5533 = vmatprep.subr.mxu0 0.0
    %5534 = vmatpush1.msra.mxu0 0.0
    %5535 = vmatprep.subr.mxu0 0.0
    %5536 = vmatpush1.msra.mxu0 0.0
    %5537 = vmatprep.subr.mxu0 0.0
    %5538 = vmatpush1.msra.mxu0 0.0
    %5539 = vmatprep.subr.mxu0 0.0
    %5540 = vmatpush1.msra.mxu0 0.0
    %5541 = vmatprep.subr.mxu0 0.0
    %5542 = vmatpush1.msra.mxu0 0.0
    %5543 = vmatprep.subr.mxu0 0.0
    %5544 = vmatpush1.msra.mxu0 0.0
    %5545 = vmatprep.subr.mxu0 0.0
    %5546 = vmatpush1.msra.mxu0 0.0
    %5547 = vmatprep.mubr.f32.mxu0 0.0
    %5548 = vmatmul.mubr.f32.gmra.mrb[0].mxu0 %v3816
    %v5549 = vpop.f32.mrb[0].mxu0
    %v5550 = vadd.f32 0.0, %v5549
    %v5551 = vpop.f32.mrb[0].mxu0
    %5552 = vmatprep.mubr.f32.mxu0 0.0
    %5553 = vmatmul.mubr.f32.gmra.mrb[0].mxu0 %v3819
    %v5554 = vpop.f32.mrb[0].mxu0
    %v5555 = vadd.f32 0.0, %v5554
    %v5556 = vpop.f32.mrb[0].mxu0
    %5557 = vmatprep.mubr.f32.mxu0 0.0
    %5558 = vmatmul.mubr.f32.gmra.mrb[0].mxu0 %v3822
    %v5559 = vpop.f32.mrb[0].mxu0
    %v5560 = vadd.f32 0.0, %v5559
    %v5561 = vpop.f32.mrb[0].mxu0
    %5562 = vmatprep.mubr.f32.mxu0 0.0
    %5563 = vmatmul.mubr.f32.gmra.mrb[0].mxu0 %v3825
    %v5564 = vpop.f32.mrb[0].mxu0
    %v5565 = vadd.f32 0.0, %v5564
    %v5566 = vpop.f32.mrb[0].mxu0
    %5567 = vmatprep.mubr.f32.mxu0 0.0
    %5568 = vmatmul.mubr.f32.gmra.mrb[0].mxu0 %v3828
    %v5569 = vpop.f32.mrb[0].mxu0
    %v5570 = vadd.f32 0.0, %v5569
    %v5571 = vpop.f32.mrb[0].mxu0
    %5572 = vmatprep.mubr.f32.mxu0 0.0
    %5573 = vmatmul.mubr.f32.gmra.mrb[0].mxu0 %v3831
    %v5574 = vpop.f32.mrb[0].mxu0
    %v5575 = vadd.f32 0.0, %v5574
    %v5576 = vpop.f32.mrb[0].mxu0
    %5577 = vdwg.mxu0
    %v5579 = vsel %vm593, %v5350, 0
    %v5582 = vsel %vm593, %v5355, 0
    %v5585 = vsel %vm593, %v5360, 0
    %v5588 = vsel %vm593, %v5365, 0
    %v5591 = vsel %vm593, %v5370, 0
    %v5594 = vsel %vm593, %v5375, 0
    %v5597 = vsel %vm593, %v5450, 0
    %v5600 = vsel %vm593, %v5455, 0
    %v5603 = vsel %vm593, %v5460, 0
    %v5606 = vsel %vm593, %v5465, 0
    %v5609 = vsel %vm593, %v5470, 0
    %v5612 = vsel %vm593, %v5475, 0
    %5614 = vmatprep.subr.mxu0 0.0
    %5615 = vmatpush1.xpose.msra.mxu0 %v5597
    %5616 = vmatprep.subr.mxu0 0.0
    %5617 = vmatpush1.xpose.msra.mxu0 %v5600
    %5618 = vmatprep.subr.mxu0 0.0
    %5619 = vmatpush1.xpose.msra.mxu0 %v5603
    %5620 = vmatprep.subr.mxu0 0.0
    %5621 = vmatpush1.xpose.msra.mxu0 %v5606
    %5622 = vmatprep.subr.mxu0 0.0
    %5623 = vmatpush1.xpose.msra.mxu0 %v5609
    %5624 = vmatprep.subr.mxu0 0.0
    %5625 = vmatpush1.xpose.msra.mxu0 %v5612
    %5626 = vmatprep.subr.mxu0 0.0
    %5627 = vmatpush1.xpose.msra.mxu0 0.0
    %5628 = vmatprep.subr.mxu0 0.0
    %5629 = vmatpush1.xpose.msra.mxu0 0.0
    %5630 = vmatprep.subr.mxu0 0.0
    %5631 = vmatpush1.xpose.msra.mxu0 0.0
    %5632 = vmatprep.subr.mxu0 0.0
    %5633 = vmatpush1.xpose.msra.mxu0 0.0
    %5634 = vmatprep.subr.mxu0 0.0
    %5635 = vmatpush1.xpose.msra.mxu0 0.0
    %5636 = vmatprep.subr.mxu0 0.0
    %5637 = vmatpush1.xpose.msra.mxu0 0.0
    %5638 = vmatprep.subr.mxu0 0.0
    %5639 = vmatpush1.xpose.msra.mxu0 0.0
    %5640 = vmatprep.subr.mxu0 0.0
    %5641 = vmatpush1.xpose.msra.mxu0 0.0
    %5642 = vmatprep.subr.mxu0 0.0
    %5643 = vmatpush1.xpose.msra.mxu0 0.0
    %5644 = vmatprep.subr.mxu0 0.0
    %5645 = vmatpush1.xpose.msra.mxu0 0.0
    %5646 = vmatprep.subr.mxu0 0.0
    %5647 = vmatpush1.xpose.msra.mxu0 0.0
    %5648 = vmatprep.subr.mxu0 0.0
    %5649 = vmatpush1.xpose.msra.mxu0 0.0
    %5650 = vmatprep.subr.mxu0 0.0
    %5651 = vmatpush1.xpose.msra.mxu0 0.0
    %5652 = vmatprep.subr.mxu0 0.0
    %5653 = vmatpush1.xpose.msra.mxu0 0.0
    %5654 = vmatprep.subr.mxu0 0.0
    %5655 = vmatpush1.xpose.msra.mxu0 0.0
    %5656 = vmatprep.subr.mxu0 0.0
    %5657 = vmatpush1.xpose.msra.mxu0 0.0
    %5658 = vmatprep.subr.mxu0 0.0
    %5659 = vmatpush1.xpose.msra.mxu0 0.0
    %5660 = vmatprep.subr.mxu0 0.0
    %5661 = vmatpush1.xpose.msra.mxu0 0.0
    %5662 = vmatprep.subr.mxu0 0.0
    %5663 = vmatpush1.xpose.msra.mxu0 0.0
    %5664 = vmatprep.subr.mxu0 0.0
    %5665 = vmatpush1.xpose.msra.mxu0 0.0
    %5666 = vmatprep.subr.mxu0 0.0
    %5667 = vmatpush1.xpose.msra.mxu0 0.0
    %5668 = vmatprep.subr.mxu0 0.0
    %5669 = vmatpush1.xpose.msra.mxu0 0.0
    %5670 = vmatprep.subr.mxu0 0.0
    %5671 = vmatpush1.xpose.msra.mxu0 0.0
    %5672 = vmatprep.subr.mxu0 0.0
    %5673 = vmatpush1.xpose.msra.mxu0 0.0
    %5674 = vmatprep.subr.mxu0 0.0
    %5675 = vmatpush1.xpose.msra.mxu0 0.0
    %5676 = vmatprep.subr.mxu0 0.0
    %5677 = vmatpush1.xpose.msra.mxu0 0.0
    %5678 = vmatprep.mubr.f32.mxu0 0.0
    %5679 = vmatmul.mubr.f32.gmra.mrb[0].mxu0 %v5579
    %v5680 = vpop.f32.mrb[0].mxu0
    %v5681 = vadd.f32 %v168, %v5680
    %v5682 = vpop.f32.mrb[0].mxu0
    %5683 = vmatprep.mubr.f32.mxu0 0.0
    %5684 = vmatmul.mubr.f32.gmra.mrb[0].mxu0 %v5582
    %v5685 = vpop.f32.mrb[0].mxu0
    %v5686 = vadd.f32 %v169, %v5685
    %v5687 = vpop.f32.mrb[0].mxu0
    %5688 = vmatprep.mubr.f32.mxu0 0.0
    %5689 = vmatmul.mubr.f32.gmra.mrb[0].mxu0 %v5585
    %v5690 = vpop.f32.mrb[0].mxu0
    %v5691 = vadd.f32 %v170, %v5690
    %v5692 = vpop.f32.mrb[0].mxu0
    %5693 = vmatprep.mubr.f32.mxu0 0.0
    %5694 = vmatmul.mubr.f32.gmra.mrb[0].mxu0 %v5588
    %v5695 = vpop.f32.mrb[0].mxu0
    %v5696 = vadd.f32 %v171, %v5695
    %v5697 = vpop.f32.mrb[0].mxu0
    %5698 = vmatprep.mubr.f32.mxu0 0.0
    %5699 = vmatmul.mubr.f32.gmra.mrb[0].mxu0 %v5591
    %v5700 = vpop.f32.mrb[0].mxu0
    %v5701 = vadd.f32 %v172, %v5700
    %v5702 = vpop.f32.mrb[0].mxu0
    %5703 = vmatprep.mubr.f32.mxu0 0.0
    %5704 = vmatmul.mubr.f32.gmra.mrb[0].mxu0 %v5594
    %v5705 = vpop.f32.mrb[0].mxu0
    %v5706 = vadd.f32 %v173, %v5705
    %v5707 = vpop.f32.mrb[0].mxu0
    %5708 = vdwg.mxu0
    %v5709 = vsel %vm54, %v5681, -inf
    %5710 = vmax.xlane.f32.xlu0 %v5709
    %v5711 = vpop.xlane.xlu0 %5710
    %v5712 = vsel %vm54, %v5686, -inf
    %5713 = vmax.xlane.f32.xlu0 %v5712
    %v5714 = vpop.xlane.xlu0 %5713
    %v5715 = vsel %vm54, %v5691, -inf
    %5716 = vmax.xlane.f32.xlu0 %v5715
    %v5717 = vpop.xlane.xlu0 %5716
    %v5718 = vsel %vm54, %v5696, -inf
    %5719 = vmax.xlane.f32.xlu0 %v5718
    %v5720 = vpop.xlane.xlu0 %5719
    %v5721 = vsel %vm54, %v5701, -inf
    %5722 = vmax.xlane.f32.xlu0 %v5721
    %v5723 = vpop.xlane.xlu0 %5722
    %v5724 = vsel %vm54, %v5706, -inf
    %5725 = vmax.xlane.f32.xlu0 %v5724
    %v5726 = vpop.xlane.xlu0 %5725
    %v5727 = vsub.f32 %v5681, %v5711
    %v5728 = vsub.f32 %v5686, %v5714
    %v5729 = vsub.f32 %v5691, %v5717
    %v5730 = vsub.f32 %v5696, %v5720
    %v5731 = vsub.f32 %v5701, %v5723
    %v5732 = vsub.f32 %v5706, %v5726
    %v5733 = vmul.f32 %v5727, 1.442695
    %v5734 = vpow.pop %v5733
    %v5735 = vmul.f32 %v5728, 1.442695
    %v5736 = vpow.pop %v5735
    %v5737 = vmul.f32 %v5729, 1.442695
    %v5738 = vpow.pop %v5737
    %v5739 = vmul.f32 %v5730, 1.442695
    %v5740 = vpow.pop %v5739
    %v5741 = vmul.f32 %v5731, 1.442695
    %v5742 = vpow.pop %v5741
    %v5743 = vmul.f32 %v5732, 1.442695
    %v5744 = vpow.pop %v5743
    %v5745 = vsel %vm54, %v5734, 0.0
    %5746 = vadd.xlane.f32.xlu0 %v5745
    %v5747 = vpop.xlane.xlu0 %5746
    %v5748 = vsel %vm54, %v5736, 0.0
    %5749 = vadd.xlane.f32.xlu0 %v5748
    %v5750 = vpop.xlane.xlu0 %5749
    %v5751 = vsel %vm54, %v5738, 0.0
    %5752 = vadd.xlane.f32.xlu0 %v5751
    %v5753 = vpop.xlane.xlu0 %5752
    %v5754 = vsel %vm54, %v5740, 0.0
    %5755 = vadd.xlane.f32.xlu0 %v5754
    %v5756 = vpop.xlane.xlu0 %5755
    %v5757 = vsel %vm54, %v5742, 0.0
    %5758 = vadd.xlane.f32.xlu0 %v5757
    %v5759 = vpop.xlane.xlu0 %5758
    %v5760 = vsel %vm54, %v5744, 0.0
    %5761 = vadd.xlane.f32.xlu0 %v5760
    %v5762 = vpop.xlane.xlu0 %5761
    %v5763 = vrcp.pop %v5747
    %v5764 = vrcp.pop %v5750
    %v5765 = vrcp.pop %v5753
    %v5766 = vrcp.pop %v5756
    %v5767 = vrcp.pop %v5759
    %v5768 = vrcp.pop %v5762
    %v5769 = vmul.f32 %v5734, %v5763
    %v5770 = vmul.f32 %v5736, %v5764
    %v5771 = vmul.f32 %v5738, %v5765
    %v5772 = vmul.f32 %v5740, %v5766
    %v5773 = vmul.f32 %v5742, %v5767
    %v5774 = vmul.f32 %v5744, %v5768
    %v5776 = vsel %vm54, %v5769, 0
    %v5779 = vsel %vm54, %v5770, 0
    %v5782 = vsel %vm54, %v5771, 0
    %v5785 = vsel %vm54, %v5772, 0
    %v5788 = vsel %vm54, %v5773, 0
    %v5791 = vsel %vm54, %v5774, 0
    %5793 = vmatprep.subr.mxu0 0.0
    %5794 = vmatpush1.msra.mxu0 %v5550
    %5795 = vmatprep.subr.mxu0 0.0
    %5796 = vmatpush1.msra.mxu0 %v5555
    %5797 = vmatprep.subr.mxu0 0.0
    %5798 = vmatpush1.msra.mxu0 %v5560
    %5799 = vmatprep.subr.mxu0 0.0
    %5800 = vmatpush1.msra.mxu0 %v5565
    %5801 = vmatprep.subr.mxu0 0.0
    %5802 = vmatpush1.msra.mxu0 %v5570
    %5803 = vmatprep.subr.mxu0 0.0
    %5804 = vmatpush1.msra.mxu0 %v5575
    %5805 = vmatprep.subr.mxu0 0.0
    %5806 = vmatpush1.msra.mxu0 0.0
    %5807 = vmatprep.subr.mxu0 0.0
    %5808 = vmatpush1.msra.mxu0 0.0
    %5809 = vmatprep.subr.mxu0 0.0
    %5810 = vmatpush1.msra.mxu0 0.0
    %5811 = vmatprep.subr.mxu0 0.0
    %5812 = vmatpush1.msra.mxu0 0.0
    %5813 = vmatprep.subr.mxu0 0.0
    %5814 = vmatpush1.msra.mxu0 0.0
    %5815 = vmatprep.subr.mxu0 0.0
    %5816 = vmatpush1.msra.mxu0 0.0
    %5817 = vmatprep.subr.mxu0 0.0
    %5818 = vmatpush1.msra.mxu0 0.0
    %5819 = vmatprep.subr.mxu0 0.0
    %5820 = vmatpush1.msra.mxu0 0.0
    %5821 = vmatprep.subr.mxu0 0.0
    %5822 = vmatpush1.msra.mxu0 0.0
    %5823 = vmatprep.subr.mxu0 0.0
    %5824 = vmatpush1.msra.mxu0 0.0
    %5825 = vmatprep.subr.mxu0 0.0
    %5826 = vmatpush1.msra.mxu0 0.0
    %5827 = vmatprep.subr.mxu0 0.0
    %5828 = vmatpush1.msra.mxu0 0.0
    %5829 = vmatprep.subr.mxu0 0.0
    %5830 = vmatpush1.msra.mxu0 0.0
    %5831 = vmatprep.subr.mxu0 0.0
    %5832 = vmatpush1.msra.mxu0 0.0
    %5833 = vmatprep.subr.mxu0 0.0
    %5834 = vmatpush1.msra.mxu0 0.0
    %5835 = vmatprep.subr.mxu0 0.0
    %5836 = vmatpush1.msra.mxu0 0.0
    %5837 = vmatprep.subr.mxu0 0.0
    %5838 = vmatpush1.msra.mxu0 0.0
    %5839 = vmatprep.subr.mxu0 0.0
    %5840 = vmatpush1.msra.mxu0 0.0
    %5841 = vmatprep.subr.mxu0 0.0
    %5842 = vmatpush1.msra.mxu0 0.0
    %5843 = vmatprep.subr.mxu0 0.0
    %5844 = vmatpush1.msra.mxu0 0.0
    %5845 = vmatprep.subr.mxu0 0.0
    %5846 = vmatpush1.msra.mxu0 0.0
    %5847 = vmatprep.subr.mxu0 0.0
    %5848 = vmatpush1.msra.mxu0 0.0
    %5849 = vmatprep.subr.mxu0 0.0
    %5850 = vmatpush1.msra.mxu0 0.0
    %5851 = vmatprep.subr.mxu0 0.0
    %5852 = vmatpush1.msra.mxu0 0.0
    %5853 = vmatprep.subr.mxu0 0.0
    %5854 = vmatpush1.msra.mxu0 0.0
    %5855 = vmatprep.subr.mxu0 0.0
    %5856 = vmatpush1.msra.mxu0 0.0
    %5857 = vmatprep.mubr.f32.mxu0 0.0
    %5858 = vmatmul.mubr.f32.gmra.mrb[0].mxu0 %v5776
    %v5859 = vpop.f32.mrb[0].mxu0
    %v5860 = vadd.f32 0.0, %v5859
    %v5861 = vpop.f32.mrb[0].mxu0
    %5862 = vmatprep.mubr.f32.mxu0 0.0
    %5863 = vmatmul.mubr.f32.gmra.mrb[0].mxu0 %v5779
    %v5864 = vpop.f32.mrb[0].mxu0
    %v5865 = vadd.f32 0.0, %v5864
    %v5866 = vpop.f32.mrb[0].mxu0
    %5867 = vmatprep.mubr.f32.mxu0 0.0
    %5868 = vmatmul.mubr.f32.gmra.mrb[0].mxu0 %v5782
    %v5869 = vpop.f32.mrb[0].mxu0
    %v5870 = vadd.f32 0.0, %v5869
    %v5871 = vpop.f32.mrb[0].mxu0
    %5872 = vmatprep.mubr.f32.mxu0 0.0
    %5873 = vmatmul.mubr.f32.gmra.mrb[0].mxu0 %v5785
    %v5874 = vpop.f32.mrb[0].mxu0
    %v5875 = vadd.f32 0.0, %v5874
    %v5876 = vpop.f32.mrb[0].mxu0
    %5877 = vmatprep.mubr.f32.mxu0 0.0
    %5878 = vmatmul.mubr.f32.gmra.mrb[0].mxu0 %v5788
    %v5879 = vpop.f32.mrb[0].mxu0
    %v5880 = vadd.f32 0.0, %v5879
    %v5881 = vpop.f32.mrb[0].mxu0
    %5882 = vmatprep.mubr.f32.mxu0 0.0
    %5883 = vmatmul.mubr.f32.gmra.mrb[0].mxu0 %v5791
    %v5884 = vpop.f32.mrb[0].mxu0
    %v5885 = vadd.f32 0.0, %v5884
    %v5886 = vpop.f32.mrb[0].mxu0
    %5887 = vdwg.mxu0
    %s5888 = scalar_lea.vmem %s5, 48
    %v5889 = vld [vmem:[%s5888] sm:$0xff]
    %v5891 = vsel %vm593, %v5860, 0
    %v5894 = vsel %vm593, %v5865, 0
    %v5897 = vsel %vm593, %v5870, 0
    %v5900 = vsel %vm593, %v5875, 0
    %v5903 = vsel %vm593, %v5880, 0
    %v5906 = vsel %vm593, %v5885, 0
    %5908 = vmatprep.subr.mxu0 0.0
    %5909 = vmatpush1.msra.mxu0 %v5889
    %5910 = vmatprep.subr.mxu0 0.0
    %5911 = vmatpush1.msra.mxu0 0.0
    %5912 = vmatprep.subr.mxu0 0.0
    %5913 = vmatpush1.msra.mxu0 0.0
    %5914 = vmatprep.subr.mxu0 0.0
    %5915 = vmatpush1.msra.mxu0 0.0
    %5916 = vmatprep.subr.mxu0 0.0
    %5917 = vmatpush1.msra.mxu0 0.0
    %5918 = vmatprep.subr.mxu0 0.0
    %5919 = vmatpush1.msra.mxu0 0.0
    %5920 = vmatprep.subr.mxu0 0.0
    %5921 = vmatpush1.msra.mxu0 0.0
    %5922 = vmatprep.subr.mxu0 0.0
    %5923 = vmatpush1.msra.mxu0 0.0
    %5924 = vmatprep.subr.mxu0 0.0
    %5925 = vmatpush1.msra.mxu0 0.0
    %5926 = vmatprep.subr.mxu0 0.0
    %5927 = vmatpush1.msra.mxu0 0.0
    %5928 = vmatprep.subr.mxu0 0.0
    %5929 = vmatpush1.msra.mxu0 0.0
    %5930 = vmatprep.subr.mxu0 0.0
    %5931 = vmatpush1.msra.mxu0 0.0
    %5932 = vmatprep.subr.mxu0 0.0
    %5933 = vmatpush1.msra.mxu0 0.0
    %5934 = vmatprep.subr.mxu0 0.0
    %5935 = vmatpush1.msra.mxu0 0.0
    %5936 = vmatprep.subr.mxu0 0.0
    %5937 = vmatpush1.msra.mxu0 0.0
    %5938 = vmatprep.subr.mxu0 0.0
    %5939 = vmatpush1.msra.mxu0 0.0
    %5940 = vmatprep.subr.mxu0 0.0
    %5941 = vmatpush1.msra.mxu0 0.0
    %5942 = vmatprep.subr.mxu0 0.0
    %5943 = vmatpush1.msra.mxu0 0.0
    %5944 = vmatprep.subr.mxu0 0.0
    %5945 = vmatpush1.msra.mxu0 0.0
    %5946 = vmatprep.subr.mxu0 0.0
    %5947 = vmatpush1.msra.mxu0 0.0
    %5948 = vmatprep.subr.mxu0 0.0
    %5949 = vmatpush1.msra.mxu0 0.0
    %5950 = vmatprep.subr.mxu0 0.0
    %5951 = vmatpush1.msra.mxu0 0.0
    %5952 = vmatprep.subr.mxu0 0.0
    %5953 = vmatpush1.msra.mxu0 0.0
    %5954 = vmatprep.subr.mxu0 0.0
    %5955 = vmatpush1.msra.mxu0 0.0
    %5956 = vmatprep.subr.mxu0 0.0
    %5957 = vmatpush1.msra.mxu0 0.0
    %5958 = vmatprep.subr.mxu0 0.0
    %5959 = vmatpush1.msra.mxu0 0.0
    %5960 = vmatprep.subr.mxu0 0.0
    %5961 = vmatpush1.msra.mxu0 0.0
    %5962 = vmatprep.subr.mxu0 0.0
    %5963 = vmatpush1.msra.mxu0 0.0
    %5964 = vmatprep.subr.mxu0 0.0
    %5965 = vmatpush1.msra.mxu0 0.0
    %5966 = vmatprep.subr.mxu0 0.0
    %5967 = vmatpush1.msra.mxu0 0.0
    %5968 = vmatprep.subr.mxu0 0.0
    %5969 = vmatpush1.msra.mxu0 0.0
    %5970 = vmatprep.subr.mxu0 0.0
    %5971 = vmatpush1.msra.mxu0 0.0
    %5972 = vmatprep.mubr.f32.mxu0 0.0
    %5973 = vmatmul.mubr.f32.gmra.mrb[0].mxu0 %v5891
    %v5974 = vpop.f32.mrb[0].mxu0
    %v5975 = vadd.f32 0.0, %v5974
    %v5976 = vpop.f32.mrb[0].mxu0
    %5977 = vmatprep.mubr.f32.mxu0 0.0
    %5978 = vmatmul.mubr.f32.gmra.mrb[0].mxu0 %v5894
    %v5979 = vpop.f32.mrb[0].mxu0
    %v5980 = vadd.f32 0.0, %v5979
    %v5981 = vpop.f32.mrb[0].mxu0
    %5982 = vmatprep.mubr.f32.mxu0 0.0
    %5983 = vmatmul.mubr.f32.gmra.mrb[0].mxu0 %v5897
    %v5984 = vpop.f32.mrb[0].mxu0
    %v5985 = vadd.f32 0.0, %v5984
    %v5986 = vpop.f32.mrb[0].mxu0
    %5987 = vmatprep.mubr.f32.mxu0 0.0
    %5988 = vmatmul.mubr.f32.gmra.mrb[0].mxu0 %v5900
    %v5989 = vpop.f32.mrb[0].mxu0
    %v5990 = vadd.f32 0.0, %v5989
    %v5991 = vpop.f32.mrb[0].mxu0
    %5992 = vmatprep.mubr.f32.mxu0 0.0
    %5993 = vmatmul.mubr.f32.gmra.mrb[0].mxu0 %v5903
    %v5994 = vpop.f32.mrb[0].mxu0
    %v5995 = vadd.f32 0.0, %v5994
    %v5996 = vpop.f32.mrb[0].mxu0
    %5997 = vmatprep.mubr.f32.mxu0 0.0
    %5998 = vmatmul.mubr.f32.gmra.mrb[0].mxu0 %v5906
    %v5999 = vpop.f32.mrb[0].mxu0
    %v6000 = vadd.f32 0.0, %v5999
    %v6001 = vpop.f32.mrb[0].mxu0
    %6002 = vdwg.mxu0
    %v6003 = vadd.f32 %v5250, %v5975
    %v6004 = vadd.f32 %v5255, %v5980
    %v6005 = vadd.f32 %v5260, %v5985
    %v6006 = vadd.f32 %v5265, %v5990
    %v6007 = vadd.f32 %v5270, %v5995
    %v6008 = vadd.f32 %v5275, %v6000
    %s6009 = scalar_lea.vmem %s4, 480
    %v6010 = vld [vmem:[%s6009] sm:$0xff]
    %v6011 = vld [vmem:[%s6009 + $0x8] sm:$0xff]
    %v6012 = vld [vmem:[%s6009 + $0x10] sm:$0xff]
    %v6013 = vld [vmem:[%s6009 + $0x18] sm:$0xff]
    %6014 = vmatprep.subr.mxu0 0.0
    %6015 = vmatpush1.msra.mxu0 %v6010
    %6016 = vmatprep.subr.mxu0 0.0
    %6017 = vmatpush1.msra.mxu0 %v6011
    %6018 = vmatprep.subr.mxu0 0.0
    %6019 = vmatpush1.msra.mxu0 %v6012
    %6020 = vmatprep.subr.mxu0 0.0
    %6021 = vmatpush1.msra.mxu0 %v6013
    %6022 = vmatprep.subr.mxu0 0.0
    %6023 = vmatpush1.msra.mxu0 0.0
    %6024 = vmatprep.subr.mxu0 0.0
    %6025 = vmatpush1.msra.mxu0 0.0
    %6026 = vmatprep.subr.mxu0 0.0
    %6027 = vmatpush1.msra.mxu0 0.0
    %6028 = vmatprep.subr.mxu0 0.0
    %6029 = vmatpush1.msra.mxu0 0.0
    %6030 = vmatprep.subr.mxu0 0.0
    %6031 = vmatpush1.msra.mxu0 0.0
    %6032 = vmatprep.subr.mxu0 0.0
    %6033 = vmatpush1.msra.mxu0 0.0
    %6034 = vmatprep.subr.mxu0 0.0
    %6035 = vmatpush1.msra.mxu0 0.0
    %6036 = vmatprep.subr.mxu0 0.0
    %6037 = vmatpush1.msra.mxu0 0.0
    %6038 = vmatprep.subr.mxu0 0.0
    %6039 = vmatpush1.msra.mxu0 0.0
    %6040 = vmatprep.subr.mxu0 0.0
    %6041 = vmatpush1.msra.mxu0 0.0
    %6042 = vmatprep.subr.mxu0 0.0
    %6043 = vmatpush1.msra.mxu0 0.0
    %6044 = vmatprep.subr.mxu0 0.0
    %6045 = vmatpush1.msra.mxu0 0.0
    %6046 = vmatprep.subr.mxu0 0.0
    %6047 = vmatpush1.msra.mxu0 0.0
    %6048 = vmatprep.subr.mxu0 0.0
    %6049 = vmatpush1.msra.mxu0 0.0
    %6050 = vmatprep.subr.mxu0 0.0
    %6051 = vmatpush1.msra.mxu0 0.0
    %6052 = vmatprep.subr.mxu0 0.0
    %6053 = vmatpush1.msra.mxu0 0.0
    %6054 = vmatprep.subr.mxu0 0.0
    %6055 = vmatpush1.msra.mxu0 0.0
    %6056 = vmatprep.subr.mxu0 0.0
    %6057 = vmatpush1.msra.mxu0 0.0
    %6058 = vmatprep.subr.mxu0 0.0
    %6059 = vmatpush1.msra.mxu0 0.0
    %6060 = vmatprep.subr.mxu0 0.0
    %6061 = vmatpush1.msra.mxu0 0.0
    %6062 = vmatprep.subr.mxu0 0.0
    %6063 = vmatpush1.msra.mxu0 0.0
    %6064 = vmatprep.subr.mxu0 0.0
    %6065 = vmatpush1.msra.mxu0 0.0
    %6066 = vmatprep.subr.mxu0 0.0
    %6067 = vmatpush1.msra.mxu0 0.0
    %6068 = vmatprep.subr.mxu0 0.0
    %6069 = vmatpush1.msra.mxu0 0.0
    %6070 = vmatprep.subr.mxu0 0.0
    %6071 = vmatpush1.msra.mxu0 0.0
    %6072 = vmatprep.subr.mxu0 0.0
    %6073 = vmatpush1.msra.mxu0 0.0
    %6074 = vmatprep.subr.mxu0 0.0
    %6075 = vmatpush1.msra.mxu0 0.0
    %6076 = vmatprep.subr.mxu0 0.0
    %6077 = vmatpush1.msra.mxu0 0.0
    %6078 = vmatprep.mubr.f32.mxu0 0.0
    %6079 = vmatmul.mubr.f32.gmra.mrb[0].mxu0 %v3816
    %v6080 = vpop.f32.mrb[0].mxu0
    %v6081 = vadd.f32 0.0, %v6080
    %v6082 = vpop.f32.mrb[0].mxu0
    %6083 = vmatprep.mubr.f32.mxu0 0.0
    %6084 = vmatmul.mubr.f32.gmra.mrb[0].mxu0 %v3819
    %v6085 = vpop.f32.mrb[0].mxu0
    %v6086 = vadd.f32 0.0, %v6085
    %v6087 = vpop.f32.mrb[0].mxu0
    %6088 = vmatprep.mubr.f32.mxu0 0.0
    %6089 = vmatmul.mubr.f32.gmra.mrb[0].mxu0 %v3822
    %v6090 = vpop.f32.mrb[0].mxu0
    %v6091 = vadd.f32 0.0, %v6090
    %v6092 = vpop.f32.mrb[0].mxu0
    %6093 = vmatprep.mubr.f32.mxu0 0.0
    %6094 = vmatmul.mubr.f32.gmra.mrb[0].mxu0 %v3825
    %v6095 = vpop.f32.mrb[0].mxu0
    %v6096 = vadd.f32 0.0, %v6095
    %v6097 = vpop.f32.mrb[0].mxu0
    %6098 = vmatprep.mubr.f32.mxu0 0.0
    %6099 = vmatmul.mubr.f32.gmra.mrb[0].mxu0 %v3828
    %v6100 = vpop.f32.mrb[0].mxu0
    %v6101 = vadd.f32 0.0, %v6100
    %v6102 = vpop.f32.mrb[0].mxu0
    %6103 = vmatprep.mubr.f32.mxu0 0.0
    %6104 = vmatmul.mubr.f32.gmra.mrb[0].mxu0 %v3831
    %v6105 = vpop.f32.mrb[0].mxu0
    %v6106 = vadd.f32 0.0, %v6105
    %v6107 = vpop.f32.mrb[0].mxu0
    %6108 = vdwg.mxu0
    %s6109 = scalar_lea.vmem %s4, 608
    %v6110 = vld [vmem:[%s6109] sm:$0xff]
    %v6111 = vld [vmem:[%s6109 + $0x8] sm:$0xff]
    %v6112 = vld [vmem:[%s6109 + $0x10] sm:$0xff]
    %v6113 = vld [vmem:[%s6109 + $0x18] sm:$0xff]
    %6114 = vmatprep.subr.mxu0 0.0
    %6115 = vmatpush1.msra.mxu0 %v6110
    %6116 = vmatprep.subr.mxu0 0.0
    %6117 = vmatpush1.msra.mxu0 %v6111
    %6118 = vmatprep.subr.mxu0 0.0
    %6119 = vmatpush1.msra.mxu0 %v6112
    %6120 = vmatprep.subr.mxu0 0.0
    %6121 = vmatpush1.msra.mxu0 %v6113
    %6122 = vmatprep.subr.mxu0 0.0
    %6123 = vmatpush1.msra.mxu0 0.0
    %6124 = vmatprep.subr.mxu0 0.0
    %6125 = vmatpush1.msra.mxu0 0.0
    %6126 = vmatprep.subr.mxu0 0.0
    %6127 = vmatpush1.msra.mxu0 0.0
    %6128 = vmatprep.subr.mxu0 0.0
    %6129 = vmatpush1.msra.mxu0 0.0
    %6130 = vmatprep.subr.mxu0 0.0
    %6131 = vmatpush1.msra.mxu0 0.0
    %6132 = vmatprep.subr.mxu0 0.0
    %6133 = vmatpush1.msra.mxu0 0.0
    %6134 = vmatprep.subr.mxu0 0.0
    %6135 = vmatpush1.msra.mxu0 0.0
    %6136 = vmatprep.subr.mxu0 0.0
    %6137 = vmatpush1.msra.mxu0 0.0
    %6138 = vmatprep.subr.mxu0 0.0
    %6139 = vmatpush1.msra.mxu0 0.0
    %6140 = vmatprep.subr.mxu0 0.0
    %6141 = vmatpush1.msra.mxu0 0.0
    %6142 = vmatprep.subr.mxu0 0.0
    %6143 = vmatpush1.msra.mxu0 0.0
    %6144 = vmatprep.subr.mxu0 0.0
    %6145 = vmatpush1.msra.mxu0 0.0
    %6146 = vmatprep.subr.mxu0 0.0
    %6147 = vmatpush1.msra.mxu0 0.0
    %6148 = vmatprep.subr.mxu0 0.0
    %6149 = vmatpush1.msra.mxu0 0.0
    %6150 = vmatprep.subr.mxu0 0.0
    %6151 = vmatpush1.msra.mxu0 0.0
    %6152 = vmatprep.subr.mxu0 0.0
    %6153 = vmatpush1.msra.mxu0 0.0
    %6154 = vmatprep.subr.mxu0 0.0
    %6155 = vmatpush1.msra.mxu0 0.0
    %6156 = vmatprep.subr.mxu0 0.0
    %6157 = vmatpush1.msra.mxu0 0.0
    %6158 = vmatprep.subr.mxu0 0.0
    %6159 = vmatpush1.msra.mxu0 0.0
    %6160 = vmatprep.subr.mxu0 0.0
    %6161 = vmatpush1.msra.mxu0 0.0
    %6162 = vmatprep.subr.mxu0 0.0
    %6163 = vmatpush1.msra.mxu0 0.0
    %6164 = vmatprep.subr.mxu0 0.0
    %6165 = vmatpush1.msra.mxu0 0.0
    %6166 = vmatprep.subr.mxu0 0.0
    %6167 = vmatpush1.msra.mxu0 0.0
    %6168 = vmatprep.subr.mxu0 0.0
    %6169 = vmatpush1.msra.mxu0 0.0
    %6170 = vmatprep.subr.mxu0 0.0
    %6171 = vmatpush1.msra.mxu0 0.0
    %6172 = vmatprep.subr.mxu0 0.0
    %6173 = vmatpush1.msra.mxu0 0.0
    %6174 = vmatprep.subr.mxu0 0.0
    %6175 = vmatpush1.msra.mxu0 0.0
    %6176 = vmatprep.subr.mxu0 0.0
    %6177 = vmatpush1.msra.mxu0 0.0
    %6178 = vmatprep.mubr.f32.mxu0 0.0
    %6179 = vmatmul.mubr.f32.gmra.mrb[0].mxu0 %v3816
    %v6180 = vpop.f32.mrb[0].mxu0
    %v6181 = vadd.f32 0.0, %v6180
    %v6182 = vpop.f32.mrb[0].mxu0
    %6183 = vmatprep.mubr.f32.mxu0 0.0
    %6184 = vmatmul.mubr.f32.gmra.mrb[0].mxu0 %v3819
    %v6185 = vpop.f32.mrb[0].mxu0
    %v6186 = vadd.f32 0.0, %v6185
    %v6187 = vpop.f32.mrb[0].mxu0
    %6188 = vmatprep.mubr.f32.mxu0 0.0
    %6189 = vmatmul.mubr.f32.gmra.mrb[0].mxu0 %v3822
    %v6190 = vpop.f32.mrb[0].mxu0
    %v6191 = vadd.f32 0.0, %v6190
    %v6192 = vpop.f32.mrb[0].mxu0
    %6193 = vmatprep.mubr.f32.mxu0 0.0
    %6194 = vmatmul.mubr.f32.gmra.mrb[0].mxu0 %v3825
    %v6195 = vpop.f32.mrb[0].mxu0
    %v6196 = vadd.f32 0.0, %v6195
    %v6197 = vpop.f32.mrb[0].mxu0
    %6198 = vmatprep.mubr.f32.mxu0 0.0
    %6199 = vmatmul.mubr.f32.gmra.mrb[0].mxu0 %v3828
    %v6200 = vpop.f32.mrb[0].mxu0
    %v6201 = vadd.f32 0.0, %v6200
    %v6202 = vpop.f32.mrb[0].mxu0
    %6203 = vmatprep.mubr.f32.mxu0 0.0
    %6204 = vmatmul.mubr.f32.gmra.mrb[0].mxu0 %v3831
    %v6205 = vpop.f32.mrb[0].mxu0
    %v6206 = vadd.f32 0.0, %v6205
    %v6207 = vpop.f32.mrb[0].mxu0
    %6208 = vdwg.mxu0
    %s6209 = scalar_lea.vmem %s4, 736
    %v6210 = vld [vmem:[%s6209] sm:$0xff]
    %v6211 = vld [vmem:[%s6209 + $0x8] sm:$0xff]
    %v6212 = vld [vmem:[%s6209 + $0x10] sm:$0xff]
    %v6213 = vld [vmem:[%s6209 + $0x18] sm:$0xff]
    %6214 = vmatprep.subr.mxu0 0.0
    %6215 = vmatpush1.msra.mxu0 %v6210
    %6216 = vmatprep.subr.mxu0 0.0
    %6217 = vmatpush1.msra.mxu0 %v6211
    %6218 = vmatprep.subr.mxu0 0.0
    %6219 = vmatpush1.msra.mxu0 %v6212
    %6220 = vmatprep.subr.mxu0 0.0
    %6221 = vmatpush1.msra.mxu0 %v6213
    %6222 = vmatprep.subr.mxu0 0.0
    %6223 = vmatpush1.msra.mxu0 0.0
    %6224 = vmatprep.subr.mxu0 0.0
    %6225 = vmatpush1.msra.mxu0 0.0
    %6226 = vmatprep.subr.mxu0 0.0
    %6227 = vmatpush1.msra.mxu0 0.0
    %6228 = vmatprep.subr.mxu0 0.0
    %6229 = vmatpush1.msra.mxu0 0.0
    %6230 = vmatprep.subr.mxu0 0.0
    %6231 = vmatpush1.msra.mxu0 0.0
    %6232 = vmatprep.subr.mxu0 0.0
    %6233 = vmatpush1.msra.mxu0 0.0
    %6234 = vmatprep.subr.mxu0 0.0
    %6235 = vmatpush1.msra.mxu0 0.0
    %6236 = vmatprep.subr.mxu0 0.0
    %6237 = vmatpush1.msra.mxu0 0.0
    %6238 = vmatprep.subr.mxu0 0.0
    %6239 = vmatpush1.msra.mxu0 0.0
    %6240 = vmatprep.subr.mxu0 0.0
    %6241 = vmatpush1.msra.mxu0 0.0
    %6242 = vmatprep.subr.mxu0 0.0
    %6243 = vmatpush1.msra.mxu0 0.0
    %6244 = vmatprep.subr.mxu0 0.0
    %6245 = vmatpush1.msra.mxu0 0.0
    %6246 = vmatprep.subr.mxu0 0.0
    %6247 = vmatpush1.msra.mxu0 0.0
    %6248 = vmatprep.subr.mxu0 0.0
    %6249 = vmatpush1.msra.mxu0 0.0
    %6250 = vmatprep.subr.mxu0 0.0
    %6251 = vmatpush1.msra.mxu0 0.0
    %6252 = vmatprep.subr.mxu0 0.0
    %6253 = vmatpush1.msra.mxu0 0.0
    %6254 = vmatprep.subr.mxu0 0.0
    %6255 = vmatpush1.msra.mxu0 0.0
    %6256 = vmatprep.subr.mxu0 0.0
    %6257 = vmatpush1.msra.mxu0 0.0
    %6258 = vmatprep.subr.mxu0 0.0
    %6259 = vmatpush1.msra.mxu0 0.0
    %6260 = vmatprep.subr.mxu0 0.0
    %6261 = vmatpush1.msra.mxu0 0.0
    %6262 = vmatprep.subr.mxu0 0.0
    %6263 = vmatpush1.msra.mxu0 0.0
    %6264 = vmatprep.subr.mxu0 0.0
    %6265 = vmatpush1.msra.mxu0 0.0
    %6266 = vmatprep.subr.mxu0 0.0
    %6267 = vmatpush1.msra.mxu0 0.0
    %6268 = vmatprep.subr.mxu0 0.0
    %6269 = vmatpush1.msra.mxu0 0.0
    %6270 = vmatprep.subr.mxu0 0.0
    %6271 = vmatpush1.msra.mxu0 0.0
    %6272 = vmatprep.subr.mxu0 0.0
    %6273 = vmatpush1.msra.mxu0 0.0
    %6274 = vmatprep.subr.mxu0 0.0
    %6275 = vmatpush1.msra.mxu0 0.0
    %6276 = vmatprep.subr.mxu0 0.0
    %6277 = vmatpush1.msra.mxu0 0.0
    %6278 = vmatprep.mubr.f32.mxu0 0.0
    %6279 = vmatmul.mubr.f32.gmra.mrb[0].mxu0 %v3816
    %v6280 = vpop.f32.mrb[0].mxu0
    %v6281 = vadd.f32 0.0, %v6280
    %v6282 = vpop.f32.mrb[0].mxu0
    %6283 = vmatprep.mubr.f32.mxu0 0.0
    %6284 = vmatmul.mubr.f32.gmra.mrb[0].mxu0 %v3819
    %v6285 = vpop.f32.mrb[0].mxu0
    %v6286 = vadd.f32 0.0, %v6285
    %v6287 = vpop.f32.mrb[0].mxu0
    %6288 = vmatprep.mubr.f32.mxu0 0.0
    %6289 = vmatmul.mubr.f32.gmra.mrb[0].mxu0 %v3822
    %v6290 = vpop.f32.mrb[0].mxu0
    %v6291 = vadd.f32 0.0, %v6290
    %v6292 = vpop.f32.mrb[0].mxu0
    %6293 = vmatprep.mubr.f32.mxu0 0.0
    %6294 = vmatmul.mubr.f32.gmra.mrb[0].mxu0 %v3825
    %v6295 = vpop.f32.mrb[0].mxu0
    %v6296 = vadd.f32 0.0, %v6295
    %v6297 = vpop.f32.mrb[0].mxu0
    %6298 = vmatprep.mubr.f32.mxu0 0.0
    %6299 = vmatmul.mubr.f32.gmra.mrb[0].mxu0 %v3828
    %v6300 = vpop.f32.mrb[0].mxu0
    %v6301 = vadd.f32 0.0, %v6300
    %v6302 = vpop.f32.mrb[0].mxu0
    %6303 = vmatprep.mubr.f32.mxu0 0.0
    %6304 = vmatmul.mubr.f32.gmra.mrb[0].mxu0 %v3831
    %v6305 = vpop.f32.mrb[0].mxu0
    %v6306 = vadd.f32 0.0, %v6305
    %v6307 = vpop.f32.mrb[0].mxu0
    %6308 = vdwg.mxu0
    %v6310 = vsel %vm593, %v6081, 0
    %v6313 = vsel %vm593, %v6086, 0
    %v6316 = vsel %vm593, %v6091, 0
    %v6319 = vsel %vm593, %v6096, 0
    %v6322 = vsel %vm593, %v6101, 0
    %v6325 = vsel %vm593, %v6106, 0
    %v6328 = vsel %vm593, %v6181, 0
    %v6331 = vsel %vm593, %v6186, 0
    %v6334 = vsel %vm593, %v6191, 0
    %v6337 = vsel %vm593, %v6196, 0
    %v6340 = vsel %vm593, %v6201, 0
    %v6343 = vsel %vm593, %v6206, 0
    %6345 = vmatprep.subr.mxu0 0.0
    %6346 = vmatpush1.xpose.msra.mxu0 %v6328
    %6347 = vmatprep.subr.mxu0 0.0
    %6348 = vmatpush1.xpose.msra.mxu0 %v6331
    %6349 = vmatprep.subr.mxu0 0.0
    %6350 = vmatpush1.xpose.msra.mxu0 %v6334
    %6351 = vmatprep.subr.mxu0 0.0
    %6352 = vmatpush1.xpose.msra.mxu0 %v6337
    %6353 = vmatprep.subr.mxu0 0.0
    %6354 = vmatpush1.xpose.msra.mxu0 %v6340
    %6355 = vmatprep.subr.mxu0 0.0
    %6356 = vmatpush1.xpose.msra.mxu0 %v6343
    %6357 = vmatprep.subr.mxu0 0.0
    %6358 = vmatpush1.xpose.msra.mxu0 0.0
    %6359 = vmatprep.subr.mxu0 0.0
    %6360 = vmatpush1.xpose.msra.mxu0 0.0
    %6361 = vmatprep.subr.mxu0 0.0
    %6362 = vmatpush1.xpose.msra.mxu0 0.0
    %6363 = vmatprep.subr.mxu0 0.0
    %6364 = vmatpush1.xpose.msra.mxu0 0.0
    %6365 = vmatprep.subr.mxu0 0.0
    %6366 = vmatpush1.xpose.msra.mxu0 0.0
    %6367 = vmatprep.subr.mxu0 0.0
    %6368 = vmatpush1.xpose.msra.mxu0 0.0
    %6369 = vmatprep.subr.mxu0 0.0
    %6370 = vmatpush1.xpose.msra.mxu0 0.0
    %6371 = vmatprep.subr.mxu0 0.0
    %6372 = vmatpush1.xpose.msra.mxu0 0.0
    %6373 = vmatprep.subr.mxu0 0.0
    %6374 = vmatpush1.xpose.msra.mxu0 0.0
    %6375 = vmatprep.subr.mxu0 0.0
    %6376 = vmatpush1.xpose.msra.mxu0 0.0
    %6377 = vmatprep.subr.mxu0 0.0
    %6378 = vmatpush1.xpose.msra.mxu0 0.0
    %6379 = vmatprep.subr.mxu0 0.0
    %6380 = vmatpush1.xpose.msra.mxu0 0.0
    %6381 = vmatprep.subr.mxu0 0.0
    %6382 = vmatpush1.xpose.msra.mxu0 0.0
    %6383 = vmatprep.subr.mxu0 0.0
    %6384 = vmatpush1.xpose.msra.mxu0 0.0
    %6385 = vmatprep.subr.mxu0 0.0
    %6386 = vmatpush1.xpose.msra.mxu0 0.0
    %6387 = vmatprep.subr.mxu0 0.0
    %6388 = vmatpush1.xpose.msra.mxu0 0.0
    %6389 = vmatprep.subr.mxu0 0.0
    %6390 = vmatpush1.xpose.msra.mxu0 0.0
    %6391 = vmatprep.subr.mxu0 0.0
    %6392 = vmatpush1.xpose.msra.mxu0 0.0
    %6393 = vmatprep.subr.mxu0 0.0
    %6394 = vmatpush1.xpose.msra.mxu0 0.0
    %6395 = vmatprep.subr.mxu0 0.0
    %6396 = vmatpush1.xpose.msra.mxu0 0.0
    %6397 = vmatprep.subr.mxu0 0.0
    %6398 = vmatpush1.xpose.msra.mxu0 0.0
    %6399 = vmatprep.subr.mxu0 0.0
    %6400 = vmatpush1.xpose.msra.mxu0 0.0
    %6401 = vmatprep.subr.mxu0 0.0
    %6402 = vmatpush1.xpose.msra.mxu0 0.0
    %6403 = vmatprep.subr.mxu0 0.0
    %6404 = vmatpush1.xpose.msra.mxu0 0.0
    %6405 = vmatprep.subr.mxu0 0.0
    %6406 = vmatpush1.xpose.msra.mxu0 0.0
    %6407 = vmatprep.subr.mxu0 0.0
    %6408 = vmatpush1.xpose.msra.mxu0 0.0
    %6409 = vmatprep.mubr.f32.mxu0 0.0
    %6410 = vmatmul.mubr.f32.gmra.mrb[0].mxu0 %v6310
    %v6411 = vpop.f32.mrb[0].mxu0
    %v6412 = vadd.f32 %v168, %v6411
    %v6413 = vpop.f32.mrb[0].mxu0
    %6414 = vmatprep.mubr.f32.mxu0 0.0
    %6415 = vmatmul.mubr.f32.gmra.mrb[0].mxu0 %v6313
    %v6416 = vpop.f32.mrb[0].mxu0
    %v6417 = vadd.f32 %v169, %v6416
    %v6418 = vpop.f32.mrb[0].mxu0
    %6419 = vmatprep.mubr.f32.mxu0 0.0
    %6420 = vmatmul.mubr.f32.gmra.mrb[0].mxu0 %v6316
    %v6421 = vpop.f32.mrb[0].mxu0
    %v6422 = vadd.f32 %v170, %v6421
    %v6423 = vpop.f32.mrb[0].mxu0
    %6424 = vmatprep.mubr.f32.mxu0 0.0
    %6425 = vmatmul.mubr.f32.gmra.mrb[0].mxu0 %v6319
    %v6426 = vpop.f32.mrb[0].mxu0
    %v6427 = vadd.f32 %v171, %v6426
    %v6428 = vpop.f32.mrb[0].mxu0
    %6429 = vmatprep.mubr.f32.mxu0 0.0
    %6430 = vmatmul.mubr.f32.gmra.mrb[0].mxu0 %v6322
    %v6431 = vpop.f32.mrb[0].mxu0
    %v6432 = vadd.f32 %v172, %v6431
    %v6433 = vpop.f32.mrb[0].mxu0
    %6434 = vmatprep.mubr.f32.mxu0 0.0
    %6435 = vmatmul.mubr.f32.gmra.mrb[0].mxu0 %v6325
    %v6436 = vpop.f32.mrb[0].mxu0
    %v6437 = vadd.f32 %v173, %v6436
    %v6438 = vpop.f32.mrb[0].mxu0
    %6439 = vdwg.mxu0
    %v6440 = vsel %vm54, %v6412, -inf
    %6441 = vmax.xlane.f32.xlu0 %v6440
    %v6442 = vpop.xlane.xlu0 %6441
    %v6443 = vsel %vm54, %v6417, -inf
    %6444 = vmax.xlane.f32.xlu0 %v6443
    %v6445 = vpop.xlane.xlu0 %6444
    %v6446 = vsel %vm54, %v6422, -inf
    %6447 = vmax.xlane.f32.xlu0 %v6446
    %v6448 = vpop.xlane.xlu0 %6447
    %v6449 = vsel %vm54, %v6427, -inf
    %6450 = vmax.xlane.f32.xlu0 %v6449
    %v6451 = vpop.xlane.xlu0 %6450
    %v6452 = vsel %vm54, %v6432, -inf
    %6453 = vmax.xlane.f32.xlu0 %v6452
    %v6454 = vpop.xlane.xlu0 %6453
    %v6455 = vsel %vm54, %v6437, -inf
    %6456 = vmax.xlane.f32.xlu0 %v6455
    %v6457 = vpop.xlane.xlu0 %6456
    %v6458 = vsub.f32 %v6412, %v6442
    %v6459 = vsub.f32 %v6417, %v6445
    %v6460 = vsub.f32 %v6422, %v6448
    %v6461 = vsub.f32 %v6427, %v6451
    %v6462 = vsub.f32 %v6432, %v6454
    %v6463 = vsub.f32 %v6437, %v6457
    %v6464 = vmul.f32 %v6458, 1.442695
    %v6465 = vpow.pop %v6464
    %v6466 = vmul.f32 %v6459, 1.442695
    %v6467 = vpow.pop %v6466
    %v6468 = vmul.f32 %v6460, 1.442695
    %v6469 = vpow.pop %v6468
    %v6470 = vmul.f32 %v6461, 1.442695
    %v6471 = vpow.pop %v6470
    %v6472 = vmul.f32 %v6462, 1.442695
    %v6473 = vpow.pop %v6472
    %v6474 = vmul.f32 %v6463, 1.442695
    %v6475 = vpow.pop %v6474
    %v6476 = vsel %vm54, %v6465, 0.0
    %6477 = vadd.xlane.f32.xlu0 %v6476
    %v6478 = vpop.xlane.xlu0 %6477
    %v6479 = vsel %vm54, %v6467, 0.0
    %6480 = vadd.xlane.f32.xlu0 %v6479
    %v6481 = vpop.xlane.xlu0 %6480
    %v6482 = vsel %vm54, %v6469, 0.0
    %6483 = vadd.xlane.f32.xlu0 %v6482
    %v6484 = vpop.xlane.xlu0 %6483
    %v6485 = vsel %vm54, %v6471, 0.0
    %6486 = vadd.xlane.f32.xlu0 %v6485
    %v6487 = vpop.xlane.xlu0 %6486
    %v6488 = vsel %vm54, %v6473, 0.0
    %6489 = vadd.xlane.f32.xlu0 %v6488
    %v6490 = vpop.xlane.xlu0 %6489
    %v6491 = vsel %vm54, %v6475, 0.0
    %6492 = vadd.xlane.f32.xlu0 %v6491
    %v6493 = vpop.xlane.xlu0 %6492
    %v6494 = vrcp.pop %v6478
    %v6495 = vrcp.pop %v6481
    %v6496 = vrcp.pop %v6484
    %v6497 = vrcp.pop %v6487
    %v6498 = vrcp.pop %v6490
    %v6499 = vrcp.pop %v6493
    %v6500 = vmul.f32 %v6465, %v6494
    %v6501 = vmul.f32 %v6467, %v6495
    %v6502 = vmul.f32 %v6469, %v6496
    %v6503 = vmul.f32 %v6471, %v6497
    %v6504 = vmul.f32 %v6473, %v6498
    %v6505 = vmul.f32 %v6475, %v6499
    %v6507 = vsel %vm54, %v6500, 0
    %v6510 = vsel %vm54, %v6501, 0
    %v6513 = vsel %vm54, %v6502, 0
    %v6516 = vsel %vm54, %v6503, 0
    %v6519 = vsel %vm54, %v6504, 0
    %v6522 = vsel %vm54, %v6505, 0
    %6524 = vmatprep.subr.mxu0 0.0
    %6525 = vmatpush1.msra.mxu0 %v6281
    %6526 = vmatprep.subr.mxu0 0.0
    %6527 = vmatpush1.msra.mxu0 %v6286
    %6528 = vmatprep.subr.mxu0 0.0
    %6529 = vmatpush1.msra.mxu0 %v6291
    %6530 = vmatprep.subr.mxu0 0.0
    %6531 = vmatpush1.msra.mxu0 %v6296
    %6532 = vmatprep.subr.mxu0 0.0
    %6533 = vmatpush1.msra.mxu0 %v6301
    %6534 = vmatprep.subr.mxu0 0.0
    %6535 = vmatpush1.msra.mxu0 %v6306
    %6536 = vmatprep.subr.mxu0 0.0
    %6537 = vmatpush1.msra.mxu0 0.0
    %6538 = vmatprep.subr.mxu0 0.0
    %6539 = vmatpush1.msra.mxu0 0.0
    %6540 = vmatprep.subr.mxu0 0.0
    %6541 = vmatpush1.msra.mxu0 0.0
    %6542 = vmatprep.subr.mxu0 0.0
    %6543 = vmatpush1.msra.mxu0 0.0
    %6544 = vmatprep.subr.mxu0 0.0
    %6545 = vmatpush1.msra.mxu0 0.0
    %6546 = vmatprep.subr.mxu0 0.0
    %6547 = vmatpush1.msra.mxu0 0.0
    %6548 = vmatprep.subr.mxu0 0.0
    %6549 = vmatpush1.msra.mxu0 0.0
    %6550 = vmatprep.subr.mxu0 0.0
    %6551 = vmatpush1.msra.mxu0 0.0
    %6552 = vmatprep.subr.mxu0 0.0
    %6553 = vmatpush1.msra.mxu0 0.0
    %6554 = vmatprep.subr.mxu0 0.0
    %6555 = vmatpush1.msra.mxu0 0.0
    %6556 = vmatprep.subr.mxu0 0.0
    %6557 = vmatpush1.msra.mxu0 0.0
    %6558 = vmatprep.subr.mxu0 0.0
    %6559 = vmatpush1.msra.mxu0 0.0
    %6560 = vmatprep.subr.mxu0 0.0
    %6561 = vmatpush1.msra.mxu0 0.0
    %6562 = vmatprep.subr.mxu0 0.0
    %6563 = vmatpush1.msra.mxu0 0.0
    %6564 = vmatprep.subr.mxu0 0.0
    %6565 = vmatpush1.msra.mxu0 0.0
    %6566 = vmatprep.subr.mxu0 0.0
    %6567 = vmatpush1.msra.mxu0 0.0
    %6568 = vmatprep.subr.mxu0 0.0
    %6569 = vmatpush1.msra.mxu0 0.0
    %6570 = vmatprep.subr.mxu0 0.0
    %6571 = vmatpush1.msra.mxu0 0.0
    %6572 = vmatprep.subr.mxu0 0.0
    %6573 = vmatpush1.msra.mxu0 0.0
    %6574 = vmatprep.subr.mxu0 0.0
    %6575 = vmatpush1.msra.mxu0 0.0
    %6576 = vmatprep.subr.mxu0 0.0
    %6577 = vmatpush1.msra.mxu0 0.0
    %6578 = vmatprep.subr.mxu0 0.0
    %6579 = vmatpush1.msra.mxu0 0.0
    %6580 = vmatprep.subr.mxu0 0.0
    %6581 = vmatpush1.msra.mxu0 0.0
    %6582 = vmatprep.subr.mxu0 0.0
    %6583 = vmatpush1.msra.mxu0 0.0
    %6584 = vmatprep.subr.mxu0 0.0
    %6585 = vmatpush1.msra.mxu0 0.0
    %6586 = vmatprep.subr.mxu0 0.0
    %6587 = vmatpush1.msra.mxu0 0.0
    %6588 = vmatprep.mubr.f32.mxu0 0.0
    %6589 = vmatmul.mubr.f32.gmra.mrb[0].mxu0 %v6507
    %v6590 = vpop.f32.mrb[0].mxu0
    %v6591 = vadd.f32 0.0, %v6590
    %v6592 = vpop.f32.mrb[0].mxu0
    %6593 = vmatprep.mubr.f32.mxu0 0.0
    %6594 = vmatmul.mubr.f32.gmra.mrb[0].mxu0 %v6510
    %v6595 = vpop.f32.mrb[0].mxu0
    %v6596 = vadd.f32 0.0, %v6595
    %v6597 = vpop.f32.mrb[0].mxu0
    %6598 = vmatprep.mubr.f32.mxu0 0.0
    %6599 = vmatmul.mubr.f32.gmra.mrb[0].mxu0 %v6513
    %v6600 = vpop.f32.mrb[0].mxu0
    %v6601 = vadd.f32 0.0, %v6600
    %v6602 = vpop.f32.mrb[0].mxu0
    %6603 = vmatprep.mubr.f32.mxu0 0.0
    %6604 = vmatmul.mubr.f32.gmra.mrb[0].mxu0 %v6516
    %v6605 = vpop.f32.mrb[0].mxu0
    %v6606 = vadd.f32 0.0, %v6605
    %v6607 = vpop.f32.mrb[0].mxu0
    %6608 = vmatprep.mubr.f32.mxu0 0.0
    %6609 = vmatmul.mubr.f32.gmra.mrb[0].mxu0 %v6519
    %v6610 = vpop.f32.mrb[0].mxu0
    %v6611 = vadd.f32 0.0, %v6610
    %v6612 = vpop.f32.mrb[0].mxu0
    %6613 = vmatprep.mubr.f32.mxu0 0.0
    %6614 = vmatmul.mubr.f32.gmra.mrb[0].mxu0 %v6522
    %v6615 = vpop.f32.mrb[0].mxu0
    %v6616 = vadd.f32 0.0, %v6615
    %v6617 = vpop.f32.mrb[0].mxu0
    %6618 = vdwg.mxu0
    %s6619 = scalar_lea.vmem %s5, 56
    %v6620 = vld [vmem:[%s6619] sm:$0xff]
    %v6622 = vsel %vm593, %v6591, 0
    %v6625 = vsel %vm593, %v6596, 0
    %v6628 = vsel %vm593, %v6601, 0
    %v6631 = vsel %vm593, %v6606, 0
    %v6634 = vsel %vm593, %v6611, 0
    %v6637 = vsel %vm593, %v6616, 0
    %6639 = vmatprep.subr.mxu0 0.0
    %6640 = vmatpush1.msra.mxu0 %v6620
    %6641 = vmatprep.subr.mxu0 0.0
    %6642 = vmatpush1.msra.mxu0 0.0
    %6643 = vmatprep.subr.mxu0 0.0
    %6644 = vmatpush1.msra.mxu0 0.0
    %6645 = vmatprep.subr.mxu0 0.0
    %6646 = vmatpush1.msra.mxu0 0.0
    %6647 = vmatprep.subr.mxu0 0.0
    %6648 = vmatpush1.msra.mxu0 0.0
    %6649 = vmatprep.subr.mxu0 0.0
    %6650 = vmatpush1.msra.mxu0 0.0
    %6651 = vmatprep.subr.mxu0 0.0
    %6652 = vmatpush1.msra.mxu0 0.0
    %6653 = vmatprep.subr.mxu0 0.0
    %6654 = vmatpush1.msra.mxu0 0.0
    %6655 = vmatprep.subr.mxu0 0.0
    %6656 = vmatpush1.msra.mxu0 0.0
    %6657 = vmatprep.subr.mxu0 0.0
    %6658 = vmatpush1.msra.mxu0 0.0
    %6659 = vmatprep.subr.mxu0 0.0
    %6660 = vmatpush1.msra.mxu0 0.0
    %6661 = vmatprep.subr.mxu0 0.0
    %6662 = vmatpush1.msra.mxu0 0.0
    %6663 = vmatprep.subr.mxu0 0.0
    %6664 = vmatpush1.msra.mxu0 0.0
    %6665 = vmatprep.subr.mxu0 0.0
    %6666 = vmatpush1.msra.mxu0 0.0
    %6667 = vmatprep.subr.mxu0 0.0
    %6668 = vmatpush1.msra.mxu0 0.0
    %6669 = vmatprep.subr.mxu0 0.0
    %6670 = vmatpush1.msra.mxu0 0.0
    %6671 = vmatprep.subr.mxu0 0.0
    %6672 = vmatpush1.msra.mxu0 0.0
    %6673 = vmatprep.subr.mxu0 0.0
    %6674 = vmatpush1.msra.mxu0 0.0
    %6675 = vmatprep.subr.mxu0 0.0
    %6676 = vmatpush1.msra.mxu0 0.0
    %6677 = vmatprep.subr.mxu0 0.0
    %6678 = vmatpush1.msra.mxu0 0.0
    %6679 = vmatprep.subr.mxu0 0.0
    %6680 = vmatpush1.msra.mxu0 0.0
    %6681 = vmatprep.subr.mxu0 0.0
    %6682 = vmatpush1.msra.mxu0 0.0
    %6683 = vmatprep.subr.mxu0 0.0
    %6684 = vmatpush1.msra.mxu0 0.0
    %6685 = vmatprep.subr.mxu0 0.0
    %6686 = vmatpush1.msra.mxu0 0.0
    %6687 = vmatprep.subr.mxu0 0.0
    %6688 = vmatpush1.msra.mxu0 0.0
    %6689 = vmatprep.subr.mxu0 0.0
    %6690 = vmatpush1.msra.mxu0 0.0
    %6691 = vmatprep.subr.mxu0 0.0
    %6692 = vmatpush1.msra.mxu0 0.0
    %6693 = vmatprep.subr.mxu0 0.0
    %6694 = vmatpush1.msra.mxu0 0.0
    %6695 = vmatprep.subr.mxu0 0.0
    %6696 = vmatpush1.msra.mxu0 0.0
    %6697 = vmatprep.subr.mxu0 0.0
    %6698 = vmatpush1.msra.mxu0 0.0
    %6699 = vmatprep.subr.mxu0 0.0
    %6700 = vmatpush1.msra.mxu0 0.0
    %6701 = vmatprep.subr.mxu0 0.0
    %6702 = vmatpush1.msra.mxu0 0.0
    %6703 = vmatprep.mubr.f32.mxu0 0.0
    %6704 = vmatmul.mubr.f32.gmra.mrb[0].mxu0 %v6622
    %v6705 = vpop.f32.mrb[0].mxu0
    %v6706 = vadd.f32 0.0, %v6705
    %v6707 = vpop.f32.mrb[0].mxu0
    %6708 = vmatprep.mubr.f32.mxu0 0.0
    %6709 = vmatmul.mubr.f32.gmra.mrb[0].mxu0 %v6625
    %v6710 = vpop.f32.mrb[0].mxu0
    %v6711 = vadd.f32 0.0, %v6710
    %v6712 = vpop.f32.mrb[0].mxu0
    %6713 = vmatprep.mubr.f32.mxu0 0.0
    %6714 = vmatmul.mubr.f32.gmra.mrb[0].mxu0 %v6628
    %v6715 = vpop.f32.mrb[0].mxu0
    %v6716 = vadd.f32 0.0, %v6715
    %v6717 = vpop.f32.mrb[0].mxu0
    %6718 = vmatprep.mubr.f32.mxu0 0.0
    %6719 = vmatmul.mubr.f32.gmra.mrb[0].mxu0 %v6631
    %v6720 = vpop.f32.mrb[0].mxu0
    %v6721 = vadd.f32 0.0, %v6720
    %v6722 = vpop.f32.mrb[0].mxu0
    %6723 = vmatprep.mubr.f32.mxu0 0.0
    %6724 = vmatmul.mubr.f32.gmra.mrb[0].mxu0 %v6634
    %v6725 = vpop.f32.mrb[0].mxu0
    %v6726 = vadd.f32 0.0, %v6725
    %v6727 = vpop.f32.mrb[0].mxu0
    %6728 = vmatprep.mubr.f32.mxu0 0.0
    %6729 = vmatmul.mubr.f32.gmra.mrb[0].mxu0 %v6637
    %v6730 = vpop.f32.mrb[0].mxu0
    %v6731 = vadd.f32 0.0, %v6730
    %v6732 = vpop.f32.mrb[0].mxu0
    %6733 = vdwg.mxu0
    %v6734 = vadd.f32 %v6003, %v6706
    %v6735 = vadd.f32 %v6004, %v6711
    %v6736 = vadd.f32 %v6005, %v6716
    %v6737 = vadd.f32 %v6006, %v6721
    %v6738 = vadd.f32 %v6007, %v6726
    %v6739 = vadd.f32 %v6008, %v6731
    %v6740 = vadd.f32 %v3704, %v6734
    %v6741 = vadd.f32 %v3705, %v6735
    %v6742 = vadd.f32 %v3706, %v6736
    %v6743 = vadd.f32 %v3707, %v6737
    %v6744 = vadd.f32 %v3708, %v6738
    %v6745 = vadd.f32 %v3709, %v6739
    %v6746 = vld [vmem:[%s9 + $0x8] sm:$0x1]
    %v6747 = vlaneseq
    %v6748 = vshrl.u32 %v6747, 7
    %v6749 = vsub.s32 0, %v6748
    %v6750 = vrot.slane %v6746, %v6749
    %v6751 = vadd.f32 %v6740, %v6750
    %v6752 = vadd.f32 %v6741, %v6750
    %v6753 = vadd.f32 %v6742, %v6750
    %v6754 = vadd.f32 %v6743, %v6750
    %v6755 = vadd.f32 %v6744, %v6750
    %v6756 = vadd.f32 %v6745, %v6750
    %v6757 = vld [vmem:[%s9 + $0x9] sm:$0x1]
    %v6758 = vld [vmem:[%s9 + $0xa] sm:$0x1]
    %v6759 = vsel %vm176, %v6751, 0.0
    %6760 = vadd.xlane.f32.xlu0 %v6759
    %v6761 = vpop.xlane.xlu0 %6760
    %v6762 = vsel %vm176, %v6752, 0.0
    %6763 = vadd.xlane.f32.xlu0 %v6762
    %v6764 = vpop.xlane.xlu0 %6763
    %v6765 = vsel %vm176, %v6753, 0.0
    %6766 = vadd.xlane.f32.xlu0 %v6765
    %v6767 = vpop.xlane.xlu0 %6766
    %v6768 = vsel %vm176, %v6754, 0.0
    %6769 = vadd.xlane.f32.xlu0 %v6768
    %v6770 = vpop.xlane.xlu0 %6769
    %v6771 = vsel %vm176, %v6755, 0.0
    %6772 = vadd.xlane.f32.xlu0 %v6771
    %v6773 = vpop.xlane.xlu0 %6772
    %v6774 = vsel %vm176, %v6756, 0.0
    %6775 = vadd.xlane.f32.xlu0 %v6774
    %v6776 = vpop.xlane.xlu0 %6775
    %v6777 = vmul.f32 %v6761, %v195
    %v6778 = vmul.f32 %v6764, %v195
    %v6779 = vmul.f32 %v6767, %v195
    %v6780 = vmul.f32 %v6770, %v195
    %v6781 = vmul.f32 %v6773, %v195
    %v6782 = vmul.f32 %v6776, %v195
    %v6783 = vsub.f32 %v6751, %v6777
    %v6784 = vsub.f32 %v6752, %v6778
    %v6785 = vsub.f32 %v6753, %v6779
    %v6786 = vsub.f32 %v6754, %v6780
    %v6787 = vsub.f32 %v6755, %v6781
    %v6788 = vsub.f32 %v6756, %v6782
    %v6789 = vmul.f32 %v6783, %v6783
    %v6790 = vmul.f32 %v6784, %v6784
    %v6791 = vmul.f32 %v6785, %v6785
    %v6792 = vmul.f32 %v6786, %v6786
    %v6793 = vmul.f32 %v6787, %v6787
    %v6794 = vmul.f32 %v6788, %v6788
    %v6795 = vsel %vm176, %v6789, 0.0
    %6796 = vadd.xlane.f32.xlu0 %v6795
    %v6797 = vpop.xlane.xlu0 %6796
    %v6798 = vsel %vm176, %v6790, 0.0
    %6799 = vadd.xlane.f32.xlu0 %v6798
    %v6800 = vpop.xlane.xlu0 %6799
    %v6801 = vsel %vm176, %v6791, 0.0
    %6802 = vadd.xlane.f32.xlu0 %v6801
    %v6803 = vpop.xlane.xlu0 %6802
    %v6804 = vsel %vm176, %v6792, 0.0
    %6805 = vadd.xlane.f32.xlu0 %v6804
    %v6806 = vpop.xlane.xlu0 %6805
    %v6807 = vsel %vm176, %v6793, 0.0
    %6808 = vadd.xlane.f32.xlu0 %v6807
    %v6809 = vpop.xlane.xlu0 %6808
    %v6810 = vsel %vm176, %v6794, 0.0
    %6811 = vadd.xlane.f32.xlu0 %v6810
    %v6812 = vpop.xlane.xlu0 %6811
    %v6813 = vmul.f32 %v6797, %v195
    %v6814 = vmul.f32 %v6800, %v195
    %v6815 = vmul.f32 %v6803, %v195
    %v6816 = vmul.f32 %v6806, %v195
    %v6817 = vmul.f32 %v6809, %v195
    %v6818 = vmul.f32 %v6812, %v195
    %v6819 = vadd.f32 %v6813, 1e-06
    %v6820 = vadd.f32 %v6814, 1e-06
    %v6821 = vadd.f32 %v6815, 1e-06
    %v6822 = vadd.f32 %v6816, 1e-06
    %v6823 = vadd.f32 %v6817, 1e-06
    %v6824 = vadd.f32 %v6818, 1e-06
    %v6825 = vrsqrt.pop %v6819
    %v6826 = vrsqrt.pop %v6820
    %v6827 = vrsqrt.pop %v6821
    %v6828 = vrsqrt.pop %v6822
    %v6829 = vrsqrt.pop %v6823
    %v6830 = vrsqrt.pop %v6824
    %v6831 = vmul.f32 %v6783, %v6825
    %v6832 = vmul.f32 %v6784, %v6826
    %v6833 = vmul.f32 %v6785, %v6827
    %v6834 = vmul.f32 %v6786, %v6828
    %v6835 = vmul.f32 %v6787, %v6829
    %v6836 = vmul.f32 %v6788, %v6830
    %v6837 = vlaneseq
    %v6838 = vshrl.u32 %v6837, 7
    %v6839 = vsub.s32 0, %v6838
    %v6840 = vrot.slane %v6757, %v6839
    %v6841 = vmul.f32 %v6831, %v6840
    %v6842 = vmul.f32 %v6832, %v6840
    %v6843 = vmul.f32 %v6833, %v6840
    %v6844 = vmul.f32 %v6834, %v6840
    %v6845 = vmul.f32 %v6835, %v6840
    %v6846 = vmul.f32 %v6836, %v6840
    %v6847 = vlaneseq
    %v6848 = vshrl.u32 %v6847, 7
    %v6849 = vsub.s32 0, %v6848
    %v6850 = vrot.slane %v6758, %v6849
    %v6851 = vadd.f32 %v6841, %v6850
    %v6852 = vadd.f32 %v6842, %v6850
    %v6853 = vadd.f32 %v6843, %v6850
    %v6854 = vadd.f32 %v6844, %v6850
    %v6855 = vadd.f32 %v6845, %v6850
    %v6856 = vadd.f32 %v6846, %v6850
    %s6857 = scalar_lea.vmem %s6, 32
    %v6858 = vld [vmem:[%s6857] sm:$0xff]
    %v6859 = vld [vmem:[%s6857 + $0x8] sm:$0xff]
    %v6860 = vld [vmem:[%s6857 + $0x10] sm:$0xff]
    %v6861 = vld [vmem:[%s6857 + $0x18] sm:$0xff]
    %v6862 = vld [vmem:[%s10 + $0x1] sm:$0x1]
    %v6863 = vlaneseq
    %v6864 = vshrl.u32 %v6863, 7
    %v6865 = vsub.s32 0, %v6864
    %v6866 = vrot.slane %v6862, %v6865
    %v6868 = vsel %vm176, %v6851, 0
    %v6871 = vsel %vm176, %v6852, 0
    %v6874 = vsel %vm176, %v6853, 0
    %v6877 = vsel %vm176, %v6854, 0
    %v6880 = vsel %vm176, %v6855, 0
    %v6883 = vsel %vm176, %v6856, 0
    %6885 = vmatprep.subr.mxu0 0.0
    %6886 = vmatpush1.msra.mxu0 %v6858
    %6887 = vmatprep.subr.mxu0 0.0
    %6888 = vmatpush1.msra.mxu0 %v6859
    %6889 = vmatprep.subr.mxu0 0.0
    %6890 = vmatpush1.msra.mxu0 %v6860
    %6891 = vmatprep.subr.mxu0 0.0
    %6892 = vmatpush1.msra.mxu0 %v6861
    %6893 = vmatprep.subr.mxu0 0.0
    %6894 = vmatpush1.msra.mxu0 0.0
    %6895 = vmatprep.subr.mxu0 0.0
    %6896 = vmatpush1.msra.mxu0 0.0
    %6897 = vmatprep.subr.mxu0 0.0
    %6898 = vmatpush1.msra.mxu0 0.0
    %6899 = vmatprep.subr.mxu0 0.0
    %6900 = vmatpush1.msra.mxu0 0.0
    %6901 = vmatprep.subr.mxu0 0.0
    %6902 = vmatpush1.msra.mxu0 0.0
    %6903 = vmatprep.subr.mxu0 0.0
    %6904 = vmatpush1.msra.mxu0 0.0
    %6905 = vmatprep.subr.mxu0 0.0
    %6906 = vmatpush1.msra.mxu0 0.0
    %6907 = vmatprep.subr.mxu0 0.0
    %6908 = vmatpush1.msra.mxu0 0.0
    %6909 = vmatprep.subr.mxu0 0.0
    %6910 = vmatpush1.msra.mxu0 0.0
    %6911 = vmatprep.subr.mxu0 0.0
    %6912 = vmatpush1.msra.mxu0 0.0
    %6913 = vmatprep.subr.mxu0 0.0
    %6914 = vmatpush1.msra.mxu0 0.0
    %6915 = vmatprep.subr.mxu0 0.0
    %6916 = vmatpush1.msra.mxu0 0.0
    %6917 = vmatprep.subr.mxu0 0.0
    %6918 = vmatpush1.msra.mxu0 0.0
    %6919 = vmatprep.subr.mxu0 0.0
    %6920 = vmatpush1.msra.mxu0 0.0
    %6921 = vmatprep.subr.mxu0 0.0
    %6922 = vmatpush1.msra.mxu0 0.0
    %6923 = vmatprep.subr.mxu0 0.0
    %6924 = vmatpush1.msra.mxu0 0.0
    %6925 = vmatprep.subr.mxu0 0.0
    %6926 = vmatpush1.msra.mxu0 0.0
    %6927 = vmatprep.subr.mxu0 0.0
    %6928 = vmatpush1.msra.mxu0 0.0
    %6929 = vmatprep.subr.mxu0 0.0
    %6930 = vmatpush1.msra.mxu0 0.0
    %6931 = vmatprep.subr.mxu0 0.0
    %6932 = vmatpush1.msra.mxu0 0.0
    %6933 = vmatprep.subr.mxu0 0.0
    %6934 = vmatpush1.msra.mxu0 0.0
    %6935 = vmatprep.subr.mxu0 0.0
    %6936 = vmatpush1.msra.mxu0 0.0
    %6937 = vmatprep.subr.mxu0 0.0
    %6938 = vmatpush1.msra.mxu0 0.0
    %6939 = vmatprep.subr.mxu0 0.0
    %6940 = vmatpush1.msra.mxu0 0.0
    %6941 = vmatprep.subr.mxu0 0.0
    %6942 = vmatpush1.msra.mxu0 0.0
    %6943 = vmatprep.subr.mxu0 0.0
    %6944 = vmatpush1.msra.mxu0 0.0
    %6945 = vmatprep.subr.mxu0 0.0
    %6946 = vmatpush1.msra.mxu0 0.0
    %6947 = vmatprep.subr.mxu0 0.0
    %6948 = vmatpush1.msra.mxu0 0.0
    %6949 = vmatprep.mubr.f32.mxu0 0.0
    %6950 = vmatmul.mubr.f32.gmra.mrb[0].mxu0 %v6868
    %v6951 = vpop.f32.mrb[0].mxu0
    %v6952 = vadd.f32 %v6866, %v6951
    %v6953 = vpop.f32.mrb[0].mxu0
    %6954 = vmatprep.mubr.f32.mxu0 0.0
    %6955 = vmatmul.mubr.f32.gmra.mrb[0].mxu0 %v6871
    %v6956 = vpop.f32.mrb[0].mxu0
    %v6957 = vadd.f32 %v6866, %v6956
    %v6958 = vpop.f32.mrb[0].mxu0
    %6959 = vmatprep.mubr.f32.mxu0 0.0
    %6960 = vmatmul.mubr.f32.gmra.mrb[0].mxu0 %v6874
    %v6961 = vpop.f32.mrb[0].mxu0
    %v6962 = vadd.f32 %v6866, %v6961
    %v6963 = vpop.f32.mrb[0].mxu0
    %6964 = vmatprep.mubr.f32.mxu0 0.0
    %6965 = vmatmul.mubr.f32.gmra.mrb[0].mxu0 %v6877
    %v6966 = vpop.f32.mrb[0].mxu0
    %v6967 = vadd.f32 %v6866, %v6966
    %v6968 = vpop.f32.mrb[0].mxu0
    %6969 = vmatprep.mubr.f32.mxu0 0.0
    %6970 = vmatmul.mubr.f32.gmra.mrb[0].mxu0 %v6880
    %v6971 = vpop.f32.mrb[0].mxu0
    %v6972 = vadd.f32 %v6866, %v6971
    %v6973 = vpop.f32.mrb[0].mxu0
    %6974 = vmatprep.mubr.f32.mxu0 0.0
    %6975 = vmatmul.mubr.f32.gmra.mrb[0].mxu0 %v6883
    %v6976 = vpop.f32.mrb[0].mxu0
    %v6977 = vadd.f32 %v6866, %v6976
    %v6978 = vpop.f32.mrb[0].mxu0
    %6979 = vdwg.mxu0
    %v6980 = vmul.f32 %v6952, 0.70710677
    %v6981 = vmul.f32 %v6957, 0.70710677
    %v6982 = vmul.f32 %v6962, 0.70710677
    %v6983 = vmul.f32 %v6967, 0.70710677
    %v6984 = vmul.f32 %v6972, 0.70710677
    %v6985 = vmul.f32 %v6977, 0.70710677
    %v6986 = vand.u32 2147483647, %v6980
    %v6987 = vand.u32 2147483647, %v6981
    %v6988 = vand.u32 2147483647, %v6982
    %v6989 = vand.u32 2147483647, %v6983
    %v6990 = vand.u32 2147483647, %v6984
    %v6991 = vand.u32 2147483647, %v6985
    %v6992 = vmul.f32 %v6986, 0.3275911
    %v6993 = vmul.f32 %v6987, 0.3275911
    %v6994 = vmul.f32 %v6988, 0.3275911
    %v6995 = vmul.f32 %v6989, 0.3275911
    %v6996 = vmul.f32 %v6990, 0.3275911
    %v6997 = vmul.f32 %v6991, 0.3275911
    %v6998 = vadd.f32 %v6992, 1.0
    %v6999 = vadd.f32 %v6993, 1.0
    %v7000 = vadd.f32 %v6994, 1.0
    %v7001 = vadd.f32 %v6995, 1.0
    %v7002 = vadd.f32 %v6996, 1.0
    %v7003 = vadd.f32 %v6997, 1.0
    %v7004 = vrcp.pop %v6998
    %v7005 = vrcp.pop %v6999
    %v7006 = vrcp.pop %v7000
    %v7007 = vrcp.pop %v7001
    %v7008 = vrcp.pop %v7002
    %v7009 = vrcp.pop %v7003
    %v7010 = vmul.f32 %v7004, 1.0614054
    %v7011 = vmul.f32 %v7005, 1.0614054
    %v7012 = vmul.f32 %v7006, 1.0614054
    %v7013 = vmul.f32 %v7007, 1.0614054
    %v7014 = vmul.f32 %v7008, 1.0614054
    %v7015 = vmul.f32 %v7009, 1.0614054
    %v7016 = vsub.f32 %v7010, 1.4531521
    %v7017 = vsub.f32 %v7011, 1.4531521
    %v7018 = vsub.f32 %v7012, 1.4531521
    %v7019 = vsub.f32 %v7013, 1.4531521
    %v7020 = vsub.f32 %v7014, 1.4531521
    %v7021 = vsub.f32 %v7015, 1.4531521
    %v7022 = vmul.f32 %v7016, %v7004
    %v7023 = vmul.f32 %v7017, %v7005
    %v7024 = vmul.f32 %v7018, %v7006
    %v7025 = vmul.f32 %v7019, %v7007
    %v7026 = vmul.f32 %v7020, %v7008
    %v7027 = vmul.f32 %v7021, %v7009
    %v7028 = vadd.f32 %v7022, 1.4214138
    %v7029 = vadd.f32 %v7023, 1.4214138
    %v7030 = vadd.f32 %v7024, 1.4214138
    %v7031 = vadd.f32 %v7025, 1.4214138
    %v7032 = vadd.f32 %v7026, 1.4214138
    %v7033 = vadd.f32 %v7027, 1.4214138
    %v7034 = vmul.f32 %v7028, %v7004
    %v7035 = vmul.f32 %v7029, %v7005
    %v7036 = vmul.f32 %v7030, %v7006
    %v7037 = vmul.f32 %v7031, %v7007
    %v7038 = vmul.f32 %v7032, %v7008
    %v7039 = vmul.f32 %v7033, %v7009
    %v7040 = vsub.f32 %v7034, 0.28449672
    %v7041 = vsub.f32 %v7035, 0.28449672
    %v7042 = vsub.f32 %v7036, 0.28449672
    %v7043 = vsub.f32 %v7037, 0.28449672
    %v7044 = vsub.f32 %v7038, 0.28449672
    %v7045 = vsub.f32 %v7039, 0.28449672
    %v7046 = vmul.f32 %v7040, %v7004
    %v7047 = vmul.f32 %v7041, %v7005
    %v7048 = vmul.f32 %v7042, %v7006
    %v7049 = vmul.f32 %v7043, %v7007
    %v7050 = vmul.f32 %v7044, %v7008
    %v7051 = vmul.f32 %v7045, %v7009
    %v7052 = vadd.f32 %v7046, 0.2548296
    %v7053 = vadd.f32 %v7047, 0.2548296
    %v7054 = vadd.f32 %v7048, 0.2548296
    %v7055 = vadd.f32 %v7049, 0.2548296
    %v7056 = vadd.f32 %v7050, 0.2548296
    %v7057 = vadd.f32 %v7051, 0.2548296
    %v7058 = vmul.f32 %v7052, %v7004
    %v7059 = vmul.f32 %v7053, %v7005
    %v7060 = vmul.f32 %v7054, %v7006
    %v7061 = vmul.f32 %v7055, %v7007
    %v7062 = vmul.f32 %v7056, %v7008
    %v7063 = vmul.f32 %v7057, %v7009
    %v7064 = vsub.f32 0.0, %v6986
    %v7065 = vsub.f32 0.0, %v6987
    %v7066 = vsub.f32 0.0, %v6988
    %v7067 = vsub.f32 0.0, %v6989
    %v7068 = vsub.f32 0.0, %v6990
    %v7069 = vsub.f32 0.0, %v6991
    %v7070 = vmul.f32 %v7064, %v6986
    %v7071 = vmul.f32 %v7065, %v6987
    %v7072 = vmul.f32 %v7066, %v6988
    %v7073 = vmul.f32 %v7067, %v6989
    %v7074 = vmul.f32 %v7068, %v6990
    %v7075 = vmul.f32 %v7069, %v6991
    %v7076 = vmul.f32 %v7070, 1.442695
    %v7077 = vpow.pop %v7076
    %v7078 = vmul.f32 %v7071, 1.442695
    %v7079 = vpow.pop %v7078
    %v7080 = vmul.f32 %v7072, 1.442695
    %v7081 = vpow.pop %v7080
    %v7082 = vmul.f32 %v7073, 1.442695
    %v7083 = vpow.pop %v7082
    %v7084 = vmul.f32 %v7074, 1.442695
    %v7085 = vpow.pop %v7084
    %v7086 = vmul.f32 %v7075, 1.442695
    %v7087 = vpow.pop %v7086
    %v7088 = vmul.f32 %v7058, %v7077
    %v7089 = vmul.f32 %v7059, %v7079
    %v7090 = vmul.f32 %v7060, %v7081
    %v7091 = vmul.f32 %v7061, %v7083
    %v7092 = vmul.f32 %v7062, %v7085
    %v7093 = vmul.f32 %v7063, %v7087
    %vm7094 = vcmp.ge.f32.partialorder %v6980, 0.0
    %vm7095 = vcmp.ge.f32.partialorder %v6981, 0.0
    %vm7096 = vcmp.ge.f32.partialorder %v6982, 0.0
    %vm7097 = vcmp.ge.f32.partialorder %v6983, 0.0
    %vm7098 = vcmp.ge.f32.partialorder %v6984, 0.0
    %vm7099 = vcmp.ge.f32.partialorder %v6985, 0.0
    %v7100 = vmul.f32 %v7088, 0.5
    %v7101 = vmul.f32 %v7089, 0.5
    %v7102 = vmul.f32 %v7090, 0.5
    %v7103 = vmul.f32 %v7091, 0.5
    %v7104 = vmul.f32 %v7092, 0.5
    %v7105 = vmul.f32 %v7093, 0.5
    %v7106 = vsub.f32 1.0, %v7100
    %v7107 = vsub.f32 1.0, %v7101
    %v7108 = vsub.f32 1.0, %v7102
    %v7109 = vsub.f32 1.0, %v7103
    %v7110 = vsub.f32 1.0, %v7104
    %v7111 = vsub.f32 1.0, %v7105
    %v7112 = vsel %vm7094, %v7106, %v7100
    %v7113 = vsel %vm7095, %v7107, %v7101
    %v7114 = vsel %vm7096, %v7108, %v7102
    %v7115 = vsel %vm7097, %v7109, %v7103
    %v7116 = vsel %vm7098, %v7110, %v7104
    %v7117 = vsel %vm7099, %v7111, %v7105
    %v7118 = vmul.f32 %v6952, %v7112
    %v7119 = vmul.f32 %v6957, %v7113
    %v7120 = vmul.f32 %v6962, %v7114
    %v7121 = vmul.f32 %v6967, %v7115
    %v7122 = vmul.f32 %v6972, %v7116
    %v7123 = vmul.f32 %v6977, %v7117
    %s7124 = scalar_lea.vmem %s7, 128
    %v7125 = vld [vmem:[%s7124] sm:$0xff]
    %v7126 = vld [vmem:[%s7124 + $0x8] sm:$0xff]
    %v7127 = vld [vmem:[%s7124 + $0x10] sm:$0xff]
    %v7128 = vld [vmem:[%s7124 + $0x18] sm:$0xff]
    %v7129 = vld [vmem:[%s7124 + $0x20] sm:$0xff]
    %v7130 = vld [vmem:[%s7124 + $0x28] sm:$0xff]
    %v7131 = vld [vmem:[%s7124 + $0x30] sm:$0xff]
    %v7132 = vld [vmem:[%s7124 + $0x38] sm:$0xff]
    %v7133 = vld [vmem:[%s7124 + $0x40] sm:$0xff]
    %v7134 = vld [vmem:[%s7124 + $0x48] sm:$0xff]
    %v7135 = vld [vmem:[%s7124 + $0x50] sm:$0xff]
    %v7136 = vld [vmem:[%s7124 + $0x58] sm:$0xff]
    %v7137 = vld [vmem:[%s7124 + $0x60] sm:$0xff]
    %v7138 = vld [vmem:[%s7124 + $0x68] sm:$0xff]
    %v7139 = vld [vmem:[%s7124 + $0x70] sm:$0xff]
    %v7140 = vld [vmem:[%s7124 + $0x78] sm:$0xff]
    %v7141 = vld [vmem:[%s9 + $0xb] sm:$0x1]
    %v7142 = vlaneseq
    %v7143 = vshrl.u32 %v7142, 7
    %v7144 = vsub.s32 0, %v7143
    %v7145 = vrot.slane %v7141, %v7144
    %7146 = vmatprep.subr.mxu0 0.0
    %7147 = vmatpush1.msra.mxu0 %v7125
    %7148 = vmatprep.subr.mxu0 0.0
    %7149 = vmatpush1.msra.mxu0 %v7126
    %7150 = vmatprep.subr.mxu0 0.0
    %7151 = vmatpush1.msra.mxu0 %v7127
    %7152 = vmatprep.subr.mxu0 0.0
    %7153 = vmatpush1.msra.mxu0 %v7128
    %7154 = vmatprep.subr.mxu0 0.0
    %7155 = vmatpush1.msra.mxu0 %v7129
    %7156 = vmatprep.subr.mxu0 0.0
    %7157 = vmatpush1.msra.mxu0 %v7130
    %7158 = vmatprep.subr.mxu0 0.0
    %7159 = vmatpush1.msra.mxu0 %v7131
    %7160 = vmatprep.subr.mxu0 0.0
    %7161 = vmatpush1.msra.mxu0 %v7132
    %7162 = vmatprep.subr.mxu0 0.0
    %7163 = vmatpush1.msra.mxu0 %v7133
    %7164 = vmatprep.subr.mxu0 0.0
    %7165 = vmatpush1.msra.mxu0 %v7134
    %7166 = vmatprep.subr.mxu0 0.0
    %7167 = vmatpush1.msra.mxu0 %v7135
    %7168 = vmatprep.subr.mxu0 0.0
    %7169 = vmatpush1.msra.mxu0 %v7136
    %7170 = vmatprep.subr.mxu0 0.0
    %7171 = vmatpush1.msra.mxu0 %v7137
    %7172 = vmatprep.subr.mxu0 0.0
    %7173 = vmatpush1.msra.mxu0 %v7138
    %7174 = vmatprep.subr.mxu0 0.0
    %7175 = vmatpush1.msra.mxu0 %v7139
    %7176 = vmatprep.subr.mxu0 0.0
    %7177 = vmatpush1.msra.mxu0 %v7140
    %7178 = vmatprep.subr.mxu0 0.0
    %7179 = vmatpush1.msra.mxu0 0.0
    %7180 = vmatprep.subr.mxu0 0.0
    %7181 = vmatpush1.msra.mxu0 0.0
    %7182 = vmatprep.subr.mxu0 0.0
    %7183 = vmatpush1.msra.mxu0 0.0
    %7184 = vmatprep.subr.mxu0 0.0
    %7185 = vmatpush1.msra.mxu0 0.0
    %7186 = vmatprep.subr.mxu0 0.0
    %7187 = vmatpush1.msra.mxu0 0.0
    %7188 = vmatprep.subr.mxu0 0.0
    %7189 = vmatpush1.msra.mxu0 0.0
    %7190 = vmatprep.subr.mxu0 0.0
    %7191 = vmatpush1.msra.mxu0 0.0
    %7192 = vmatprep.subr.mxu0 0.0
    %7193 = vmatpush1.msra.mxu0 0.0
    %7194 = vmatprep.subr.mxu0 0.0
    %7195 = vmatpush1.msra.mxu0 0.0
    %7196 = vmatprep.subr.mxu0 0.0
    %7197 = vmatpush1.msra.mxu0 0.0
    %7198 = vmatprep.subr.mxu0 0.0
    %7199 = vmatpush1.msra.mxu0 0.0
    %7200 = vmatprep.subr.mxu0 0.0
    %7201 = vmatpush1.msra.mxu0 0.0
    %7202 = vmatprep.subr.mxu0 0.0
    %7203 = vmatpush1.msra.mxu0 0.0
    %7204 = vmatprep.subr.mxu0 0.0
    %7205 = vmatpush1.msra.mxu0 0.0
    %7206 = vmatprep.subr.mxu0 0.0
    %7207 = vmatpush1.msra.mxu0 0.0
    %7208 = vmatprep.subr.mxu0 0.0
    %7209 = vmatpush1.msra.mxu0 0.0
    %7210 = vmatprep.mubr.f32.mxu0 0.0
    %7211 = vmatmul.mubr.f32.gmra.mrb[0].mxu0 %v7118
    %v7212 = vpop.f32.mrb[0].mxu0
    %v7213 = vpop.f32.mrb[0].mxu0
    %7214 = vmatprep.mubr.f32.mxu0 0.0
    %7215 = vmatmul.mubr.f32.gmra.mrb[0].mxu0 %v7119
    %v7216 = vpop.f32.mrb[0].mxu0
    %v7217 = vpop.f32.mrb[0].mxu0
    %7218 = vmatprep.mubr.f32.mxu0 0.0
    %7219 = vmatmul.mubr.f32.gmra.mrb[0].mxu0 %v7120
    %v7220 = vpop.f32.mrb[0].mxu0
    %v7221 = vadd.f32 %v7145, %v7220
    %v7222 = vpop.f32.mrb[0].mxu0
    %7223 = vmatprep.mubr.f32.mxu0 0.0
    %7224 = vmatmul.mubr.f32.gmra.mrb[0].mxu0 %v7121
    %v7225 = vpop.f32.mrb[0].mxu0
    %v7226 = vpop.f32.mrb[0].mxu0
    %7227 = vmatprep.mubr.f32.mxu0 0.0
    %7228 = vmatmul.mubr.f32.gmra.mrb[0].mxu0 %v7122
    %v7229 = vpop.f32.mrb[0].mxu0
    %v7230 = vpop.f32.mrb[0].mxu0
    %7231 = vmatprep.mubr.f32.mxu0 0.0
    %7232 = vmatmul.mubr.f32.gmra.mrb[0].mxu0 %v7123
    %v7233 = vpop.f32.mrb[0].mxu0
    %v7234 = vadd.f32 %v7145, %v7233
    %v7235 = vpop.f32.mrb[0].mxu0
    %7236 = vdwg.mxu0
    %v7237 = vadd.f32 %v6753, %v7221
    %v7238 = vadd.f32 %v6756, %v7234
    %v7239 = vld [vmem:[%s9 + $0xc] sm:$0x1]
    %v7240 = vld [vmem:[%s9 + $0xd] sm:$0x1]
    %v7243 = vrot.slane %v7238, 7
    %vm7244 = vcmask 1041409
    %v7245 = vsel %vm7244, %v7243, %v7237
    %vm7247 = vcmask 254976
    %v7248 = vsel %vm7247, %v7245, 0.0
    %7249 = vadd.xlane.f32.xlu0 %v7248
    %v7250 = vpop.xlane.xlu0 %7249
    %v7251 = vmul.f32 %v7250, %v195
    %v7253 = vrot.slane %v7251, 1
    %v7256 = vsub.f32 %v7237, %v7251
    %v7257 = vsub.f32 %v7238, %v7253
    %v7258 = vmul.f32 %v7256, %v7256
    %v7259 = vmul.f32 %v7257, %v7257
    %v7262 = vrot.slane %v7259, 7
    %v7263 = vsel %vm7244, %v7262, %v7258
    %v7265 = vsel %vm7247, %v7263, 0.0
    %7266 = vadd.xlane.f32.xlu0 %v7265
    %v7267 = vpop.xlane.xlu0 %7266
    %v7268 = vmul.f32 %v7267, %v195
    %v7269 = vadd.f32 %v7268, 1e-06
    %v7270 = vrsqrt.pop %v7269
    %v7272 = vrot.slane %v7270, 1
    %v7275 = vmul.f32 %v7256, %v7270
    %v7276 = vmul.f32 %v7257, %v7272
    %v7277 = vlaneseq
    %v7278 = vshrl.u32 %v7277, 7
    %v7279 = vsub.s32 0, %v7278
    %v7280 = vrot.slane %v7239, %v7279
    %v7281 = vmul.f32 %v7275, %v7280
    %v7282 = vmul.f32 %v7276, %v7280
    %v7283 = vlaneseq
    %v7284 = vshrl.u32 %v7283, 7
    %v7285 = vsub.s32 0, %v7284
    %v7286 = vrot.slane %v7240, %v7285
    %v7287 = vadd.f32 %v7281, %v7286
    %v7288 = vadd.f32 %v7282, %v7286
    %v7289 = vld [vmem:[%s8] sm:$0xff]
    %v7290 = vld [vmem:[%s8 + $0x8] sm:$0xff]
    %v7291 = vld [vmem:[%s8 + $0x10] sm:$0xff]
    %v7292 = vld [vmem:[%s8 + $0x18] sm:$0xff]
    %v7293 = vld [vmem:[%s10 + $0x2] sm:$0x1]
    %v7294 = vlaneseq
    %v7295 = vshrl.u32 %v7294, 7
    %v7296 = vsub.s32 0, %v7295
    %v7297 = vrot.slane %v7293, %v7296
    %v7300 = vrot.slane %v7288, 7
    %v7301 = vsel %vm7244, %v7300, %v7287
    %v7302 = vsel %vm176, %v7301, 0
    %7304 = vmatprep.subr.mxu0 0.0
    %7305 = vmatpush1.msra.mxu0 %v7289
    %7306 = vmatprep.subr.mxu0 0.0
    %7307 = vmatpush1.msra.mxu0 %v7290
    %7308 = vmatprep.subr.mxu0 0.0
    %7309 = vmatpush1.msra.mxu0 %v7291
    %7310 = vmatprep.subr.mxu0 0.0
    %7311 = vmatpush1.msra.mxu0 %v7292
    %7312 = vmatprep.subr.mxu0 0.0
    %7313 = vmatpush1.msra.mxu0 0.0
    %7314 = vmatprep.subr.mxu0 0.0
    %7315 = vmatpush1.msra.mxu0 0.0
    %7316 = vmatprep.subr.mxu0 0.0
    %7317 = vmatpush1.msra.mxu0 0.0
    %7318 = vmatprep.subr.mxu0 0.0
    %7319 = vmatpush1.msra.mxu0 0.0
    %7320 = vmatprep.subr.mxu0 0.0
    %7321 = vmatpush1.msra.mxu0 0.0
    %7322 = vmatprep.subr.mxu0 0.0
    %7323 = vmatpush1.msra.mxu0 0.0
    %7324 = vmatprep.subr.mxu0 0.0
    %7325 = vmatpush1.msra.mxu0 0.0
    %7326 = vmatprep.subr.mxu0 0.0
    %7327 = vmatpush1.msra.mxu0 0.0
    %7328 = vmatprep.subr.mxu0 0.0
    %7329 = vmatpush1.msra.mxu0 0.0
    %7330 = vmatprep.subr.mxu0 0.0
    %7331 = vmatpush1.msra.mxu0 0.0
    %7332 = vmatprep.subr.mxu0 0.0
    %7333 = vmatpush1.msra.mxu0 0.0
    %7334 = vmatprep.subr.mxu0 0.0
    %7335 = vmatpush1.msra.mxu0 0.0
    %7336 = vmatprep.subr.mxu0 0.0
    %7337 = vmatpush1.msra.mxu0 0.0
    %7338 = vmatprep.subr.mxu0 0.0
    %7339 = vmatpush1.msra.mxu0 0.0
    %7340 = vmatprep.subr.mxu0 0.0
    %7341 = vmatpush1.msra.mxu0 0.0
    %7342 = vmatprep.subr.mxu0 0.0
    %7343 = vmatpush1.msra.mxu0 0.0
    %7344 = vmatprep.subr.mxu0 0.0
    %7345 = vmatpush1.msra.mxu0 0.0
    %7346 = vmatprep.subr.mxu0 0.0
    %7347 = vmatpush1.msra.mxu0 0.0
    %7348 = vmatprep.subr.mxu0 0.0
    %7349 = vmatpush1.msra.mxu0 0.0
    %7350 = vmatprep.subr.mxu0 0.0
    %7351 = vmatpush1.msra.mxu0 0.0
    %7352 = vmatprep.subr.mxu0 0.0
    %7353 = vmatpush1.msra.mxu0 0.0
    %7354 = vmatprep.subr.mxu0 0.0
    %7355 = vmatpush1.msra.mxu0 0.0
    %7356 = vmatprep.subr.mxu0 0.0
    %7357 = vmatpush1.msra.mxu0 0.0
    %7358 = vmatprep.subr.mxu0 0.0
    %7359 = vmatpush1.msra.mxu0 0.0
    %7360 = vmatprep.subr.mxu0 0.0
    %7361 = vmatpush1.msra.mxu0 0.0
    %7362 = vmatprep.subr.mxu0 0.0
    %7363 = vmatpush1.msra.mxu0 0.0
    %7364 = vmatprep.subr.mxu0 0.0
    %7365 = vmatpush1.msra.mxu0 0.0
    %7366 = vmatprep.subr.mxu0 0.0
    %7367 = vmatpush1.msra.mxu0 0.0
    %7368 = vmatprep.mubr.f32.mxu0 0.0
    %7369 = vmatmul.mubr.f32.gmra.mrb[0].mxu0 %v7302
    %v7370 = vpop.f32.mrb[0].mxu0
    %v7371 = vadd.f32 %v7297, %v7370
    %v7372 = vpop.f32.mrb[0].mxu0
    %7373 = vdwg.mxu0
    %7374 = vst [vmem:[#allocation2] sm:$0x3] %v7371
    // Predicated region
    $region46: #{vit_forward.1} parent=1 // pred_check
      _
    $region47: #{vit_forward.1} parent=1 // pred_check_branch
      %7376 = sbr.rel (0) target = $region49
    $region48: #{vit_forward.1} parent=1 // pred_region
      %s7378 = ssub.s32 32, 32
      %7379 = vsyncadd [#allocation3], %s7378
      %s7381 = sshll.u32 [#allocation2], 4
      %s7382 = int_to_ptr.vmem [resolvable:$true] %s7381
      %7384 = dma.vmem_to_hbm [thread:$0]  %s7382, 32, %s11, [#allocation3]
    $region49: #{vit_forward.1} parent=1 // pred_fallthru
      _
    // Predicated region
    $region50: #{vit_forward.1} parent=1 // pred_check
      _
    $region51: #{vit_forward.1} parent=1 // pred_check_branch
      %7386 = sbr.rel (0) target = $region53
    $region52: #{vit_forward.1} parent=1 // pred_region
      %7387 = dma.done [#allocation3], 32
    $region53: #{vit_forward.1} parent=1 // pred_fallthru
      _
    %7388 = vsyncpa [#allocation3], 1

</llo_original>
